<compile_context>
chip_gen: v7x
topology: tpu7x:2x2x1
jax: 0.10.0
libtpu: 0.0.40
codegen_flags: <defaults>
</compile_context>

<pallas_src>
import functools
import math

import jax
import jax.numpy as jnp
from jax import lax
from jax.experimental import pallas as pl
from jax.experimental.pallas import tpu as pltpu

LANE = 128


def _ceil_to(n, m):
    return ((n + m - 1) // m) * m


def _pad2d(a, rows, cols):
    return jnp.pad(a, ((0, rows - a.shape[0]), (0, cols - a.shape[1])))


# ---------------------------------------------------------------------------
# Fused decoder kernel: all LSTM layers (wavefronted) + dense projection.
# Grid = (batch_blocks,), everything VMEM-resident.
# ---------------------------------------------------------------------------
def _make_decoder_kernel(seq_len: int, hp: int, num_layers: int, b_blk: int):
    def sigmoid(z):
        # exact identity: sigmoid(z) = 0.5*(tanh(z/2)+1) -> single EUP push
        return 0.5 * (jnp.tanh(0.5 * z) + 1.0)

    def cell(gates, c):
        # gates: (B, 4*hp), gate order [i, f, o, g]
        act = sigmoid(gates[:, :3 * hp])            # one EUP slab for i|f|o
        g_g = jnp.tanh(gates[:, 3 * hp:])           # g
        i_g = act[:, 0:hp]
        f_g = act[:, hp:2 * hp]
        o_g = act[:, 2 * hp:3 * hp]
        c_new = f_g * c + i_g * g_g
        h_new = o_g * jnp.tanh(c_new)
        return h_new, c_new

    def kernel(*refs):
        x_ref = refs[0]
        lrefs = refs[1:1 + 3 * num_layers]          # (wih_t, whh_t, bias) per layer
        dense_ref = refs[1 + 3 * num_layers]
        out_ref = refs[2 + 3 * num_layers]          # (seq_len, B, out_pad)

        wih = [lrefs[3 * L][...] for L in range(num_layers)]
        whh = [lrefs[3 * L + 1][...] for L in range(num_layers)]
        bias = [lrefs[3 * L + 2][...] for L in range(num_layers)]
        dense = dense_ref[...]

        zeros = jnp.zeros((b_blk, hp), jnp.float32)
        h = [zeros] * num_layers
        c = [zeros] * num_layers

        # Layer 0's input is constant over time -> project once (one MXU matmul).
        gi0 = jnp.dot(x_ref[...], wih[0],
                      preferred_element_type=jnp.float32) + bias[0]

        # pending[L]: input row for layer L at its next time step (set by layer
        # L-1 on the previous wavefront step; exactly produced when consumed).
        pending = [None] * num_layers

        # Wavefront: step s runs layer L on time step t = s - L (if in range).
        for s in range(seq_len + num_layers - 1):   # static -> fully unrolled
            new_pending = [None] * num_layers
            for L in range(num_layers):
                t = s - L
                if not (0 <= t < seq_len):
                    continue
                if L == 0:
                    gates = gi0 + jnp.dot(h[0], whh[0],
                                          preferred_element_type=jnp.float32)
                else:
                    inp = pending[L]                # (B, hp), from step s-1
                    # Input projection is off the recurrent critical path
                    # (operand already available) -> separate K=128 matmul.
                    gates = (jnp.dot(inp, wih[L],
                                     preferred_element_type=jnp.float32)
                             + jnp.dot(h[L], whh[L],
                                       preferred_element_type=jnp.float32)
                             + bias[L])
                h[L], c[L] = cell(gates, c[L])
                if L < num_layers - 1:
                    new_pending[L + 1] = sigmoid(h[L])   # h_activ between layers
                else:
                    # Dense projection per step, lane-dense (B, out_pad) store.
                    out_ref[t] = jnp.dot(h[L], dense,
                                         preferred_element_type=jnp.float32)
            pending = new_pending

    return kernel


# ---------------------------------------------------------------------------
# Parameter init (mirrors PyTorch shapes / init ranges) and lane packing
# ---------------------------------------------------------------------------
def init_decoder_params(key, input_dim, out_dim, h_dims):
    layer_dims = [input_dim] + h_dims + [h_dims[-1]]
    num_layers = len(layer_dims) - 1
    raw_layers = []
    for idx in range(num_layers):
        d_in, hid = layer_dims[idx], layer_dims[idx + 1]
        k = 1.0 / math.sqrt(hid)
        key, k1, k2, k3, k4 = jax.random.split(key, 5)
        w_ih = jax.random.uniform(k1, (4 * hid, d_in), jnp.float32, -k, k)
        w_hh = jax.random.uniform(k2, (4 * hid, hid), jnp.float32, -k, k)
        b_ih = jax.random.uniform(k3, (4 * hid,), jnp.float32, -k, k)
        b_hh = jax.random.uniform(k4, (4 * hid,), jnp.float32, -k, k)
        raw_layers.append((w_ih, w_hh, b_ih, b_hh))
    key, kd = jax.random.split(key)
    dense = jax.random.uniform(kd, (layer_dims[-1], out_dim), jnp.float32,
                               0.0, 1.0)                    # torch.rand -> U(0,1)
    return raw_layers, dense


def _pack_lstm(w_ih, w_hh, b_ih, b_hh, hp, in_pad):
    """PyTorch LSTM weights -> padded, transposed, gate-reordered [i,f,o,g]."""
    hid = w_ih.shape[0] // 4

    def pack_w(w, ncols_pad):
        gi, gf, gg, go = jnp.split(w, 4, axis=0)            # PyTorch order [i,f,g,o]
        blocks = [gi, gf, go, gg]                           # sigmoid gates first
        return jnp.concatenate([_pad2d(b, hp, ncols_pad) for b in blocks],
                               axis=0)                      # (4*hp, ncols_pad)

    wih_t = pack_w(w_ih, in_pad).T                          # (in_pad, 4*hp)
    whh_t = pack_w(w_hh, hp).T                              # (hp, 4*hp)
    b = b_ih + b_hh
    bi, bf, bg, bo = jnp.split(b, 4)
    bias = jnp.concatenate(
        [jnp.pad(v, (0, hp - hid)) for v in (bi, bf, bo, bg)])[None, :]
    return wih_t, whh_t, bias                               # bias: (1, 4*hp)


def pack_decoder_params(raw_layers, dense, hp):
    packed = []
    for idx, (w_ih, w_hh, b_ih, b_hh) in enumerate(raw_layers):
        d_in = w_ih.shape[1]
        in_pad = _ceil_to(d_in, LANE) if idx == 0 else hp
        packed.append(_pack_lstm(w_ih, w_hh, b_ih, b_hh, hp, in_pad))
    dense_pad = _pad2d(dense, hp, _ceil_to(dense.shape[1], LANE))
    return packed, dense_pad


# ---------------------------------------------------------------------------
# Decoder forward: batch of latents, single fused pallas_call,
# batch-blocked grid ("parallel" -> v7x 2-TC sharding).
# ---------------------------------------------------------------------------
def decoder_forward(x_batch, packed_layers, dense_pad, *, seq_len, out_dim, hp,
                    in_pad0, b_blk):
    B, input_dim = x_batch.shape
    assert B % b_blk == 0, "batch must be a multiple of the batch block"
    num_layers = len(packed_layers)
    out_pad = dense_pad.shape[1]

    x_pad = jnp.zeros((B, in_pad0), jnp.float32).at[:, :input_dim].set(x_batch)

    flat = []
    in_specs = [pl.BlockSpec((b_blk, in_pad0), lambda i: (i, 0))]
    for (wih_t, whh_t, bias) in packed_layers:
        flat += [wih_t, whh_t, bias]
        in_specs += [pl.BlockSpec(wih_t.shape, lambda i: (0, 0)),
                     pl.BlockSpec(whh_t.shape, lambda i: (0, 0)),
                     pl.BlockSpec(bias.shape, lambda i: (0, 0))]
    in_specs.append(pl.BlockSpec(dense_pad.shape, lambda i: (0, 0)))

    out = pl.pallas_call(
        _make_decoder_kernel(seq_len, hp, num_layers, b_blk),
        out_shape=jax.ShapeDtypeStruct((seq_len, B, out_pad), jnp.float32),
        grid_spec=pltpu.PrefetchScalarGridSpec(
            num_scalar_prefetch=0,
            grid=(B // b_blk,),
            in_specs=in_specs,
            out_specs=pl.BlockSpec((seq_len, b_blk, out_pad),
                                   lambda i: (0, i, 0)),
        ),
        compiler_params=pltpu.CompilerParams(
            dimension_semantics=("parallel",)),
    )(x_pad, *flat, dense_pad)

    # (seq_len, B, out_pad) -> (B, seq_len, out_dim)
    return jnp.transpose(out[:, :, :out_dim], (1, 0, 2))


# ---------------------------------------------------------------------------
# Pure-JAX reference (PyTorch gate order / semantics) for correctness check
# ---------------------------------------------------------------------------
def reference_decoder(x_batch, seq_len, raw_layers, dense):
    hi = lax.Precision.HIGHEST
    B = x_batch.shape[0]
    xs = jnp.tile(x_batch[:, None, :], (1, seq_len, 1))     # (B, S, in)
    n = len(raw_layers)
    for idx, (w_ih, w_hh, b_ih, b_hh) in enumerate(raw_layers):
        hid = w_hh.shape[1]
        h = jnp.zeros((B, hid), jnp.float32)
        c = jnp.zeros((B, hid), jnp.float32)
        outs = []
        for t in range(seq_len):
            gates = (jnp.dot(xs[:, t], w_ih.T, precision=hi) + b_ih
                     + jnp.dot(h, w_hh.T, precision=hi) + b_hh)
            i = jax.nn.sigmoid(gates[:, 0 * hid:1 * hid])
            f = jax.nn.sigmoid(gates[:, 1 * hid:2 * hid])
            g = jnp.tanh(gates[:, 2 * hid:3 * hid])
            o = jax.nn.sigmoid(gates[:, 3 * hid:4 * hid])
            c = f * c + i * g
            h = o * jnp.tanh(c)
            outs.append(h)
        xs = jnp.stack(outs, axis=1)                        # (B, S, hid)
        if idx < n - 1:
            xs = jax.nn.sigmoid(xs)
    return jnp.einsum('bsh,ho->bso', xs, dense, precision=hi)


if __name__ == "__main__":
    key = jax.random.PRNGKey(0)
    input_dim, out_dim, h_dims, seq_len = 16, 8, [32, 64], 8
    batch, b_blk = 16, 8        # 2 batch blocks of 8 latents -> grid=(2,)

    key, kp, kx = jax.random.split(key, 3)
    raw_layers, dense = init_decoder_params(kp, input_dim, out_dim, h_dims)
    x = jax.random.normal(kx, (batch, input_dim), dtype=jnp.float32)

    hp = _ceil_to(max(w_hh.shape[1] for (_, w_hh, _, _) in raw_layers), LANE)
    in_pad0 = _ceil_to(input_dim, LANE)
    packed_layers, dense_pad = pack_decoder_params(raw_layers, dense, hp)

    fwd = jax.jit(functools.partial(decoder_forward, seq_len=seq_len,
                                    out_dim=out_dim, hp=hp, in_pad0=in_pad0,
                                    b_blk=b_blk))
    out = fwd(x, packed_layers, dense_pad)
    jax.block_until_ready(out)

    ref = reference_decoder(x, seq_len, raw_layers, dense)
    assert out.shape == (batch, seq_len, out_dim)
    err = float(jnp.max(jnp.abs(out - ref)))
    assert bool(jnp.allclose(out, ref, rtol=1e-2, atol=1e-2)), (
        "max abs err %f" % err)
    print("KERNEL_OK")
</pallas_src>

<mosaic_0001>
module attributes {stable_mosaic.version = 11 : i64} {
  func.func @kernel(%arg0: i32, %arg1: memref<8x128xf32, #tpu.memory_space<vmem>>, %arg2: memref<128x512xf32, #tpu.memory_space<vmem>>, %arg3: memref<128x512xf32, #tpu.memory_space<vmem>>, %arg4: memref<1x512xf32, #tpu.memory_space<vmem>>, %arg5: memref<128x512xf32, #tpu.memory_space<vmem>>, %arg6: memref<128x512xf32, #tpu.memory_space<vmem>>, %arg7: memref<1x512xf32, #tpu.memory_space<vmem>>, %arg8: memref<128x512xf32, #tpu.memory_space<vmem>>, %arg9: memref<128x512xf32, #tpu.memory_space<vmem>>, %arg10: memref<1x512xf32, #tpu.memory_space<vmem>>, %arg11: memref<128x128xf32, #tpu.memory_space<vmem>>, %arg12: memref<8x8x128xf32, #tpu.memory_space<vmem>>) attributes {dimension_semantics = [#tpu.dimension_semantics<parallel>], iteration_bounds = array<i64: 2>, scalar_prefetch = 0 : i64, scratch_operands = 0 : i64, tpu.core_type = #tpu.core_type<tc>, window_params = [{transform_indices = @transform_0, window_bounds = array<i64: 8, 128>}, {pipeline_mode = #tpu.pipeline_mode<synchronous>, transform_indices = @transform_1, window_bounds = array<i64: 128, 512>}, {pipeline_mode = #tpu.pipeline_mode<synchronous>, transform_indices = @transform_2, window_bounds = array<i64: 128, 512>}, {pipeline_mode = #tpu.pipeline_mode<synchronous>, transform_indices = @transform_3, window_bounds = array<i64: 1, 512>}, {pipeline_mode = #tpu.pipeline_mode<synchronous>, transform_indices = @transform_4, window_bounds = array<i64: 128, 512>}, {pipeline_mode = #tpu.pipeline_mode<synchronous>, transform_indices = @transform_5, window_bounds = array<i64: 128, 512>}, {pipeline_mode = #tpu.pipeline_mode<synchronous>, transform_indices = @transform_6, window_bounds = array<i64: 1, 512>}, {pipeline_mode = #tpu.pipeline_mode<synchronous>, transform_indices = @transform_7, window_bounds = array<i64: 128, 512>}, {pipeline_mode = #tpu.pipeline_mode<synchronous>, transform_indices = @transform_8, window_bounds = array<i64: 128, 512>}, {pipeline_mode = #tpu.pipeline_mode<synchronous>, transform_indices = @transform_9, window_bounds = array<i64: 1, 512>}, {pipeline_mode = #tpu.pipeline_mode<synchronous>, transform_indices = @transform_10, window_bounds = array<i64: 128, 128>}, {transform_indices = @transform_11, window_bounds = array<i64: 8, 8, 128>}]} {
    %c0 = arith.constant 0 : index
    %c0_0 = arith.constant 0 : index
    %0 = vector.load %arg2[%c0, %c0_0] : memref<128x512xf32, #tpu.memory_space<vmem>>, vector<128x512xf32>
    %c0_1 = arith.constant 0 : index
    %c0_2 = arith.constant 0 : index
    %1 = vector.load %arg5[%c0_1, %c0_2] : memref<128x512xf32, #tpu.memory_space<vmem>>, vector<128x512xf32>
    %c0_3 = arith.constant 0 : index
    %c0_4 = arith.constant 0 : index
    %2 = vector.load %arg8[%c0_3, %c0_4] : memref<128x512xf32, #tpu.memory_space<vmem>>, vector<128x512xf32>
    %c0_5 = arith.constant 0 : index
    %c0_6 = arith.constant 0 : index
    %3 = vector.load %arg3[%c0_5, %c0_6] : memref<128x512xf32, #tpu.memory_space<vmem>>, vector<128x512xf32>
    %c0_7 = arith.constant 0 : index
    %c0_8 = arith.constant 0 : index
    %4 = vector.load %arg6[%c0_7, %c0_8] : memref<128x512xf32, #tpu.memory_space<vmem>>, vector<128x512xf32>
    %c0_9 = arith.constant 0 : index
    %c0_10 = arith.constant 0 : index
    %5 = vector.load %arg9[%c0_9, %c0_10] : memref<128x512xf32, #tpu.memory_space<vmem>>, vector<128x512xf32>
    %c0_11 = arith.constant 0 : index
    %c0_12 = arith.constant 0 : index
    %6 = vector.load %arg4[%c0_11, %c0_12] : memref<1x512xf32, #tpu.memory_space<vmem>>, vector<1x512xf32>
    %c0_13 = arith.constant 0 : index
    %c0_14 = arith.constant 0 : index
    %7 = vector.load %arg7[%c0_13, %c0_14] : memref<1x512xf32, #tpu.memory_space<vmem>>, vector<1x512xf32>
    %c0_15 = arith.constant 0 : index
    %c0_16 = arith.constant 0 : index
    %8 = vector.load %arg10[%c0_15, %c0_16] : memref<1x512xf32, #tpu.memory_space<vmem>>, vector<1x512xf32>
    %c0_17 = arith.constant 0 : index
    %c0_18 = arith.constant 0 : index
    %9 = vector.load %arg11[%c0_17, %c0_18] : memref<128x128xf32, #tpu.memory_space<vmem>>, vector<128x128xf32>
    %cst = arith.constant 0.000000e+00 : f32
    %10 = vector.broadcast %cst : f32 to vector<8x128xf32>
    %c0_19 = arith.constant 0 : index
    %c0_20 = arith.constant 0 : index
    %11 = vector.load %arg1[%c0_19, %c0_20] : memref<8x128xf32, #tpu.memory_space<vmem>>, vector<8x128xf32>
    %cst_21 = arith.constant dense<0.000000e+00> : vector<8x512xf32>
    %12 = tpu.matmul %11, %0, %cst_21 {dimension_numbers = #tpu.dot_dimension_numbers<[1], [0], [0], [1], [0, 0, 1, 1], [], []>} : vector<8x128xf32>, vector<128x512xf32>, vector<8x512xf32> -> vector<8x512xf32>
    %13 = vector.broadcast %6 : vector<1x512xf32> to vector<8x512xf32>
    %14 = arith.addf %12, %13 : vector<8x512xf32>
    %cst_22 = arith.constant dense<0.000000e+00> : vector<8x512xf32>
    %15 = tpu.matmul %10, %3, %cst_22 {dimension_numbers = #tpu.dot_dimension_numbers<[1], [0], [0], [1], [0, 0, 1, 1], [], []>} : vector<8x128xf32>, vector<128x512xf32>, vector<8x512xf32> -> vector<8x512xf32>
    %16 = arith.addf %14, %15 : vector<8x512xf32>
    %17 = vector.extract_strided_slice %16 {offsets = [0, 0], sizes = [8, 384], strides = [1, 1]} : vector<8x512xf32> to vector<8x384xf32>
    %cst_23 = arith.constant 5.000000e-01 : f32
    %18 = vector.broadcast %cst_23 : f32 to vector<8x384xf32>
    %19 = arith.mulf %18, %17 : vector<8x384xf32>
    %20 = math.tanh %19 : vector<8x384xf32>
    %cst_24 = arith.constant 1.000000e+00 : f32
    %21 = vector.broadcast %cst_24 : f32 to vector<8x384xf32>
    %22 = arith.addf %20, %21 : vector<8x384xf32>
    %cst_25 = arith.constant 5.000000e-01 : f32
    %23 = vector.broadcast %cst_25 : f32 to vector<8x384xf32>
    %24 = arith.mulf %23, %22 : vector<8x384xf32>
    %25 = vector.extract_strided_slice %16 {offsets = [0, 384], sizes = [8, 128], strides = [1, 1]} : vector<8x512xf32> to vector<8x128xf32>
    %26 = math.tanh %25 : vector<8x128xf32>
    %27 = vector.extract_strided_slice %24 {offsets = [0, 0], sizes = [8, 128], strides = [1, 1]} : vector<8x384xf32> to vector<8x128xf32>
    %28 = vector.extract_strided_slice %24 {offsets = [0, 128], sizes = [8, 128], strides = [1, 1]} : vector<8x384xf32> to vector<8x128xf32>
    %29 = vector.extract_strided_slice %24 {offsets = [0, 256], sizes = [8, 128], strides = [1, 1]} : vector<8x384xf32> to vector<8x128xf32>
    %30 = arith.mulf %28, %10 : vector<8x128xf32>
    %31 = arith.mulf %27, %26 : vector<8x128xf32>
    %32 = arith.addf %30, %31 : vector<8x128xf32>
    %33 = math.tanh %32 : vector<8x128xf32>
    %34 = arith.mulf %29, %33 : vector<8x128xf32>
    %cst_26 = arith.constant 5.000000e-01 : f32
    %35 = vector.broadcast %cst_26 : f32 to vector<8x128xf32>
    %36 = arith.mulf %35, %34 : vector<8x128xf32>
    %37 = math.tanh %36 : vector<8x128xf32>
    %cst_27 = arith.constant 1.000000e+00 : f32
    %38 = vector.broadcast %cst_27 : f32 to vector<8x128xf32>
    %39 = arith.addf %37, %38 : vector<8x128xf32>
    %cst_28 = arith.constant 5.000000e-01 : f32
    %40 = vector.broadcast %cst_28 : f32 to vector<8x128xf32>
    %41 = arith.mulf %40, %39 : vector<8x128xf32>
    %cst_29 = arith.constant dense<0.000000e+00> : vector<8x512xf32>
    %42 = tpu.matmul %34, %3, %cst_29 {dimension_numbers = #tpu.dot_dimension_numbers<[1], [0], [0], [1], [0, 0, 1, 1], [], []>} : vector<8x128xf32>, vector<128x512xf32>, vector<8x512xf32> -> vector<8x512xf32>
    %43 = arith.addf %14, %42 : vector<8x512xf32>
    %44 = vector.extract_strided_slice %43 {offsets = [0, 0], sizes = [8, 384], strides = [1, 1]} : vector<8x512xf32> to vector<8x384xf32>
    %cst_30 = arith.constant 5.000000e-01 : f32
    %45 = vector.broadcast %cst_30 : f32 to vector<8x384xf32>
    %46 = arith.mulf %45, %44 : vector<8x384xf32>
    %47 = math.tanh %46 : vector<8x384xf32>
    %cst_31 = arith.constant 1.000000e+00 : f32
    %48 = vector.broadcast %cst_31 : f32 to vector<8x384xf32>
    %49 = arith.addf %47, %48 : vector<8x384xf32>
    %cst_32 = arith.constant 5.000000e-01 : f32
    %50 = vector.broadcast %cst_32 : f32 to vector<8x384xf32>
    %51 = arith.mulf %50, %49 : vector<8x384xf32>
    %52 = vector.extract_strided_slice %43 {offsets = [0, 384], sizes = [8, 128], strides = [1, 1]} : vector<8x512xf32> to vector<8x128xf32>
    %53 = math.tanh %52 : vector<8x128xf32>
    %54 = vector.extract_strided_slice %51 {offsets = [0, 0], sizes = [8, 128], strides = [1, 1]} : vector<8x384xf32> to vector<8x128xf32>
    %55 = vector.extract_strided_slice %51 {offsets = [0, 128], sizes = [8, 128], strides = [1, 1]} : vector<8x384xf32> to vector<8x128xf32>
    %56 = vector.extract_strided_slice %51 {offsets = [0, 256], sizes = [8, 128], strides = [1, 1]} : vector<8x384xf32> to vector<8x128xf32>
    %57 = arith.mulf %55, %32 : vector<8x128xf32>
    %58 = arith.mulf %54, %53 : vector<8x128xf32>
    %59 = arith.addf %57, %58 : vector<8x128xf32>
    %60 = math.tanh %59 : vector<8x128xf32>
    %61 = arith.mulf %56, %60 : vector<8x128xf32>
    %cst_33 = arith.constant 5.000000e-01 : f32
    %62 = vector.broadcast %cst_33 : f32 to vector<8x128xf32>
    %63 = arith.mulf %62, %61 : vector<8x128xf32>
    %64 = math.tanh %63 : vector<8x128xf32>
    %cst_34 = arith.constant 1.000000e+00 : f32
    %65 = vector.broadcast %cst_34 : f32 to vector<8x128xf32>
    %66 = arith.addf %64, %65 : vector<8x128xf32>
    %cst_35 = arith.constant 5.000000e-01 : f32
    %67 = vector.broadcast %cst_35 : f32 to vector<8x128xf32>
    %68 = arith.mulf %67, %66 : vector<8x128xf32>
    %cst_36 = arith.constant dense<0.000000e+00> : vector<8x512xf32>
    %69 = tpu.matmul %41, %1, %cst_36 {dimension_numbers = #tpu.dot_dimension_numbers<[1], [0], [0], [1], [0, 0, 1, 1], [], []>} : vector<8x128xf32>, vector<128x512xf32>, vector<8x512xf32> -> vector<8x512xf32>
    %cst_37 = arith.constant dense<0.000000e+00> : vector<8x512xf32>
    %70 = tpu.matmul %10, %4, %cst_37 {dimension_numbers = #tpu.dot_dimension_numbers<[1], [0], [0], [1], [0, 0, 1, 1], [], []>} : vector<8x128xf32>, vector<128x512xf32>, vector<8x512xf32> -> vector<8x512xf32>
    %71 = arith.addf %69, %70 : vector<8x512xf32>
    %72 = vector.broadcast %7 : vector<1x512xf32> to vector<8x512xf32>
    %73 = arith.addf %71, %72 : vector<8x512xf32>
    %74 = vector.extract_strided_slice %73 {offsets = [0, 0], sizes = [8, 384], strides = [1, 1]} : vector<8x512xf32> to vector<8x384xf32>
    %cst_38 = arith.constant 5.000000e-01 : f32
    %75 = vector.broadcast %cst_38 : f32 to vector<8x384xf32>
    %76 = arith.mulf %75, %74 : vector<8x384xf32>
    %77 = math.tanh %76 : vector<8x384xf32>
    %cst_39 = arith.constant 1.000000e+00 : f32
    %78 = vector.broadcast %cst_39 : f32 to vector<8x384xf32>
    %79 = arith.addf %77, %78 : vector<8x384xf32>
    %cst_40 = arith.constant 5.000000e-01 : f32
    %80 = vector.broadcast %cst_40 : f32 to vector<8x384xf32>
    %81 = arith.mulf %80, %79 : vector<8x384xf32>
    %82 = vector.extract_strided_slice %73 {offsets = [0, 384], sizes = [8, 128], strides = [1, 1]} : vector<8x512xf32> to vector<8x128xf32>
    %83 = math.tanh %82 : vector<8x128xf32>
    %84 = vector.extract_strided_slice %81 {offsets = [0, 0], sizes = [8, 128], strides = [1, 1]} : vector<8x384xf32> to vector<8x128xf32>
    %85 = vector.extract_strided_slice %81 {offsets = [0, 128], sizes = [8, 128], strides = [1, 1]} : vector<8x384xf32> to vector<8x128xf32>
    %86 = vector.extract_strided_slice %81 {offsets = [0, 256], sizes = [8, 128], strides = [1, 1]} : vector<8x384xf32> to vector<8x128xf32>
    %87 = arith.mulf %85, %10 : vector<8x128xf32>
    %88 = arith.mulf %84, %83 : vector<8x128xf32>
    %89 = arith.addf %87, %88 : vector<8x128xf32>
    %90 = math.tanh %89 : vector<8x128xf32>
    %91 = arith.mulf %86, %90 : vector<8x128xf32>
    %cst_41 = arith.constant 5.000000e-01 : f32
    %92 = vector.broadcast %cst_41 : f32 to vector<8x128xf32>
    %93 = arith.mulf %92, %91 : vector<8x128xf32>
    %94 = math.tanh %93 : vector<8x128xf32>
    %cst_42 = arith.constant 1.000000e+00 : f32
    %95 = vector.broadcast %cst_42 : f32 to vector<8x128xf32>
    %96 = arith.addf %94, %95 : vector<8x128xf32>
    %cst_43 = arith.constant 5.000000e-01 : f32
    %97 = vector.broadcast %cst_43 : f32 to vector<8x128xf32>
    %98 = arith.mulf %97, %96 : vector<8x128xf32>
    %cst_44 = arith.constant dense<0.000000e+00> : vector<8x512xf32>
    %99 = tpu.matmul %61, %3, %cst_44 {dimension_numbers = #tpu.dot_dimension_numbers<[1], [0], [0], [1], [0, 0, 1, 1], [], []>} : vector<8x128xf32>, vector<128x512xf32>, vector<8x512xf32> -> vector<8x512xf32>
    %100 = arith.addf %14, %99 : vector<8x512xf32>
    %101 = vector.extract_strided_slice %100 {offsets = [0, 0], sizes = [8, 384], strides = [1, 1]} : vector<8x512xf32> to vector<8x384xf32>
    %cst_45 = arith.constant 5.000000e-01 : f32
    %102 = vector.broadcast %cst_45 : f32 to vector<8x384xf32>
    %103 = arith.mulf %102, %101 : vector<8x384xf32>
    %104 = math.tanh %103 : vector<8x384xf32>
    %cst_46 = arith.constant 1.000000e+00 : f32
    %105 = vector.broadcast %cst_46 : f32 to vector<8x384xf32>
    %106 = arith.addf %104, %105 : vector<8x384xf32>
    %cst_47 = arith.constant 5.000000e-01 : f32
    %107 = vector.broadcast %cst_47 : f32 to vector<8x384xf32>
    %108 = arith.mulf %107, %106 : vector<8x384xf32>
    %109 = vector.extract_strided_slice %100 {offsets = [0, 384], sizes = [8, 128], strides = [1, 1]} : vector<8x512xf32> to vector<8x128xf32>
    %110 = math.tanh %109 : vector<8x128xf32>
    %111 = vector.extract_strided_slice %108 {offsets = [0, 0], sizes = [8, 128], strides = [1, 1]} : vector<8x384xf32> to vector<8x128xf32>
    %112 = vector.extract_strided_slice %108 {offsets = [0, 128], sizes = [8, 128], strides = [1, 1]} : vector<8x384xf32> to vector<8x128xf32>
    %113 = vector.extract_strided_slice %108 {offsets = [0, 256], sizes = [8, 128], strides = [1, 1]} : vector<8x384xf32> to vector<8x128xf32>
    %114 = arith.mulf %112, %59 : vector<8x128xf32>
    %115 = arith.mulf %111, %110 : vector<8x128xf32>
    %116 = arith.addf %114, %115 : vector<8x128xf32>
    %117 = math.tanh %116 : vector<8x128xf32>
    %118 = arith.mulf %113, %117 : vector<8x128xf32>
    %cst_48 = arith.constant 5.000000e-01 : f32
    %119 = vector.broadcast %cst_48 : f32 to vector<8x128xf32>
    %120 = arith.mulf %119, %118 : vector<8x128xf32>
    %121 = math.tanh %120 : vector<8x128xf32>
    %cst_49 = arith.constant 1.000000e+00 : f32
    %122 = vector.broadcast %cst_49 : f32 to vector<8x128xf32>
    %123 = arith.addf %121, %122 : vector<8x128xf32>
    %cst_50 = arith.constant 5.000000e-01 : f32
    %124 = vector.broadcast %cst_50 : f32 to vector<8x128xf32>
    %125 = arith.mulf %124, %123 : vector<8x128xf32>
    %cst_51 = arith.constant dense<0.000000e+00> : vector<8x512xf32>
    %126 = tpu.matmul %68, %1, %cst_51 {dimension_numbers = #tpu.dot_dimension_numbers<[1], [0], [0], [1], [0, 0, 1, 1], [], []>} : vector<8x128xf32>, vector<128x512xf32>, vector<8x512xf32> -> vector<8x512xf32>
    %cst_52 = arith.constant dense<0.000000e+00> : vector<8x512xf32>
    %127 = tpu.matmul %91, %4, %cst_52 {dimension_numbers = #tpu.dot_dimension_numbers<[1], [0], [0], [1], [0, 0, 1, 1], [], []>} : vector<8x128xf32>, vector<128x512xf32>, vector<8x512xf32> -> vector<8x512xf32>
    %128 = arith.addf %126, %127 : vector<8x512xf32>
    %129 = vector.broadcast %7 : vector<1x512xf32> to vector<8x512xf32>
    %130 = arith.addf %128, %129 : vector<8x512xf32>
    %131 = vector.extract_strided_slice %130 {offsets = [0, 0], sizes = [8, 384], strides = [1, 1]} : vector<8x512xf32> to vector<8x384xf32>
    %cst_53 = arith.constant 5.000000e-01 : f32
    %132 = vector.broadcast %cst_53 : f32 to vector<8x384xf32>
    %133 = arith.mulf %132, %131 : vector<8x384xf32>
    %134 = math.tanh %133 : vector<8x384xf32>
    %cst_54 = arith.constant 1.000000e+00 : f32
    %135 = vector.broadcast %cst_54 : f32 to vector<8x384xf32>
    %136 = arith.addf %134, %135 : vector<8x384xf32>
    %cst_55 = arith.constant 5.000000e-01 : f32
    %137 = vector.broadcast %cst_55 : f32 to vector<8x384xf32>
    %138 = arith.mulf %137, %136 : vector<8x384xf32>
    %139 = vector.extract_strided_slice %130 {offsets = [0, 384], sizes = [8, 128], strides = [1, 1]} : vector<8x512xf32> to vector<8x128xf32>
    %140 = math.tanh %139 : vector<8x128xf32>
    %141 = vector.extract_strided_slice %138 {offsets = [0, 0], sizes = [8, 128], strides = [1, 1]} : vector<8x384xf32> to vector<8x128xf32>
    %142 = vector.extract_strided_slice %138 {offsets = [0, 128], sizes = [8, 128], strides = [1, 1]} : vector<8x384xf32> to vector<8x128xf32>
    %143 = vector.extract_strided_slice %138 {offsets = [0, 256], sizes = [8, 128], strides = [1, 1]} : vector<8x384xf32> to vector<8x128xf32>
    %144 = arith.mulf %142, %89 : vector<8x128xf32>
    %145 = arith.mulf %141, %140 : vector<8x128xf32>
    %146 = arith.addf %144, %145 : vector<8x128xf32>
    %147 = math.tanh %146 : vector<8x128xf32>
    %148 = arith.mulf %143, %147 : vector<8x128xf32>
    %cst_56 = arith.constant 5.000000e-01 : f32
    %149 = vector.broadcast %cst_56 : f32 to vector<8x128xf32>
    %150 = arith.mulf %149, %148 : vector<8x128xf32>
    %151 = math.tanh %150 : vector<8x128xf32>
    %cst_57 = arith.constant 1.000000e+00 : f32
    %152 = vector.broadcast %cst_57 : f32 to vector<8x128xf32>
    %153 = arith.addf %151, %152 : vector<8x128xf32>
    %cst_58 = arith.constant 5.000000e-01 : f32
    %154 = vector.broadcast %cst_58 : f32 to vector<8x128xf32>
    %155 = arith.mulf %154, %153 : vector<8x128xf32>
    %cst_59 = arith.constant dense<0.000000e+00> : vector<8x512xf32>
    %156 = tpu.matmul %98, %2, %cst_59 {dimension_numbers = #tpu.dot_dimension_numbers<[1], [0], [0], [1], [0, 0, 1, 1], [], []>} : vector<8x128xf32>, vector<128x512xf32>, vector<8x512xf32> -> vector<8x512xf32>
    %cst_60 = arith.constant dense<0.000000e+00> : vector<8x512xf32>
    %157 = tpu.matmul %10, %5, %cst_60 {dimension_numbers = #tpu.dot_dimension_numbers<[1], [0], [0], [1], [0, 0, 1, 1], [], []>} : vector<8x128xf32>, vector<128x512xf32>, vector<8x512xf32> -> vector<8x512xf32>
    %158 = arith.addf %156, %157 : vector<8x512xf32>
    %159 = vector.broadcast %8 : vector<1x512xf32> to vector<8x512xf32>
    %160 = arith.addf %158, %159 : vector<8x512xf32>
    %161 = vector.extract_strided_slice %160 {offsets = [0, 0], sizes = [8, 384], strides = [1, 1]} : vector<8x512xf32> to vector<8x384xf32>
    %cst_61 = arith.constant 5.000000e-01 : f32
    %162 = vector.broadcast %cst_61 : f32 to vector<8x384xf32>
    %163 = arith.mulf %162, %161 : vector<8x384xf32>
    %164 = math.tanh %163 : vector<8x384xf32>
    %cst_62 = arith.constant 1.000000e+00 : f32
    %165 = vector.broadcast %cst_62 : f32 to vector<8x384xf32>
    %166 = arith.addf %164, %165 : vector<8x384xf32>
    %cst_63 = arith.constant 5.000000e-01 : f32
    %167 = vector.broadcast %cst_63 : f32 to vector<8x384xf32>
    %168 = arith.mulf %167, %166 : vector<8x384xf32>
    %169 = vector.extract_strided_slice %160 {offsets = [0, 384], sizes = [8, 128], strides = [1, 1]} : vector<8x512xf32> to vector<8x128xf32>
    %170 = math.tanh %169 : vector<8x128xf32>
    %171 = vector.extract_strided_slice %168 {offsets = [0, 0], sizes = [8, 128], strides = [1, 1]} : vector<8x384xf32> to vector<8x128xf32>
    %172 = vector.extract_strided_slice %168 {offsets = [0, 128], sizes = [8, 128], strides = [1, 1]} : vector<8x384xf32> to vector<8x128xf32>
    %173 = vector.extract_strided_slice %168 {offsets = [0, 256], sizes = [8, 128], strides = [1, 1]} : vector<8x384xf32> to vector<8x128xf32>
    %174 = arith.mulf %172, %10 : vector<8x128xf32>
    %175 = arith.mulf %171, %170 : vector<8x128xf32>
    %176 = arith.addf %174, %175 : vector<8x128xf32>
    %177 = math.tanh %176 : vector<8x128xf32>
    %178 = arith.mulf %173, %177 : vector<8x128xf32>
    %cst_64 = arith.constant dense<0.000000e+00> : vector<8x128xf32>
    %179 = tpu.matmul %178, %9, %cst_64 {dimension_numbers = #tpu.dot_dimension_numbers<[1], [0], [0], [1], [0, 0, 1, 1], [], []>} : vector<8x128xf32>, vector<128x128xf32>, vector<8x128xf32> -> vector<8x128xf32>
    %c0_65 = arith.constant 0 : index
    %c0_66 = arith.constant 0 : index
    %c0_67 = arith.constant 0 : index
    %180 = vector.load %arg12[%c0_65, %c0_66, %c0_67] : memref<8x8x128xf32, #tpu.memory_space<vmem>>, vector<1x8x128xf32>
    %181 = vector.shape_cast %180 : vector<1x8x128xf32> to vector<8x128xf32>
    %182 = vector.shape_cast %179 : vector<8x128xf32> to vector<1x8x128xf32>
    tpu.vector_store %arg12[%c0_65, %c0_66, %c0_67], %182 {strides = array<i32>} : memref<8x8x128xf32, #tpu.memory_space<vmem>>, vector<1x8x128xf32>,
    %cst_68 = arith.constant dense<0.000000e+00> : vector<8x512xf32>
    %183 = tpu.matmul %118, %3, %cst_68 {dimension_numbers = #tpu.dot_dimension_numbers<[1], [0], [0], [1], [0, 0, 1, 1], [], []>} : vector<8x128xf32>, vector<128x512xf32>, vector<8x512xf32> -> vector<8x512xf32>
    %184 = arith.addf %14, %183 : vector<8x512xf32>
    %185 = vector.extract_strided_slice %184 {offsets = [0, 0], sizes = [8, 384], strides = [1, 1]} : vector<8x512xf32> to vector<8x384xf32>
    %cst_69 = arith.constant 5.000000e-01 : f32
    %186 = vector.broadcast %cst_69 : f32 to vector<8x384xf32>
    %187 = arith.mulf %186, %185 : vector<8x384xf32>
    %188 = math.tanh %187 : vector<8x384xf32>
    %cst_70 = arith.constant 1.000000e+00 : f32
    %189 = vector.broadcast %cst_70 : f32 to vector<8x384xf32>
    %190 = arith.addf %188, %189 : vector<8x384xf32>
    %cst_71 = arith.constant 5.000000e-01 : f32
    %191 = vector.broadcast %cst_71 : f32 to vector<8x384xf32>
    %192 = arith.mulf %191, %190 : vector<8x384xf32>
    %193 = vector.extract_strided_slice %184 {offsets = [0, 384], sizes = [8, 128], strides = [1, 1]} : vector<8x512xf32> to vector<8x128xf32>
    %194 = math.tanh %193 : vector<8x128xf32>
    %195 = vector.extract_strided_slice %192 {offsets = [0, 0], sizes = [8, 128], strides = [1, 1]} : vector<8x384xf32> to vector<8x128xf32>
    %196 = vector.extract_strided_slice %192 {offsets = [0, 128], sizes = [8, 128], strides = [1, 1]} : vector<8x384xf32> to vector<8x128xf32>
    %197 = vector.extract_strided_slice %192 {offsets = [0, 256], sizes = [8, 128], strides = [1, 1]} : vector<8x384xf32> to vector<8x128xf32>
    %198 = arith.mulf %196, %116 : vector<8x128xf32>
    %199 = arith.mulf %195, %194 : vector<8x128xf32>
    %200 = arith.addf %198, %199 : vector<8x128xf32>
    %201 = math.tanh %200 : vector<8x128xf32>
    %202 = arith.mulf %197, %201 : vector<8x128xf32>
    %cst_72 = arith.constant 5.000000e-01 : f32
    %203 = vector.broadcast %cst_72 : f32 to vector<8x128xf32>
    %204 = arith.mulf %203, %202 : vector<8x128xf32>
    %205 = math.tanh %204 : vector<8x128xf32>
    %cst_73 = arith.constant 1.000000e+00 : f32
    %206 = vector.broadcast %cst_73 : f32 to vector<8x128xf32>
    %207 = arith.addf %205, %206 : vector<8x128xf32>
    %cst_74 = arith.constant 5.000000e-01 : f32
    %208 = vector.broadcast %cst_74 : f32 to vector<8x128xf32>
    %209 = arith.mulf %208, %207 : vector<8x128xf32>
    %cst_75 = arith.constant dense<0.000000e+00> : vector<8x512xf32>
    %210 = tpu.matmul %125, %1, %cst_75 {dimension_numbers = #tpu.dot_dimension_numbers<[1], [0], [0], [1], [0, 0, 1, 1], [], []>} : vector<8x128xf32>, vector<128x512xf32>, vector<8x512xf32> -> vector<8x512xf32>
    %cst_76 = arith.constant dense<0.000000e+00> : vector<8x512xf32>
    %211 = tpu.matmul %148, %4, %cst_76 {dimension_numbers = #tpu.dot_dimension_numbers<[1], [0], [0], [1], [0, 0, 1, 1], [], []>} : vector<8x128xf32>, vector<128x512xf32>, vector<8x512xf32> -> vector<8x512xf32>
    %212 = arith.addf %210, %211 : vector<8x512xf32>
    %213 = vector.broadcast %7 : vector<1x512xf32> to vector<8x512xf32>
    %214 = arith.addf %212, %213 : vector<8x512xf32>
    %215 = vector.extract_strided_slice %214 {offsets = [0, 0], sizes = [8, 384], strides = [1, 1]} : vector<8x512xf32> to vector<8x384xf32>
    %cst_77 = arith.constant 5.000000e-01 : f32
    %216 = vector.broadcast %cst_77 : f32 to vector<8x384xf32>
    %217 = arith.mulf %216, %215 : vector<8x384xf32>
    %218 = math.tanh %217 : vector<8x384xf32>
    %cst_78 = arith.constant 1.000000e+00 : f32
    %219 = vector.broadcast %cst_78 : f32 to vector<8x384xf32>
    %220 = arith.addf %218, %219 : vector<8x384xf32>
    %cst_79 = arith.constant 5.000000e-01 : f32
    %221 = vector.broadcast %cst_79 : f32 to vector<8x384xf32>
    %222 = arith.mulf %221, %220 : vector<8x384xf32>
    %223 = vector.extract_strided_slice %214 {offsets = [0, 384], sizes = [8, 128], strides = [1, 1]} : vector<8x512xf32> to vector<8x128xf32>
    %224 = math.tanh %223 : vector<8x128xf32>
    %225 = vector.extract_strided_slice %222 {offsets = [0, 0], sizes = [8, 128], strides = [1, 1]} : vector<8x384xf32> to vector<8x128xf32>
    %226 = vector.extract_strided_slice %222 {offsets = [0, 128], sizes = [8, 128], strides = [1, 1]} : vector<8x384xf32> to vector<8x128xf32>
    %227 = vector.extract_strided_slice %222 {offsets = [0, 256], sizes = [8, 128], strides = [1, 1]} : vector<8x384xf32> to vector<8x128xf32>
    %228 = arith.mulf %226, %146 : vector<8x128xf32>
    %229 = arith.mulf %225, %224 : vector<8x128xf32>
    %230 = arith.addf %228, %229 : vector<8x128xf32>
    %231 = math.tanh %230 : vector<8x128xf32>
    %232 = arith.mulf %227, %231 : vector<8x128xf32>
    %cst_80 = arith.constant 5.000000e-01 : f32
    %233 = vector.broadcast %cst_80 : f32 to vector<8x128xf32>
    %234 = arith.mulf %233, %232 : vector<8x128xf32>
    %235 = math.tanh %234 : vector<8x128xf32>
    %cst_81 = arith.constant 1.000000e+00 : f32
    %236 = vector.broadcast %cst_81 : f32 to vector<8x128xf32>
    %237 = arith.addf %235, %236 : vector<8x128xf32>
    %cst_82 = arith.constant 5.000000e-01 : f32
    %238 = vector.broadcast %cst_82 : f32 to vector<8x128xf32>
    %239 = arith.mulf %238, %237 : vector<8x128xf32>
    %cst_83 = arith.constant dense<0.000000e+00> : vector<8x512xf32>
    %240 = tpu.matmul %155, %2, %cst_83 {dimension_numbers = #tpu.dot_dimension_numbers<[1], [0], [0], [1], [0, 0, 1, 1], [], []>} : vector<8x128xf32>, vector<128x512xf32>, vector<8x512xf32> -> vector<8x512xf32>
    %cst_84 = arith.constant dense<0.000000e+00> : vector<8x512xf32>
    %241 = tpu.matmul %178, %5, %cst_84 {dimension_numbers = #tpu.dot_dimension_numbers<[1], [0], [0], [1], [0, 0, 1, 1], [], []>} : vector<8x128xf32>, vector<128x512xf32>, vector<8x512xf32> -> vector<8x512xf32>
    %242 = arith.addf %240, %241 : vector<8x512xf32>
    %243 = vector.broadcast %8 : vector<1x512xf32> to vector<8x512xf32>
    %244 = arith.addf %242, %243 : vector<8x512xf32>
    %245 = vector.extract_strided_slice %244 {offsets = [0, 0], sizes = [8, 384], strides = [1, 1]} : vector<8x512xf32> to vector<8x384xf32>
    %cst_85 = arith.constant 5.000000e-01 : f32
    %246 = vector.broadcast %cst_85 : f32 to vector<8x384xf32>
    %247 = arith.mulf %246, %245 : vector<8x384xf32>
    %248 = math.tanh %247 : vector<8x384xf32>
    %cst_86 = arith.constant 1.000000e+00 : f32
    %249 = vector.broadcast %cst_86 : f32 to vector<8x384xf32>
    %250 = arith.addf %248, %249 : vector<8x384xf32>
    %cst_87 = arith.constant 5.000000e-01 : f32
    %251 = vector.broadcast %cst_87 : f32 to vector<8x384xf32>
    %252 = arith.mulf %251, %250 : vector<8x384xf32>
    %253 = vector.extract_strided_slice %244 {offsets = [0, 384], sizes = [8, 128], strides = [1, 1]} : vector<8x512xf32> to vector<8x128xf32>
    %254 = math.tanh %253 : vector<8x128xf32>
    %255 = vector.extract_strided_slice %252 {offsets = [0, 0], sizes = [8, 128], strides = [1, 1]} : vector<8x384xf32> to vector<8x128xf32>
    %256 = vector.extract_strided_slice %252 {offsets = [0, 128], sizes = [8, 128], strides = [1, 1]} : vector<8x384xf32> to vector<8x128xf32>
    %257 = vector.extract_strided_slice %252 {offsets = [0, 256], sizes = [8, 128], strides = [1, 1]} : vector<8x384xf32> to vector<8x128xf32>
    %258 = arith.mulf %256, %176 : vector<8x128xf32>
    %259 = arith.mulf %255, %254 : vector<8x128xf32>
    %260 = arith.addf %258, %259 : vector<8x128xf32>
    %261 = math.tanh %260 : vector<8x128xf32>
    %262 = arith.mulf %257, %261 : vector<8x128xf32>
    %cst_88 = arith.constant dense<0.000000e+00> : vector<8x128xf32>
    %263 = tpu.matmul %262, %9, %cst_88 {dimension_numbers = #tpu.dot_dimension_numbers<[1], [0], [0], [1], [0, 0, 1, 1], [], []>} : vector<8x128xf32>, vector<128x128xf32>, vector<8x128xf32> -> vector<8x128xf32>
    %c1 = arith.constant 1 : index
    %c0_89 = arith.constant 0 : index
    %c0_90 = arith.constant 0 : index
    %264 = vector.load %arg12[%c1, %c0_89, %c0_90] : memref<8x8x128xf32, #tpu.memory_space<vmem>>, vector<1x8x128xf32>
    %265 = vector.shape_cast %264 : vector<1x8x128xf32> to vector<8x128xf32>
    %266 = vector.shape_cast %263 : vector<8x128xf32> to vector<1x8x128xf32>
    tpu.vector_store %arg12[%c1, %c0_89, %c0_90], %266 {strides = array<i32>} : memref<8x8x128xf32, #tpu.memory_space<vmem>>, vector<1x8x128xf32>,
    %cst_91 = arith.constant dense<0.000000e+00> : vector<8x512xf32>
    %267 = tpu.matmul %202, %3, %cst_91 {dimension_numbers = #tpu.dot_dimension_numbers<[1], [0], [0], [1], [0, 0, 1, 1], [], []>} : vector<8x128xf32>, vector<128x512xf32>, vector<8x512xf32> -> vector<8x512xf32>
    %268 = arith.addf %14, %267 : vector<8x512xf32>
    %269 = vector.extract_strided_slice %268 {offsets = [0, 0], sizes = [8, 384], strides = [1, 1]} : vector<8x512xf32> to vector<8x384xf32>
    %cst_92 = arith.constant 5.000000e-01 : f32
    %270 = vector.broadcast %cst_92 : f32 to vector<8x384xf32>
    %271 = arith.mulf %270, %269 : vector<8x384xf32>
    %272 = math.tanh %271 : vector<8x384xf32>
    %cst_93 = arith.constant 1.000000e+00 : f32
    %273 = vector.broadcast %cst_93 : f32 to vector<8x384xf32>
    %274 = arith.addf %272, %273 : vector<8x384xf32>
    %cst_94 = arith.constant 5.000000e-01 : f32
    %275 = vector.broadcast %cst_94 : f32 to vector<8x384xf32>
    %276 = arith.mulf %275, %274 : vector<8x384xf32>
    %277 = vector.extract_strided_slice %268 {offsets = [0, 384], sizes = [8, 128], strides = [1, 1]} : vector<8x512xf32> to vector<8x128xf32>
    %278 = math.tanh %277 : vector<8x128xf32>
    %279 = vector.extract_strided_slice %276 {offsets = [0, 0], sizes = [8, 128], strides = [1, 1]} : vector<8x384xf32> to vector<8x128xf32>
    %280 = vector.extract_strided_slice %276 {offsets = [0, 128], sizes = [8, 128], strides = [1, 1]} : vector<8x384xf32> to vector<8x128xf32>
    %281 = vector.extract_strided_slice %276 {offsets = [0, 256], sizes = [8, 128], strides = [1, 1]} : vector<8x384xf32> to vector<8x128xf32>
    %282 = arith.mulf %280, %200 : vector<8x128xf32>
    %283 = arith.mulf %279, %278 : vector<8x128xf32>
    %284 = arith.addf %282, %283 : vector<8x128xf32>
    %285 = math.tanh %284 : vector<8x128xf32>
    %286 = arith.mulf %281, %285 : vector<8x128xf32>
    %cst_95 = arith.constant 5.000000e-01 : f32
    %287 = vector.broadcast %cst_95 : f32 to vector<8x128xf32>
    %288 = arith.mulf %287, %286 : vector<8x128xf32>
    %289 = math.tanh %288 : vector<8x128xf32>
    %cst_96 = arith.constant 1.000000e+00 : f32
    %290 = vector.broadcast %cst_96 : f32 to vector<8x128xf32>
    %291 = arith.addf %289, %290 : vector<8x128xf32>
    %cst_97 = arith.constant 5.000000e-01 : f32
    %292 = vector.broadcast %cst_97 : f32 to vector<8x128xf32>
    %293 = arith.mulf %292, %291 : vector<8x128xf32>
    %cst_98 = arith.constant dense<0.000000e+00> : vector<8x512xf32>
    %294 = tpu.matmul %209, %1, %cst_98 {dimension_numbers = #tpu.dot_dimension_numbers<[1], [0], [0], [1], [0, 0, 1, 1], [], []>} : vector<8x128xf32>, vector<128x512xf32>, vector<8x512xf32> -> vector<8x512xf32>
    %cst_99 = arith.constant dense<0.000000e+00> : vector<8x512xf32>
    %295 = tpu.matmul %232, %4, %cst_99 {dimension_numbers = #tpu.dot_dimension_numbers<[1], [0], [0], [1], [0, 0, 1, 1], [], []>} : vector<8x128xf32>, vector<128x512xf32>, vector<8x512xf32> -> vector<8x512xf32>
    %296 = arith.addf %294, %295 : vector<8x512xf32>
    %297 = vector.broadcast %7 : vector<1x512xf32> to vector<8x512xf32>
    %298 = arith.addf %296, %297 : vector<8x512xf32>
    %299 = vector.extract_strided_slice %298 {offsets = [0, 0], sizes = [8, 384], strides = [1, 1]} : vector<8x512xf32> to vector<8x384xf32>
    %cst_100 = arith.constant 5.000000e-01 : f32
    %300 = vector.broadcast %cst_100 : f32 to vector<8x384xf32>
    %301 = arith.mulf %300, %299 : vector<8x384xf32>
    %302 = math.tanh %301 : vector<8x384xf32>
    %cst_101 = arith.constant 1.000000e+00 : f32
    %303 = vector.broadcast %cst_101 : f32 to vector<8x384xf32>
    %304 = arith.addf %302, %303 : vector<8x384xf32>
    %cst_102 = arith.constant 5.000000e-01 : f32
    %305 = vector.broadcast %cst_102 : f32 to vector<8x384xf32>
    %306 = arith.mulf %305, %304 : vector<8x384xf32>
    %307 = vector.extract_strided_slice %298 {offsets = [0, 384], sizes = [8, 128], strides = [1, 1]} : vector<8x512xf32> to vector<8x128xf32>
    %308 = math.tanh %307 : vector<8x128xf32>
    %309 = vector.extract_strided_slice %306 {offsets = [0, 0], sizes = [8, 128], strides = [1, 1]} : vector<8x384xf32> to vector<8x128xf32>
    %310 = vector.extract_strided_slice %306 {offsets = [0, 128], sizes = [8, 128], strides = [1, 1]} : vector<8x384xf32> to vector<8x128xf32>
    %311 = vector.extract_strided_slice %306 {offsets = [0, 256], sizes = [8, 128], strides = [1, 1]} : vector<8x384xf32> to vector<8x128xf32>
    %312 = arith.mulf %310, %230 : vector<8x128xf32>
    %313 = arith.mulf %309, %308 : vector<8x128xf32>
    %314 = arith.addf %312, %313 : vector<8x128xf32>
    %315 = math.tanh %314 : vector<8x128xf32>
    %316 = arith.mulf %311, %315 : vector<8x128xf32>
    %cst_103 = arith.constant 5.000000e-01 : f32
    %317 = vector.broadcast %cst_103 : f32 to vector<8x128xf32>
    %318 = arith.mulf %317, %316 : vector<8x128xf32>
    %319 = math.tanh %318 : vector<8x128xf32>
    %cst_104 = arith.constant 1.000000e+00 : f32
    %320 = vector.broadcast %cst_104 : f32 to vector<8x128xf32>
    %321 = arith.addf %319, %320 : vector<8x128xf32>
    %cst_105 = arith.constant 5.000000e-01 : f32
    %322 = vector.broadcast %cst_105 : f32 to vector<8x128xf32>
    %323 = arith.mulf %322, %321 : vector<8x128xf32>
    %cst_106 = arith.constant dense<0.000000e+00> : vector<8x512xf32>
    %324 = tpu.matmul %239, %2, %cst_106 {dimension_numbers = #tpu.dot_dimension_numbers<[1], [0], [0], [1], [0, 0, 1, 1], [], []>} : vector<8x128xf32>, vector<128x512xf32>, vector<8x512xf32> -> vector<8x512xf32>
    %cst_107 = arith.constant dense<0.000000e+00> : vector<8x512xf32>
    %325 = tpu.matmul %262, %5, %cst_107 {dimension_numbers = #tpu.dot_dimension_numbers<[1], [0], [0], [1], [0, 0, 1, 1], [], []>} : vector<8x128xf32>, vector<128x512xf32>, vector<8x512xf32> -> vector<8x512xf32>
    %326 = arith.addf %324, %325 : vector<8x512xf32>
    %327 = vector.broadcast %8 : vector<1x512xf32> to vector<8x512xf32>
    %328 = arith.addf %326, %327 : vector<8x512xf32>
    %329 = vector.extract_strided_slice %328 {offsets = [0, 0], sizes = [8, 384], strides = [1, 1]} : vector<8x512xf32> to vector<8x384xf32>
    %cst_108 = arith.constant 5.000000e-01 : f32
    %330 = vector.broadcast %cst_108 : f32 to vector<8x384xf32>
    %331 = arith.mulf %330, %329 : vector<8x384xf32>
    %332 = math.tanh %331 : vector<8x384xf32>
    %cst_109 = arith.constant 1.000000e+00 : f32
    %333 = vector.broadcast %cst_109 : f32 to vector<8x384xf32>
    %334 = arith.addf %332, %333 : vector<8x384xf32>
    %cst_110 = arith.constant 5.000000e-01 : f32
    %335 = vector.broadcast %cst_110 : f32 to vector<8x384xf32>
    %336 = arith.mulf %335, %334 : vector<8x384xf32>
    %337 = vector.extract_strided_slice %328 {offsets = [0, 384], sizes = [8, 128], strides = [1, 1]} : vector<8x512xf32> to vector<8x128xf32>
    %338 = math.tanh %337 : vector<8x128xf32>
    %339 = vector.extract_strided_slice %336 {offsets = [0, 0], sizes = [8, 128], strides = [1, 1]} : vector<8x384xf32> to vector<8x128xf32>
    %340 = vector.extract_strided_slice %336 {offsets = [0, 128], sizes = [8, 128], strides = [1, 1]} : vector<8x384xf32> to vector<8x128xf32>
    %341 = vector.extract_strided_slice %336 {offsets = [0, 256], sizes = [8, 128], strides = [1, 1]} : vector<8x384xf32> to vector<8x128xf32>
    %342 = arith.mulf %340, %260 : vector<8x128xf32>
    %343 = arith.mulf %339, %338 : vector<8x128xf32>
    %344 = arith.addf %342, %343 : vector<8x128xf32>
    %345 = math.tanh %344 : vector<8x128xf32>
    %346 = arith.mulf %341, %345 : vector<8x128xf32>
    %cst_111 = arith.constant dense<0.000000e+00> : vector<8x128xf32>
    %347 = tpu.matmul %346, %9, %cst_111 {dimension_numbers = #tpu.dot_dimension_numbers<[1], [0], [0], [1], [0, 0, 1, 1], [], []>} : vector<8x128xf32>, vector<128x128xf32>, vector<8x128xf32> -> vector<8x128xf32>
    %c2 = arith.constant 2 : index
    %c0_112 = arith.constant 0 : index
    %c0_113 = arith.constant 0 : index
    %348 = vector.load %arg12[%c2, %c0_112, %c0_113] : memref<8x8x128xf32, #tpu.memory_space<vmem>>, vector<1x8x128xf32>
    %349 = vector.shape_cast %348 : vector<1x8x128xf32> to vector<8x128xf32>
    %350 = vector.shape_cast %347 : vector<8x128xf32> to vector<1x8x128xf32>
    tpu.vector_store %arg12[%c2, %c0_112, %c0_113], %350 {strides = array<i32>} : memref<8x8x128xf32, #tpu.memory_space<vmem>>, vector<1x8x128xf32>,
    %cst_114 = arith.constant dense<0.000000e+00> : vector<8x512xf32>
    %351 = tpu.matmul %286, %3, %cst_114 {dimension_numbers = #tpu.dot_dimension_numbers<[1], [0], [0], [1], [0, 0, 1, 1], [], []>} : vector<8x128xf32>, vector<128x512xf32>, vector<8x512xf32> -> vector<8x512xf32>
    %352 = arith.addf %14, %351 : vector<8x512xf32>
    %353 = vector.extract_strided_slice %352 {offsets = [0, 0], sizes = [8, 384], strides = [1, 1]} : vector<8x512xf32> to vector<8x384xf32>
    %cst_115 = arith.constant 5.000000e-01 : f32
    %354 = vector.broadcast %cst_115 : f32 to vector<8x384xf32>
    %355 = arith.mulf %354, %353 : vector<8x384xf32>
    %356 = math.tanh %355 : vector<8x384xf32>
    %cst_116 = arith.constant 1.000000e+00 : f32
    %357 = vector.broadcast %cst_116 : f32 to vector<8x384xf32>
    %358 = arith.addf %356, %357 : vector<8x384xf32>
    %cst_117 = arith.constant 5.000000e-01 : f32
    %359 = vector.broadcast %cst_117 : f32 to vector<8x384xf32>
    %360 = arith.mulf %359, %358 : vector<8x384xf32>
    %361 = vector.extract_strided_slice %352 {offsets = [0, 384], sizes = [8, 128], strides = [1, 1]} : vector<8x512xf32> to vector<8x128xf32>
    %362 = math.tanh %361 : vector<8x128xf32>
    %363 = vector.extract_strided_slice %360 {offsets = [0, 0], sizes = [8, 128], strides = [1, 1]} : vector<8x384xf32> to vector<8x128xf32>
    %364 = vector.extract_strided_slice %360 {offsets = [0, 128], sizes = [8, 128], strides = [1, 1]} : vector<8x384xf32> to vector<8x128xf32>
    %365 = vector.extract_strided_slice %360 {offsets = [0, 256], sizes = [8, 128], strides = [1, 1]} : vector<8x384xf32> to vector<8x128xf32>
    %366 = arith.mulf %364, %284 : vector<8x128xf32>
    %367 = arith.mulf %363, %362 : vector<8x128xf32>
    %368 = arith.addf %366, %367 : vector<8x128xf32>
    %369 = math.tanh %368 : vector<8x128xf32>
    %370 = arith.mulf %365, %369 : vector<8x128xf32>
    %cst_118 = arith.constant 5.000000e-01 : f32
    %371 = vector.broadcast %cst_118 : f32 to vector<8x128xf32>
    %372 = arith.mulf %371, %370 : vector<8x128xf32>
    %373 = math.tanh %372 : vector<8x128xf32>
    %cst_119 = arith.constant 1.000000e+00 : f32
    %374 = vector.broadcast %cst_119 : f32 to vector<8x128xf32>
    %375 = arith.addf %373, %374 : vector<8x128xf32>
    %cst_120 = arith.constant 5.000000e-01 : f32
    %376 = vector.broadcast %cst_120 : f32 to vector<8x128xf32>
    %377 = arith.mulf %376, %375 : vector<8x128xf32>
    %cst_121 = arith.constant dense<0.000000e+00> : vector<8x512xf32>
    %378 = tpu.matmul %293, %1, %cst_121 {dimension_numbers = #tpu.dot_dimension_numbers<[1], [0], [0], [1], [0, 0, 1, 1], [], []>} : vector<8x128xf32>, vector<128x512xf32>, vector<8x512xf32> -> vector<8x512xf32>
    %cst_122 = arith.constant dense<0.000000e+00> : vector<8x512xf32>
    %379 = tpu.matmul %316, %4, %cst_122 {dimension_numbers = #tpu.dot_dimension_numbers<[1], [0], [0], [1], [0, 0, 1, 1], [], []>} : vector<8x128xf32>, vector<128x512xf32>, vector<8x512xf32> -> vector<8x512xf32>
    %380 = arith.addf %378, %379 : vector<8x512xf32>
    %381 = vector.broadcast %7 : vector<1x512xf32> to vector<8x512xf32>
    %382 = arith.addf %380, %381 : vector<8x512xf32>
    %383 = vector.extract_strided_slice %382 {offsets = [0, 0], sizes = [8, 384], strides = [1, 1]} : vector<8x512xf32> to vector<8x384xf32>
    %cst_123 = arith.constant 5.000000e-01 : f32
    %384 = vector.broadcast %cst_123 : f32 to vector<8x384xf32>
    %385 = arith.mulf %384, %383 : vector<8x384xf32>
    %386 = math.tanh %385 : vector<8x384xf32>
    %cst_124 = arith.constant 1.000000e+00 : f32
    %387 = vector.broadcast %cst_124 : f32 to vector<8x384xf32>
    %388 = arith.addf %386, %387 : vector<8x384xf32>
    %cst_125 = arith.constant 5.000000e-01 : f32
    %389 = vector.broadcast %cst_125 : f32 to vector<8x384xf32>
    %390 = arith.mulf %389, %388 : vector<8x384xf32>
    %391 = vector.extract_strided_slice %382 {offsets = [0, 384], sizes = [8, 128], strides = [1, 1]} : vector<8x512xf32> to vector<8x128xf32>
    %392 = math.tanh %391 : vector<8x128xf32>
    %393 = vector.extract_strided_slice %390 {offsets = [0, 0], sizes = [8, 128], strides = [1, 1]} : vector<8x384xf32> to vector<8x128xf32>
    %394 = vector.extract_strided_slice %390 {offsets = [0, 128], sizes = [8, 128], strides = [1, 1]} : vector<8x384xf32> to vector<8x128xf32>
    %395 = vector.extract_strided_slice %390 {offsets = [0, 256], sizes = [8, 128], strides = [1, 1]} : vector<8x384xf32> to vector<8x128xf32>
    %396 = arith.mulf %394, %314 : vector<8x128xf32>
    %397 = arith.mulf %393, %392 : vector<8x128xf32>
    %398 = arith.addf %396, %397 : vector<8x128xf32>
    %399 = math.tanh %398 : vector<8x128xf32>
    %400 = arith.mulf %395, %399 : vector<8x128xf32>
    %cst_126 = arith.constant 5.000000e-01 : f32
    %401 = vector.broadcast %cst_126 : f32 to vector<8x128xf32>
    %402 = arith.mulf %401, %400 : vector<8x128xf32>
    %403 = math.tanh %402 : vector<8x128xf32>
    %cst_127 = arith.constant 1.000000e+00 : f32
    %404 = vector.broadcast %cst_127 : f32 to vector<8x128xf32>
    %405 = arith.addf %403, %404 : vector<8x128xf32>
    %cst_128 = arith.constant 5.000000e-01 : f32
    %406 = vector.broadcast %cst_128 : f32 to vector<8x128xf32>
    %407 = arith.mulf %406, %405 : vector<8x128xf32>
    %cst_129 = arith.constant dense<0.000000e+00> : vector<8x512xf32>
    %408 = tpu.matmul %323, %2, %cst_129 {dimension_numbers = #tpu.dot_dimension_numbers<[1], [0], [0], [1], [0, 0, 1, 1], [], []>} : vector<8x128xf32>, vector<128x512xf32>, vector<8x512xf32> -> vector<8x512xf32>
    %cst_130 = arith.constant dense<0.000000e+00> : vector<8x512xf32>
    %409 = tpu.matmul %346, %5, %cst_130 {dimension_numbers = #tpu.dot_dimension_numbers<[1], [0], [0], [1], [0, 0, 1, 1], [], []>} : vector<8x128xf32>, vector<128x512xf32>, vector<8x512xf32> -> vector<8x512xf32>
    %410 = arith.addf %408, %409 : vector<8x512xf32>
    %411 = vector.broadcast %8 : vector<1x512xf32> to vector<8x512xf32>
    %412 = arith.addf %410, %411 : vector<8x512xf32>
    %413 = vector.extract_strided_slice %412 {offsets = [0, 0], sizes = [8, 384], strides = [1, 1]} : vector<8x512xf32> to vector<8x384xf32>
    %cst_131 = arith.constant 5.000000e-01 : f32
    %414 = vector.broadcast %cst_131 : f32 to vector<8x384xf32>
    %415 = arith.mulf %414, %413 : vector<8x384xf32>
    %416 = math.tanh %415 : vector<8x384xf32>
    %cst_132 = arith.constant 1.000000e+00 : f32
    %417 = vector.broadcast %cst_132 : f32 to vector<8x384xf32>
    %418 = arith.addf %416, %417 : vector<8x384xf32>
    %cst_133 = arith.constant 5.000000e-01 : f32
    %419 = vector.broadcast %cst_133 : f32 to vector<8x384xf32>
    %420 = arith.mulf %419, %418 : vector<8x384xf32>
    %421 = vector.extract_strided_slice %412 {offsets = [0, 384], sizes = [8, 128], strides = [1, 1]} : vector<8x512xf32> to vector<8x128xf32>
    %422 = math.tanh %421 : vector<8x128xf32>
    %423 = vector.extract_strided_slice %420 {offsets = [0, 0], sizes = [8, 128], strides = [1, 1]} : vector<8x384xf32> to vector<8x128xf32>
    %424 = vector.extract_strided_slice %420 {offsets = [0, 128], sizes = [8, 128], strides = [1, 1]} : vector<8x384xf32> to vector<8x128xf32>
    %425 = vector.extract_strided_slice %420 {offsets = [0, 256], sizes = [8, 128], strides = [1, 1]} : vector<8x384xf32> to vector<8x128xf32>
    %426 = arith.mulf %424, %344 : vector<8x128xf32>
    %427 = arith.mulf %423, %422 : vector<8x128xf32>
    %428 = arith.addf %426, %427 : vector<8x128xf32>
    %429 = math.tanh %428 : vector<8x128xf32>
    %430 = arith.mulf %425, %429 : vector<8x128xf32>
    %cst_134 = arith.constant dense<0.000000e+00> : vector<8x128xf32>
    %431 = tpu.matmul %430, %9, %cst_134 {dimension_numbers = #tpu.dot_dimension_numbers<[1], [0], [0], [1], [0, 0, 1, 1], [], []>} : vector<8x128xf32>, vector<128x128xf32>, vector<8x128xf32> -> vector<8x128xf32>
    %c3 = arith.constant 3 : index
    %c0_135 = arith.constant 0 : index
    %c0_136 = arith.constant 0 : index
    %432 = vector.load %arg12[%c3, %c0_135, %c0_136] : memref<8x8x128xf32, #tpu.memory_space<vmem>>, vector<1x8x128xf32>
    %433 = vector.shape_cast %432 : vector<1x8x128xf32> to vector<8x128xf32>
    %434 = vector.shape_cast %431 : vector<8x128xf32> to vector<1x8x128xf32>
    tpu.vector_store %arg12[%c3, %c0_135, %c0_136], %434 {strides = array<i32>} : memref<8x8x128xf32, #tpu.memory_space<vmem>>, vector<1x8x128xf32>,
    %cst_137 = arith.constant dense<0.000000e+00> : vector<8x512xf32>
    %435 = tpu.matmul %370, %3, %cst_137 {dimension_numbers = #tpu.dot_dimension_numbers<[1], [0], [0], [1], [0, 0, 1, 1], [], []>} : vector<8x128xf32>, vector<128x512xf32>, vector<8x512xf32> -> vector<8x512xf32>
    %436 = arith.addf %14, %435 : vector<8x512xf32>
    %437 = vector.extract_strided_slice %436 {offsets = [0, 0], sizes = [8, 384], strides = [1, 1]} : vector<8x512xf32> to vector<8x384xf32>
    %cst_138 = arith.constant 5.000000e-01 : f32
    %438 = vector.broadcast %cst_138 : f32 to vector<8x384xf32>
    %439 = arith.mulf %438, %437 : vector<8x384xf32>
    %440 = math.tanh %439 : vector<8x384xf32>
    %cst_139 = arith.constant 1.000000e+00 : f32
    %441 = vector.broadcast %cst_139 : f32 to vector<8x384xf32>
    %442 = arith.addf %440, %441 : vector<8x384xf32>
    %cst_140 = arith.constant 5.000000e-01 : f32
    %443 = vector.broadcast %cst_140 : f32 to vector<8x384xf32>
    %444 = arith.mulf %443, %442 : vector<8x384xf32>
    %445 = vector.extract_strided_slice %436 {offsets = [0, 384], sizes = [8, 128], strides = [1, 1]} : vector<8x512xf32> to vector<8x128xf32>
    %446 = math.tanh %445 : vector<8x128xf32>
    %447 = vector.extract_strided_slice %444 {offsets = [0, 0], sizes = [8, 128], strides = [1, 1]} : vector<8x384xf32> to vector<8x128xf32>
    %448 = vector.extract_strided_slice %444 {offsets = [0, 128], sizes = [8, 128], strides = [1, 1]} : vector<8x384xf32> to vector<8x128xf32>
    %449 = vector.extract_strided_slice %444 {offsets = [0, 256], sizes = [8, 128], strides = [1, 1]} : vector<8x384xf32> to vector<8x128xf32>
    %450 = arith.mulf %448, %368 : vector<8x128xf32>
    %451 = arith.mulf %447, %446 : vector<8x128xf32>
    %452 = arith.addf %450, %451 : vector<8x128xf32>
    %453 = math.tanh %452 : vector<8x128xf32>
    %454 = arith.mulf %449, %453 : vector<8x128xf32>
    %cst_141 = arith.constant 5.000000e-01 : f32
    %455 = vector.broadcast %cst_141 : f32 to vector<8x128xf32>
    %456 = arith.mulf %455, %454 : vector<8x128xf32>
    %457 = math.tanh %456 : vector<8x128xf32>
    %cst_142 = arith.constant 1.000000e+00 : f32
    %458 = vector.broadcast %cst_142 : f32 to vector<8x128xf32>
    %459 = arith.addf %457, %458 : vector<8x128xf32>
    %cst_143 = arith.constant 5.000000e-01 : f32
    %460 = vector.broadcast %cst_143 : f32 to vector<8x128xf32>
    %461 = arith.mulf %460, %459 : vector<8x128xf32>
    %cst_144 = arith.constant dense<0.000000e+00> : vector<8x512xf32>
    %462 = tpu.matmul %377, %1, %cst_144 {dimension_numbers = #tpu.dot_dimension_numbers<[1], [0], [0], [1], [0, 0, 1, 1], [], []>} : vector<8x128xf32>, vector<128x512xf32>, vector<8x512xf32> -> vector<8x512xf32>
    %cst_145 = arith.constant dense<0.000000e+00> : vector<8x512xf32>
    %463 = tpu.matmul %400, %4, %cst_145 {dimension_numbers = #tpu.dot_dimension_numbers<[1], [0], [0], [1], [0, 0, 1, 1], [], []>} : vector<8x128xf32>, vector<128x512xf32>, vector<8x512xf32> -> vector<8x512xf32>
    %464 = arith.addf %462, %463 : vector<8x512xf32>
    %465 = vector.broadcast %7 : vector<1x512xf32> to vector<8x512xf32>
    %466 = arith.addf %464, %465 : vector<8x512xf32>
    %467 = vector.extract_strided_slice %466 {offsets = [0, 0], sizes = [8, 384], strides = [1, 1]} : vector<8x512xf32> to vector<8x384xf32>
    %cst_146 = arith.constant 5.000000e-01 : f32
    %468 = vector.broadcast %cst_146 : f32 to vector<8x384xf32>
    %469 = arith.mulf %468, %467 : vector<8x384xf32>
    %470 = math.tanh %469 : vector<8x384xf32>
    %cst_147 = arith.constant 1.000000e+00 : f32
    %471 = vector.broadcast %cst_147 : f32 to vector<8x384xf32>
    %472 = arith.addf %470, %471 : vector<8x384xf32>
    %cst_148 = arith.constant 5.000000e-01 : f32
    %473 = vector.broadcast %cst_148 : f32 to vector<8x384xf32>
    %474 = arith.mulf %473, %472 : vector<8x384xf32>
    %475 = vector.extract_strided_slice %466 {offsets = [0, 384], sizes = [8, 128], strides = [1, 1]} : vector<8x512xf32> to vector<8x128xf32>
    %476 = math.tanh %475 : vector<8x128xf32>
    %477 = vector.extract_strided_slice %474 {offsets = [0, 0], sizes = [8, 128], strides = [1, 1]} : vector<8x384xf32> to vector<8x128xf32>
    %478 = vector.extract_strided_slice %474 {offsets = [0, 128], sizes = [8, 128], strides = [1, 1]} : vector<8x384xf32> to vector<8x128xf32>
    %479 = vector.extract_strided_slice %474 {offsets = [0, 256], sizes = [8, 128], strides = [1, 1]} : vector<8x384xf32> to vector<8x128xf32>
    %480 = arith.mulf %478, %398 : vector<8x128xf32>
    %481 = arith.mulf %477, %476 : vector<8x128xf32>
    %482 = arith.addf %480, %481 : vector<8x128xf32>
    %483 = math.tanh %482 : vector<8x128xf32>
    %484 = arith.mulf %479, %483 : vector<8x128xf32>
    %cst_149 = arith.constant 5.000000e-01 : f32
    %485 = vector.broadcast %cst_149 : f32 to vector<8x128xf32>
    %486 = arith.mulf %485, %484 : vector<8x128xf32>
    %487 = math.tanh %486 : vector<8x128xf32>
    %cst_150 = arith.constant 1.000000e+00 : f32
    %488 = vector.broadcast %cst_150 : f32 to vector<8x128xf32>
    %489 = arith.addf %487, %488 : vector<8x128xf32>
    %cst_151 = arith.constant 5.000000e-01 : f32
    %490 = vector.broadcast %cst_151 : f32 to vector<8x128xf32>
    %491 = arith.mulf %490, %489 : vector<8x128xf32>
    %cst_152 = arith.constant dense<0.000000e+00> : vector<8x512xf32>
    %492 = tpu.matmul %407, %2, %cst_152 {dimension_numbers = #tpu.dot_dimension_numbers<[1], [0], [0], [1], [0, 0, 1, 1], [], []>} : vector<8x128xf32>, vector<128x512xf32>, vector<8x512xf32> -> vector<8x512xf32>
    %cst_153 = arith.constant dense<0.000000e+00> : vector<8x512xf32>
    %493 = tpu.matmul %430, %5, %cst_153 {dimension_numbers = #tpu.dot_dimension_numbers<[1], [0], [0], [1], [0, 0, 1, 1], [], []>} : vector<8x128xf32>, vector<128x512xf32>, vector<8x512xf32> -> vector<8x512xf32>
    %494 = arith.addf %492, %493 : vector<8x512xf32>
    %495 = vector.broadcast %8 : vector<1x512xf32> to vector<8x512xf32>
    %496 = arith.addf %494, %495 : vector<8x512xf32>
    %497 = vector.extract_strided_slice %496 {offsets = [0, 0], sizes = [8, 384], strides = [1, 1]} : vector<8x512xf32> to vector<8x384xf32>
    %cst_154 = arith.constant 5.000000e-01 : f32
    %498 = vector.broadcast %cst_154 : f32 to vector<8x384xf32>
    %499 = arith.mulf %498, %497 : vector<8x384xf32>
    %500 = math.tanh %499 : vector<8x384xf32>
    %cst_155 = arith.constant 1.000000e+00 : f32
    %501 = vector.broadcast %cst_155 : f32 to vector<8x384xf32>
    %502 = arith.addf %500, %501 : vector<8x384xf32>
    %cst_156 = arith.constant 5.000000e-01 : f32
    %503 = vector.broadcast %cst_156 : f32 to vector<8x384xf32>
    %504 = arith.mulf %503, %502 : vector<8x384xf32>
    %505 = vector.extract_strided_slice %496 {offsets = [0, 384], sizes = [8, 128], strides = [1, 1]} : vector<8x512xf32> to vector<8x128xf32>
    %506 = math.tanh %505 : vector<8x128xf32>
    %507 = vector.extract_strided_slice %504 {offsets = [0, 0], sizes = [8, 128], strides = [1, 1]} : vector<8x384xf32> to vector<8x128xf32>
    %508 = vector.extract_strided_slice %504 {offsets = [0, 128], sizes = [8, 128], strides = [1, 1]} : vector<8x384xf32> to vector<8x128xf32>
    %509 = vector.extract_strided_slice %504 {offsets = [0, 256], sizes = [8, 128], strides = [1, 1]} : vector<8x384xf32> to vector<8x128xf32>
    %510 = arith.mulf %508, %428 : vector<8x128xf32>
    %511 = arith.mulf %507, %506 : vector<8x128xf32>
    %512 = arith.addf %510, %511 : vector<8x128xf32>
    %513 = math.tanh %512 : vector<8x128xf32>
    %514 = arith.mulf %509, %513 : vector<8x128xf32>
    %cst_157 = arith.constant dense<0.000000e+00> : vector<8x128xf32>
    %515 = tpu.matmul %514, %9, %cst_157 {dimension_numbers = #tpu.dot_dimension_numbers<[1], [0], [0], [1], [0, 0, 1, 1], [], []>} : vector<8x128xf32>, vector<128x128xf32>, vector<8x128xf32> -> vector<8x128xf32>
    %c4 = arith.constant 4 : index
    %c0_158 = arith.constant 0 : index
    %c0_159 = arith.constant 0 : index
    %516 = vector.load %arg12[%c4, %c0_158, %c0_159] : memref<8x8x128xf32, #tpu.memory_space<vmem>>, vector<1x8x128xf32>
    %517 = vector.shape_cast %516 : vector<1x8x128xf32> to vector<8x128xf32>
    %518 = vector.shape_cast %515 : vector<8x128xf32> to vector<1x8x128xf32>
    tpu.vector_store %arg12[%c4, %c0_158, %c0_159], %518 {strides = array<i32>} : memref<8x8x128xf32, #tpu.memory_space<vmem>>, vector<1x8x128xf32>,
    %cst_160 = arith.constant dense<0.000000e+00> : vector<8x512xf32>
    %519 = tpu.matmul %454, %3, %cst_160 {dimension_numbers = #tpu.dot_dimension_numbers<[1], [0], [0], [1], [0, 0, 1, 1], [], []>} : vector<8x128xf32>, vector<128x512xf32>, vector<8x512xf32> -> vector<8x512xf32>
    %520 = arith.addf %14, %519 : vector<8x512xf32>
    %521 = vector.extract_strided_slice %520 {offsets = [0, 0], sizes = [8, 384], strides = [1, 1]} : vector<8x512xf32> to vector<8x384xf32>
    %cst_161 = arith.constant 5.000000e-01 : f32
    %522 = vector.broadcast %cst_161 : f32 to vector<8x384xf32>
    %523 = arith.mulf %522, %521 : vector<8x384xf32>
    %524 = math.tanh %523 : vector<8x384xf32>
    %cst_162 = arith.constant 1.000000e+00 : f32
    %525 = vector.broadcast %cst_162 : f32 to vector<8x384xf32>
    %526 = arith.addf %524, %525 : vector<8x384xf32>
    %cst_163 = arith.constant 5.000000e-01 : f32
    %527 = vector.broadcast %cst_163 : f32 to vector<8x384xf32>
    %528 = arith.mulf %527, %526 : vector<8x384xf32>
    %529 = vector.extract_strided_slice %520 {offsets = [0, 384], sizes = [8, 128], strides = [1, 1]} : vector<8x512xf32> to vector<8x128xf32>
    %530 = math.tanh %529 : vector<8x128xf32>
    %531 = vector.extract_strided_slice %528 {offsets = [0, 0], sizes = [8, 128], strides = [1, 1]} : vector<8x384xf32> to vector<8x128xf32>
    %532 = vector.extract_strided_slice %528 {offsets = [0, 128], sizes = [8, 128], strides = [1, 1]} : vector<8x384xf32> to vector<8x128xf32>
    %533 = vector.extract_strided_slice %528 {offsets = [0, 256], sizes = [8, 128], strides = [1, 1]} : vector<8x384xf32> to vector<8x128xf32>
    %534 = arith.mulf %532, %452 : vector<8x128xf32>
    %535 = arith.mulf %531, %530 : vector<8x128xf32>
    %536 = arith.addf %534, %535 : vector<8x128xf32>
    %537 = math.tanh %536 : vector<8x128xf32>
    %538 = arith.mulf %533, %537 : vector<8x128xf32>
    %cst_164 = arith.constant 5.000000e-01 : f32
    %539 = vector.broadcast %cst_164 : f32 to vector<8x128xf32>
    %540 = arith.mulf %539, %538 : vector<8x128xf32>
    %541 = math.tanh %540 : vector<8x128xf32>
    %cst_165 = arith.constant 1.000000e+00 : f32
    %542 = vector.broadcast %cst_165 : f32 to vector<8x128xf32>
    %543 = arith.addf %541, %542 : vector<8x128xf32>
    %cst_166 = arith.constant 5.000000e-01 : f32
    %544 = vector.broadcast %cst_166 : f32 to vector<8x128xf32>
    %545 = arith.mulf %544, %543 : vector<8x128xf32>
    %cst_167 = arith.constant dense<0.000000e+00> : vector<8x512xf32>
    %546 = tpu.matmul %461, %1, %cst_167 {dimension_numbers = #tpu.dot_dimension_numbers<[1], [0], [0], [1], [0, 0, 1, 1], [], []>} : vector<8x128xf32>, vector<128x512xf32>, vector<8x512xf32> -> vector<8x512xf32>
    %cst_168 = arith.constant dense<0.000000e+00> : vector<8x512xf32>
    %547 = tpu.matmul %484, %4, %cst_168 {dimension_numbers = #tpu.dot_dimension_numbers<[1], [0], [0], [1], [0, 0, 1, 1], [], []>} : vector<8x128xf32>, vector<128x512xf32>, vector<8x512xf32> -> vector<8x512xf32>
    %548 = arith.addf %546, %547 : vector<8x512xf32>
    %549 = vector.broadcast %7 : vector<1x512xf32> to vector<8x512xf32>
    %550 = arith.addf %548, %549 : vector<8x512xf32>
    %551 = vector.extract_strided_slice %550 {offsets = [0, 0], sizes = [8, 384], strides = [1, 1]} : vector<8x512xf32> to vector<8x384xf32>
    %cst_169 = arith.constant 5.000000e-01 : f32
    %552 = vector.broadcast %cst_169 : f32 to vector<8x384xf32>
    %553 = arith.mulf %552, %551 : vector<8x384xf32>
    %554 = math.tanh %553 : vector<8x384xf32>
    %cst_170 = arith.constant 1.000000e+00 : f32
    %555 = vector.broadcast %cst_170 : f32 to vector<8x384xf32>
    %556 = arith.addf %554, %555 : vector<8x384xf32>
    %cst_171 = arith.constant 5.000000e-01 : f32
    %557 = vector.broadcast %cst_171 : f32 to vector<8x384xf32>
    %558 = arith.mulf %557, %556 : vector<8x384xf32>
    %559 = vector.extract_strided_slice %550 {offsets = [0, 384], sizes = [8, 128], strides = [1, 1]} : vector<8x512xf32> to vector<8x128xf32>
    %560 = math.tanh %559 : vector<8x128xf32>
    %561 = vector.extract_strided_slice %558 {offsets = [0, 0], sizes = [8, 128], strides = [1, 1]} : vector<8x384xf32> to vector<8x128xf32>
    %562 = vector.extract_strided_slice %558 {offsets = [0, 128], sizes = [8, 128], strides = [1, 1]} : vector<8x384xf32> to vector<8x128xf32>
    %563 = vector.extract_strided_slice %558 {offsets = [0, 256], sizes = [8, 128], strides = [1, 1]} : vector<8x384xf32> to vector<8x128xf32>
    %564 = arith.mulf %562, %482 : vector<8x128xf32>
    %565 = arith.mulf %561, %560 : vector<8x128xf32>
    %566 = arith.addf %564, %565 : vector<8x128xf32>
    %567 = math.tanh %566 : vector<8x128xf32>
    %568 = arith.mulf %563, %567 : vector<8x128xf32>
    %cst_172 = arith.constant 5.000000e-01 : f32
    %569 = vector.broadcast %cst_172 : f32 to vector<8x128xf32>
    %570 = arith.mulf %569, %568 : vector<8x128xf32>
    %571 = math.tanh %570 : vector<8x128xf32>
    %cst_173 = arith.constant 1.000000e+00 : f32
    %572 = vector.broadcast %cst_173 : f32 to vector<8x128xf32>
    %573 = arith.addf %571, %572 : vector<8x128xf32>
    %cst_174 = arith.constant 5.000000e-01 : f32
    %574 = vector.broadcast %cst_174 : f32 to vector<8x128xf32>
    %575 = arith.mulf %574, %573 : vector<8x128xf32>
    %cst_175 = arith.constant dense<0.000000e+00> : vector<8x512xf32>
    %576 = tpu.matmul %491, %2, %cst_175 {dimension_numbers = #tpu.dot_dimension_numbers<[1], [0], [0], [1], [0, 0, 1, 1], [], []>} : vector<8x128xf32>, vector<128x512xf32>, vector<8x512xf32> -> vector<8x512xf32>
    %cst_176 = arith.constant dense<0.000000e+00> : vector<8x512xf32>
    %577 = tpu.matmul %514, %5, %cst_176 {dimension_numbers = #tpu.dot_dimension_numbers<[1], [0], [0], [1], [0, 0, 1, 1], [], []>} : vector<8x128xf32>, vector<128x512xf32>, vector<8x512xf32> -> vector<8x512xf32>
    %578 = arith.addf %576, %577 : vector<8x512xf32>
    %579 = vector.broadcast %8 : vector<1x512xf32> to vector<8x512xf32>
    %580 = arith.addf %578, %579 : vector<8x512xf32>
    %581 = vector.extract_strided_slice %580 {offsets = [0, 0], sizes = [8, 384], strides = [1, 1]} : vector<8x512xf32> to vector<8x384xf32>
    %cst_177 = arith.constant 5.000000e-01 : f32
    %582 = vector.broadcast %cst_177 : f32 to vector<8x384xf32>
    %583 = arith.mulf %582, %581 : vector<8x384xf32>
    %584 = math.tanh %583 : vector<8x384xf32>
    %cst_178 = arith.constant 1.000000e+00 : f32
    %585 = vector.broadcast %cst_178 : f32 to vector<8x384xf32>
    %586 = arith.addf %584, %585 : vector<8x384xf32>
    %cst_179 = arith.constant 5.000000e-01 : f32
    %587 = vector.broadcast %cst_179 : f32 to vector<8x384xf32>
    %588 = arith.mulf %587, %586 : vector<8x384xf32>
    %589 = vector.extract_strided_slice %580 {offsets = [0, 384], sizes = [8, 128], strides = [1, 1]} : vector<8x512xf32> to vector<8x128xf32>
    %590 = math.tanh %589 : vector<8x128xf32>
    %591 = vector.extract_strided_slice %588 {offsets = [0, 0], sizes = [8, 128], strides = [1, 1]} : vector<8x384xf32> to vector<8x128xf32>
    %592 = vector.extract_strided_slice %588 {offsets = [0, 128], sizes = [8, 128], strides = [1, 1]} : vector<8x384xf32> to vector<8x128xf32>
    %593 = vector.extract_strided_slice %588 {offsets = [0, 256], sizes = [8, 128], strides = [1, 1]} : vector<8x384xf32> to vector<8x128xf32>
    %594 = arith.mulf %592, %512 : vector<8x128xf32>
    %595 = arith.mulf %591, %590 : vector<8x128xf32>
    %596 = arith.addf %594, %595 : vector<8x128xf32>
    %597 = math.tanh %596 : vector<8x128xf32>
    %598 = arith.mulf %593, %597 : vector<8x128xf32>
    %cst_180 = arith.constant dense<0.000000e+00> : vector<8x128xf32>
    %599 = tpu.matmul %598, %9, %cst_180 {dimension_numbers = #tpu.dot_dimension_numbers<[1], [0], [0], [1], [0, 0, 1, 1], [], []>} : vector<8x128xf32>, vector<128x128xf32>, vector<8x128xf32> -> vector<8x128xf32>
    %c5 = arith.constant 5 : index
    %c0_181 = arith.constant 0 : index
    %c0_182 = arith.constant 0 : index
    %600 = vector.load %arg12[%c5, %c0_181, %c0_182] : memref<8x8x128xf32, #tpu.memory_space<vmem>>, vector<1x8x128xf32>
    %601 = vector.shape_cast %600 : vector<1x8x128xf32> to vector<8x128xf32>
    %602 = vector.shape_cast %599 : vector<8x128xf32> to vector<1x8x128xf32>
    tpu.vector_store %arg12[%c5, %c0_181, %c0_182], %602 {strides = array<i32>} : memref<8x8x128xf32, #tpu.memory_space<vmem>>, vector<1x8x128xf32>,
    %cst_183 = arith.constant dense<0.000000e+00> : vector<8x512xf32>
    %603 = tpu.matmul %545, %1, %cst_183 {dimension_numbers = #tpu.dot_dimension_numbers<[1], [0], [0], [1], [0, 0, 1, 1], [], []>} : vector<8x128xf32>, vector<128x512xf32>, vector<8x512xf32> -> vector<8x512xf32>
    %cst_184 = arith.constant dense<0.000000e+00> : vector<8x512xf32>
    %604 = tpu.matmul %568, %4, %cst_184 {dimension_numbers = #tpu.dot_dimension_numbers<[1], [0], [0], [1], [0, 0, 1, 1], [], []>} : vector<8x128xf32>, vector<128x512xf32>, vector<8x512xf32> -> vector<8x512xf32>
    %605 = arith.addf %603, %604 : vector<8x512xf32>
    %606 = vector.broadcast %7 : vector<1x512xf32> to vector<8x512xf32>
    %607 = arith.addf %605, %606 : vector<8x512xf32>
    %608 = vector.extract_strided_slice %607 {offsets = [0, 0], sizes = [8, 384], strides = [1, 1]} : vector<8x512xf32> to vector<8x384xf32>
    %cst_185 = arith.constant 5.000000e-01 : f32
    %609 = vector.broadcast %cst_185 : f32 to vector<8x384xf32>
    %610 = arith.mulf %609, %608 : vector<8x384xf32>
    %611 = math.tanh %610 : vector<8x384xf32>
    %cst_186 = arith.constant 1.000000e+00 : f32
    %612 = vector.broadcast %cst_186 : f32 to vector<8x384xf32>
    %613 = arith.addf %611, %612 : vector<8x384xf32>
    %cst_187 = arith.constant 5.000000e-01 : f32
    %614 = vector.broadcast %cst_187 : f32 to vector<8x384xf32>
    %615 = arith.mulf %614, %613 : vector<8x384xf32>
    %616 = vector.extract_strided_slice %607 {offsets = [0, 384], sizes = [8, 128], strides = [1, 1]} : vector<8x512xf32> to vector<8x128xf32>
    %617 = math.tanh %616 : vector<8x128xf32>
    %618 = vector.extract_strided_slice %615 {offsets = [0, 0], sizes = [8, 128], strides = [1, 1]} : vector<8x384xf32> to vector<8x128xf32>
    %619 = vector.extract_strided_slice %615 {offsets = [0, 128], sizes = [8, 128], strides = [1, 1]} : vector<8x384xf32> to vector<8x128xf32>
    %620 = vector.extract_strided_slice %615 {offsets = [0, 256], sizes = [8, 128], strides = [1, 1]} : vector<8x384xf32> to vector<8x128xf32>
    %621 = arith.mulf %619, %566 : vector<8x128xf32>
    %622 = arith.mulf %618, %617 : vector<8x128xf32>
    %623 = arith.addf %621, %622 : vector<8x128xf32>
    %624 = math.tanh %623 : vector<8x128xf32>
    %625 = arith.mulf %620, %624 : vector<8x128xf32>
    %cst_188 = arith.constant 5.000000e-01 : f32
    %626 = vector.broadcast %cst_188 : f32 to vector<8x128xf32>
    %627 = arith.mulf %626, %625 : vector<8x128xf32>
    %628 = math.tanh %627 : vector<8x128xf32>
    %cst_189 = arith.constant 1.000000e+00 : f32
    %629 = vector.broadcast %cst_189 : f32 to vector<8x128xf32>
    %630 = arith.addf %628, %629 : vector<8x128xf32>
    %cst_190 = arith.constant 5.000000e-01 : f32
    %631 = vector.broadcast %cst_190 : f32 to vector<8x128xf32>
    %632 = arith.mulf %631, %630 : vector<8x128xf32>
    %cst_191 = arith.constant dense<0.000000e+00> : vector<8x512xf32>
    %633 = tpu.matmul %575, %2, %cst_191 {dimension_numbers = #tpu.dot_dimension_numbers<[1], [0], [0], [1], [0, 0, 1, 1], [], []>} : vector<8x128xf32>, vector<128x512xf32>, vector<8x512xf32> -> vector<8x512xf32>
    %cst_192 = arith.constant dense<0.000000e+00> : vector<8x512xf32>
    %634 = tpu.matmul %598, %5, %cst_192 {dimension_numbers = #tpu.dot_dimension_numbers<[1], [0], [0], [1], [0, 0, 1, 1], [], []>} : vector<8x128xf32>, vector<128x512xf32>, vector<8x512xf32> -> vector<8x512xf32>
    %635 = arith.addf %633, %634 : vector<8x512xf32>
    %636 = vector.broadcast %8 : vector<1x512xf32> to vector<8x512xf32>
    %637 = arith.addf %635, %636 : vector<8x512xf32>
    %638 = vector.extract_strided_slice %637 {offsets = [0, 0], sizes = [8, 384], strides = [1, 1]} : vector<8x512xf32> to vector<8x384xf32>
    %cst_193 = arith.constant 5.000000e-01 : f32
    %639 = vector.broadcast %cst_193 : f32 to vector<8x384xf32>
    %640 = arith.mulf %639, %638 : vector<8x384xf32>
    %641 = math.tanh %640 : vector<8x384xf32>
    %cst_194 = arith.constant 1.000000e+00 : f32
    %642 = vector.broadcast %cst_194 : f32 to vector<8x384xf32>
    %643 = arith.addf %641, %642 : vector<8x384xf32>
    %cst_195 = arith.constant 5.000000e-01 : f32
    %644 = vector.broadcast %cst_195 : f32 to vector<8x384xf32>
    %645 = arith.mulf %644, %643 : vector<8x384xf32>
    %646 = vector.extract_strided_slice %637 {offsets = [0, 384], sizes = [8, 128], strides = [1, 1]} : vector<8x512xf32> to vector<8x128xf32>
    %647 = math.tanh %646 : vector<8x128xf32>
    %648 = vector.extract_strided_slice %645 {offsets = [0, 0], sizes = [8, 128], strides = [1, 1]} : vector<8x384xf32> to vector<8x128xf32>
    %649 = vector.extract_strided_slice %645 {offsets = [0, 128], sizes = [8, 128], strides = [1, 1]} : vector<8x384xf32> to vector<8x128xf32>
    %650 = vector.extract_strided_slice %645 {offsets = [0, 256], sizes = [8, 128], strides = [1, 1]} : vector<8x384xf32> to vector<8x128xf32>
    %651 = arith.mulf %649, %596 : vector<8x128xf32>
    %652 = arith.mulf %648, %647 : vector<8x128xf32>
    %653 = arith.addf %651, %652 : vector<8x128xf32>
    %654 = math.tanh %653 : vector<8x128xf32>
    %655 = arith.mulf %650, %654 : vector<8x128xf32>
    %cst_196 = arith.constant dense<0.000000e+00> : vector<8x128xf32>
    %656 = tpu.matmul %655, %9, %cst_196 {dimension_numbers = #tpu.dot_dimension_numbers<[1], [0], [0], [1], [0, 0, 1, 1], [], []>} : vector<8x128xf32>, vector<128x128xf32>, vector<8x128xf32> -> vector<8x128xf32>
    %c6 = arith.constant 6 : index
    %c0_197 = arith.constant 0 : index
    %c0_198 = arith.constant 0 : index
    %657 = vector.load %arg12[%c6, %c0_197, %c0_198] : memref<8x8x128xf32, #tpu.memory_space<vmem>>, vector<1x8x128xf32>
    %658 = vector.shape_cast %657 : vector<1x8x128xf32> to vector<8x128xf32>
    %659 = vector.shape_cast %656 : vector<8x128xf32> to vector<1x8x128xf32>
    tpu.vector_store %arg12[%c6, %c0_197, %c0_198], %659 {strides = array<i32>} : memref<8x8x128xf32, #tpu.memory_space<vmem>>, vector<1x8x128xf32>,
    %cst_199 = arith.constant dense<0.000000e+00> : vector<8x512xf32>
    %660 = tpu.matmul %632, %2, %cst_199 {dimension_numbers = #tpu.dot_dimension_numbers<[1], [0], [0], [1], [0, 0, 1, 1], [], []>} : vector<8x128xf32>, vector<128x512xf32>, vector<8x512xf32> -> vector<8x512xf32>
    %cst_200 = arith.constant dense<0.000000e+00> : vector<8x512xf32>
    %661 = tpu.matmul %655, %5, %cst_200 {dimension_numbers = #tpu.dot_dimension_numbers<[1], [0], [0], [1], [0, 0, 1, 1], [], []>} : vector<8x128xf32>, vector<128x512xf32>, vector<8x512xf32> -> vector<8x512xf32>
    %662 = arith.addf %660, %661 : vector<8x512xf32>
    %663 = vector.broadcast %8 : vector<1x512xf32> to vector<8x512xf32>
    %664 = arith.addf %662, %663 : vector<8x512xf32>
    %665 = vector.extract_strided_slice %664 {offsets = [0, 0], sizes = [8, 384], strides = [1, 1]} : vector<8x512xf32> to vector<8x384xf32>
    %cst_201 = arith.constant 5.000000e-01 : f32
    %666 = vector.broadcast %cst_201 : f32 to vector<8x384xf32>
    %667 = arith.mulf %666, %665 : vector<8x384xf32>
    %668 = math.tanh %667 : vector<8x384xf32>
    %cst_202 = arith.constant 1.000000e+00 : f32
    %669 = vector.broadcast %cst_202 : f32 to vector<8x384xf32>
    %670 = arith.addf %668, %669 : vector<8x384xf32>
    %cst_203 = arith.constant 5.000000e-01 : f32
    %671 = vector.broadcast %cst_203 : f32 to vector<8x384xf32>
    %672 = arith.mulf %671, %670 : vector<8x384xf32>
    %673 = vector.extract_strided_slice %664 {offsets = [0, 384], sizes = [8, 128], strides = [1, 1]} : vector<8x512xf32> to vector<8x128xf32>
    %674 = math.tanh %673 : vector<8x128xf32>
    %675 = vector.extract_strided_slice %672 {offsets = [0, 0], sizes = [8, 128], strides = [1, 1]} : vector<8x384xf32> to vector<8x128xf32>
    %676 = vector.extract_strided_slice %672 {offsets = [0, 128], sizes = [8, 128], strides = [1, 1]} : vector<8x384xf32> to vector<8x128xf32>
    %677 = vector.extract_strided_slice %672 {offsets = [0, 256], sizes = [8, 128], strides = [1, 1]} : vector<8x384xf32> to vector<8x128xf32>
    %678 = arith.mulf %676, %653 : vector<8x128xf32>
    %679 = arith.mulf %675, %674 : vector<8x128xf32>
    %680 = arith.addf %678, %679 : vector<8x128xf32>
    %681 = math.tanh %680 : vector<8x128xf32>
    %682 = arith.mulf %677, %681 : vector<8x128xf32>
    %cst_204 = arith.constant dense<0.000000e+00> : vector<8x128xf32>
    %683 = tpu.matmul %682, %9, %cst_204 {dimension_numbers = #tpu.dot_dimension_numbers<[1], [0], [0], [1], [0, 0, 1, 1], [], []>} : vector<8x128xf32>, vector<128x128xf32>, vector<8x128xf32> -> vector<8x128xf32>
    %c7 = arith.constant 7 : index
    %c0_205 = arith.constant 0 : index
    %c0_206 = arith.constant 0 : index
    %684 = vector.load %arg12[%c7, %c0_205, %c0_206] : memref<8x8x128xf32, #tpu.memory_space<vmem>>, vector<1x8x128xf32>
    %685 = vector.shape_cast %684 : vector<1x8x128xf32> to vector<8x128xf32>
    %686 = vector.shape_cast %683 : vector<8x128xf32> to vector<1x8x128xf32>
    tpu.vector_store %arg12[%c7, %c0_205, %c0_206], %686 {strides = array<i32>} : memref<8x8x128xf32, #tpu.memory_space<vmem>>, vector<1x8x128xf32>,
    return
  }
  func.func @transform_0(%arg0: i32) -> (i32, i32) {
    %c0_i32 = arith.constant 0 : i32
    %c0_i32_0 = arith.constant 0 : i32
    return %arg0, %c0_i32 : i32, i32
  }
  func.func @transform_1(%arg0: i32) -> (i32, i32) {
    %c0_i32 = arith.constant 0 : i32
    %c0_i32_0 = arith.constant 0 : i32
    %c0_i32_1 = arith.constant 0 : i32
    return %c0_i32, %c0_i32_0 : i32, i32
  }
  func.func @transform_2(%arg0: i32) -> (i32, i32) {
    %c0_i32 = arith.constant 0 : i32
    %c0_i32_0 = arith.constant 0 : i32
    %c0_i32_1 = arith.constant 0 : i32
    return %c0_i32, %c0_i32_0 : i32, i32
  }
  func.func @transform_3(%arg0: i32) -> (i32, i32) {
    %c0_i32 = arith.constant 0 : i32
    %c0_i32_0 = arith.constant 0 : i32
    %c0_i32_1 = arith.constant 0 : i32
    return %c0_i32, %c0_i32_0 : i32, i32
  }
  func.func @transform_4(%arg0: i32) -> (i32, i32) {
    %c0_i32 = arith.constant 0 : i32
    %c0_i32_0 = arith.constant 0 : i32
    %c0_i32_1 = arith.constant 0 : i32
    return %c0_i32, %c0_i32_0 : i32, i32
  }
  func.func @transform_5(%arg0: i32) -> (i32, i32) {
    %c0_i32 = arith.constant 0 : i32
    %c0_i32_0 = arith.constant 0 : i32
    %c0_i32_1 = arith.constant 0 : i32
    return %c0_i32, %c0_i32_0 : i32, i32
  }
  func.func @transform_6(%arg0: i32) -> (i32, i32) {
    %c0_i32 = arith.constant 0 : i32
    %c0_i32_0 = arith.constant 0 : i32
    %c0_i32_1 = arith.constant 0 : i32
    return %c0_i32, %c0_i32_0 : i32, i32
  }
  func.func @transform_7(%arg0: i32) -> (i32, i32) {
    %c0_i32 = arith.constant 0 : i32
    %c0_i32_0 = arith.constant 0 : i32
    %c0_i32_1 = arith.constant 0 : i32
    return %c0_i32, %c0_i32_0 : i32, i32
  }
  func.func @transform_8(%arg0: i32) -> (i32, i32) {
    %c0_i32 = arith.constant 0 : i32
    %c0_i32_0 = arith.constant 0 : i32
    %c0_i32_1 = arith.constant 0 : i32
    return %c0_i32, %c0_i32_0 : i32, i32
  }
  func.func @transform_9(%arg0: i32) -> (i32, i32) {
    %c0_i32 = arith.constant 0 : i32
    %c0_i32_0 = arith.constant 0 : i32
    %c0_i32_1 = arith.constant 0 : i32
    return %c0_i32, %c0_i32_0 : i32, i32
  }
  func.func @transform_10(%arg0: i32) -> (i32, i32) {
    %c0_i32 = arith.constant 0 : i32
    %c0_i32_0 = arith.constant 0 : i32
    %c0_i32_1 = arith.constant 0 : i32
    return %c0_i32, %c0_i32_0 : i32, i32
  }
  func.func @transform_11(%arg0: i32) -> (i32, i32, i32) {
    %c0_i32 = arith.constant 0 : i32
    %c0_i32_0 = arith.constant 0 : i32
    %c0_i32_1 = arith.constant 0 : i32
    return %c0_i32, %arg0, %c0_i32_0 : i32, i32, i32
  }
}

</mosaic_0001>

<llo_original>
// kernel: decoder_forward.1
$region0: #{decoder_forward.1}
  #allocation0 [shape = 'u32[]', space=smem, size = 0x4, offset = 0x4, fixed_abs, tag = 'smem constant byte address 0x4 - core index']
  #allocation1 [shape = 'u32[144,128]{1,0:T(1,128)}', space=vmem, size = 0x12000, scoped, tag = 'internal scratch']
  %s0 = inlined_call_operand.vmem [shape: f32[16,128], index: 0, kind: input, shape index: {}]
  %s1 = inlined_call_operand.hbm [shape: f32[128,512], index: 1, kind: input, shape index: {}]
  %s2 = inlined_call_operand.hbm [shape: f32[128,512], index: 2, kind: input, shape index: {}]
  %s3 = inlined_call_operand.vmem [shape: f32[1,512], index: 3, kind: input, shape index: {}]
  %s4 = inlined_call_operand.hbm [shape: f32[128,512], index: 4, kind: input, shape index: {}]
  %s5 = inlined_call_operand.hbm [shape: f32[128,512], index: 5, kind: input, shape index: {}]
  %s6 = inlined_call_operand.vmem [shape: f32[1,512], index: 6, kind: input, shape index: {}]
  %s7 = inlined_call_operand.hbm [shape: f32[128,512], index: 7, kind: input, shape index: {}]
  %s8 = inlined_call_operand.hbm [shape: f32[128,512], index: 8, kind: input, shape index: {}]
  %s9 = inlined_call_operand.vmem [shape: f32[1,512], index: 9, kind: input, shape index: {}]
  %s10 = inlined_call_operand.hbm [shape: f32[128,128], index: 10, kind: input, shape index: {}]
  %s11 = inlined_call_operand.vmem [shape: f32[8,16,128], index: 11, kind: output, shape index: {}]
  %s12 = sld [smem:[#allocation0]]
  $region139: #{decoder_forward.1} parent=0
    _
  %s14 = ssub.s32 1, %s12
  %s15 = scalar_select 0, %s14, %s12
  $region1: #{decoder_forward.1} parent=0
    #allocation2 [shape = 'u8[262144]{0}', space=vmem, size = 0x40000, scoped, tag = 'input window, operand 1, single buffered']
    #allocation3 [shape = 's32[2]{0}', space=sflag, size = 0x8, scoped, tag = 'scoped memory for decoder_forward.1']
    #allocation4 [shape = 'u8[262144]{0}', space=vmem, size = 0x40000, scoped, tag = 'input window, operand 2, single buffered']
    #allocation5 [shape = 's32[1]{0}', space=sflag, size = 0x4, scoped, tag = 'scoped memory for decoder_forward.1']
    #allocation6 [shape = 'u8[262144]{0}', space=vmem, size = 0x40000, scoped, tag = 'input window, operand 4, single buffered']
    #allocation7 [shape = 'u8[262144]{0}', space=vmem, size = 0x40000, scoped, tag = 'input window, operand 5, single buffered']
    #allocation8 [shape = 's32[1]{0}', space=sflag, size = 0x4, scoped, tag = 'scoped memory for decoder_forward.1']
    #allocation9 [shape = 'u8[262144]{0}', space=vmem, size = 0x40000, scoped, tag = 'input window, operand 7, single buffered']
    #allocation10 [shape = 'u8[262144]{0}', space=vmem, size = 0x40000, scoped, tag = 'input window, operand 8, single buffered']
    #allocation11 [shape = 's32[1]{0}', space=sflag, size = 0x4, scoped, tag = 'scoped memory for decoder_forward.1']
    #allocation12 [shape = 'u8[65536]{0}', space=vmem, size = 0x10000, scoped, tag = 'input window, operand 10, single buffered']
    #allocation13 [shape = 'u8[65536]{0}', space=vmem, size = 0x10000, scoped, tag = 'output window, operand 0']
    %16 = vsyncpa [#allocation3], 0
    %17 = vsyncpa [#allocation5], 0
    %18 = vsyncpa [#allocation8], 0
    %19 = vsyncpa [#allocation11], 0
    loop: start=0, step=1, limit=4
    $region2: #{decoder_forward.1} parent=1 // loop_pre_header
      _
    $region3: #{decoder_forward.1} parent=1 // loop_header
      %s21 = sphi 0, %s25
      %p22 = scmp.ge.s32.totalorder %s21, 4
      %s31 = sphi 0, %s33
      %s34 = sphi 0, %s31
      %s35 = sphi 0, %s34
      %s51 = sphi 0, %s35
      %s55 = sphi 0, %s55
      %s57 = sphi 0, %s55
      %s58 = sphi 0, %s57
      %s72 = sphi 0, %s58
      %s76 = sphi 0, %s76
      %s78 = sphi 0, %s76
      %s79 = sphi 0, %s78
      %s93 = sphi 0, %s79
      %s97 = sphi 0, %s97
      %s99 = sphi 0, %s97
      %s100 = sphi 0, %s99
      %s114 = sphi 0, %s100
      %s118 = sphi 0, %s118
      %s120 = sphi 0, %s118
      %s121 = sphi 0, %s120
      %s135 = sphi 0, %s121
      %s139 = sphi 0, %s139
      %s141 = sphi 0, %s139
      %s142 = sphi 0, %s141
      %s156 = sphi 0, %s142
      %s160 = sphi 0, %s160
      %s162 = sphi 0, %s160
      %s163 = sphi 0, %s162
      %s177 = sphi 0, %s163
      %s181 = sphi 0, %s181
      %s183 = sphi 0, %s181
      %s184 = sphi 0, %s183
      %s198 = sphi 0, %s184
      %s202 = sphi 0, %s202
      %s204 = sphi 0, %s202
      %s205 = sphi 0, %s204
      %s219 = sphi 0, %s205
      %s223 = sphi 0, %s223
      %s225 = sphi 0, %s223
      %s226 = sphi 0, %s225
      %s240 = sphi 0, %s226
      %s244 = sphi 0, %s244
      %s246 = sphi 0, %s244
      %s247 = sphi 0, %s246
      %s261 = sphi 0, %s247
      %s267 = sphi 0, %s269
      %s270 = sphi 0, %s267
      %s271 = sphi 0, %s270
      %s287 = sphi 0, %s271
    $region4: #{decoder_forward.1} parent=1 // loop_header_branch
      %24 = sbr.rel (%p22) target = $region8
    $region5: #{decoder_forward.1} parent=1 // loop_body
      %s26 = ssub.s32 %s21, 1
      %s27 = ssub.s32 %s21, 2
      %s28 = sadd.s32 %s21, 1
      %s29 = ssub.s32 %s21, %s28
      %p30 = scmp.eq.s32.totalorder %s29, 0
      %s32 = sadd.s32 %s31, 1
      %s33 = scalar_select %p30, %s31, %s32
      %p36 = pneg %p30
      %p37 = scmp.eq.s32.totalorder %s21, 1
      %p38 = por %p36, %p37
      %p39 = scmp.ne.s32.totalorder %s31, %s34
      %p40 = scmp.eq.s32.totalorder %s21, 0
      %p41 = por %p39, %p40
      %p42 = scmp.ne.s32.totalorder %s31, %s34
      %p43 = scmp.eq.s32.totalorder %s26, 1
      %p44 = por %p42, %p43
      %p45 = scmp.ne.s32.totalorder %s34, %s35
      %p46 = scmp.eq.s32.totalorder %s26, 0
      %p47 = por %p45, %p46
      %p48 = scmp.ne.s32.totalorder %s34, %s35
      %p49 = scmp.eq.s32.totalorder %s27, 1
      %p50 = por %p48, %p49
      %p52 = scmp.ne.s32.totalorder %s35, %s51
      %p53 = scmp.eq.s32.totalorder %s27, 0
      %p54 = por %p52, %p53
      %s56 = sadd.s32 %s55, 1
      %p59 = scmp.eq.s32.totalorder %s21, 1
      %p60 = scmp.ne.s32.totalorder %s55, %s57
      %p61 = scmp.eq.s32.totalorder %s21, 0
      %p62 = por %p60, %p61
      %p63 = scmp.ne.s32.totalorder %s55, %s57
      %p64 = scmp.eq.s32.totalorder %s26, 1
      %p65 = por %p63, %p64
      %p66 = scmp.ne.s32.totalorder %s57, %s58
      %p67 = scmp.eq.s32.totalorder %s26, 0
      %p68 = por %p66, %p67
      %p69 = scmp.ne.s32.totalorder %s57, %s58
      %p70 = scmp.eq.s32.totalorder %s27, 1
      %p71 = por %p69, %p70
      %p73 = scmp.ne.s32.totalorder %s58, %s72
      %p74 = scmp.eq.s32.totalorder %s27, 0
      %p75 = por %p73, %p74
      %s77 = sadd.s32 %s76, 1
      %p80 = scmp.eq.s32.totalorder %s21, 1
      %p81 = scmp.ne.s32.totalorder %s76, %s78
      %p82 = scmp.eq.s32.totalorder %s21, 0
      %p83 = por %p81, %p82
      %p84 = scmp.ne.s32.totalorder %s76, %s78
      %p85 = scmp.eq.s32.totalorder %s26, 1
      %p86 = por %p84, %p85
      %p87 = scmp.ne.s32.totalorder %s78, %s79
      %p88 = scmp.eq.s32.totalorder %s26, 0
      %p89 = por %p87, %p88
      %p90 = scmp.ne.s32.totalorder %s78, %s79
      %p91 = scmp.eq.s32.totalorder %s27, 1
      %p92 = por %p90, %p91
      %p94 = scmp.ne.s32.totalorder %s79, %s93
      %p95 = scmp.eq.s32.totalorder %s27, 0
      %p96 = por %p94, %p95
      %s98 = sadd.s32 %s97, 1
      %p101 = scmp.eq.s32.totalorder %s21, 1
      %p102 = scmp.ne.s32.totalorder %s97, %s99
      %p103 = scmp.eq.s32.totalorder %s21, 0
      %p104 = por %p102, %p103
      %p105 = scmp.ne.s32.totalorder %s97, %s99
      %p106 = scmp.eq.s32.totalorder %s26, 1
      %p107 = por %p105, %p106
      %p108 = scmp.ne.s32.totalorder %s99, %s100
      %p109 = scmp.eq.s32.totalorder %s26, 0
      %p110 = por %p108, %p109
      %p111 = scmp.ne.s32.totalorder %s99, %s100
      %p112 = scmp.eq.s32.totalorder %s27, 1
      %p113 = por %p111, %p112
      %p115 = scmp.ne.s32.totalorder %s100, %s114
      %p116 = scmp.eq.s32.totalorder %s27, 0
      %p117 = por %p115, %p116
      %s119 = sadd.s32 %s118, 1
      %p122 = scmp.eq.s32.totalorder %s21, 1
      %p123 = scmp.ne.s32.totalorder %s118, %s120
      %p124 = scmp.eq.s32.totalorder %s21, 0
      %p125 = por %p123, %p124
      %p126 = scmp.ne.s32.totalorder %s118, %s120
      %p127 = scmp.eq.s32.totalorder %s26, 1
      %p128 = por %p126, %p127
      %p129 = scmp.ne.s32.totalorder %s120, %s121
      %p130 = scmp.eq.s32.totalorder %s26, 0
      %p131 = por %p129, %p130
      %p132 = scmp.ne.s32.totalorder %s120, %s121
      %p133 = scmp.eq.s32.totalorder %s27, 1
      %p134 = por %p132, %p133
      %p136 = scmp.ne.s32.totalorder %s121, %s135
      %p137 = scmp.eq.s32.totalorder %s27, 0
      %p138 = por %p136, %p137
      %s140 = sadd.s32 %s139, 1
      %p143 = scmp.eq.s32.totalorder %s21, 1
      %p144 = scmp.ne.s32.totalorder %s139, %s141
      %p145 = scmp.eq.s32.totalorder %s21, 0
      %p146 = por %p144, %p145
      %p147 = scmp.ne.s32.totalorder %s139, %s141
      %p148 = scmp.eq.s32.totalorder %s26, 1
      %p149 = por %p147, %p148
      %p150 = scmp.ne.s32.totalorder %s141, %s142
      %p151 = scmp.eq.s32.totalorder %s26, 0
      %p152 = por %p150, %p151
      %p153 = scmp.ne.s32.totalorder %s141, %s142
      %p154 = scmp.eq.s32.totalorder %s27, 1
      %p155 = por %p153, %p154
      %p157 = scmp.ne.s32.totalorder %s142, %s156
      %p158 = scmp.eq.s32.totalorder %s27, 0
      %p159 = por %p157, %p158
      %s161 = sadd.s32 %s160, 1
      %p164 = scmp.eq.s32.totalorder %s21, 1
      %p165 = scmp.ne.s32.totalorder %s160, %s162
      %p166 = scmp.eq.s32.totalorder %s21, 0
      %p167 = por %p165, %p166
      %p168 = scmp.ne.s32.totalorder %s160, %s162
      %p169 = scmp.eq.s32.totalorder %s26, 1
      %p170 = por %p168, %p169
      %p171 = scmp.ne.s32.totalorder %s162, %s163
      %p172 = scmp.eq.s32.totalorder %s26, 0
      %p173 = por %p171, %p172
      %p174 = scmp.ne.s32.totalorder %s162, %s163
      %p175 = scmp.eq.s32.totalorder %s27, 1
      %p176 = por %p174, %p175
      %p178 = scmp.ne.s32.totalorder %s163, %s177
      %p179 = scmp.eq.s32.totalorder %s27, 0
      %p180 = por %p178, %p179
      %s182 = sadd.s32 %s181, 1
      %p185 = scmp.eq.s32.totalorder %s21, 1
      %p186 = scmp.ne.s32.totalorder %s181, %s183
      %p187 = scmp.eq.s32.totalorder %s21, 0
      %p188 = por %p186, %p187
      %p189 = scmp.ne.s32.totalorder %s181, %s183
      %p190 = scmp.eq.s32.totalorder %s26, 1
      %p191 = por %p189, %p190
      %p192 = scmp.ne.s32.totalorder %s183, %s184
      %p193 = scmp.eq.s32.totalorder %s26, 0
      %p194 = por %p192, %p193
      %p195 = scmp.ne.s32.totalorder %s183, %s184
      %p196 = scmp.eq.s32.totalorder %s27, 1
      %p197 = por %p195, %p196
      %p199 = scmp.ne.s32.totalorder %s184, %s198
      %p200 = scmp.eq.s32.totalorder %s27, 0
      %p201 = por %p199, %p200
      %s203 = sadd.s32 %s202, 1
      %p206 = scmp.eq.s32.totalorder %s21, 1
      %p207 = scmp.ne.s32.totalorder %s202, %s204
      %p208 = scmp.eq.s32.totalorder %s21, 0
      %p209 = por %p207, %p208
      %p210 = scmp.ne.s32.totalorder %s202, %s204
      %p211 = scmp.eq.s32.totalorder %s26, 1
      %p212 = por %p210, %p211
      %p213 = scmp.ne.s32.totalorder %s204, %s205
      %p214 = scmp.eq.s32.totalorder %s26, 0
      %p215 = por %p213, %p214
      %p216 = scmp.ne.s32.totalorder %s204, %s205
      %p217 = scmp.eq.s32.totalorder %s27, 1
      %p218 = por %p216, %p217
      %p220 = scmp.ne.s32.totalorder %s205, %s219
      %p221 = scmp.eq.s32.totalorder %s27, 0
      %p222 = por %p220, %p221
      %s224 = sadd.s32 %s223, 1
      %p227 = scmp.eq.s32.totalorder %s21, 1
      %p228 = scmp.ne.s32.totalorder %s223, %s225
      %p229 = scmp.eq.s32.totalorder %s21, 0
      %p230 = por %p228, %p229
      %p231 = scmp.ne.s32.totalorder %s223, %s225
      %p232 = scmp.eq.s32.totalorder %s26, 1
      %p233 = por %p231, %p232
      %p234 = scmp.ne.s32.totalorder %s225, %s226
      %p235 = scmp.eq.s32.totalorder %s26, 0
      %p236 = por %p234, %p235
      %p237 = scmp.ne.s32.totalorder %s225, %s226
      %p238 = scmp.eq.s32.totalorder %s27, 1
      %p239 = por %p237, %p238
      %p241 = scmp.ne.s32.totalorder %s226, %s240
      %p242 = scmp.eq.s32.totalorder %s27, 0
      %p243 = por %p241, %p242
      %s245 = sadd.s32 %s244, 1
      %p248 = scmp.eq.s32.totalorder %s21, 1
      %p249 = scmp.ne.s32.totalorder %s244, %s246
      %p250 = scmp.eq.s32.totalorder %s21, 0
      %p251 = por %p249, %p250
      %p252 = scmp.ne.s32.totalorder %s244, %s246
      %p253 = scmp.eq.s32.totalorder %s26, 1
      %p254 = por %p252, %p253
      %p255 = scmp.ne.s32.totalorder %s246, %s247
      %p256 = scmp.eq.s32.totalorder %s26, 0
      %p257 = por %p255, %p256
      %p258 = scmp.ne.s32.totalorder %s246, %s247
      %p259 = scmp.eq.s32.totalorder %s27, 1
      %p260 = por %p258, %p259
      %p262 = scmp.ne.s32.totalorder %s247, %s261
      %p263 = scmp.eq.s32.totalorder %s27, 0
      %p264 = por %p262, %p263
      %s265 = ssub.s32 %s21, %s28
      %p266 = scmp.eq.s32.totalorder %s265, 0
      %s268 = sadd.s32 %s267, 1
      %s269 = scalar_select %p266, %s267, %s268
      %p272 = pneg %p266
      %p273 = scmp.eq.s32.totalorder %s21, 1
      %p274 = por %p272, %p273
      %p275 = scmp.ne.s32.totalorder %s267, %s270
      %p276 = scmp.eq.s32.totalorder %s21, 0
      %p277 = por %p275, %p276
      %p278 = scmp.ne.s32.totalorder %s267, %s270
      %p279 = scmp.eq.s32.totalorder %s26, 1
      %p280 = por %p278, %p279
      %p281 = scmp.ne.s32.totalorder %s270, %s271
      %p282 = scmp.eq.s32.totalorder %s26, 0
      %p283 = por %p281, %p282
      %p284 = scmp.ne.s32.totalorder %s270, %s271
      %p285 = scmp.eq.s32.totalorder %s27, 1
      %p286 = por %p284, %p285
      %p288 = scmp.ne.s32.totalorder %s271, %s287
      %p289 = scmp.eq.s32.totalorder %s27, 0
      %p290 = por %p288, %p289
      %p291 = scmp.le.s32.totalorder 1, %s21
      %p292 = scmp.lt.s32.totalorder %s21, 3
      %p293 = pnand %p291, %p292
      %p294 = pneg %p293
      // Predicated region
      $region9: #{decoder_forward.1} parent=5 // pred_check
        _
      $region10: #{decoder_forward.1} parent=5 // pred_check_branch
        %296 = sbr.rel (%p293) target = $region12
      $region11: #{decoder_forward.1} parent=5 // pred_region
        %s297 = ssub.s32 %s21, 1
        // Predicated region
        $region13: #{decoder_forward.1} parent=11 // pred_check
          %p298 = pneg %p68
        $region14: #{decoder_forward.1} parent=11 // pred_check_branch
          %300 = sbr.rel (%p298) target = $region16
        $region15: #{decoder_forward.1} parent=11 // pred_region
          %s302 = ssub.s32 8192, 8192
          %303 = vsyncadd [#allocation3], %s302
          %s304 = sshll.u32 [#allocation2], 4
          %s305 = int_to_ptr.vmem [resolvable:$true] %s304
          %310 = dma.hbm_to_vmem [thread:$0]  %s1, 8192, %s305, [#allocation3], 512, 512, 32
        $region16: #{decoder_forward.1} parent=11 // pred_fallthru
          _
        // Predicated region
        $region17: #{decoder_forward.1} parent=11 // pred_check
          %p311 = pneg %p89
        $region18: #{decoder_forward.1} parent=11 // pred_check_branch
          %313 = sbr.rel (%p311) target = $region20
        $region19: #{decoder_forward.1} parent=11 // pred_region
          %s315 = ssub.s32 8192, 8192
          %316 = vsyncadd [#allocation5], %s315
          %s317 = sshll.u32 [#allocation4], 4
          %s318 = int_to_ptr.vmem [resolvable:$true] %s317
          %323 = dma.hbm_to_vmem [thread:$0]  %s2, 8192, %s318, [#allocation5], 512, 512, 32
        $region20: #{decoder_forward.1} parent=11 // pred_fallthru
          _
        // Predicated region
        $region21: #{decoder_forward.1} parent=11 // pred_check
          %p324 = pneg %p110
        $region22: #{decoder_forward.1} parent=11 // pred_check_branch
          %326 = sbr.rel (%p324) target = $region24
        $region23: #{decoder_forward.1} parent=11 // pred_region
          _
        $region24: #{decoder_forward.1} parent=11 // pred_fallthru
          _
        // Predicated region
        $region25: #{decoder_forward.1} parent=11 // pred_check
          %p327 = pneg %p131
        $region26: #{decoder_forward.1} parent=11 // pred_check_branch
          %329 = sbr.rel (%p327) target = $region28
        $region27: #{decoder_forward.1} parent=11 // pred_region
          %s331 = ssub.s32 8192, 8192
          %332 = vsyncadd [#allocation5], %s331
          %s333 = sshll.u32 [#allocation6], 4
          %s334 = int_to_ptr.vmem [resolvable:$true] %s333
          %339 = dma.hbm_to_vmem [thread:$0]  %s4, 8192, %s334, [#allocation5], 512, 512, 32
        $region28: #{decoder_forward.1} parent=11 // pred_fallthru
          _
        // Predicated region
        $region29: #{decoder_forward.1} parent=11 // pred_check
          %p340 = pneg %p152
        $region30: #{decoder_forward.1} parent=11 // pred_check_branch
          %342 = sbr.rel (%p340) target = $region32
        $region31: #{decoder_forward.1} parent=11 // pred_region
          %s344 = ssub.s32 8192, 8192
          %345 = vsyncadd [#allocation8], %s344
          %s346 = sshll.u32 [#allocation7], 4
          %s347 = int_to_ptr.vmem [resolvable:$true] %s346
          %352 = dma.hbm_to_vmem [thread:$0]  %s5, 8192, %s347, [#allocation8], 512, 512, 32
        $region32: #{decoder_forward.1} parent=11 // pred_fallthru
          _
        // Predicated region
        $region33: #{decoder_forward.1} parent=11 // pred_check
          %p353 = pneg %p173
        $region34: #{decoder_forward.1} parent=11 // pred_check_branch
          %355 = sbr.rel (%p353) target = $region36
        $region35: #{decoder_forward.1} parent=11 // pred_region
          _
        $region36: #{decoder_forward.1} parent=11 // pred_fallthru
          _
        // Predicated region
        $region37: #{decoder_forward.1} parent=11 // pred_check
          %p356 = pneg %p194
        $region38: #{decoder_forward.1} parent=11 // pred_check_branch
          %358 = sbr.rel (%p356) target = $region40
        $region39: #{decoder_forward.1} parent=11 // pred_region
          %s360 = ssub.s32 8192, 8192
          %361 = vsyncadd [#allocation8], %s360
          %s362 = sshll.u32 [#allocation9], 4
          %s363 = int_to_ptr.vmem [resolvable:$true] %s362
          %368 = dma.hbm_to_vmem [thread:$0]  %s7, 8192, %s363, [#allocation8], 512, 512, 32
        $region40: #{decoder_forward.1} parent=11 // pred_fallthru
          _
        // Predicated region
        $region41: #{decoder_forward.1} parent=11 // pred_check
          %p369 = pneg %p215
        $region42: #{decoder_forward.1} parent=11 // pred_check_branch
          %371 = sbr.rel (%p369) target = $region44
        $region43: #{decoder_forward.1} parent=11 // pred_region
          %s373 = ssub.s32 8192, 8192
          %374 = vsyncadd [#allocation11], %s373
          %s375 = sshll.u32 [#allocation10], 4
          %s376 = int_to_ptr.vmem [resolvable:$true] %s375
          %381 = dma.hbm_to_vmem [thread:$0]  %s8, 8192, %s376, [#allocation11], 512, 512, 32
        $region44: #{decoder_forward.1} parent=11 // pred_fallthru
          _
        // Predicated region
        $region45: #{decoder_forward.1} parent=11 // pred_check
          %p382 = pneg %p236
        $region46: #{decoder_forward.1} parent=11 // pred_check_branch
          %384 = sbr.rel (%p382) target = $region48
        $region47: #{decoder_forward.1} parent=11 // pred_region
          _
        $region48: #{decoder_forward.1} parent=11 // pred_fallthru
          _
        // Predicated region
        $region49: #{decoder_forward.1} parent=11 // pred_check
          %p385 = pneg %p257
        $region50: #{decoder_forward.1} parent=11 // pred_check_branch
          %387 = sbr.rel (%p385) target = $region52
        $region51: #{decoder_forward.1} parent=11 // pred_region
          %s389 = ssub.s32 2048, 2048
          %390 = vsyncadd [#allocation11], %s389
          %s391 = sshll.u32 [#allocation12], 4
          %s392 = int_to_ptr.vmem [resolvable:$true] %s391
          %397 = dma.hbm_to_vmem [thread:$0]  %s10, 2048, %s392, [#allocation11], 128, 128, 8
        $region52: #{decoder_forward.1} parent=11 // pred_fallthru
          _
      $region12: #{decoder_forward.1} parent=5 // pred_fallthru
        _
      %p398 = scmp.lt.s32.totalorder %s21, 2
      // Predicated region
      $region53: #{decoder_forward.1} parent=5 // pred_check
        %p399 = pneg %p398
      $region54: #{decoder_forward.1} parent=5 // pred_check_branch
        %401 = sbr.rel (%p399) target = $region56
      $region55: #{decoder_forward.1} parent=5 // pred_region
        // Predicated region
        $region57: #{decoder_forward.1} parent=55 // pred_check
          %p402 = pneg %p41
        $region58: #{decoder_forward.1} parent=55 // pred_check_branch
          %404 = sbr.rel (%p402) target = $region60
        $region59: #{decoder_forward.1} parent=55 // pred_region
          %p405 = scmp.lt.s32.totalorder %s21, 1
          %s406 = scalar_select %p405, %s21, 1
          %s407 = smul.addr %s406, 8
          %s408 = scalar_lea.vmem %s0, %s407
        $region60: #{decoder_forward.1} parent=55 // pred_fallthru
          _
      $region56: #{decoder_forward.1} parent=5 // pred_fallthru
        _
      %p409 = scmp.le.s32.totalorder 1, %s21
      %p410 = scmp.lt.s32.totalorder %s21, 3
      %p411 = pnand %p409, %p410
      %p412 = pneg %p411
      // Predicated region
      $region61: #{decoder_forward.1} parent=5 // pred_check
        _
      $region62: #{decoder_forward.1} parent=5 // pred_check_branch
        %414 = sbr.rel (%p411) target = $region64
      $region63: #{decoder_forward.1} parent=5 // pred_region
        %s415 = ssub.s32 %s21, 1
        // Predicated region
        $region65: #{decoder_forward.1} parent=63 // pred_check
          %p416 = pneg %p68
        $region66: #{decoder_forward.1} parent=63 // pred_check_branch
          %418 = sbr.rel (%p416) target = $region68
        $region67: #{decoder_forward.1} parent=63 // pred_region
          %419 = dma.done [#allocation3], 8192
        $region68: #{decoder_forward.1} parent=63 // pred_fallthru
          _
        // Predicated region
        $region69: #{decoder_forward.1} parent=63 // pred_check
          %p420 = pneg %p89
        $region70: #{decoder_forward.1} parent=63 // pred_check_branch
          %422 = sbr.rel (%p420) target = $region72
        $region71: #{decoder_forward.1} parent=63 // pred_region
          %423 = dma.done [#allocation5], 8192
        $region72: #{decoder_forward.1} parent=63 // pred_fallthru
          _
        // Predicated region
        $region73: #{decoder_forward.1} parent=63 // pred_check
          %p424 = pneg %p131
        $region74: #{decoder_forward.1} parent=63 // pred_check_branch
          %426 = sbr.rel (%p424) target = $region76
        $region75: #{decoder_forward.1} parent=63 // pred_region
          %427 = dma.done [#allocation5], 8192
        $region76: #{decoder_forward.1} parent=63 // pred_fallthru
          _
        // Predicated region
        $region77: #{decoder_forward.1} parent=63 // pred_check
          %p428 = pneg %p152
        $region78: #{decoder_forward.1} parent=63 // pred_check_branch
          %430 = sbr.rel (%p428) target = $region80
        $region79: #{decoder_forward.1} parent=63 // pred_region
          %431 = dma.done [#allocation8], 8192
        $region80: #{decoder_forward.1} parent=63 // pred_fallthru
          _
        // Predicated region
        $region81: #{decoder_forward.1} parent=63 // pred_check
          %p432 = pneg %p194
        $region82: #{decoder_forward.1} parent=63 // pred_check_branch
          %434 = sbr.rel (%p432) target = $region84
        $region83: #{decoder_forward.1} parent=63 // pred_region
          %435 = dma.done [#allocation8], 8192
        $region84: #{decoder_forward.1} parent=63 // pred_fallthru
          _
        // Predicated region
        $region85: #{decoder_forward.1} parent=63 // pred_check
          %p436 = pneg %p215
        $region86: #{decoder_forward.1} parent=63 // pred_check_branch
          %438 = sbr.rel (%p436) target = $region88
        $region87: #{decoder_forward.1} parent=63 // pred_region
          %439 = dma.done [#allocation11], 8192
        $region88: #{decoder_forward.1} parent=63 // pred_fallthru
          _
        // Predicated region
        $region89: #{decoder_forward.1} parent=63 // pred_check
          %p440 = pneg %p257
        $region90: #{decoder_forward.1} parent=63 // pred_check_branch
          %442 = sbr.rel (%p440) target = $region92
        $region91: #{decoder_forward.1} parent=63 // pred_region
          %443 = dma.done [#allocation11], 2048
        $region92: #{decoder_forward.1} parent=63 // pred_fallthru
          _
        %p444 = scmp.lt.s32.totalorder %s26, 1
        %s445 = scalar_select %p444, %s26, 1
        %s446 = smul.addr %s445, 8
        %s447 = scalar_lea.vmem %s0, %s446
        %p448 = pneg %p47
        %p449 = pneg %p44
        %p450 = pneg %p68
        %p451 = pneg %p65
        %p452 = pneg %p89
        %p453 = pneg %p86
        %p454 = pneg %p110
        %p455 = pneg %p107
        %p456 = pneg %p131
        %p457 = pneg %p128
        %p458 = pneg %p152
        %p459 = pneg %p149
        %p460 = pneg %p173
        %p461 = pneg %p170
        %p462 = pneg %p194
        %p463 = pneg %p191
        %p464 = pneg %p215
        %p465 = pneg %p212
        %p466 = pneg %p236
        %p467 = pneg %p233
        %p468 = pneg %p257
        %p469 = pneg %p254
        %p470 = pneg %p283
        %p471 = pneg %p280
        %s472 = sand.u32 %s270, 1
        %s473 = sand.u32 %s270, 1
        %s474 = smul.addr %s473, 64
        %s475 = scalar_lea.vmem [#allocation13], %s474
        %p476 = scmp.lt.s32.totalorder %s26, 1
        %s477 = scalar_select %p476, %s26, 1
        %s478 = smul.addr %s477, 8
        %s479 = scalar_lea.vmem %s0, %s478
        %v480 = vld [vmem:[#allocation2] sm:$0xff]
        %v481 = vld [vmem:[#allocation2 + $0x8] sm:$0xff]
        %v482 = vld [vmem:[#allocation2 + $0x10] sm:$0xff]
        %v483 = vld [vmem:[#allocation2 + $0x18] sm:$0xff]
        %v484 = vld [vmem:[#allocation2 + $0x20] sm:$0xff]
        %v485 = vld [vmem:[#allocation2 + $0x28] sm:$0xff]
        %v486 = vld [vmem:[#allocation2 + $0x30] sm:$0xff]
        %v487 = vld [vmem:[#allocation2 + $0x38] sm:$0xff]
        %v488 = vld [vmem:[#allocation2 + $0x40] sm:$0xff]
        %v489 = vld [vmem:[#allocation2 + $0x48] sm:$0xff]
        %v490 = vld [vmem:[#allocation2 + $0x50] sm:$0xff]
        %v491 = vld [vmem:[#allocation2 + $0x58] sm:$0xff]
        %v492 = vld [vmem:[#allocation2 + $0x60] sm:$0xff]
        %v493 = vld [vmem:[#allocation2 + $0x68] sm:$0xff]
        %v494 = vld [vmem:[#allocation2 + $0x70] sm:$0xff]
        %v495 = vld [vmem:[#allocation2 + $0x78] sm:$0xff]
        %v496 = vld [vmem:[#allocation2 + $0x80] sm:$0xff]
        %v497 = vld [vmem:[#allocation2 + $0x88] sm:$0xff]
        %v498 = vld [vmem:[#allocation2 + $0x90] sm:$0xff]
        %v499 = vld [vmem:[#allocation2 + $0x98] sm:$0xff]
        %v500 = vld [vmem:[#allocation2 + $0xa0] sm:$0xff]
        %v501 = vld [vmem:[#allocation2 + $0xa8] sm:$0xff]
        %v502 = vld [vmem:[#allocation2 + $0xb0] sm:$0xff]
        %v503 = vld [vmem:[#allocation2 + $0xb8] sm:$0xff]
        %v504 = vld [vmem:[#allocation2 + $0xc0] sm:$0xff]
        %v505 = vld [vmem:[#allocation2 + $0xc8] sm:$0xff]
        %v506 = vld [vmem:[#allocation2 + $0xd0] sm:$0xff]
        %v507 = vld [vmem:[#allocation2 + $0xd8] sm:$0xff]
        %v508 = vld [vmem:[#allocation2 + $0xe0] sm:$0xff]
        %v509 = vld [vmem:[#allocation2 + $0xe8] sm:$0xff]
        %v510 = vld [vmem:[#allocation2 + $0xf0] sm:$0xff]
        %v511 = vld [vmem:[#allocation2 + $0xf8] sm:$0xff]
        %v512 = vld [vmem:[#allocation2 + $0x100] sm:$0xff]
        %v513 = vld [vmem:[#allocation2 + $0x108] sm:$0xff]
        %v514 = vld [vmem:[#allocation2 + $0x110] sm:$0xff]
        %v515 = vld [vmem:[#allocation2 + $0x118] sm:$0xff]
        %v516 = vld [vmem:[#allocation2 + $0x120] sm:$0xff]
        %v517 = vld [vmem:[#allocation2 + $0x128] sm:$0xff]
        %v518 = vld [vmem:[#allocation2 + $0x130] sm:$0xff]
        %v519 = vld [vmem:[#allocation2 + $0x138] sm:$0xff]
        %v520 = vld [vmem:[#allocation2 + $0x140] sm:$0xff]
        %v521 = vld [vmem:[#allocation2 + $0x148] sm:$0xff]
        %v522 = vld [vmem:[#allocation2 + $0x150] sm:$0xff]
        %v523 = vld [vmem:[#allocation2 + $0x158] sm:$0xff]
        %v524 = vld [vmem:[#allocation2 + $0x160] sm:$0xff]
        %v525 = vld [vmem:[#allocation2 + $0x168] sm:$0xff]
        %v526 = vld [vmem:[#allocation2 + $0x170] sm:$0xff]
        %v527 = vld [vmem:[#allocation2 + $0x178] sm:$0xff]
        %v528 = vld [vmem:[#allocation2 + $0x180] sm:$0xff]
        %v529 = vld [vmem:[#allocation2 + $0x188] sm:$0xff]
        %v530 = vld [vmem:[#allocation2 + $0x190] sm:$0xff]
        %v531 = vld [vmem:[#allocation2 + $0x198] sm:$0xff]
        %v532 = vld [vmem:[#allocation2 + $0x1a0] sm:$0xff]
        %v533 = vld [vmem:[#allocation2 + $0x1a8] sm:$0xff]
        %v534 = vld [vmem:[#allocation2 + $0x1b0] sm:$0xff]
        %v535 = vld [vmem:[#allocation2 + $0x1b8] sm:$0xff]
        %v536 = vld [vmem:[#allocation2 + $0x1c0] sm:$0xff]
        %v537 = vld [vmem:[#allocation2 + $0x1c8] sm:$0xff]
        %v538 = vld [vmem:[#allocation2 + $0x1d0] sm:$0xff]
        %v539 = vld [vmem:[#allocation2 + $0x1d8] sm:$0xff]
        %v540 = vld [vmem:[#allocation2 + $0x1e0] sm:$0xff]
        %v541 = vld [vmem:[#allocation2 + $0x1e8] sm:$0xff]
        %v542 = vld [vmem:[#allocation2 + $0x1f0] sm:$0xff]
        %v543 = vld [vmem:[#allocation2 + $0x1f8] sm:$0xff]
        %v544 = vld [vmem:[#allocation6] sm:$0xff]
        %v545 = vld [vmem:[#allocation6 + $0x8] sm:$0xff]
        %v546 = vld [vmem:[#allocation6 + $0x10] sm:$0xff]
        %v547 = vld [vmem:[#allocation6 + $0x18] sm:$0xff]
        %v548 = vld [vmem:[#allocation6 + $0x20] sm:$0xff]
        %v549 = vld [vmem:[#allocation6 + $0x28] sm:$0xff]
        %v550 = vld [vmem:[#allocation6 + $0x30] sm:$0xff]
        %v551 = vld [vmem:[#allocation6 + $0x38] sm:$0xff]
        %v552 = vld [vmem:[#allocation6 + $0x40] sm:$0xff]
        %v553 = vld [vmem:[#allocation6 + $0x48] sm:$0xff]
        %v554 = vld [vmem:[#allocation6 + $0x50] sm:$0xff]
        %v555 = vld [vmem:[#allocation6 + $0x58] sm:$0xff]
        %v556 = vld [vmem:[#allocation6 + $0x60] sm:$0xff]
        %v557 = vld [vmem:[#allocation6 + $0x68] sm:$0xff]
        %v558 = vld [vmem:[#allocation6 + $0x70] sm:$0xff]
        %v559 = vld [vmem:[#allocation6 + $0x78] sm:$0xff]
        %v560 = vld [vmem:[#allocation6 + $0x80] sm:$0xff]
        %v561 = vld [vmem:[#allocation6 + $0x88] sm:$0xff]
        %v562 = vld [vmem:[#allocation6 + $0x90] sm:$0xff]
        %v563 = vld [vmem:[#allocation6 + $0x98] sm:$0xff]
        %v564 = vld [vmem:[#allocation6 + $0xa0] sm:$0xff]
        %v565 = vld [vmem:[#allocation6 + $0xa8] sm:$0xff]
        %v566 = vld [vmem:[#allocation6 + $0xb0] sm:$0xff]
        %v567 = vld [vmem:[#allocation6 + $0xb8] sm:$0xff]
        %v568 = vld [vmem:[#allocation6 + $0xc0] sm:$0xff]
        %v569 = vld [vmem:[#allocation6 + $0xc8] sm:$0xff]
        %v570 = vld [vmem:[#allocation6 + $0xd0] sm:$0xff]
        %v571 = vld [vmem:[#allocation6 + $0xd8] sm:$0xff]
        %v572 = vld [vmem:[#allocation6 + $0xe0] sm:$0xff]
        %v573 = vld [vmem:[#allocation6 + $0xe8] sm:$0xff]
        %v574 = vld [vmem:[#allocation6 + $0xf0] sm:$0xff]
        %v575 = vld [vmem:[#allocation6 + $0xf8] sm:$0xff]
        %v576 = vld [vmem:[#allocation6 + $0x100] sm:$0xff]
        %v577 = vld [vmem:[#allocation6 + $0x108] sm:$0xff]
        %v578 = vld [vmem:[#allocation6 + $0x110] sm:$0xff]
        %v579 = vld [vmem:[#allocation6 + $0x118] sm:$0xff]
        %v580 = vld [vmem:[#allocation6 + $0x120] sm:$0xff]
        %v581 = vld [vmem:[#allocation6 + $0x128] sm:$0xff]
        %v582 = vld [vmem:[#allocation6 + $0x130] sm:$0xff]
        %v583 = vld [vmem:[#allocation6 + $0x138] sm:$0xff]
        %v584 = vld [vmem:[#allocation6 + $0x140] sm:$0xff]
        %v585 = vld [vmem:[#allocation6 + $0x148] sm:$0xff]
        %v586 = vld [vmem:[#allocation6 + $0x150] sm:$0xff]
        %v587 = vld [vmem:[#allocation6 + $0x158] sm:$0xff]
        %v588 = vld [vmem:[#allocation6 + $0x160] sm:$0xff]
        %v589 = vld [vmem:[#allocation6 + $0x168] sm:$0xff]
        %v590 = vld [vmem:[#allocation6 + $0x170] sm:$0xff]
        %v591 = vld [vmem:[#allocation6 + $0x178] sm:$0xff]
        %v592 = vld [vmem:[#allocation6 + $0x180] sm:$0xff]
        %v593 = vld [vmem:[#allocation6 + $0x188] sm:$0xff]
        %v594 = vld [vmem:[#allocation6 + $0x190] sm:$0xff]
        %v595 = vld [vmem:[#allocation6 + $0x198] sm:$0xff]
        %v596 = vld [vmem:[#allocation6 + $0x1a0] sm:$0xff]
        %v597 = vld [vmem:[#allocation6 + $0x1a8] sm:$0xff]
        %v598 = vld [vmem:[#allocation6 + $0x1b0] sm:$0xff]
        %v599 = vld [vmem:[#allocation6 + $0x1b8] sm:$0xff]
        %v600 = vld [vmem:[#allocation6 + $0x1c0] sm:$0xff]
        %v601 = vld [vmem:[#allocation6 + $0x1c8] sm:$0xff]
        %v602 = vld [vmem:[#allocation6 + $0x1d0] sm:$0xff]
        %v603 = vld [vmem:[#allocation6 + $0x1d8] sm:$0xff]
        %v604 = vld [vmem:[#allocation6 + $0x1e0] sm:$0xff]
        %v605 = vld [vmem:[#allocation6 + $0x1e8] sm:$0xff]
        %v606 = vld [vmem:[#allocation6 + $0x1f0] sm:$0xff]
        %v607 = vld [vmem:[#allocation6 + $0x1f8] sm:$0xff]
        %v608 = vld [vmem:[#allocation9] sm:$0xff]
        %v609 = vld [vmem:[#allocation9 + $0x8] sm:$0xff]
        %v610 = vld [vmem:[#allocation9 + $0x10] sm:$0xff]
        %v611 = vld [vmem:[#allocation9 + $0x18] sm:$0xff]
        %v612 = vld [vmem:[#allocation9 + $0x20] sm:$0xff]
        %v613 = vld [vmem:[#allocation9 + $0x28] sm:$0xff]
        %v614 = vld [vmem:[#allocation9 + $0x30] sm:$0xff]
        %v615 = vld [vmem:[#allocation9 + $0x38] sm:$0xff]
        %v616 = vld [vmem:[#allocation9 + $0x40] sm:$0xff]
        %v617 = vld [vmem:[#allocation9 + $0x48] sm:$0xff]
        %v618 = vld [vmem:[#allocation9 + $0x50] sm:$0xff]
        %v619 = vld [vmem:[#allocation9 + $0x58] sm:$0xff]
        %v620 = vld [vmem:[#allocation9 + $0x60] sm:$0xff]
        %v621 = vld [vmem:[#allocation9 + $0x68] sm:$0xff]
        %v622 = vld [vmem:[#allocation9 + $0x70] sm:$0xff]
        %v623 = vld [vmem:[#allocation9 + $0x78] sm:$0xff]
        %v624 = vld [vmem:[#allocation9 + $0x80] sm:$0xff]
        %v625 = vld [vmem:[#allocation9 + $0x88] sm:$0xff]
        %v626 = vld [vmem:[#allocation9 + $0x90] sm:$0xff]
        %v627 = vld [vmem:[#allocation9 + $0x98] sm:$0xff]
        %v628 = vld [vmem:[#allocation9 + $0xa0] sm:$0xff]
        %v629 = vld [vmem:[#allocation9 + $0xa8] sm:$0xff]
        %v630 = vld [vmem:[#allocation9 + $0xb0] sm:$0xff]
        %v631 = vld [vmem:[#allocation9 + $0xb8] sm:$0xff]
        %v632 = vld [vmem:[#allocation9 + $0xc0] sm:$0xff]
        %v633 = vld [vmem:[#allocation9 + $0xc8] sm:$0xff]
        %v634 = vld [vmem:[#allocation9 + $0xd0] sm:$0xff]
        %v635 = vld [vmem:[#allocation9 + $0xd8] sm:$0xff]
        %v636 = vld [vmem:[#allocation9 + $0xe0] sm:$0xff]
        %v637 = vld [vmem:[#allocation9 + $0xe8] sm:$0xff]
        %v638 = vld [vmem:[#allocation9 + $0xf0] sm:$0xff]
        %v639 = vld [vmem:[#allocation9 + $0xf8] sm:$0xff]
        %v640 = vld [vmem:[#allocation9 + $0x100] sm:$0xff]
        %v641 = vld [vmem:[#allocation9 + $0x108] sm:$0xff]
        %v642 = vld [vmem:[#allocation9 + $0x110] sm:$0xff]
        %v643 = vld [vmem:[#allocation9 + $0x118] sm:$0xff]
        %v644 = vld [vmem:[#allocation9 + $0x120] sm:$0xff]
        %v645 = vld [vmem:[#allocation9 + $0x128] sm:$0xff]
        %v646 = vld [vmem:[#allocation9 + $0x130] sm:$0xff]
        %v647 = vld [vmem:[#allocation9 + $0x138] sm:$0xff]
        %v648 = vld [vmem:[#allocation9 + $0x140] sm:$0xff]
        %v649 = vld [vmem:[#allocation9 + $0x148] sm:$0xff]
        %v650 = vld [vmem:[#allocation9 + $0x150] sm:$0xff]
        %v651 = vld [vmem:[#allocation9 + $0x158] sm:$0xff]
        %v652 = vld [vmem:[#allocation9 + $0x160] sm:$0xff]
        %v653 = vld [vmem:[#allocation9 + $0x168] sm:$0xff]
        %v654 = vld [vmem:[#allocation9 + $0x170] sm:$0xff]
        %v655 = vld [vmem:[#allocation9 + $0x178] sm:$0xff]
        %v656 = vld [vmem:[#allocation9 + $0x180] sm:$0xff]
        %v657 = vld [vmem:[#allocation9 + $0x188] sm:$0xff]
        %v658 = vld [vmem:[#allocation9 + $0x190] sm:$0xff]
        %v659 = vld [vmem:[#allocation9 + $0x198] sm:$0xff]
        %v660 = vld [vmem:[#allocation9 + $0x1a0] sm:$0xff]
        %v661 = vld [vmem:[#allocation9 + $0x1a8] sm:$0xff]
        %v662 = vld [vmem:[#allocation9 + $0x1b0] sm:$0xff]
        %v663 = vld [vmem:[#allocation9 + $0x1b8] sm:$0xff]
        %v664 = vld [vmem:[#allocation9 + $0x1c0] sm:$0xff]
        %v665 = vld [vmem:[#allocation9 + $0x1c8] sm:$0xff]
        %v666 = vld [vmem:[#allocation9 + $0x1d0] sm:$0xff]
        %v667 = vld [vmem:[#allocation9 + $0x1d8] sm:$0xff]
        %v668 = vld [vmem:[#allocation9 + $0x1e0] sm:$0xff]
        %v669 = vld [vmem:[#allocation9 + $0x1e8] sm:$0xff]
        %v670 = vld [vmem:[#allocation9 + $0x1f0] sm:$0xff]
        %v671 = vld [vmem:[#allocation9 + $0x1f8] sm:$0xff]
        %v672 = vld [vmem:[#allocation4] sm:$0xff]
        %v673 = vld [vmem:[#allocation4 + $0x8] sm:$0xff]
        %v674 = vld [vmem:[#allocation4 + $0x10] sm:$0xff]
        %v675 = vld [vmem:[#allocation4 + $0x18] sm:$0xff]
        %v676 = vld [vmem:[#allocation4 + $0x20] sm:$0xff]
        %v677 = vld [vmem:[#allocation4 + $0x28] sm:$0xff]
        %v678 = vld [vmem:[#allocation4 + $0x30] sm:$0xff]
        %v679 = vld [vmem:[#allocation4 + $0x38] sm:$0xff]
        %v680 = vld [vmem:[#allocation4 + $0x40] sm:$0xff]
        %v681 = vld [vmem:[#allocation4 + $0x48] sm:$0xff]
        %v682 = vld [vmem:[#allocation4 + $0x50] sm:$0xff]
        %v683 = vld [vmem:[#allocation4 + $0x58] sm:$0xff]
        %v684 = vld [vmem:[#allocation4 + $0x60] sm:$0xff]
        %v685 = vld [vmem:[#allocation4 + $0x68] sm:$0xff]
        %v686 = vld [vmem:[#allocation4 + $0x70] sm:$0xff]
        %v687 = vld [vmem:[#allocation4 + $0x78] sm:$0xff]
        %v688 = vld [vmem:[#allocation4 + $0x80] sm:$0xff]
        %v689 = vld [vmem:[#allocation4 + $0x88] sm:$0xff]
        %v690 = vld [vmem:[#allocation4 + $0x90] sm:$0xff]
        %v691 = vld [vmem:[#allocation4 + $0x98] sm:$0xff]
        %v692 = vld [vmem:[#allocation4 + $0xa0] sm:$0xff]
        %v693 = vld [vmem:[#allocation4 + $0xa8] sm:$0xff]
        %v694 = vld [vmem:[#allocation4 + $0xb0] sm:$0xff]
        %v695 = vld [vmem:[#allocation4 + $0xb8] sm:$0xff]
        %v696 = vld [vmem:[#allocation4 + $0xc0] sm:$0xff]
        %v697 = vld [vmem:[#allocation4 + $0xc8] sm:$0xff]
        %v698 = vld [vmem:[#allocation4 + $0xd0] sm:$0xff]
        %v699 = vld [vmem:[#allocation4 + $0xd8] sm:$0xff]
        %v700 = vld [vmem:[#allocation4 + $0xe0] sm:$0xff]
        %v701 = vld [vmem:[#allocation4 + $0xe8] sm:$0xff]
        %v702 = vld [vmem:[#allocation4 + $0xf0] sm:$0xff]
        %v703 = vld [vmem:[#allocation4 + $0xf8] sm:$0xff]
        %v704 = vld [vmem:[#allocation4 + $0x100] sm:$0xff]
        %v705 = vld [vmem:[#allocation4 + $0x108] sm:$0xff]
        %v706 = vld [vmem:[#allocation4 + $0x110] sm:$0xff]
        %v707 = vld [vmem:[#allocation4 + $0x118] sm:$0xff]
        %v708 = vld [vmem:[#allocation4 + $0x120] sm:$0xff]
        %v709 = vld [vmem:[#allocation4 + $0x128] sm:$0xff]
        %v710 = vld [vmem:[#allocation4 + $0x130] sm:$0xff]
        %v711 = vld [vmem:[#allocation4 + $0x138] sm:$0xff]
        %v712 = vld [vmem:[#allocation4 + $0x140] sm:$0xff]
        %v713 = vld [vmem:[#allocation4 + $0x148] sm:$0xff]
        %v714 = vld [vmem:[#allocation4 + $0x150] sm:$0xff]
        %v715 = vld [vmem:[#allocation4 + $0x158] sm:$0xff]
        %v716 = vld [vmem:[#allocation4 + $0x160] sm:$0xff]
        %v717 = vld [vmem:[#allocation4 + $0x168] sm:$0xff]
        %v718 = vld [vmem:[#allocation4 + $0x170] sm:$0xff]
        %v719 = vld [vmem:[#allocation4 + $0x178] sm:$0xff]
        %v720 = vld [vmem:[#allocation4 + $0x180] sm:$0xff]
        %v721 = vld [vmem:[#allocation4 + $0x188] sm:$0xff]
        %v722 = vld [vmem:[#allocation4 + $0x190] sm:$0xff]
        %v723 = vld [vmem:[#allocation4 + $0x198] sm:$0xff]
        %v724 = vld [vmem:[#allocation4 + $0x1a0] sm:$0xff]
        %v725 = vld [vmem:[#allocation4 + $0x1a8] sm:$0xff]
        %v726 = vld [vmem:[#allocation4 + $0x1b0] sm:$0xff]
        %v727 = vld [vmem:[#allocation4 + $0x1b8] sm:$0xff]
        %v728 = vld [vmem:[#allocation4 + $0x1c0] sm:$0xff]
        %v729 = vld [vmem:[#allocation4 + $0x1c8] sm:$0xff]
        %v730 = vld [vmem:[#allocation4 + $0x1d0] sm:$0xff]
        %v731 = vld [vmem:[#allocation4 + $0x1d8] sm:$0xff]
        %v732 = vld [vmem:[#allocation4 + $0x1e0] sm:$0xff]
        %v733 = vld [vmem:[#allocation4 + $0x1e8] sm:$0xff]
        %v734 = vld [vmem:[#allocation4 + $0x1f0] sm:$0xff]
        %v735 = vld [vmem:[#allocation4 + $0x1f8] sm:$0xff]
        %v736 = vld [vmem:[#allocation7] sm:$0xff]
        %v737 = vld [vmem:[#allocation7 + $0x8] sm:$0xff]
        %v738 = vld [vmem:[#allocation7 + $0x10] sm:$0xff]
        %v739 = vld [vmem:[#allocation7 + $0x18] sm:$0xff]
        %v740 = vld [vmem:[#allocation7 + $0x20] sm:$0xff]
        %v741 = vld [vmem:[#allocation7 + $0x28] sm:$0xff]
        %v742 = vld [vmem:[#allocation7 + $0x30] sm:$0xff]
        %v743 = vld [vmem:[#allocation7 + $0x38] sm:$0xff]
        %v744 = vld [vmem:[#allocation7 + $0x40] sm:$0xff]
        %v745 = vld [vmem:[#allocation7 + $0x48] sm:$0xff]
        %v746 = vld [vmem:[#allocation7 + $0x50] sm:$0xff]
        %v747 = vld [vmem:[#allocation7 + $0x58] sm:$0xff]
        %v748 = vld [vmem:[#allocation7 + $0x60] sm:$0xff]
        %v749 = vld [vmem:[#allocation7 + $0x68] sm:$0xff]
        %v750 = vld [vmem:[#allocation7 + $0x70] sm:$0xff]
        %v751 = vld [vmem:[#allocation7 + $0x78] sm:$0xff]
        %v752 = vld [vmem:[#allocation7 + $0x80] sm:$0xff]
        %v753 = vld [vmem:[#allocation7 + $0x88] sm:$0xff]
        %v754 = vld [vmem:[#allocation7 + $0x90] sm:$0xff]
        %v755 = vld [vmem:[#allocation7 + $0x98] sm:$0xff]
        %v756 = vld [vmem:[#allocation7 + $0xa0] sm:$0xff]
        %v757 = vld [vmem:[#allocation7 + $0xa8] sm:$0xff]
        %v758 = vld [vmem:[#allocation7 + $0xb0] sm:$0xff]
        %v759 = vld [vmem:[#allocation7 + $0xb8] sm:$0xff]
        %v760 = vld [vmem:[#allocation7 + $0xc0] sm:$0xff]
        %v761 = vld [vmem:[#allocation7 + $0xc8] sm:$0xff]
        %v762 = vld [vmem:[#allocation7 + $0xd0] sm:$0xff]
        %v763 = vld [vmem:[#allocation7 + $0xd8] sm:$0xff]
        %v764 = vld [vmem:[#allocation7 + $0xe0] sm:$0xff]
        %v765 = vld [vmem:[#allocation7 + $0xe8] sm:$0xff]
        %v766 = vld [vmem:[#allocation7 + $0xf0] sm:$0xff]
        %v767 = vld [vmem:[#allocation7 + $0xf8] sm:$0xff]
        %v768 = vld [vmem:[#allocation7 + $0x100] sm:$0xff]
        %v769 = vld [vmem:[#allocation7 + $0x108] sm:$0xff]
        %v770 = vld [vmem:[#allocation7 + $0x110] sm:$0xff]
        %v771 = vld [vmem:[#allocation7 + $0x118] sm:$0xff]
        %v772 = vld [vmem:[#allocation7 + $0x120] sm:$0xff]
        %v773 = vld [vmem:[#allocation7 + $0x128] sm:$0xff]
        %v774 = vld [vmem:[#allocation7 + $0x130] sm:$0xff]
        %v775 = vld [vmem:[#allocation7 + $0x138] sm:$0xff]
        %v776 = vld [vmem:[#allocation7 + $0x140] sm:$0xff]
        %v777 = vld [vmem:[#allocation7 + $0x148] sm:$0xff]
        %v778 = vld [vmem:[#allocation7 + $0x150] sm:$0xff]
        %v779 = vld [vmem:[#allocation7 + $0x158] sm:$0xff]
        %v780 = vld [vmem:[#allocation7 + $0x160] sm:$0xff]
        %v781 = vld [vmem:[#allocation7 + $0x168] sm:$0xff]
        %v782 = vld [vmem:[#allocation7 + $0x170] sm:$0xff]
        %v783 = vld [vmem:[#allocation7 + $0x178] sm:$0xff]
        %v784 = vld [vmem:[#allocation7 + $0x180] sm:$0xff]
        %v785 = vld [vmem:[#allocation7 + $0x188] sm:$0xff]
        %v786 = vld [vmem:[#allocation7 + $0x190] sm:$0xff]
        %v787 = vld [vmem:[#allocation7 + $0x198] sm:$0xff]
        %v788 = vld [vmem:[#allocation7 + $0x1a0] sm:$0xff]
        %v789 = vld [vmem:[#allocation7 + $0x1a8] sm:$0xff]
        %v790 = vld [vmem:[#allocation7 + $0x1b0] sm:$0xff]
        %v791 = vld [vmem:[#allocation7 + $0x1b8] sm:$0xff]
        %v792 = vld [vmem:[#allocation7 + $0x1c0] sm:$0xff]
        %v793 = vld [vmem:[#allocation7 + $0x1c8] sm:$0xff]
        %v794 = vld [vmem:[#allocation7 + $0x1d0] sm:$0xff]
        %v795 = vld [vmem:[#allocation7 + $0x1d8] sm:$0xff]
        %v796 = vld [vmem:[#allocation7 + $0x1e0] sm:$0xff]
        %v797 = vld [vmem:[#allocation7 + $0x1e8] sm:$0xff]
        %v798 = vld [vmem:[#allocation7 + $0x1f0] sm:$0xff]
        %v799 = vld [vmem:[#allocation7 + $0x1f8] sm:$0xff]
        %v800 = vld [vmem:[#allocation10] sm:$0xff]
        %v801 = vld [vmem:[#allocation10 + $0x8] sm:$0xff]
        %v802 = vld [vmem:[#allocation10 + $0x10] sm:$0xff]
        %v803 = vld [vmem:[#allocation10 + $0x18] sm:$0xff]
        %v804 = vld [vmem:[#allocation10 + $0x20] sm:$0xff]
        %v805 = vld [vmem:[#allocation10 + $0x28] sm:$0xff]
        %v806 = vld [vmem:[#allocation10 + $0x30] sm:$0xff]
        %v807 = vld [vmem:[#allocation10 + $0x38] sm:$0xff]
        %v808 = vld [vmem:[#allocation10 + $0x40] sm:$0xff]
        %v809 = vld [vmem:[#allocation10 + $0x48] sm:$0xff]
        %v810 = vld [vmem:[#allocation10 + $0x50] sm:$0xff]
        %v811 = vld [vmem:[#allocation10 + $0x58] sm:$0xff]
        %v812 = vld [vmem:[#allocation10 + $0x60] sm:$0xff]
        %v813 = vld [vmem:[#allocation10 + $0x68] sm:$0xff]
        %v814 = vld [vmem:[#allocation10 + $0x70] sm:$0xff]
        %v815 = vld [vmem:[#allocation10 + $0x78] sm:$0xff]
        %v816 = vld [vmem:[#allocation10 + $0x80] sm:$0xff]
        %v817 = vld [vmem:[#allocation10 + $0x88] sm:$0xff]
        %v818 = vld [vmem:[#allocation10 + $0x90] sm:$0xff]
        %v819 = vld [vmem:[#allocation10 + $0x98] sm:$0xff]
        %v820 = vld [vmem:[#allocation10 + $0xa0] sm:$0xff]
        %v821 = vld [vmem:[#allocation10 + $0xa8] sm:$0xff]
        %v822 = vld [vmem:[#allocation10 + $0xb0] sm:$0xff]
        %v823 = vld [vmem:[#allocation10 + $0xb8] sm:$0xff]
        %v824 = vld [vmem:[#allocation10 + $0xc0] sm:$0xff]
        %v825 = vld [vmem:[#allocation10 + $0xc8] sm:$0xff]
        %v826 = vld [vmem:[#allocation10 + $0xd0] sm:$0xff]
        %v827 = vld [vmem:[#allocation10 + $0xd8] sm:$0xff]
        %v828 = vld [vmem:[#allocation10 + $0xe0] sm:$0xff]
        %v829 = vld [vmem:[#allocation10 + $0xe8] sm:$0xff]
        %v830 = vld [vmem:[#allocation10 + $0xf0] sm:$0xff]
        %v831 = vld [vmem:[#allocation10 + $0xf8] sm:$0xff]
        %v832 = vld [vmem:[#allocation10 + $0x100] sm:$0xff]
        %v833 = vld [vmem:[#allocation10 + $0x108] sm:$0xff]
        %v834 = vld [vmem:[#allocation10 + $0x110] sm:$0xff]
        %v835 = vld [vmem:[#allocation10 + $0x118] sm:$0xff]
        %v836 = vld [vmem:[#allocation10 + $0x120] sm:$0xff]
        %v837 = vld [vmem:[#allocation10 + $0x128] sm:$0xff]
        %v838 = vld [vmem:[#allocation10 + $0x130] sm:$0xff]
        %v839 = vld [vmem:[#allocation10 + $0x138] sm:$0xff]
        %v840 = vld [vmem:[#allocation10 + $0x140] sm:$0xff]
        %v841 = vld [vmem:[#allocation10 + $0x148] sm:$0xff]
        %v842 = vld [vmem:[#allocation10 + $0x150] sm:$0xff]
        %v843 = vld [vmem:[#allocation10 + $0x158] sm:$0xff]
        %v844 = vld [vmem:[#allocation10 + $0x160] sm:$0xff]
        %v845 = vld [vmem:[#allocation10 + $0x168] sm:$0xff]
        %v846 = vld [vmem:[#allocation10 + $0x170] sm:$0xff]
        %v847 = vld [vmem:[#allocation10 + $0x178] sm:$0xff]
        %v848 = vld [vmem:[#allocation10 + $0x180] sm:$0xff]
        %v849 = vld [vmem:[#allocation10 + $0x188] sm:$0xff]
        %v850 = vld [vmem:[#allocation10 + $0x190] sm:$0xff]
        %v851 = vld [vmem:[#allocation10 + $0x198] sm:$0xff]
        %v852 = vld [vmem:[#allocation10 + $0x1a0] sm:$0xff]
        %v853 = vld [vmem:[#allocation10 + $0x1a8] sm:$0xff]
        %v854 = vld [vmem:[#allocation10 + $0x1b0] sm:$0xff]
        %v855 = vld [vmem:[#allocation10 + $0x1b8] sm:$0xff]
        %v856 = vld [vmem:[#allocation10 + $0x1c0] sm:$0xff]
        %v857 = vld [vmem:[#allocation10 + $0x1c8] sm:$0xff]
        %v858 = vld [vmem:[#allocation10 + $0x1d0] sm:$0xff]
        %v859 = vld [vmem:[#allocation10 + $0x1d8] sm:$0xff]
        %v860 = vld [vmem:[#allocation10 + $0x1e0] sm:$0xff]
        %v861 = vld [vmem:[#allocation10 + $0x1e8] sm:$0xff]
        %v862 = vld [vmem:[#allocation10 + $0x1f0] sm:$0xff]
        %v863 = vld [vmem:[#allocation10 + $0x1f8] sm:$0xff]
        %v864 = vld [vmem:[%s3] sm:$0xf]
        %v865 = vld [vmem:[%s6] sm:$0xf]
        %v866 = vld [vmem:[%s9] sm:$0xf]
        %v867 = vld [vmem:[#allocation12] sm:$0xff]
        %v868 = vld [vmem:[#allocation12 + $0x8] sm:$0xff]
        %v869 = vld [vmem:[#allocation12 + $0x10] sm:$0xff]
        %v870 = vld [vmem:[#allocation12 + $0x18] sm:$0xff]
        %v871 = vld [vmem:[#allocation12 + $0x20] sm:$0xff]
        %v872 = vld [vmem:[#allocation12 + $0x28] sm:$0xff]
        %v873 = vld [vmem:[#allocation12 + $0x30] sm:$0xff]
        %v874 = vld [vmem:[#allocation12 + $0x38] sm:$0xff]
        %v875 = vld [vmem:[#allocation12 + $0x40] sm:$0xff]
        %v876 = vld [vmem:[#allocation12 + $0x48] sm:$0xff]
        %v877 = vld [vmem:[#allocation12 + $0x50] sm:$0xff]
        %v878 = vld [vmem:[#allocation12 + $0x58] sm:$0xff]
        %v879 = vld [vmem:[#allocation12 + $0x60] sm:$0xff]
        %v880 = vld [vmem:[#allocation12 + $0x68] sm:$0xff]
        %v881 = vld [vmem:[#allocation12 + $0x70] sm:$0xff]
        %v882 = vld [vmem:[#allocation12 + $0x78] sm:$0xff]
        %v883 = vld [vmem:[%s479] sm:$0xff]
        %v885 = vlaneseq
        %v886 = vshrl.u32 %v885, 7
        %v887 = vsub.s32 0, %v886
        %v888 = vrot.slane %v864, %v887
        %v889 = vlaneseq
        %v890 = vshrl.u32 %v889, 7
        %v891 = vsub.s32 1, %v890
        %v892 = vrot.slane %v864, %v891
        %v893 = vlaneseq
        %v894 = vshrl.u32 %v893, 7
        %v895 = vsub.s32 2, %v894
        %v896 = vrot.slane %v864, %v895
        %v897 = vlaneseq
        %v898 = vshrl.u32 %v897, 7
        %v899 = vsub.s32 3, %v898
        %v900 = vrot.slane %v864, %v899
        %905 = vmatprep.subr.mxu0 %v481
        %906 = vmatpush1.msra.mxu0 %v480
        %907 = vmatprep.subr.mxu0 %v485
        %908 = vmatpush1.msra.mxu0 %v484
        %909 = vmatprep.subr.mxu0 %v489
        %910 = vmatpush1.msra.mxu0 %v488
        %911 = vmatprep.subr.mxu0 %v493
        %912 = vmatpush1.msra.mxu0 %v492
        %913 = vmatprep.subr.mxu0 %v497
        %914 = vmatpush1.msra.mxu0 %v496
        %915 = vmatprep.subr.mxu0 %v501
        %916 = vmatpush1.msra.mxu0 %v500
        %917 = vmatprep.subr.mxu0 %v505
        %918 = vmatpush1.msra.mxu0 %v504
        %919 = vmatprep.subr.mxu0 %v509
        %920 = vmatpush1.msra.mxu0 %v508
        %921 = vmatprep.subr.mxu0 %v513
        %922 = vmatpush1.msra.mxu0 %v512
        %923 = vmatprep.subr.mxu0 %v517
        %924 = vmatpush1.msra.mxu0 %v516
        %925 = vmatprep.subr.mxu0 %v521
        %926 = vmatpush1.msra.mxu0 %v520
        %927 = vmatprep.subr.mxu0 %v525
        %928 = vmatpush1.msra.mxu0 %v524
        %929 = vmatprep.subr.mxu0 %v529
        %930 = vmatpush1.msra.mxu0 %v528
        %931 = vmatprep.subr.mxu0 %v533
        %932 = vmatpush1.msra.mxu0 %v532
        %933 = vmatprep.subr.mxu0 %v537
        %934 = vmatpush1.msra.mxu0 %v536
        %935 = vmatprep.subr.mxu0 %v541
        %936 = vmatpush1.msra.mxu0 %v540
        %937 = vmatprep.subr.mxu0 0.0
        %938 = vmatpush1.msra.mxu0 0.0
        %939 = vmatprep.subr.mxu0 0.0
        %940 = vmatpush1.msra.mxu0 0.0
        %941 = vmatprep.subr.mxu0 0.0
        %942 = vmatpush1.msra.mxu0 0.0
        %943 = vmatprep.subr.mxu0 0.0
        %944 = vmatpush1.msra.mxu0 0.0
        %945 = vmatprep.subr.mxu0 0.0
        %946 = vmatpush1.msra.mxu0 0.0
        %947 = vmatprep.subr.mxu0 0.0
        %948 = vmatpush1.msra.mxu0 0.0
        %949 = vmatprep.subr.mxu0 0.0
        %950 = vmatpush1.msra.mxu0 0.0
        %951 = vmatprep.subr.mxu0 0.0
        %952 = vmatpush1.msra.mxu0 0.0
        %953 = vmatprep.subr.mxu0 0.0
        %954 = vmatpush1.msra.mxu0 0.0
        %955 = vmatprep.subr.mxu0 0.0
        %956 = vmatpush1.msra.mxu0 0.0
        %957 = vmatprep.subr.mxu0 0.0
        %958 = vmatpush1.msra.mxu0 0.0
        %959 = vmatprep.subr.mxu0 0.0
        %960 = vmatpush1.msra.mxu0 0.0
        %961 = vmatprep.subr.mxu0 0.0
        %962 = vmatpush1.msra.mxu0 0.0
        %963 = vmatprep.subr.mxu0 0.0
        %964 = vmatpush1.msra.mxu0 0.0
        %965 = vmatprep.subr.mxu0 0.0
        %966 = vmatpush1.msra.mxu0 0.0
        %967 = vmatprep.subr.mxu0 0.0
        %968 = vmatpush1.msra.mxu0 0.0
        %969 = vmatprep.mubr.f32.mxu0 0.0
        %970 = vmatmul.mubr.f32.gmra.mrb[0].mxu0 %v883
        %v971 = vpop.f32.mrb[0].mxu0
        %v972 = vadd.f32 %v888, %v971
        %v973 = vpop.f32.mrb[0].mxu0
        %v974 = vadd.f32 %v892, %v973
        %975 = vdwg.mxu0
        %976 = vmatprep.subr.mxu0 %v483
        %977 = vmatpush1.msra.mxu0 %v482
        %978 = vmatprep.subr.mxu0 %v487
        %979 = vmatpush1.msra.mxu0 %v486
        %980 = vmatprep.subr.mxu0 %v491
        %981 = vmatpush1.msra.mxu0 %v490
        %982 = vmatprep.subr.mxu0 %v495
        %983 = vmatpush1.msra.mxu0 %v494
        %984 = vmatprep.subr.mxu0 %v499
        %985 = vmatpush1.msra.mxu0 %v498
        %986 = vmatprep.subr.mxu0 %v503
        %987 = vmatpush1.msra.mxu0 %v502
        %988 = vmatprep.subr.mxu0 %v507
        %989 = vmatpush1.msra.mxu0 %v506
        %990 = vmatprep.subr.mxu0 %v511
        %991 = vmatpush1.msra.mxu0 %v510
        %992 = vmatprep.subr.mxu0 %v515
        %993 = vmatpush1.msra.mxu0 %v514
        %994 = vmatprep.subr.mxu0 %v519
        %995 = vmatpush1.msra.mxu0 %v518
        %996 = vmatprep.subr.mxu0 %v523
        %997 = vmatpush1.msra.mxu0 %v522
        %998 = vmatprep.subr.mxu0 %v527
        %999 = vmatpush1.msra.mxu0 %v526
        %1000 = vmatprep.subr.mxu0 %v531
        %1001 = vmatpush1.msra.mxu0 %v530
        %1002 = vmatprep.subr.mxu0 %v535
        %1003 = vmatpush1.msra.mxu0 %v534
        %1004 = vmatprep.subr.mxu0 %v539
        %1005 = vmatpush1.msra.mxu0 %v538
        %1006 = vmatprep.subr.mxu0 %v543
        %1007 = vmatpush1.msra.mxu0 %v542
        %1008 = vmatprep.subr.mxu0 0.0
        %1009 = vmatpush1.msra.mxu0 0.0
        %1010 = vmatprep.subr.mxu0 0.0
        %1011 = vmatpush1.msra.mxu0 0.0
        %1012 = vmatprep.subr.mxu0 0.0
        %1013 = vmatpush1.msra.mxu0 0.0
        %1014 = vmatprep.subr.mxu0 0.0
        %1015 = vmatpush1.msra.mxu0 0.0
        %1016 = vmatprep.subr.mxu0 0.0
        %1017 = vmatpush1.msra.mxu0 0.0
        %1018 = vmatprep.subr.mxu0 0.0
        %1019 = vmatpush1.msra.mxu0 0.0
        %1020 = vmatprep.subr.mxu0 0.0
        %1021 = vmatpush1.msra.mxu0 0.0
        %1022 = vmatprep.subr.mxu0 0.0
        %1023 = vmatpush1.msra.mxu0 0.0
        %1024 = vmatprep.subr.mxu0 0.0
        %1025 = vmatpush1.msra.mxu0 0.0
        %1026 = vmatprep.subr.mxu0 0.0
        %1027 = vmatpush1.msra.mxu0 0.0
        %1028 = vmatprep.subr.mxu0 0.0
        %1029 = vmatpush1.msra.mxu0 0.0
        %1030 = vmatprep.subr.mxu0 0.0
        %1031 = vmatpush1.msra.mxu0 0.0
        %1032 = vmatprep.subr.mxu0 0.0
        %1033 = vmatpush1.msra.mxu0 0.0
        %1034 = vmatprep.subr.mxu0 0.0
        %1035 = vmatpush1.msra.mxu0 0.0
        %1036 = vmatprep.subr.mxu0 0.0
        %1037 = vmatpush1.msra.mxu0 0.0
        %1038 = vmatprep.subr.mxu0 0.0
        %1039 = vmatpush1.msra.mxu0 0.0
        %1040 = vmatprep.mubr.f32.mxu0 0.0
        %1041 = vmatmul.mubr.f32.gmra.mrb[0].mxu0 %v883
        %v1042 = vpop.f32.mrb[0].mxu0
        %v1043 = vadd.f32 %v896, %v1042
        %v1044 = vpop.f32.mrb[0].mxu0
        %v1045 = vadd.f32 %v900, %v1044
        %1046 = vdwg.mxu0
        %1047 = vmatprep.subr.mxu0 %v673
        %1048 = vmatpush1.msra.mxu0 %v672
        %1049 = vmatprep.subr.mxu0 %v677
        %1050 = vmatpush1.msra.mxu0 %v676
        %1051 = vmatprep.subr.mxu0 %v681
        %1052 = vmatpush1.msra.mxu0 %v680
        %1053 = vmatprep.subr.mxu0 %v685
        %1054 = vmatpush1.msra.mxu0 %v684
        %1055 = vmatprep.subr.mxu0 %v689
        %1056 = vmatpush1.msra.mxu0 %v688
        %1057 = vmatprep.subr.mxu0 %v693
        %1058 = vmatpush1.msra.mxu0 %v692
        %1059 = vmatprep.subr.mxu0 %v697
        %1060 = vmatpush1.msra.mxu0 %v696
        %1061 = vmatprep.subr.mxu0 %v701
        %1062 = vmatpush1.msra.mxu0 %v700
        %1063 = vmatprep.subr.mxu0 %v705
        %1064 = vmatpush1.msra.mxu0 %v704
        %1065 = vmatprep.subr.mxu0 %v709
        %1066 = vmatpush1.msra.mxu0 %v708
        %1067 = vmatprep.subr.mxu0 %v713
        %1068 = vmatpush1.msra.mxu0 %v712
        %1069 = vmatprep.subr.mxu0 %v717
        %1070 = vmatpush1.msra.mxu0 %v716
        %1071 = vmatprep.subr.mxu0 %v721
        %1072 = vmatpush1.msra.mxu0 %v720
        %1073 = vmatprep.subr.mxu0 %v725
        %1074 = vmatpush1.msra.mxu0 %v724
        %1075 = vmatprep.subr.mxu0 %v729
        %1076 = vmatpush1.msra.mxu0 %v728
        %1077 = vmatprep.subr.mxu0 %v733
        %1078 = vmatpush1.msra.mxu0 %v732
        %1079 = vmatprep.subr.mxu0 0.0
        %1080 = vmatpush1.msra.mxu0 0.0
        %1081 = vmatprep.subr.mxu0 0.0
        %1082 = vmatpush1.msra.mxu0 0.0
        %1083 = vmatprep.subr.mxu0 0.0
        %1084 = vmatpush1.msra.mxu0 0.0
        %1085 = vmatprep.subr.mxu0 0.0
        %1086 = vmatpush1.msra.mxu0 0.0
        %1087 = vmatprep.subr.mxu0 0.0
        %1088 = vmatpush1.msra.mxu0 0.0
        %1089 = vmatprep.subr.mxu0 0.0
        %1090 = vmatpush1.msra.mxu0 0.0
        %1091 = vmatprep.subr.mxu0 0.0
        %1092 = vmatpush1.msra.mxu0 0.0
        %1093 = vmatprep.subr.mxu0 0.0
        %1094 = vmatpush1.msra.mxu0 0.0
        %1095 = vmatprep.subr.mxu0 0.0
        %1096 = vmatpush1.msra.mxu0 0.0
        %1097 = vmatprep.subr.mxu0 0.0
        %1098 = vmatpush1.msra.mxu0 0.0
        %1099 = vmatprep.subr.mxu0 0.0
        %1100 = vmatpush1.msra.mxu0 0.0
        %1101 = vmatprep.subr.mxu0 0.0
        %1102 = vmatpush1.msra.mxu0 0.0
        %1103 = vmatprep.subr.mxu0 0.0
        %1104 = vmatpush1.msra.mxu0 0.0
        %1105 = vmatprep.subr.mxu0 0.0
        %1106 = vmatpush1.msra.mxu0 0.0
        %1107 = vmatprep.subr.mxu0 0.0
        %1108 = vmatpush1.msra.mxu0 0.0
        %1109 = vmatprep.subr.mxu0 0.0
        %1110 = vmatpush1.msra.mxu0 0.0
        %1111 = vmatprep.mubr.f32.mxu0 0.0
        %1112 = vmatmul.mubr.f32.gmra.mrb[0].mxu0 0.0
        %v1113 = vpop.f32.mrb[0].mxu0
        %v1114 = vadd.f32 0.0, %v1113
        %v1115 = vpop.f32.mrb[0].mxu0
        %v1116 = vadd.f32 0.0, %v1115
        %1117 = vdwg.mxu0
        %1118 = vmatprep.subr.mxu0 %v675
        %1119 = vmatpush1.msra.mxu0 %v674
        %1120 = vmatprep.subr.mxu0 %v679
        %1121 = vmatpush1.msra.mxu0 %v678
        %1122 = vmatprep.subr.mxu0 %v683
        %1123 = vmatpush1.msra.mxu0 %v682
        %1124 = vmatprep.subr.mxu0 %v687
        %1125 = vmatpush1.msra.mxu0 %v686
        %1126 = vmatprep.subr.mxu0 %v691
        %1127 = vmatpush1.msra.mxu0 %v690
        %1128 = vmatprep.subr.mxu0 %v695
        %1129 = vmatpush1.msra.mxu0 %v694
        %1130 = vmatprep.subr.mxu0 %v699
        %1131 = vmatpush1.msra.mxu0 %v698
        %1132 = vmatprep.subr.mxu0 %v703
        %1133 = vmatpush1.msra.mxu0 %v702
        %1134 = vmatprep.subr.mxu0 %v707
        %1135 = vmatpush1.msra.mxu0 %v706
        %1136 = vmatprep.subr.mxu0 %v711
        %1137 = vmatpush1.msra.mxu0 %v710
        %1138 = vmatprep.subr.mxu0 %v715
        %1139 = vmatpush1.msra.mxu0 %v714
        %1140 = vmatprep.subr.mxu0 %v719
        %1141 = vmatpush1.msra.mxu0 %v718
        %1142 = vmatprep.subr.mxu0 %v723
        %1143 = vmatpush1.msra.mxu0 %v722
        %1144 = vmatprep.subr.mxu0 %v727
        %1145 = vmatpush1.msra.mxu0 %v726
        %1146 = vmatprep.subr.mxu0 %v731
        %1147 = vmatpush1.msra.mxu0 %v730
        %1148 = vmatprep.subr.mxu0 %v735
        %1149 = vmatpush1.msra.mxu0 %v734
        %1150 = vmatprep.subr.mxu0 0.0
        %1151 = vmatpush1.msra.mxu0 0.0
        %1152 = vmatprep.subr.mxu0 0.0
        %1153 = vmatpush1.msra.mxu0 0.0
        %1154 = vmatprep.subr.mxu0 0.0
        %1155 = vmatpush1.msra.mxu0 0.0
        %1156 = vmatprep.subr.mxu0 0.0
        %1157 = vmatpush1.msra.mxu0 0.0
        %1158 = vmatprep.subr.mxu0 0.0
        %1159 = vmatpush1.msra.mxu0 0.0
        %1160 = vmatprep.subr.mxu0 0.0
        %1161 = vmatpush1.msra.mxu0 0.0
        %1162 = vmatprep.subr.mxu0 0.0
        %1163 = vmatpush1.msra.mxu0 0.0
        %1164 = vmatprep.subr.mxu0 0.0
        %1165 = vmatpush1.msra.mxu0 0.0
        %1166 = vmatprep.subr.mxu0 0.0
        %1167 = vmatpush1.msra.mxu0 0.0
        %1168 = vmatprep.subr.mxu0 0.0
        %1169 = vmatpush1.msra.mxu0 0.0
        %1170 = vmatprep.subr.mxu0 0.0
        %1171 = vmatpush1.msra.mxu0 0.0
        %1172 = vmatprep.subr.mxu0 0.0
        %1173 = vmatpush1.msra.mxu0 0.0
        %1174 = vmatprep.subr.mxu0 0.0
        %1175 = vmatpush1.msra.mxu0 0.0
        %1176 = vmatprep.subr.mxu0 0.0
        %1177 = vmatpush1.msra.mxu0 0.0
        %1178 = vmatprep.subr.mxu0 0.0
        %1179 = vmatpush1.msra.mxu0 0.0
        %1180 = vmatprep.subr.mxu0 0.0
        %1181 = vmatpush1.msra.mxu0 0.0
        %1182 = vmatprep.mubr.f32.mxu0 0.0
        %1183 = vmatmul.mubr.f32.gmra.mrb[0].mxu0 0.0
        %v1184 = vpop.f32.mrb[0].mxu0
        %v1185 = vadd.f32 0.0, %v1184
        %v1186 = vpop.f32.mrb[0].mxu0
        %v1187 = vadd.f32 0.0, %v1186
        %1188 = vdwg.mxu0
        %v1189 = vadd.f32 %v972, %v1114
        %v1190 = vadd.f32 %v974, %v1116
        %v1191 = vadd.f32 %v1043, %v1185
        %v1192 = vadd.f32 %v1045, %v1187
        %v1193 = vmul.f32 %v1189, 0.5
        %v1194 = vmul.f32 %v1190, 0.5
        %v1195 = vmul.f32 %v1191, 0.5
        %v1196 = vtanh.pop %v1193
        %v1197 = vtanh.pop %v1194
        %v1198 = vtanh.pop %v1195
        %v1199 = vadd.f32 %v1196, 1.0
        %v1200 = vadd.f32 %v1197, 1.0
        %v1201 = vadd.f32 %v1198, 1.0
        %v1202 = vmul.f32 %v1199, 0.5
        %v1203 = vmul.f32 %v1200, 0.5
        %v1204 = vmul.f32 %v1201, 0.5
        %v1205 = vtanh.pop %v1192
        %v1206 = vmul.f32 %v1203, 0.0
        %v1207 = vmul.f32 %v1202, %v1205
        %v1208 = vadd.f32 %v1206, %v1207
        %v1209 = vtanh.pop %v1208
        %v1210 = vmul.f32 %v1204, %v1209
        %v1211 = vmul.f32 %v1210, 0.5
        %v1212 = vtanh.pop %v1211
        %v1213 = vadd.f32 %v1212, 1.0
        %v1214 = vmul.f32 %v1213, 0.5
        %1215 = vmatprep.subr.mxu0 %v673
        %1216 = vmatpush1.msra.mxu0 %v672
        %1217 = vmatprep.subr.mxu0 %v677
        %1218 = vmatpush1.msra.mxu0 %v676
        %1219 = vmatprep.subr.mxu0 %v681
        %1220 = vmatpush1.msra.mxu0 %v680
        %1221 = vmatprep.subr.mxu0 %v685
        %1222 = vmatpush1.msra.mxu0 %v684
        %1223 = vmatprep.subr.mxu0 %v689
        %1224 = vmatpush1.msra.mxu0 %v688
        %1225 = vmatprep.subr.mxu0 %v693
        %1226 = vmatpush1.msra.mxu0 %v692
        %1227 = vmatprep.subr.mxu0 %v697
        %1228 = vmatpush1.msra.mxu0 %v696
        %1229 = vmatprep.subr.mxu0 %v701
        %1230 = vmatpush1.msra.mxu0 %v700
        %1231 = vmatprep.subr.mxu0 %v705
        %1232 = vmatpush1.msra.mxu0 %v704
        %1233 = vmatprep.subr.mxu0 %v709
        %1234 = vmatpush1.msra.mxu0 %v708
        %1235 = vmatprep.subr.mxu0 %v713
        %1236 = vmatpush1.msra.mxu0 %v712
        %1237 = vmatprep.subr.mxu0 %v717
        %1238 = vmatpush1.msra.mxu0 %v716
        %1239 = vmatprep.subr.mxu0 %v721
        %1240 = vmatpush1.msra.mxu0 %v720
        %1241 = vmatprep.subr.mxu0 %v725
        %1242 = vmatpush1.msra.mxu0 %v724
        %1243 = vmatprep.subr.mxu0 %v729
        %1244 = vmatpush1.msra.mxu0 %v728
        %1245 = vmatprep.subr.mxu0 %v733
        %1246 = vmatpush1.msra.mxu0 %v732
        %1247 = vmatprep.subr.mxu0 0.0
        %1248 = vmatpush1.msra.mxu0 0.0
        %1249 = vmatprep.subr.mxu0 0.0
        %1250 = vmatpush1.msra.mxu0 0.0
        %1251 = vmatprep.subr.mxu0 0.0
        %1252 = vmatpush1.msra.mxu0 0.0
        %1253 = vmatprep.subr.mxu0 0.0
        %1254 = vmatpush1.msra.mxu0 0.0
        %1255 = vmatprep.subr.mxu0 0.0
        %1256 = vmatpush1.msra.mxu0 0.0
        %1257 = vmatprep.subr.mxu0 0.0
        %1258 = vmatpush1.msra.mxu0 0.0
        %1259 = vmatprep.subr.mxu0 0.0
        %1260 = vmatpush1.msra.mxu0 0.0
        %1261 = vmatprep.subr.mxu0 0.0
        %1262 = vmatpush1.msra.mxu0 0.0
        %1263 = vmatprep.subr.mxu0 0.0
        %1264 = vmatpush1.msra.mxu0 0.0
        %1265 = vmatprep.subr.mxu0 0.0
        %1266 = vmatpush1.msra.mxu0 0.0
        %1267 = vmatprep.subr.mxu0 0.0
        %1268 = vmatpush1.msra.mxu0 0.0
        %1269 = vmatprep.subr.mxu0 0.0
        %1270 = vmatpush1.msra.mxu0 0.0
        %1271 = vmatprep.subr.mxu0 0.0
        %1272 = vmatpush1.msra.mxu0 0.0
        %1273 = vmatprep.subr.mxu0 0.0
        %1274 = vmatpush1.msra.mxu0 0.0
        %1275 = vmatprep.subr.mxu0 0.0
        %1276 = vmatpush1.msra.mxu0 0.0
        %1277 = vmatprep.subr.mxu0 0.0
        %1278 = vmatpush1.msra.mxu0 0.0
        %1279 = vmatprep.mubr.f32.mxu0 0.0
        %1280 = vmatmul.mubr.f32.gmra.mrb[0].mxu0 %v1210
        %v1281 = vpop.f32.mrb[0].mxu0
        %v1282 = vadd.f32 0.0, %v1281
        %v1283 = vpop.f32.mrb[0].mxu0
        %v1284 = vadd.f32 0.0, %v1283
        %1285 = vdwg.mxu0
        %1286 = vmatprep.subr.mxu0 %v675
        %1287 = vmatpush1.msra.mxu0 %v674
        %1288 = vmatprep.subr.mxu0 %v679
        %1289 = vmatpush1.msra.mxu0 %v678
        %1290 = vmatprep.subr.mxu0 %v683
        %1291 = vmatpush1.msra.mxu0 %v682
        %1292 = vmatprep.subr.mxu0 %v687
        %1293 = vmatpush1.msra.mxu0 %v686
        %1294 = vmatprep.subr.mxu0 %v691
        %1295 = vmatpush1.msra.mxu0 %v690
        %1296 = vmatprep.subr.mxu0 %v695
        %1297 = vmatpush1.msra.mxu0 %v694
        %1298 = vmatprep.subr.mxu0 %v699
        %1299 = vmatpush1.msra.mxu0 %v698
        %1300 = vmatprep.subr.mxu0 %v703
        %1301 = vmatpush1.msra.mxu0 %v702
        %1302 = vmatprep.subr.mxu0 %v707
        %1303 = vmatpush1.msra.mxu0 %v706
        %1304 = vmatprep.subr.mxu0 %v711
        %1305 = vmatpush1.msra.mxu0 %v710
        %1306 = vmatprep.subr.mxu0 %v715
        %1307 = vmatpush1.msra.mxu0 %v714
        %1308 = vmatprep.subr.mxu0 %v719
        %1309 = vmatpush1.msra.mxu0 %v718
        %1310 = vmatprep.subr.mxu0 %v723
        %1311 = vmatpush1.msra.mxu0 %v722
        %1312 = vmatprep.subr.mxu0 %v727
        %1313 = vmatpush1.msra.mxu0 %v726
        %1314 = vmatprep.subr.mxu0 %v731
        %1315 = vmatpush1.msra.mxu0 %v730
        %1316 = vmatprep.subr.mxu0 %v735
        %1317 = vmatpush1.msra.mxu0 %v734
        %1318 = vmatprep.subr.mxu0 0.0
        %1319 = vmatpush1.msra.mxu0 0.0
        %1320 = vmatprep.subr.mxu0 0.0
        %1321 = vmatpush1.msra.mxu0 0.0
        %1322 = vmatprep.subr.mxu0 0.0
        %1323 = vmatpush1.msra.mxu0 0.0
        %1324 = vmatprep.subr.mxu0 0.0
        %1325 = vmatpush1.msra.mxu0 0.0
        %1326 = vmatprep.subr.mxu0 0.0
        %1327 = vmatpush1.msra.mxu0 0.0
        %1328 = vmatprep.subr.mxu0 0.0
        %1329 = vmatpush1.msra.mxu0 0.0
        %1330 = vmatprep.subr.mxu0 0.0
        %1331 = vmatpush1.msra.mxu0 0.0
        %1332 = vmatprep.subr.mxu0 0.0
        %1333 = vmatpush1.msra.mxu0 0.0
        %1334 = vmatprep.subr.mxu0 0.0
        %1335 = vmatpush1.msra.mxu0 0.0
        %1336 = vmatprep.subr.mxu0 0.0
        %1337 = vmatpush1.msra.mxu0 0.0
        %1338 = vmatprep.subr.mxu0 0.0
        %1339 = vmatpush1.msra.mxu0 0.0
        %1340 = vmatprep.subr.mxu0 0.0
        %1341 = vmatpush1.msra.mxu0 0.0
        %1342 = vmatprep.subr.mxu0 0.0
        %1343 = vmatpush1.msra.mxu0 0.0
        %1344 = vmatprep.subr.mxu0 0.0
        %1345 = vmatpush1.msra.mxu0 0.0
        %1346 = vmatprep.subr.mxu0 0.0
        %1347 = vmatpush1.msra.mxu0 0.0
        %1348 = vmatprep.subr.mxu0 0.0
        %1349 = vmatpush1.msra.mxu0 0.0
        %1350 = vmatprep.mubr.f32.mxu0 0.0
        %1351 = vmatmul.mubr.f32.gmra.mrb[0].mxu0 %v1210
        %v1352 = vpop.f32.mrb[0].mxu0
        %v1353 = vadd.f32 0.0, %v1352
        %v1354 = vpop.f32.mrb[0].mxu0
        %v1355 = vadd.f32 0.0, %v1354
        %1356 = vdwg.mxu0
        %v1357 = vadd.f32 %v972, %v1282
        %v1358 = vadd.f32 %v974, %v1284
        %v1359 = vadd.f32 %v1043, %v1353
        %v1360 = vadd.f32 %v1045, %v1355
        %v1361 = vmul.f32 %v1357, 0.5
        %v1362 = vmul.f32 %v1358, 0.5
        %v1363 = vmul.f32 %v1359, 0.5
        %v1364 = vtanh.pop %v1361
        %v1365 = vtanh.pop %v1362
        %v1366 = vtanh.pop %v1363
        %v1367 = vadd.f32 %v1364, 1.0
        %v1368 = vadd.f32 %v1365, 1.0
        %v1369 = vadd.f32 %v1366, 1.0
        %v1370 = vmul.f32 %v1367, 0.5
        %v1371 = vmul.f32 %v1368, 0.5
        %v1372 = vmul.f32 %v1369, 0.5
        %v1373 = vtanh.pop %v1360
        %v1374 = vmul.f32 %v1371, %v1208
        %v1375 = vmul.f32 %v1370, %v1373
        %v1376 = vadd.f32 %v1374, %v1375
        %v1377 = vtanh.pop %v1376
        %v1378 = vmul.f32 %v1372, %v1377
        %v1379 = vmul.f32 %v1378, 0.5
        %v1380 = vtanh.pop %v1379
        %v1381 = vadd.f32 %v1380, 1.0
        %v1382 = vmul.f32 %v1381, 0.5
        %1383 = vmatprep.subr.mxu0 %v737
        %1384 = vmatpush1.msra.mxu0 %v736
        %1385 = vmatprep.subr.mxu0 %v741
        %1386 = vmatpush1.msra.mxu0 %v740
        %1387 = vmatprep.subr.mxu0 %v745
        %1388 = vmatpush1.msra.mxu0 %v744
        %1389 = vmatprep.subr.mxu0 %v749
        %1390 = vmatpush1.msra.mxu0 %v748
        %1391 = vmatprep.subr.mxu0 %v753
        %1392 = vmatpush1.msra.mxu0 %v752
        %1393 = vmatprep.subr.mxu0 %v757
        %1394 = vmatpush1.msra.mxu0 %v756
        %1395 = vmatprep.subr.mxu0 %v761
        %1396 = vmatpush1.msra.mxu0 %v760
        %1397 = vmatprep.subr.mxu0 %v765
        %1398 = vmatpush1.msra.mxu0 %v764
        %1399 = vmatprep.subr.mxu0 %v769
        %1400 = vmatpush1.msra.mxu0 %v768
        %1401 = vmatprep.subr.mxu0 %v773
        %1402 = vmatpush1.msra.mxu0 %v772
        %1403 = vmatprep.subr.mxu0 %v777
        %1404 = vmatpush1.msra.mxu0 %v776
        %1405 = vmatprep.subr.mxu0 %v781
        %1406 = vmatpush1.msra.mxu0 %v780
        %1407 = vmatprep.subr.mxu0 %v785
        %1408 = vmatpush1.msra.mxu0 %v784
        %1409 = vmatprep.subr.mxu0 %v789
        %1410 = vmatpush1.msra.mxu0 %v788
        %1411 = vmatprep.subr.mxu0 %v793
        %1412 = vmatpush1.msra.mxu0 %v792
        %1413 = vmatprep.subr.mxu0 %v797
        %1414 = vmatpush1.msra.mxu0 %v796
        %1415 = vmatprep.subr.mxu0 0.0
        %1416 = vmatpush1.msra.mxu0 0.0
        %1417 = vmatprep.subr.mxu0 0.0
        %1418 = vmatpush1.msra.mxu0 0.0
        %1419 = vmatprep.subr.mxu0 0.0
        %1420 = vmatpush1.msra.mxu0 0.0
        %1421 = vmatprep.subr.mxu0 0.0
        %1422 = vmatpush1.msra.mxu0 0.0
        %1423 = vmatprep.subr.mxu0 0.0
        %1424 = vmatpush1.msra.mxu0 0.0
        %1425 = vmatprep.subr.mxu0 0.0
        %1426 = vmatpush1.msra.mxu0 0.0
        %1427 = vmatprep.subr.mxu0 0.0
        %1428 = vmatpush1.msra.mxu0 0.0
        %1429 = vmatprep.subr.mxu0 0.0
        %1430 = vmatpush1.msra.mxu0 0.0
        %1431 = vmatprep.subr.mxu0 0.0
        %1432 = vmatpush1.msra.mxu0 0.0
        %1433 = vmatprep.subr.mxu0 0.0
        %1434 = vmatpush1.msra.mxu0 0.0
        %1435 = vmatprep.subr.mxu0 0.0
        %1436 = vmatpush1.msra.mxu0 0.0
        %1437 = vmatprep.subr.mxu0 0.0
        %1438 = vmatpush1.msra.mxu0 0.0
        %1439 = vmatprep.subr.mxu0 0.0
        %1440 = vmatpush1.msra.mxu0 0.0
        %1441 = vmatprep.subr.mxu0 0.0
        %1442 = vmatpush1.msra.mxu0 0.0
        %1443 = vmatprep.subr.mxu0 0.0
        %1444 = vmatpush1.msra.mxu0 0.0
        %1445 = vmatprep.subr.mxu0 0.0
        %1446 = vmatpush1.msra.mxu0 0.0
        %1447 = vmatprep.mubr.f32.mxu0 0.0
        %1448 = vmatmul.mubr.f32.gmra.mrb[0].mxu0 0.0
        %v1449 = vpop.f32.mrb[0].mxu0
        %v1450 = vadd.f32 0.0, %v1449
        %v1451 = vpop.f32.mrb[0].mxu0
        %v1452 = vadd.f32 0.0, %v1451
        %1453 = vdwg.mxu0
        %1454 = vmatprep.subr.mxu0 %v739
        %1455 = vmatpush1.msra.mxu0 %v738
        %1456 = vmatprep.subr.mxu0 %v743
        %1457 = vmatpush1.msra.mxu0 %v742
        %1458 = vmatprep.subr.mxu0 %v747
        %1459 = vmatpush1.msra.mxu0 %v746
        %1460 = vmatprep.subr.mxu0 %v751
        %1461 = vmatpush1.msra.mxu0 %v750
        %1462 = vmatprep.subr.mxu0 %v755
        %1463 = vmatpush1.msra.mxu0 %v754
        %1464 = vmatprep.subr.mxu0 %v759
        %1465 = vmatpush1.msra.mxu0 %v758
        %1466 = vmatprep.subr.mxu0 %v763
        %1467 = vmatpush1.msra.mxu0 %v762
        %1468 = vmatprep.subr.mxu0 %v767
        %1469 = vmatpush1.msra.mxu0 %v766
        %1470 = vmatprep.subr.mxu0 %v771
        %1471 = vmatpush1.msra.mxu0 %v770
        %1472 = vmatprep.subr.mxu0 %v775
        %1473 = vmatpush1.msra.mxu0 %v774
        %1474 = vmatprep.subr.mxu0 %v779
        %1475 = vmatpush1.msra.mxu0 %v778
        %1476 = vmatprep.subr.mxu0 %v783
        %1477 = vmatpush1.msra.mxu0 %v782
        %1478 = vmatprep.subr.mxu0 %v787
        %1479 = vmatpush1.msra.mxu0 %v786
        %1480 = vmatprep.subr.mxu0 %v791
        %1481 = vmatpush1.msra.mxu0 %v790
        %1482 = vmatprep.subr.mxu0 %v795
        %1483 = vmatpush1.msra.mxu0 %v794
        %1484 = vmatprep.subr.mxu0 %v799
        %1485 = vmatpush1.msra.mxu0 %v798
        %1486 = vmatprep.subr.mxu0 0.0
        %1487 = vmatpush1.msra.mxu0 0.0
        %1488 = vmatprep.subr.mxu0 0.0
        %1489 = vmatpush1.msra.mxu0 0.0
        %1490 = vmatprep.subr.mxu0 0.0
        %1491 = vmatpush1.msra.mxu0 0.0
        %1492 = vmatprep.subr.mxu0 0.0
        %1493 = vmatpush1.msra.mxu0 0.0
        %1494 = vmatprep.subr.mxu0 0.0
        %1495 = vmatpush1.msra.mxu0 0.0
        %1496 = vmatprep.subr.mxu0 0.0
        %1497 = vmatpush1.msra.mxu0 0.0
        %1498 = vmatprep.subr.mxu0 0.0
        %1499 = vmatpush1.msra.mxu0 0.0
        %1500 = vmatprep.subr.mxu0 0.0
        %1501 = vmatpush1.msra.mxu0 0.0
        %1502 = vmatprep.subr.mxu0 0.0
        %1503 = vmatpush1.msra.mxu0 0.0
        %1504 = vmatprep.subr.mxu0 0.0
        %1505 = vmatpush1.msra.mxu0 0.0
        %1506 = vmatprep.subr.mxu0 0.0
        %1507 = vmatpush1.msra.mxu0 0.0
        %1508 = vmatprep.subr.mxu0 0.0
        %1509 = vmatpush1.msra.mxu0 0.0
        %1510 = vmatprep.subr.mxu0 0.0
        %1511 = vmatpush1.msra.mxu0 0.0
        %1512 = vmatprep.subr.mxu0 0.0
        %1513 = vmatpush1.msra.mxu0 0.0
        %1514 = vmatprep.subr.mxu0 0.0
        %1515 = vmatpush1.msra.mxu0 0.0
        %1516 = vmatprep.subr.mxu0 0.0
        %1517 = vmatpush1.msra.mxu0 0.0
        %1518 = vmatprep.mubr.f32.mxu0 0.0
        %1519 = vmatmul.mubr.f32.gmra.mrb[0].mxu0 0.0
        %v1520 = vpop.f32.mrb[0].mxu0
        %v1521 = vadd.f32 0.0, %v1520
        %v1522 = vpop.f32.mrb[0].mxu0
        %v1523 = vadd.f32 0.0, %v1522
        %1524 = vdwg.mxu0
        %1525 = vmatprep.subr.mxu0 %v545
        %1526 = vmatpush1.msra.mxu0 %v544
        %1527 = vmatprep.subr.mxu0 %v549
        %1528 = vmatpush1.msra.mxu0 %v548
        %1529 = vmatprep.subr.mxu0 %v553
        %1530 = vmatpush1.msra.mxu0 %v552
        %1531 = vmatprep.subr.mxu0 %v557
        %1532 = vmatpush1.msra.mxu0 %v556
        %1533 = vmatprep.subr.mxu0 %v561
        %1534 = vmatpush1.msra.mxu0 %v560
        %1535 = vmatprep.subr.mxu0 %v565
        %1536 = vmatpush1.msra.mxu0 %v564
        %1537 = vmatprep.subr.mxu0 %v569
        %1538 = vmatpush1.msra.mxu0 %v568
        %1539 = vmatprep.subr.mxu0 %v573
        %1540 = vmatpush1.msra.mxu0 %v572
        %1541 = vmatprep.subr.mxu0 %v577
        %1542 = vmatpush1.msra.mxu0 %v576
        %1543 = vmatprep.subr.mxu0 %v581
        %1544 = vmatpush1.msra.mxu0 %v580
        %1545 = vmatprep.subr.mxu0 %v585
        %1546 = vmatpush1.msra.mxu0 %v584
        %1547 = vmatprep.subr.mxu0 %v589
        %1548 = vmatpush1.msra.mxu0 %v588
        %1549 = vmatprep.subr.mxu0 %v593
        %1550 = vmatpush1.msra.mxu0 %v592
        %1551 = vmatprep.subr.mxu0 %v597
        %1552 = vmatpush1.msra.mxu0 %v596
        %1553 = vmatprep.subr.mxu0 %v601
        %1554 = vmatpush1.msra.mxu0 %v600
        %1555 = vmatprep.subr.mxu0 %v605
        %1556 = vmatpush1.msra.mxu0 %v604
        %1557 = vmatprep.subr.mxu0 0.0
        %1558 = vmatpush1.msra.mxu0 0.0
        %1559 = vmatprep.subr.mxu0 0.0
        %1560 = vmatpush1.msra.mxu0 0.0
        %1561 = vmatprep.subr.mxu0 0.0
        %1562 = vmatpush1.msra.mxu0 0.0
        %1563 = vmatprep.subr.mxu0 0.0
        %1564 = vmatpush1.msra.mxu0 0.0
        %1565 = vmatprep.subr.mxu0 0.0
        %1566 = vmatpush1.msra.mxu0 0.0
        %1567 = vmatprep.subr.mxu0 0.0
        %1568 = vmatpush1.msra.mxu0 0.0
        %1569 = vmatprep.subr.mxu0 0.0
        %1570 = vmatpush1.msra.mxu0 0.0
        %1571 = vmatprep.subr.mxu0 0.0
        %1572 = vmatpush1.msra.mxu0 0.0
        %1573 = vmatprep.subr.mxu0 0.0
        %1574 = vmatpush1.msra.mxu0 0.0
        %1575 = vmatprep.subr.mxu0 0.0
        %1576 = vmatpush1.msra.mxu0 0.0
        %1577 = vmatprep.subr.mxu0 0.0
        %1578 = vmatpush1.msra.mxu0 0.0
        %1579 = vmatprep.subr.mxu0 0.0
        %1580 = vmatpush1.msra.mxu0 0.0
        %1581 = vmatprep.subr.mxu0 0.0
        %1582 = vmatpush1.msra.mxu0 0.0
        %1583 = vmatprep.subr.mxu0 0.0
        %1584 = vmatpush1.msra.mxu0 0.0
        %1585 = vmatprep.subr.mxu0 0.0
        %1586 = vmatpush1.msra.mxu0 0.0
        %1587 = vmatprep.subr.mxu0 0.0
        %1588 = vmatpush1.msra.mxu0 0.0
        %1589 = vmatprep.mubr.f32.mxu0 0.0
        %1590 = vmatmul.mubr.f32.gmra.mrb[0].mxu0 %v1214
        %v1591 = vpop.f32.mrb[0].mxu0
        %v1592 = vadd.f32 %v1450, %v1591
        %v1593 = vpop.f32.mrb[0].mxu0
        %v1594 = vadd.f32 %v1452, %v1593
        %1595 = vdwg.mxu0
        %1596 = vmatprep.subr.mxu0 %v547
        %1597 = vmatpush1.msra.mxu0 %v546
        %1598 = vmatprep.subr.mxu0 %v551
        %1599 = vmatpush1.msra.mxu0 %v550
        %1600 = vmatprep.subr.mxu0 %v555
        %1601 = vmatpush1.msra.mxu0 %v554
        %1602 = vmatprep.subr.mxu0 %v559
        %1603 = vmatpush1.msra.mxu0 %v558
        %1604 = vmatprep.subr.mxu0 %v563
        %1605 = vmatpush1.msra.mxu0 %v562
        %1606 = vmatprep.subr.mxu0 %v567
        %1607 = vmatpush1.msra.mxu0 %v566
        %1608 = vmatprep.subr.mxu0 %v571
        %1609 = vmatpush1.msra.mxu0 %v570
        %1610 = vmatprep.subr.mxu0 %v575
        %1611 = vmatpush1.msra.mxu0 %v574
        %1612 = vmatprep.subr.mxu0 %v579
        %1613 = vmatpush1.msra.mxu0 %v578
        %1614 = vmatprep.subr.mxu0 %v583
        %1615 = vmatpush1.msra.mxu0 %v582
        %1616 = vmatprep.subr.mxu0 %v587
        %1617 = vmatpush1.msra.mxu0 %v586
        %1618 = vmatprep.subr.mxu0 %v591
        %1619 = vmatpush1.msra.mxu0 %v590
        %1620 = vmatprep.subr.mxu0 %v595
        %1621 = vmatpush1.msra.mxu0 %v594
        %1622 = vmatprep.subr.mxu0 %v599
        %1623 = vmatpush1.msra.mxu0 %v598
        %1624 = vmatprep.subr.mxu0 %v603
        %1625 = vmatpush1.msra.mxu0 %v602
        %1626 = vmatprep.subr.mxu0 %v607
        %1627 = vmatpush1.msra.mxu0 %v606
        %1628 = vmatprep.subr.mxu0 0.0
        %1629 = vmatpush1.msra.mxu0 0.0
        %1630 = vmatprep.subr.mxu0 0.0
        %1631 = vmatpush1.msra.mxu0 0.0
        %1632 = vmatprep.subr.mxu0 0.0
        %1633 = vmatpush1.msra.mxu0 0.0
        %1634 = vmatprep.subr.mxu0 0.0
        %1635 = vmatpush1.msra.mxu0 0.0
        %1636 = vmatprep.subr.mxu0 0.0
        %1637 = vmatpush1.msra.mxu0 0.0
        %1638 = vmatprep.subr.mxu0 0.0
        %1639 = vmatpush1.msra.mxu0 0.0
        %1640 = vmatprep.subr.mxu0 0.0
        %1641 = vmatpush1.msra.mxu0 0.0
        %1642 = vmatprep.subr.mxu0 0.0
        %1643 = vmatpush1.msra.mxu0 0.0
        %1644 = vmatprep.subr.mxu0 0.0
        %1645 = vmatpush1.msra.mxu0 0.0
        %1646 = vmatprep.subr.mxu0 0.0
        %1647 = vmatpush1.msra.mxu0 0.0
        %1648 = vmatprep.subr.mxu0 0.0
        %1649 = vmatpush1.msra.mxu0 0.0
        %1650 = vmatprep.subr.mxu0 0.0
        %1651 = vmatpush1.msra.mxu0 0.0
        %1652 = vmatprep.subr.mxu0 0.0
        %1653 = vmatpush1.msra.mxu0 0.0
        %1654 = vmatprep.subr.mxu0 0.0
        %1655 = vmatpush1.msra.mxu0 0.0
        %1656 = vmatprep.subr.mxu0 0.0
        %1657 = vmatpush1.msra.mxu0 0.0
        %1658 = vmatprep.subr.mxu0 0.0
        %1659 = vmatpush1.msra.mxu0 0.0
        %1660 = vmatprep.mubr.f32.mxu0 0.0
        %1661 = vmatmul.mubr.f32.gmra.mrb[0].mxu0 %v1214
        %v1662 = vpop.f32.mrb[0].mxu0
        %v1663 = vadd.f32 %v1521, %v1662
        %v1664 = vpop.f32.mrb[0].mxu0
        %v1665 = vadd.f32 %v1523, %v1664
        %1666 = vdwg.mxu0
        %v1668 = vlaneseq
        %v1669 = vshrl.u32 %v1668, 7
        %v1670 = vsub.s32 0, %v1669
        %v1671 = vrot.slane %v865, %v1670
        %v1672 = vlaneseq
        %v1673 = vshrl.u32 %v1672, 7
        %v1674 = vsub.s32 1, %v1673
        %v1675 = vrot.slane %v865, %v1674
        %v1676 = vlaneseq
        %v1677 = vshrl.u32 %v1676, 7
        %v1678 = vsub.s32 2, %v1677
        %v1679 = vrot.slane %v865, %v1678
        %v1680 = vlaneseq
        %v1681 = vshrl.u32 %v1680, 7
        %v1682 = vsub.s32 3, %v1681
        %v1683 = vrot.slane %v865, %v1682
        %v1688 = vadd.f32 %v1592, %v1671
        %v1689 = vadd.f32 %v1594, %v1675
        %v1690 = vadd.f32 %v1663, %v1679
        %v1691 = vadd.f32 %v1665, %v1683
        %v1692 = vmul.f32 %v1688, 0.5
        %v1693 = vmul.f32 %v1689, 0.5
        %v1694 = vmul.f32 %v1690, 0.5
        %v1695 = vtanh.pop %v1692
        %v1696 = vtanh.pop %v1693
        %v1697 = vtanh.pop %v1694
        %v1698 = vadd.f32 %v1695, 1.0
        %v1699 = vadd.f32 %v1696, 1.0
        %v1700 = vadd.f32 %v1697, 1.0
        %v1701 = vmul.f32 %v1698, 0.5
        %v1702 = vmul.f32 %v1699, 0.5
        %v1703 = vmul.f32 %v1700, 0.5
        %v1704 = vtanh.pop %v1691
        %v1705 = vmul.f32 %v1702, 0.0
        %v1706 = vmul.f32 %v1701, %v1704
        %v1707 = vadd.f32 %v1705, %v1706
        %v1708 = vtanh.pop %v1707
        %v1709 = vmul.f32 %v1703, %v1708
        %v1710 = vmul.f32 %v1709, 0.5
        %v1711 = vtanh.pop %v1710
        %v1712 = vadd.f32 %v1711, 1.0
        %v1713 = vmul.f32 %v1712, 0.5
        %1714 = vmatprep.subr.mxu0 %v673
        %1715 = vmatpush1.msra.mxu0 %v672
        %1716 = vmatprep.subr.mxu0 %v677
        %1717 = vmatpush1.msra.mxu0 %v676
        %1718 = vmatprep.subr.mxu0 %v681
        %1719 = vmatpush1.msra.mxu0 %v680
        %1720 = vmatprep.subr.mxu0 %v685
        %1721 = vmatpush1.msra.mxu0 %v684
        %1722 = vmatprep.subr.mxu0 %v689
        %1723 = vmatpush1.msra.mxu0 %v688
        %1724 = vmatprep.subr.mxu0 %v693
        %1725 = vmatpush1.msra.mxu0 %v692
        %1726 = vmatprep.subr.mxu0 %v697
        %1727 = vmatpush1.msra.mxu0 %v696
        %1728 = vmatprep.subr.mxu0 %v701
        %1729 = vmatpush1.msra.mxu0 %v700
        %1730 = vmatprep.subr.mxu0 %v705
        %1731 = vmatpush1.msra.mxu0 %v704
        %1732 = vmatprep.subr.mxu0 %v709
        %1733 = vmatpush1.msra.mxu0 %v708
        %1734 = vmatprep.subr.mxu0 %v713
        %1735 = vmatpush1.msra.mxu0 %v712
        %1736 = vmatprep.subr.mxu0 %v717
        %1737 = vmatpush1.msra.mxu0 %v716
        %1738 = vmatprep.subr.mxu0 %v721
        %1739 = vmatpush1.msra.mxu0 %v720
        %1740 = vmatprep.subr.mxu0 %v725
        %1741 = vmatpush1.msra.mxu0 %v724
        %1742 = vmatprep.subr.mxu0 %v729
        %1743 = vmatpush1.msra.mxu0 %v728
        %1744 = vmatprep.subr.mxu0 %v733
        %1745 = vmatpush1.msra.mxu0 %v732
        %1746 = vmatprep.subr.mxu0 0.0
        %1747 = vmatpush1.msra.mxu0 0.0
        %1748 = vmatprep.subr.mxu0 0.0
        %1749 = vmatpush1.msra.mxu0 0.0
        %1750 = vmatprep.subr.mxu0 0.0
        %1751 = vmatpush1.msra.mxu0 0.0
        %1752 = vmatprep.subr.mxu0 0.0
        %1753 = vmatpush1.msra.mxu0 0.0
        %1754 = vmatprep.subr.mxu0 0.0
        %1755 = vmatpush1.msra.mxu0 0.0
        %1756 = vmatprep.subr.mxu0 0.0
        %1757 = vmatpush1.msra.mxu0 0.0
        %1758 = vmatprep.subr.mxu0 0.0
        %1759 = vmatpush1.msra.mxu0 0.0
        %1760 = vmatprep.subr.mxu0 0.0
        %1761 = vmatpush1.msra.mxu0 0.0
        %1762 = vmatprep.subr.mxu0 0.0
        %1763 = vmatpush1.msra.mxu0 0.0
        %1764 = vmatprep.subr.mxu0 0.0
        %1765 = vmatpush1.msra.mxu0 0.0
        %1766 = vmatprep.subr.mxu0 0.0
        %1767 = vmatpush1.msra.mxu0 0.0
        %1768 = vmatprep.subr.mxu0 0.0
        %1769 = vmatpush1.msra.mxu0 0.0
        %1770 = vmatprep.subr.mxu0 0.0
        %1771 = vmatpush1.msra.mxu0 0.0
        %1772 = vmatprep.subr.mxu0 0.0
        %1773 = vmatpush1.msra.mxu0 0.0
        %1774 = vmatprep.subr.mxu0 0.0
        %1775 = vmatpush1.msra.mxu0 0.0
        %1776 = vmatprep.subr.mxu0 0.0
        %1777 = vmatpush1.msra.mxu0 0.0
        %1778 = vmatprep.mubr.f32.mxu0 0.0
        %1779 = vmatmul.mubr.f32.gmra.mrb[0].mxu0 %v1378
        %v1780 = vpop.f32.mrb[0].mxu0
        %v1781 = vadd.f32 0.0, %v1780
        %v1782 = vpop.f32.mrb[0].mxu0
        %v1783 = vadd.f32 0.0, %v1782
        %1784 = vdwg.mxu0
        %1785 = vmatprep.subr.mxu0 %v675
        %1786 = vmatpush1.msra.mxu0 %v674
        %1787 = vmatprep.subr.mxu0 %v679
        %1788 = vmatpush1.msra.mxu0 %v678
        %1789 = vmatprep.subr.mxu0 %v683
        %1790 = vmatpush1.msra.mxu0 %v682
        %1791 = vmatprep.subr.mxu0 %v687
        %1792 = vmatpush1.msra.mxu0 %v686
        %1793 = vmatprep.subr.mxu0 %v691
        %1794 = vmatpush1.msra.mxu0 %v690
        %1795 = vmatprep.subr.mxu0 %v695
        %1796 = vmatpush1.msra.mxu0 %v694
        %1797 = vmatprep.subr.mxu0 %v699
        %1798 = vmatpush1.msra.mxu0 %v698
        %1799 = vmatprep.subr.mxu0 %v703
        %1800 = vmatpush1.msra.mxu0 %v702
        %1801 = vmatprep.subr.mxu0 %v707
        %1802 = vmatpush1.msra.mxu0 %v706
        %1803 = vmatprep.subr.mxu0 %v711
        %1804 = vmatpush1.msra.mxu0 %v710
        %1805 = vmatprep.subr.mxu0 %v715
        %1806 = vmatpush1.msra.mxu0 %v714
        %1807 = vmatprep.subr.mxu0 %v719
        %1808 = vmatpush1.msra.mxu0 %v718
        %1809 = vmatprep.subr.mxu0 %v723
        %1810 = vmatpush1.msra.mxu0 %v722
        %1811 = vmatprep.subr.mxu0 %v727
        %1812 = vmatpush1.msra.mxu0 %v726
        %1813 = vmatprep.subr.mxu0 %v731
        %1814 = vmatpush1.msra.mxu0 %v730
        %1815 = vmatprep.subr.mxu0 %v735
        %1816 = vmatpush1.msra.mxu0 %v734
        %1817 = vmatprep.subr.mxu0 0.0
        %1818 = vmatpush1.msra.mxu0 0.0
        %1819 = vmatprep.subr.mxu0 0.0
        %1820 = vmatpush1.msra.mxu0 0.0
        %1821 = vmatprep.subr.mxu0 0.0
        %1822 = vmatpush1.msra.mxu0 0.0
        %1823 = vmatprep.subr.mxu0 0.0
        %1824 = vmatpush1.msra.mxu0 0.0
        %1825 = vmatprep.subr.mxu0 0.0
        %1826 = vmatpush1.msra.mxu0 0.0
        %1827 = vmatprep.subr.mxu0 0.0
        %1828 = vmatpush1.msra.mxu0 0.0
        %1829 = vmatprep.subr.mxu0 0.0
        %1830 = vmatpush1.msra.mxu0 0.0
        %1831 = vmatprep.subr.mxu0 0.0
        %1832 = vmatpush1.msra.mxu0 0.0
        %1833 = vmatprep.subr.mxu0 0.0
        %1834 = vmatpush1.msra.mxu0 0.0
        %1835 = vmatprep.subr.mxu0 0.0
        %1836 = vmatpush1.msra.mxu0 0.0
        %1837 = vmatprep.subr.mxu0 0.0
        %1838 = vmatpush1.msra.mxu0 0.0
        %1839 = vmatprep.subr.mxu0 0.0
        %1840 = vmatpush1.msra.mxu0 0.0
        %1841 = vmatprep.subr.mxu0 0.0
        %1842 = vmatpush1.msra.mxu0 0.0
        %1843 = vmatprep.subr.mxu0 0.0
        %1844 = vmatpush1.msra.mxu0 0.0
        %1845 = vmatprep.subr.mxu0 0.0
        %1846 = vmatpush1.msra.mxu0 0.0
        %1847 = vmatprep.subr.mxu0 0.0
        %1848 = vmatpush1.msra.mxu0 0.0
        %1849 = vmatprep.mubr.f32.mxu0 0.0
        %1850 = vmatmul.mubr.f32.gmra.mrb[0].mxu0 %v1378
        %v1851 = vpop.f32.mrb[0].mxu0
        %v1852 = vadd.f32 0.0, %v1851
        %v1853 = vpop.f32.mrb[0].mxu0
        %v1854 = vadd.f32 0.0, %v1853
        %1855 = vdwg.mxu0
        %v1856 = vadd.f32 %v972, %v1781
        %v1857 = vadd.f32 %v974, %v1783
        %v1858 = vadd.f32 %v1043, %v1852
        %v1859 = vadd.f32 %v1045, %v1854
        %v1860 = vmul.f32 %v1856, 0.5
        %v1861 = vmul.f32 %v1857, 0.5
        %v1862 = vmul.f32 %v1858, 0.5
        %v1863 = vtanh.pop %v1860
        %v1864 = vtanh.pop %v1861
        %v1865 = vtanh.pop %v1862
        %v1866 = vadd.f32 %v1863, 1.0
        %v1867 = vadd.f32 %v1864, 1.0
        %v1868 = vadd.f32 %v1865, 1.0
        %v1869 = vmul.f32 %v1866, 0.5
        %v1870 = vmul.f32 %v1867, 0.5
        %v1871 = vmul.f32 %v1868, 0.5
        %v1872 = vtanh.pop %v1859
        %v1873 = vmul.f32 %v1870, %v1376
        %v1874 = vmul.f32 %v1869, %v1872
        %v1875 = vadd.f32 %v1873, %v1874
        %v1876 = vtanh.pop %v1875
        %v1877 = vmul.f32 %v1871, %v1876
        %v1878 = vmul.f32 %v1877, 0.5
        %v1879 = vtanh.pop %v1878
        %v1880 = vadd.f32 %v1879, 1.0
        %v1881 = vmul.f32 %v1880, 0.5
        %1882 = vmatprep.subr.mxu0 %v737
        %1883 = vmatpush1.msra.mxu0 %v736
        %1884 = vmatprep.subr.mxu0 %v741
        %1885 = vmatpush1.msra.mxu0 %v740
        %1886 = vmatprep.subr.mxu0 %v745
        %1887 = vmatpush1.msra.mxu0 %v744
        %1888 = vmatprep.subr.mxu0 %v749
        %1889 = vmatpush1.msra.mxu0 %v748
        %1890 = vmatprep.subr.mxu0 %v753
        %1891 = vmatpush1.msra.mxu0 %v752
        %1892 = vmatprep.subr.mxu0 %v757
        %1893 = vmatpush1.msra.mxu0 %v756
        %1894 = vmatprep.subr.mxu0 %v761
        %1895 = vmatpush1.msra.mxu0 %v760
        %1896 = vmatprep.subr.mxu0 %v765
        %1897 = vmatpush1.msra.mxu0 %v764
        %1898 = vmatprep.subr.mxu0 %v769
        %1899 = vmatpush1.msra.mxu0 %v768
        %1900 = vmatprep.subr.mxu0 %v773
        %1901 = vmatpush1.msra.mxu0 %v772
        %1902 = vmatprep.subr.mxu0 %v777
        %1903 = vmatpush1.msra.mxu0 %v776
        %1904 = vmatprep.subr.mxu0 %v781
        %1905 = vmatpush1.msra.mxu0 %v780
        %1906 = vmatprep.subr.mxu0 %v785
        %1907 = vmatpush1.msra.mxu0 %v784
        %1908 = vmatprep.subr.mxu0 %v789
        %1909 = vmatpush1.msra.mxu0 %v788
        %1910 = vmatprep.subr.mxu0 %v793
        %1911 = vmatpush1.msra.mxu0 %v792
        %1912 = vmatprep.subr.mxu0 %v797
        %1913 = vmatpush1.msra.mxu0 %v796
        %1914 = vmatprep.subr.mxu0 0.0
        %1915 = vmatpush1.msra.mxu0 0.0
        %1916 = vmatprep.subr.mxu0 0.0
        %1917 = vmatpush1.msra.mxu0 0.0
        %1918 = vmatprep.subr.mxu0 0.0
        %1919 = vmatpush1.msra.mxu0 0.0
        %1920 = vmatprep.subr.mxu0 0.0
        %1921 = vmatpush1.msra.mxu0 0.0
        %1922 = vmatprep.subr.mxu0 0.0
        %1923 = vmatpush1.msra.mxu0 0.0
        %1924 = vmatprep.subr.mxu0 0.0
        %1925 = vmatpush1.msra.mxu0 0.0
        %1926 = vmatprep.subr.mxu0 0.0
        %1927 = vmatpush1.msra.mxu0 0.0
        %1928 = vmatprep.subr.mxu0 0.0
        %1929 = vmatpush1.msra.mxu0 0.0
        %1930 = vmatprep.subr.mxu0 0.0
        %1931 = vmatpush1.msra.mxu0 0.0
        %1932 = vmatprep.subr.mxu0 0.0
        %1933 = vmatpush1.msra.mxu0 0.0
        %1934 = vmatprep.subr.mxu0 0.0
        %1935 = vmatpush1.msra.mxu0 0.0
        %1936 = vmatprep.subr.mxu0 0.0
        %1937 = vmatpush1.msra.mxu0 0.0
        %1938 = vmatprep.subr.mxu0 0.0
        %1939 = vmatpush1.msra.mxu0 0.0
        %1940 = vmatprep.subr.mxu0 0.0
        %1941 = vmatpush1.msra.mxu0 0.0
        %1942 = vmatprep.subr.mxu0 0.0
        %1943 = vmatpush1.msra.mxu0 0.0
        %1944 = vmatprep.subr.mxu0 0.0
        %1945 = vmatpush1.msra.mxu0 0.0
        %1946 = vmatprep.mubr.f32.mxu0 0.0
        %1947 = vmatmul.mubr.f32.gmra.mrb[0].mxu0 %v1709
        %v1948 = vpop.f32.mrb[0].mxu0
        %v1949 = vadd.f32 0.0, %v1948
        %v1950 = vpop.f32.mrb[0].mxu0
        %v1951 = vadd.f32 0.0, %v1950
        %1952 = vdwg.mxu0
        %1953 = vmatprep.subr.mxu0 %v739
        %1954 = vmatpush1.msra.mxu0 %v738
        %1955 = vmatprep.subr.mxu0 %v743
        %1956 = vmatpush1.msra.mxu0 %v742
        %1957 = vmatprep.subr.mxu0 %v747
        %1958 = vmatpush1.msra.mxu0 %v746
        %1959 = vmatprep.subr.mxu0 %v751
        %1960 = vmatpush1.msra.mxu0 %v750
        %1961 = vmatprep.subr.mxu0 %v755
        %1962 = vmatpush1.msra.mxu0 %v754
        %1963 = vmatprep.subr.mxu0 %v759
        %1964 = vmatpush1.msra.mxu0 %v758
        %1965 = vmatprep.subr.mxu0 %v763
        %1966 = vmatpush1.msra.mxu0 %v762
        %1967 = vmatprep.subr.mxu0 %v767
        %1968 = vmatpush1.msra.mxu0 %v766
        %1969 = vmatprep.subr.mxu0 %v771
        %1970 = vmatpush1.msra.mxu0 %v770
        %1971 = vmatprep.subr.mxu0 %v775
        %1972 = vmatpush1.msra.mxu0 %v774
        %1973 = vmatprep.subr.mxu0 %v779
        %1974 = vmatpush1.msra.mxu0 %v778
        %1975 = vmatprep.subr.mxu0 %v783
        %1976 = vmatpush1.msra.mxu0 %v782
        %1977 = vmatprep.subr.mxu0 %v787
        %1978 = vmatpush1.msra.mxu0 %v786
        %1979 = vmatprep.subr.mxu0 %v791
        %1980 = vmatpush1.msra.mxu0 %v790
        %1981 = vmatprep.subr.mxu0 %v795
        %1982 = vmatpush1.msra.mxu0 %v794
        %1983 = vmatprep.subr.mxu0 %v799
        %1984 = vmatpush1.msra.mxu0 %v798
        %1985 = vmatprep.subr.mxu0 0.0
        %1986 = vmatpush1.msra.mxu0 0.0
        %1987 = vmatprep.subr.mxu0 0.0
        %1988 = vmatpush1.msra.mxu0 0.0
        %1989 = vmatprep.subr.mxu0 0.0
        %1990 = vmatpush1.msra.mxu0 0.0
        %1991 = vmatprep.subr.mxu0 0.0
        %1992 = vmatpush1.msra.mxu0 0.0
        %1993 = vmatprep.subr.mxu0 0.0
        %1994 = vmatpush1.msra.mxu0 0.0
        %1995 = vmatprep.subr.mxu0 0.0
        %1996 = vmatpush1.msra.mxu0 0.0
        %1997 = vmatprep.subr.mxu0 0.0
        %1998 = vmatpush1.msra.mxu0 0.0
        %1999 = vmatprep.subr.mxu0 0.0
        %2000 = vmatpush1.msra.mxu0 0.0
        %2001 = vmatprep.subr.mxu0 0.0
        %2002 = vmatpush1.msra.mxu0 0.0
        %2003 = vmatprep.subr.mxu0 0.0
        %2004 = vmatpush1.msra.mxu0 0.0
        %2005 = vmatprep.subr.mxu0 0.0
        %2006 = vmatpush1.msra.mxu0 0.0
        %2007 = vmatprep.subr.mxu0 0.0
        %2008 = vmatpush1.msra.mxu0 0.0
        %2009 = vmatprep.subr.mxu0 0.0
        %2010 = vmatpush1.msra.mxu0 0.0
        %2011 = vmatprep.subr.mxu0 0.0
        %2012 = vmatpush1.msra.mxu0 0.0
        %2013 = vmatprep.subr.mxu0 0.0
        %2014 = vmatpush1.msra.mxu0 0.0
        %2015 = vmatprep.subr.mxu0 0.0
        %2016 = vmatpush1.msra.mxu0 0.0
        %2017 = vmatprep.mubr.f32.mxu0 0.0
        %2018 = vmatmul.mubr.f32.gmra.mrb[0].mxu0 %v1709
        %v2019 = vpop.f32.mrb[0].mxu0
        %v2020 = vadd.f32 0.0, %v2019
        %v2021 = vpop.f32.mrb[0].mxu0
        %v2022 = vadd.f32 0.0, %v2021
        %2023 = vdwg.mxu0
        %2024 = vmatprep.subr.mxu0 %v545
        %2025 = vmatpush1.msra.mxu0 %v544
        %2026 = vmatprep.subr.mxu0 %v549
        %2027 = vmatpush1.msra.mxu0 %v548
        %2028 = vmatprep.subr.mxu0 %v553
        %2029 = vmatpush1.msra.mxu0 %v552
        %2030 = vmatprep.subr.mxu0 %v557
        %2031 = vmatpush1.msra.mxu0 %v556
        %2032 = vmatprep.subr.mxu0 %v561
        %2033 = vmatpush1.msra.mxu0 %v560
        %2034 = vmatprep.subr.mxu0 %v565
        %2035 = vmatpush1.msra.mxu0 %v564
        %2036 = vmatprep.subr.mxu0 %v569
        %2037 = vmatpush1.msra.mxu0 %v568
        %2038 = vmatprep.subr.mxu0 %v573
        %2039 = vmatpush1.msra.mxu0 %v572
        %2040 = vmatprep.subr.mxu0 %v577
        %2041 = vmatpush1.msra.mxu0 %v576
        %2042 = vmatprep.subr.mxu0 %v581
        %2043 = vmatpush1.msra.mxu0 %v580
        %2044 = vmatprep.subr.mxu0 %v585
        %2045 = vmatpush1.msra.mxu0 %v584
        %2046 = vmatprep.subr.mxu0 %v589
        %2047 = vmatpush1.msra.mxu0 %v588
        %2048 = vmatprep.subr.mxu0 %v593
        %2049 = vmatpush1.msra.mxu0 %v592
        %2050 = vmatprep.subr.mxu0 %v597
        %2051 = vmatpush1.msra.mxu0 %v596
        %2052 = vmatprep.subr.mxu0 %v601
        %2053 = vmatpush1.msra.mxu0 %v600
        %2054 = vmatprep.subr.mxu0 %v605
        %2055 = vmatpush1.msra.mxu0 %v604
        %2056 = vmatprep.subr.mxu0 0.0
        %2057 = vmatpush1.msra.mxu0 0.0
        %2058 = vmatprep.subr.mxu0 0.0
        %2059 = vmatpush1.msra.mxu0 0.0
        %2060 = vmatprep.subr.mxu0 0.0
        %2061 = vmatpush1.msra.mxu0 0.0
        %2062 = vmatprep.subr.mxu0 0.0
        %2063 = vmatpush1.msra.mxu0 0.0
        %2064 = vmatprep.subr.mxu0 0.0
        %2065 = vmatpush1.msra.mxu0 0.0
        %2066 = vmatprep.subr.mxu0 0.0
        %2067 = vmatpush1.msra.mxu0 0.0
        %2068 = vmatprep.subr.mxu0 0.0
        %2069 = vmatpush1.msra.mxu0 0.0
        %2070 = vmatprep.subr.mxu0 0.0
        %2071 = vmatpush1.msra.mxu0 0.0
        %2072 = vmatprep.subr.mxu0 0.0
        %2073 = vmatpush1.msra.mxu0 0.0
        %2074 = vmatprep.subr.mxu0 0.0
        %2075 = vmatpush1.msra.mxu0 0.0
        %2076 = vmatprep.subr.mxu0 0.0
        %2077 = vmatpush1.msra.mxu0 0.0
        %2078 = vmatprep.subr.mxu0 0.0
        %2079 = vmatpush1.msra.mxu0 0.0
        %2080 = vmatprep.subr.mxu0 0.0
        %2081 = vmatpush1.msra.mxu0 0.0
        %2082 = vmatprep.subr.mxu0 0.0
        %2083 = vmatpush1.msra.mxu0 0.0
        %2084 = vmatprep.subr.mxu0 0.0
        %2085 = vmatpush1.msra.mxu0 0.0
        %2086 = vmatprep.subr.mxu0 0.0
        %2087 = vmatpush1.msra.mxu0 0.0
        %2088 = vmatprep.mubr.f32.mxu0 0.0
        %2089 = vmatmul.mubr.f32.gmra.mrb[0].mxu0 %v1382
        %v2090 = vpop.f32.mrb[0].mxu0
        %v2091 = vadd.f32 %v1949, %v2090
        %v2092 = vpop.f32.mrb[0].mxu0
        %v2093 = vadd.f32 %v1951, %v2092
        %2094 = vdwg.mxu0
        %2095 = vmatprep.subr.mxu0 %v547
        %2096 = vmatpush1.msra.mxu0 %v546
        %2097 = vmatprep.subr.mxu0 %v551
        %2098 = vmatpush1.msra.mxu0 %v550
        %2099 = vmatprep.subr.mxu0 %v555
        %2100 = vmatpush1.msra.mxu0 %v554
        %2101 = vmatprep.subr.mxu0 %v559
        %2102 = vmatpush1.msra.mxu0 %v558
        %2103 = vmatprep.subr.mxu0 %v563
        %2104 = vmatpush1.msra.mxu0 %v562
        %2105 = vmatprep.subr.mxu0 %v567
        %2106 = vmatpush1.msra.mxu0 %v566
        %2107 = vmatprep.subr.mxu0 %v571
        %2108 = vmatpush1.msra.mxu0 %v570
        %2109 = vmatprep.subr.mxu0 %v575
        %2110 = vmatpush1.msra.mxu0 %v574
        %2111 = vmatprep.subr.mxu0 %v579
        %2112 = vmatpush1.msra.mxu0 %v578
        %2113 = vmatprep.subr.mxu0 %v583
        %2114 = vmatpush1.msra.mxu0 %v582
        %2115 = vmatprep.subr.mxu0 %v587
        %2116 = vmatpush1.msra.mxu0 %v586
        %2117 = vmatprep.subr.mxu0 %v591
        %2118 = vmatpush1.msra.mxu0 %v590
        %2119 = vmatprep.subr.mxu0 %v595
        %2120 = vmatpush1.msra.mxu0 %v594
        %2121 = vmatprep.subr.mxu0 %v599
        %2122 = vmatpush1.msra.mxu0 %v598
        %2123 = vmatprep.subr.mxu0 %v603
        %2124 = vmatpush1.msra.mxu0 %v602
        %2125 = vmatprep.subr.mxu0 %v607
        %2126 = vmatpush1.msra.mxu0 %v606
        %2127 = vmatprep.subr.mxu0 0.0
        %2128 = vmatpush1.msra.mxu0 0.0
        %2129 = vmatprep.subr.mxu0 0.0
        %2130 = vmatpush1.msra.mxu0 0.0
        %2131 = vmatprep.subr.mxu0 0.0
        %2132 = vmatpush1.msra.mxu0 0.0
        %2133 = vmatprep.subr.mxu0 0.0
        %2134 = vmatpush1.msra.mxu0 0.0
        %2135 = vmatprep.subr.mxu0 0.0
        %2136 = vmatpush1.msra.mxu0 0.0
        %2137 = vmatprep.subr.mxu0 0.0
        %2138 = vmatpush1.msra.mxu0 0.0
        %2139 = vmatprep.subr.mxu0 0.0
        %2140 = vmatpush1.msra.mxu0 0.0
        %2141 = vmatprep.subr.mxu0 0.0
        %2142 = vmatpush1.msra.mxu0 0.0
        %2143 = vmatprep.subr.mxu0 0.0
        %2144 = vmatpush1.msra.mxu0 0.0
        %2145 = vmatprep.subr.mxu0 0.0
        %2146 = vmatpush1.msra.mxu0 0.0
        %2147 = vmatprep.subr.mxu0 0.0
        %2148 = vmatpush1.msra.mxu0 0.0
        %2149 = vmatprep.subr.mxu0 0.0
        %2150 = vmatpush1.msra.mxu0 0.0
        %2151 = vmatprep.subr.mxu0 0.0
        %2152 = vmatpush1.msra.mxu0 0.0
        %2153 = vmatprep.subr.mxu0 0.0
        %2154 = vmatpush1.msra.mxu0 0.0
        %2155 = vmatprep.subr.mxu0 0.0
        %2156 = vmatpush1.msra.mxu0 0.0
        %2157 = vmatprep.subr.mxu0 0.0
        %2158 = vmatpush1.msra.mxu0 0.0
        %2159 = vmatprep.mubr.f32.mxu0 0.0
        %2160 = vmatmul.mubr.f32.gmra.mrb[0].mxu0 %v1382
        %v2161 = vpop.f32.mrb[0].mxu0
        %v2162 = vadd.f32 %v2020, %v2161
        %v2163 = vpop.f32.mrb[0].mxu0
        %v2164 = vadd.f32 %v2022, %v2163
        %2165 = vdwg.mxu0
        %v2166 = vadd.f32 %v2091, %v1671
        %v2167 = vadd.f32 %v2093, %v1675
        %v2168 = vadd.f32 %v2162, %v1679
        %v2169 = vadd.f32 %v2164, %v1683
        %v2170 = vmul.f32 %v2166, 0.5
        %v2171 = vmul.f32 %v2167, 0.5
        %v2172 = vmul.f32 %v2168, 0.5
        %v2173 = vtanh.pop %v2170
        %v2174 = vtanh.pop %v2171
        %v2175 = vtanh.pop %v2172
        %v2176 = vadd.f32 %v2173, 1.0
        %v2177 = vadd.f32 %v2174, 1.0
        %v2178 = vadd.f32 %v2175, 1.0
        %v2179 = vmul.f32 %v2176, 0.5
        %v2180 = vmul.f32 %v2177, 0.5
        %v2181 = vmul.f32 %v2178, 0.5
        %v2182 = vtanh.pop %v2169
        %v2183 = vmul.f32 %v2180, %v1707
        %v2184 = vmul.f32 %v2179, %v2182
        %v2185 = vadd.f32 %v2183, %v2184
        %v2186 = vtanh.pop %v2185
        %v2187 = vmul.f32 %v2181, %v2186
        %v2188 = vmul.f32 %v2187, 0.5
        %v2189 = vtanh.pop %v2188
        %v2190 = vadd.f32 %v2189, 1.0
        %v2191 = vmul.f32 %v2190, 0.5
        %2192 = vmatprep.subr.mxu0 %v801
        %2193 = vmatpush1.msra.mxu0 %v800
        %2194 = vmatprep.subr.mxu0 %v805
        %2195 = vmatpush1.msra.mxu0 %v804
        %2196 = vmatprep.subr.mxu0 %v809
        %2197 = vmatpush1.msra.mxu0 %v808
        %2198 = vmatprep.subr.mxu0 %v813
        %2199 = vmatpush1.msra.mxu0 %v812
        %2200 = vmatprep.subr.mxu0 %v817
        %2201 = vmatpush1.msra.mxu0 %v816
        %2202 = vmatprep.subr.mxu0 %v821
        %2203 = vmatpush1.msra.mxu0 %v820
        %2204 = vmatprep.subr.mxu0 %v825
        %2205 = vmatpush1.msra.mxu0 %v824
        %2206 = vmatprep.subr.mxu0 %v829
        %2207 = vmatpush1.msra.mxu0 %v828
        %2208 = vmatprep.subr.mxu0 %v833
        %2209 = vmatpush1.msra.mxu0 %v832
        %2210 = vmatprep.subr.mxu0 %v837
        %2211 = vmatpush1.msra.mxu0 %v836
        %2212 = vmatprep.subr.mxu0 %v841
        %2213 = vmatpush1.msra.mxu0 %v840
        %2214 = vmatprep.subr.mxu0 %v845
        %2215 = vmatpush1.msra.mxu0 %v844
        %2216 = vmatprep.subr.mxu0 %v849
        %2217 = vmatpush1.msra.mxu0 %v848
        %2218 = vmatprep.subr.mxu0 %v853
        %2219 = vmatpush1.msra.mxu0 %v852
        %2220 = vmatprep.subr.mxu0 %v857
        %2221 = vmatpush1.msra.mxu0 %v856
        %2222 = vmatprep.subr.mxu0 %v861
        %2223 = vmatpush1.msra.mxu0 %v860
        %2224 = vmatprep.subr.mxu0 0.0
        %2225 = vmatpush1.msra.mxu0 0.0
        %2226 = vmatprep.subr.mxu0 0.0
        %2227 = vmatpush1.msra.mxu0 0.0
        %2228 = vmatprep.subr.mxu0 0.0
        %2229 = vmatpush1.msra.mxu0 0.0
        %2230 = vmatprep.subr.mxu0 0.0
        %2231 = vmatpush1.msra.mxu0 0.0
        %2232 = vmatprep.subr.mxu0 0.0
        %2233 = vmatpush1.msra.mxu0 0.0
        %2234 = vmatprep.subr.mxu0 0.0
        %2235 = vmatpush1.msra.mxu0 0.0
        %2236 = vmatprep.subr.mxu0 0.0
        %2237 = vmatpush1.msra.mxu0 0.0
        %2238 = vmatprep.subr.mxu0 0.0
        %2239 = vmatpush1.msra.mxu0 0.0
        %2240 = vmatprep.subr.mxu0 0.0
        %2241 = vmatpush1.msra.mxu0 0.0
        %2242 = vmatprep.subr.mxu0 0.0
        %2243 = vmatpush1.msra.mxu0 0.0
        %2244 = vmatprep.subr.mxu0 0.0
        %2245 = vmatpush1.msra.mxu0 0.0
        %2246 = vmatprep.subr.mxu0 0.0
        %2247 = vmatpush1.msra.mxu0 0.0
        %2248 = vmatprep.subr.mxu0 0.0
        %2249 = vmatpush1.msra.mxu0 0.0
        %2250 = vmatprep.subr.mxu0 0.0
        %2251 = vmatpush1.msra.mxu0 0.0
        %2252 = vmatprep.subr.mxu0 0.0
        %2253 = vmatpush1.msra.mxu0 0.0
        %2254 = vmatprep.subr.mxu0 0.0
        %2255 = vmatpush1.msra.mxu0 0.0
        %2256 = vmatprep.mubr.f32.mxu0 0.0
        %2257 = vmatmul.mubr.f32.gmra.mrb[0].mxu0 0.0
        %v2258 = vpop.f32.mrb[0].mxu0
        %v2259 = vadd.f32 0.0, %v2258
        %v2260 = vpop.f32.mrb[0].mxu0
        %v2261 = vadd.f32 0.0, %v2260
        %2262 = vdwg.mxu0
        %2263 = vmatprep.subr.mxu0 %v803
        %2264 = vmatpush1.msra.mxu0 %v802
        %2265 = vmatprep.subr.mxu0 %v807
        %2266 = vmatpush1.msra.mxu0 %v806
        %2267 = vmatprep.subr.mxu0 %v811
        %2268 = vmatpush1.msra.mxu0 %v810
        %2269 = vmatprep.subr.mxu0 %v815
        %2270 = vmatpush1.msra.mxu0 %v814
        %2271 = vmatprep.subr.mxu0 %v819
        %2272 = vmatpush1.msra.mxu0 %v818
        %2273 = vmatprep.subr.mxu0 %v823
        %2274 = vmatpush1.msra.mxu0 %v822
        %2275 = vmatprep.subr.mxu0 %v827
        %2276 = vmatpush1.msra.mxu0 %v826
        %2277 = vmatprep.subr.mxu0 %v831
        %2278 = vmatpush1.msra.mxu0 %v830
        %2279 = vmatprep.subr.mxu0 %v835
        %2280 = vmatpush1.msra.mxu0 %v834
        %2281 = vmatprep.subr.mxu0 %v839
        %2282 = vmatpush1.msra.mxu0 %v838
        %2283 = vmatprep.subr.mxu0 %v843
        %2284 = vmatpush1.msra.mxu0 %v842
        %2285 = vmatprep.subr.mxu0 %v847
        %2286 = vmatpush1.msra.mxu0 %v846
        %2287 = vmatprep.subr.mxu0 %v851
        %2288 = vmatpush1.msra.mxu0 %v850
        %2289 = vmatprep.subr.mxu0 %v855
        %2290 = vmatpush1.msra.mxu0 %v854
        %2291 = vmatprep.subr.mxu0 %v859
        %2292 = vmatpush1.msra.mxu0 %v858
        %2293 = vmatprep.subr.mxu0 %v863
        %2294 = vmatpush1.msra.mxu0 %v862
        %2295 = vmatprep.subr.mxu0 0.0
        %2296 = vmatpush1.msra.mxu0 0.0
        %2297 = vmatprep.subr.mxu0 0.0
        %2298 = vmatpush1.msra.mxu0 0.0
        %2299 = vmatprep.subr.mxu0 0.0
        %2300 = vmatpush1.msra.mxu0 0.0
        %2301 = vmatprep.subr.mxu0 0.0
        %2302 = vmatpush1.msra.mxu0 0.0
        %2303 = vmatprep.subr.mxu0 0.0
        %2304 = vmatpush1.msra.mxu0 0.0
        %2305 = vmatprep.subr.mxu0 0.0
        %2306 = vmatpush1.msra.mxu0 0.0
        %2307 = vmatprep.subr.mxu0 0.0
        %2308 = vmatpush1.msra.mxu0 0.0
        %2309 = vmatprep.subr.mxu0 0.0
        %2310 = vmatpush1.msra.mxu0 0.0
        %2311 = vmatprep.subr.mxu0 0.0
        %2312 = vmatpush1.msra.mxu0 0.0
        %2313 = vmatprep.subr.mxu0 0.0
        %2314 = vmatpush1.msra.mxu0 0.0
        %2315 = vmatprep.subr.mxu0 0.0
        %2316 = vmatpush1.msra.mxu0 0.0
        %2317 = vmatprep.subr.mxu0 0.0
        %2318 = vmatpush1.msra.mxu0 0.0
        %2319 = vmatprep.subr.mxu0 0.0
        %2320 = vmatpush1.msra.mxu0 0.0
        %2321 = vmatprep.subr.mxu0 0.0
        %2322 = vmatpush1.msra.mxu0 0.0
        %2323 = vmatprep.subr.mxu0 0.0
        %2324 = vmatpush1.msra.mxu0 0.0
        %2325 = vmatprep.subr.mxu0 0.0
        %2326 = vmatpush1.msra.mxu0 0.0
        %2327 = vmatprep.mubr.f32.mxu0 0.0
        %2328 = vmatmul.mubr.f32.gmra.mrb[0].mxu0 0.0
        %v2329 = vpop.f32.mrb[0].mxu0
        %v2330 = vadd.f32 0.0, %v2329
        %v2331 = vpop.f32.mrb[0].mxu0
        %v2332 = vadd.f32 0.0, %v2331
        %2333 = vdwg.mxu0
        %2334 = vmatprep.subr.mxu0 %v609
        %2335 = vmatpush1.msra.mxu0 %v608
        %2336 = vmatprep.subr.mxu0 %v613
        %2337 = vmatpush1.msra.mxu0 %v612
        %2338 = vmatprep.subr.mxu0 %v617
        %2339 = vmatpush1.msra.mxu0 %v616
        %2340 = vmatprep.subr.mxu0 %v621
        %2341 = vmatpush1.msra.mxu0 %v620
        %2342 = vmatprep.subr.mxu0 %v625
        %2343 = vmatpush1.msra.mxu0 %v624
        %2344 = vmatprep.subr.mxu0 %v629
        %2345 = vmatpush1.msra.mxu0 %v628
        %2346 = vmatprep.subr.mxu0 %v633
        %2347 = vmatpush1.msra.mxu0 %v632
        %2348 = vmatprep.subr.mxu0 %v637
        %2349 = vmatpush1.msra.mxu0 %v636
        %2350 = vmatprep.subr.mxu0 %v641
        %2351 = vmatpush1.msra.mxu0 %v640
        %2352 = vmatprep.subr.mxu0 %v645
        %2353 = vmatpush1.msra.mxu0 %v644
        %2354 = vmatprep.subr.mxu0 %v649
        %2355 = vmatpush1.msra.mxu0 %v648
        %2356 = vmatprep.subr.mxu0 %v653
        %2357 = vmatpush1.msra.mxu0 %v652
        %2358 = vmatprep.subr.mxu0 %v657
        %2359 = vmatpush1.msra.mxu0 %v656
        %2360 = vmatprep.subr.mxu0 %v661
        %2361 = vmatpush1.msra.mxu0 %v660
        %2362 = vmatprep.subr.mxu0 %v665
        %2363 = vmatpush1.msra.mxu0 %v664
        %2364 = vmatprep.subr.mxu0 %v669
        %2365 = vmatpush1.msra.mxu0 %v668
        %2366 = vmatprep.subr.mxu0 0.0
        %2367 = vmatpush1.msra.mxu0 0.0
        %2368 = vmatprep.subr.mxu0 0.0
        %2369 = vmatpush1.msra.mxu0 0.0
        %2370 = vmatprep.subr.mxu0 0.0
        %2371 = vmatpush1.msra.mxu0 0.0
        %2372 = vmatprep.subr.mxu0 0.0
        %2373 = vmatpush1.msra.mxu0 0.0
        %2374 = vmatprep.subr.mxu0 0.0
        %2375 = vmatpush1.msra.mxu0 0.0
        %2376 = vmatprep.subr.mxu0 0.0
        %2377 = vmatpush1.msra.mxu0 0.0
        %2378 = vmatprep.subr.mxu0 0.0
        %2379 = vmatpush1.msra.mxu0 0.0
        %2380 = vmatprep.subr.mxu0 0.0
        %2381 = vmatpush1.msra.mxu0 0.0
        %2382 = vmatprep.subr.mxu0 0.0
        %2383 = vmatpush1.msra.mxu0 0.0
        %2384 = vmatprep.subr.mxu0 0.0
        %2385 = vmatpush1.msra.mxu0 0.0
        %2386 = vmatprep.subr.mxu0 0.0
        %2387 = vmatpush1.msra.mxu0 0.0
        %2388 = vmatprep.subr.mxu0 0.0
        %2389 = vmatpush1.msra.mxu0 0.0
        %2390 = vmatprep.subr.mxu0 0.0
        %2391 = vmatpush1.msra.mxu0 0.0
        %2392 = vmatprep.subr.mxu0 0.0
        %2393 = vmatpush1.msra.mxu0 0.0
        %2394 = vmatprep.subr.mxu0 0.0
        %2395 = vmatpush1.msra.mxu0 0.0
        %2396 = vmatprep.subr.mxu0 0.0
        %2397 = vmatpush1.msra.mxu0 0.0
        %2398 = vmatprep.mubr.f32.mxu0 0.0
        %2399 = vmatmul.mubr.f32.gmra.mrb[0].mxu0 %v1713
        %v2400 = vpop.f32.mrb[0].mxu0
        %v2401 = vadd.f32 %v2259, %v2400
        %v2402 = vpop.f32.mrb[0].mxu0
        %v2403 = vadd.f32 %v2261, %v2402
        %2404 = vdwg.mxu0
        %2405 = vmatprep.subr.mxu0 %v611
        %2406 = vmatpush1.msra.mxu0 %v610
        %2407 = vmatprep.subr.mxu0 %v615
        %2408 = vmatpush1.msra.mxu0 %v614
        %2409 = vmatprep.subr.mxu0 %v619
        %2410 = vmatpush1.msra.mxu0 %v618
        %2411 = vmatprep.subr.mxu0 %v623
        %2412 = vmatpush1.msra.mxu0 %v622
        %2413 = vmatprep.subr.mxu0 %v627
        %2414 = vmatpush1.msra.mxu0 %v626
        %2415 = vmatprep.subr.mxu0 %v631
        %2416 = vmatpush1.msra.mxu0 %v630
        %2417 = vmatprep.subr.mxu0 %v635
        %2418 = vmatpush1.msra.mxu0 %v634
        %2419 = vmatprep.subr.mxu0 %v639
        %2420 = vmatpush1.msra.mxu0 %v638
        %2421 = vmatprep.subr.mxu0 %v643
        %2422 = vmatpush1.msra.mxu0 %v642
        %2423 = vmatprep.subr.mxu0 %v647
        %2424 = vmatpush1.msra.mxu0 %v646
        %2425 = vmatprep.subr.mxu0 %v651
        %2426 = vmatpush1.msra.mxu0 %v650
        %2427 = vmatprep.subr.mxu0 %v655
        %2428 = vmatpush1.msra.mxu0 %v654
        %2429 = vmatprep.subr.mxu0 %v659
        %2430 = vmatpush1.msra.mxu0 %v658
        %2431 = vmatprep.subr.mxu0 %v663
        %2432 = vmatpush1.msra.mxu0 %v662
        %2433 = vmatprep.subr.mxu0 %v667
        %2434 = vmatpush1.msra.mxu0 %v666
        %2435 = vmatprep.subr.mxu0 %v671
        %2436 = vmatpush1.msra.mxu0 %v670
        %2437 = vmatprep.subr.mxu0 0.0
        %2438 = vmatpush1.msra.mxu0 0.0
        %2439 = vmatprep.subr.mxu0 0.0
        %2440 = vmatpush1.msra.mxu0 0.0
        %2441 = vmatprep.subr.mxu0 0.0
        %2442 = vmatpush1.msra.mxu0 0.0
        %2443 = vmatprep.subr.mxu0 0.0
        %2444 = vmatpush1.msra.mxu0 0.0
        %2445 = vmatprep.subr.mxu0 0.0
        %2446 = vmatpush1.msra.mxu0 0.0
        %2447 = vmatprep.subr.mxu0 0.0
        %2448 = vmatpush1.msra.mxu0 0.0
        %2449 = vmatprep.subr.mxu0 0.0
        %2450 = vmatpush1.msra.mxu0 0.0
        %2451 = vmatprep.subr.mxu0 0.0
        %2452 = vmatpush1.msra.mxu0 0.0
        %2453 = vmatprep.subr.mxu0 0.0
        %2454 = vmatpush1.msra.mxu0 0.0
        %2455 = vmatprep.subr.mxu0 0.0
        %2456 = vmatpush1.msra.mxu0 0.0
        %2457 = vmatprep.subr.mxu0 0.0
        %2458 = vmatpush1.msra.mxu0 0.0
        %2459 = vmatprep.subr.mxu0 0.0
        %2460 = vmatpush1.msra.mxu0 0.0
        %2461 = vmatprep.subr.mxu0 0.0
        %2462 = vmatpush1.msra.mxu0 0.0
        %2463 = vmatprep.subr.mxu0 0.0
        %2464 = vmatpush1.msra.mxu0 0.0
        %2465 = vmatprep.subr.mxu0 0.0
        %2466 = vmatpush1.msra.mxu0 0.0
        %2467 = vmatprep.subr.mxu0 0.0
        %2468 = vmatpush1.msra.mxu0 0.0
        %2469 = vmatprep.mubr.f32.mxu0 0.0
        %2470 = vmatmul.mubr.f32.gmra.mrb[0].mxu0 %v1713
        %v2471 = vpop.f32.mrb[0].mxu0
        %v2472 = vadd.f32 %v2330, %v2471
        %v2473 = vpop.f32.mrb[0].mxu0
        %v2474 = vadd.f32 %v2332, %v2473
        %2475 = vdwg.mxu0
        %v2477 = vlaneseq
        %v2478 = vshrl.u32 %v2477, 7
        %v2479 = vsub.s32 0, %v2478
        %v2480 = vrot.slane %v866, %v2479
        %v2481 = vlaneseq
        %v2482 = vshrl.u32 %v2481, 7
        %v2483 = vsub.s32 1, %v2482
        %v2484 = vrot.slane %v866, %v2483
        %v2485 = vlaneseq
        %v2486 = vshrl.u32 %v2485, 7
        %v2487 = vsub.s32 2, %v2486
        %v2488 = vrot.slane %v866, %v2487
        %v2489 = vlaneseq
        %v2490 = vshrl.u32 %v2489, 7
        %v2491 = vsub.s32 3, %v2490
        %v2492 = vrot.slane %v866, %v2491
        %v2497 = vadd.f32 %v2401, %v2480
        %v2498 = vadd.f32 %v2403, %v2484
        %v2499 = vadd.f32 %v2472, %v2488
        %v2500 = vadd.f32 %v2474, %v2492
        %v2501 = vmul.f32 %v2497, 0.5
        %v2502 = vmul.f32 %v2498, 0.5
        %v2503 = vmul.f32 %v2499, 0.5
        %v2504 = vtanh.pop %v2501
        %v2505 = vtanh.pop %v2502
        %v2506 = vtanh.pop %v2503
        %v2507 = vadd.f32 %v2504, 1.0
        %v2508 = vadd.f32 %v2505, 1.0
        %v2509 = vadd.f32 %v2506, 1.0
        %v2510 = vmul.f32 %v2507, 0.5
        %v2511 = vmul.f32 %v2508, 0.5
        %v2512 = vmul.f32 %v2509, 0.5
        %v2513 = vtanh.pop %v2500
        %v2514 = vmul.f32 %v2511, 0.0
        %v2515 = vmul.f32 %v2510, %v2513
        %v2516 = vadd.f32 %v2514, %v2515
        %v2517 = vtanh.pop %v2516
        %v2518 = vmul.f32 %v2512, %v2517
        %2519 = vmatprep.subr.mxu0 0.0
        %2520 = vmatpush1.msra.mxu0 %v867
        %2521 = vmatprep.subr.mxu0 0.0
        %2522 = vmatpush1.msra.mxu0 %v868
        %2523 = vmatprep.subr.mxu0 0.0
        %2524 = vmatpush1.msra.mxu0 %v869
        %2525 = vmatprep.subr.mxu0 0.0
        %2526 = vmatpush1.msra.mxu0 %v870
        %2527 = vmatprep.subr.mxu0 0.0
        %2528 = vmatpush1.msra.mxu0 %v871
        %2529 = vmatprep.subr.mxu0 0.0
        %2530 = vmatpush1.msra.mxu0 %v872
        %2531 = vmatprep.subr.mxu0 0.0
        %2532 = vmatpush1.msra.mxu0 %v873
        %2533 = vmatprep.subr.mxu0 0.0
        %2534 = vmatpush1.msra.mxu0 %v874
        %2535 = vmatprep.subr.mxu0 0.0
        %2536 = vmatpush1.msra.mxu0 %v875
        %2537 = vmatprep.subr.mxu0 0.0
        %2538 = vmatpush1.msra.mxu0 %v876
        %2539 = vmatprep.subr.mxu0 0.0
        %2540 = vmatpush1.msra.mxu0 %v877
        %2541 = vmatprep.subr.mxu0 0.0
        %2542 = vmatpush1.msra.mxu0 %v878
        %2543 = vmatprep.subr.mxu0 0.0
        %2544 = vmatpush1.msra.mxu0 %v879
        %2545 = vmatprep.subr.mxu0 0.0
        %2546 = vmatpush1.msra.mxu0 %v880
        %2547 = vmatprep.subr.mxu0 0.0
        %2548 = vmatpush1.msra.mxu0 %v881
        %2549 = vmatprep.subr.mxu0 0.0
        %2550 = vmatpush1.msra.mxu0 %v882
        %2551 = vmatprep.subr.mxu0 0.0
        %2552 = vmatpush1.msra.mxu0 0.0
        %2553 = vmatprep.subr.mxu0 0.0
        %2554 = vmatpush1.msra.mxu0 0.0
        %2555 = vmatprep.subr.mxu0 0.0
        %2556 = vmatpush1.msra.mxu0 0.0
        %2557 = vmatprep.subr.mxu0 0.0
        %2558 = vmatpush1.msra.mxu0 0.0
        %2559 = vmatprep.subr.mxu0 0.0
        %2560 = vmatpush1.msra.mxu0 0.0
        %2561 = vmatprep.subr.mxu0 0.0
        %2562 = vmatpush1.msra.mxu0 0.0
        %2563 = vmatprep.subr.mxu0 0.0
        %2564 = vmatpush1.msra.mxu0 0.0
        %2565 = vmatprep.subr.mxu0 0.0
        %2566 = vmatpush1.msra.mxu0 0.0
        %2567 = vmatprep.subr.mxu0 0.0
        %2568 = vmatpush1.msra.mxu0 0.0
        %2569 = vmatprep.subr.mxu0 0.0
        %2570 = vmatpush1.msra.mxu0 0.0
        %2571 = vmatprep.subr.mxu0 0.0
        %2572 = vmatpush1.msra.mxu0 0.0
        %2573 = vmatprep.subr.mxu0 0.0
        %2574 = vmatpush1.msra.mxu0 0.0
        %2575 = vmatprep.subr.mxu0 0.0
        %2576 = vmatpush1.msra.mxu0 0.0
        %2577 = vmatprep.subr.mxu0 0.0
        %2578 = vmatpush1.msra.mxu0 0.0
        %2579 = vmatprep.subr.mxu0 0.0
        %2580 = vmatpush1.msra.mxu0 0.0
        %2581 = vmatprep.subr.mxu0 0.0
        %2582 = vmatpush1.msra.mxu0 0.0
        %2583 = vmatprep.mubr.f32.mxu0 0.0
        %2584 = vmatmul.mubr.f32.gmra.mrb[0].mxu0 %v2518
        %v2585 = vpop.f32.mrb[0].mxu0
        %v2586 = vadd.f32 0.0, %v2585
        %v2587 = vpop.f32.mrb[0].mxu0
        %2588 = vdwg.mxu0
        %2589 = vst [vmem:[%s475] sm:$0xff] %v2586
        %2590 = vmatprep.subr.mxu0 %v673
        %2591 = vmatpush1.msra.mxu0 %v672
        %2592 = vmatprep.subr.mxu0 %v677
        %2593 = vmatpush1.msra.mxu0 %v676
        %2594 = vmatprep.subr.mxu0 %v681
        %2595 = vmatpush1.msra.mxu0 %v680
        %2596 = vmatprep.subr.mxu0 %v685
        %2597 = vmatpush1.msra.mxu0 %v684
        %2598 = vmatprep.subr.mxu0 %v689
        %2599 = vmatpush1.msra.mxu0 %v688
        %2600 = vmatprep.subr.mxu0 %v693
        %2601 = vmatpush1.msra.mxu0 %v692
        %2602 = vmatprep.subr.mxu0 %v697
        %2603 = vmatpush1.msra.mxu0 %v696
        %2604 = vmatprep.subr.mxu0 %v701
        %2605 = vmatpush1.msra.mxu0 %v700
        %2606 = vmatprep.subr.mxu0 %v705
        %2607 = vmatpush1.msra.mxu0 %v704
        %2608 = vmatprep.subr.mxu0 %v709
        %2609 = vmatpush1.msra.mxu0 %v708
        %2610 = vmatprep.subr.mxu0 %v713
        %2611 = vmatpush1.msra.mxu0 %v712
        %2612 = vmatprep.subr.mxu0 %v717
        %2613 = vmatpush1.msra.mxu0 %v716
        %2614 = vmatprep.subr.mxu0 %v721
        %2615 = vmatpush1.msra.mxu0 %v720
        %2616 = vmatprep.subr.mxu0 %v725
        %2617 = vmatpush1.msra.mxu0 %v724
        %2618 = vmatprep.subr.mxu0 %v729
        %2619 = vmatpush1.msra.mxu0 %v728
        %2620 = vmatprep.subr.mxu0 %v733
        %2621 = vmatpush1.msra.mxu0 %v732
        %2622 = vmatprep.subr.mxu0 0.0
        %2623 = vmatpush1.msra.mxu0 0.0
        %2624 = vmatprep.subr.mxu0 0.0
        %2625 = vmatpush1.msra.mxu0 0.0
        %2626 = vmatprep.subr.mxu0 0.0
        %2627 = vmatpush1.msra.mxu0 0.0
        %2628 = vmatprep.subr.mxu0 0.0
        %2629 = vmatpush1.msra.mxu0 0.0
        %2630 = vmatprep.subr.mxu0 0.0
        %2631 = vmatpush1.msra.mxu0 0.0
        %2632 = vmatprep.subr.mxu0 0.0
        %2633 = vmatpush1.msra.mxu0 0.0
        %2634 = vmatprep.subr.mxu0 0.0
        %2635 = vmatpush1.msra.mxu0 0.0
        %2636 = vmatprep.subr.mxu0 0.0
        %2637 = vmatpush1.msra.mxu0 0.0
        %2638 = vmatprep.subr.mxu0 0.0
        %2639 = vmatpush1.msra.mxu0 0.0
        %2640 = vmatprep.subr.mxu0 0.0
        %2641 = vmatpush1.msra.mxu0 0.0
        %2642 = vmatprep.subr.mxu0 0.0
        %2643 = vmatpush1.msra.mxu0 0.0
        %2644 = vmatprep.subr.mxu0 0.0
        %2645 = vmatpush1.msra.mxu0 0.0
        %2646 = vmatprep.subr.mxu0 0.0
        %2647 = vmatpush1.msra.mxu0 0.0
        %2648 = vmatprep.subr.mxu0 0.0
        %2649 = vmatpush1.msra.mxu0 0.0
        %2650 = vmatprep.subr.mxu0 0.0
        %2651 = vmatpush1.msra.mxu0 0.0
        %2652 = vmatprep.subr.mxu0 0.0
        %2653 = vmatpush1.msra.mxu0 0.0
        %2654 = vmatprep.mubr.f32.mxu0 0.0
        %2655 = vmatmul.mubr.f32.gmra.mrb[0].mxu0 %v1877
        %v2656 = vpop.f32.mrb[0].mxu0
        %v2657 = vadd.f32 0.0, %v2656
        %v2658 = vpop.f32.mrb[0].mxu0
        %v2659 = vadd.f32 0.0, %v2658
        %2660 = vdwg.mxu0
        %2661 = vmatprep.subr.mxu0 %v675
        %2662 = vmatpush1.msra.mxu0 %v674
        %2663 = vmatprep.subr.mxu0 %v679
        %2664 = vmatpush1.msra.mxu0 %v678
        %2665 = vmatprep.subr.mxu0 %v683
        %2666 = vmatpush1.msra.mxu0 %v682
        %2667 = vmatprep.subr.mxu0 %v687
        %2668 = vmatpush1.msra.mxu0 %v686
        %2669 = vmatprep.subr.mxu0 %v691
        %2670 = vmatpush1.msra.mxu0 %v690
        %2671 = vmatprep.subr.mxu0 %v695
        %2672 = vmatpush1.msra.mxu0 %v694
        %2673 = vmatprep.subr.mxu0 %v699
        %2674 = vmatpush1.msra.mxu0 %v698
        %2675 = vmatprep.subr.mxu0 %v703
        %2676 = vmatpush1.msra.mxu0 %v702
        %2677 = vmatprep.subr.mxu0 %v707
        %2678 = vmatpush1.msra.mxu0 %v706
        %2679 = vmatprep.subr.mxu0 %v711
        %2680 = vmatpush1.msra.mxu0 %v710
        %2681 = vmatprep.subr.mxu0 %v715
        %2682 = vmatpush1.msra.mxu0 %v714
        %2683 = vmatprep.subr.mxu0 %v719
        %2684 = vmatpush1.msra.mxu0 %v718
        %2685 = vmatprep.subr.mxu0 %v723
        %2686 = vmatpush1.msra.mxu0 %v722
        %2687 = vmatprep.subr.mxu0 %v727
        %2688 = vmatpush1.msra.mxu0 %v726
        %2689 = vmatprep.subr.mxu0 %v731
        %2690 = vmatpush1.msra.mxu0 %v730
        %2691 = vmatprep.subr.mxu0 %v735
        %2692 = vmatpush1.msra.mxu0 %v734
        %2693 = vmatprep.subr.mxu0 0.0
        %2694 = vmatpush1.msra.mxu0 0.0
        %2695 = vmatprep.subr.mxu0 0.0
        %2696 = vmatpush1.msra.mxu0 0.0
        %2697 = vmatprep.subr.mxu0 0.0
        %2698 = vmatpush1.msra.mxu0 0.0
        %2699 = vmatprep.subr.mxu0 0.0
        %2700 = vmatpush1.msra.mxu0 0.0
        %2701 = vmatprep.subr.mxu0 0.0
        %2702 = vmatpush1.msra.mxu0 0.0
        %2703 = vmatprep.subr.mxu0 0.0
        %2704 = vmatpush1.msra.mxu0 0.0
        %2705 = vmatprep.subr.mxu0 0.0
        %2706 = vmatpush1.msra.mxu0 0.0
        %2707 = vmatprep.subr.mxu0 0.0
        %2708 = vmatpush1.msra.mxu0 0.0
        %2709 = vmatprep.subr.mxu0 0.0
        %2710 = vmatpush1.msra.mxu0 0.0
        %2711 = vmatprep.subr.mxu0 0.0
        %2712 = vmatpush1.msra.mxu0 0.0
        %2713 = vmatprep.subr.mxu0 0.0
        %2714 = vmatpush1.msra.mxu0 0.0
        %2715 = vmatprep.subr.mxu0 0.0
        %2716 = vmatpush1.msra.mxu0 0.0
        %2717 = vmatprep.subr.mxu0 0.0
        %2718 = vmatpush1.msra.mxu0 0.0
        %2719 = vmatprep.subr.mxu0 0.0
        %2720 = vmatpush1.msra.mxu0 0.0
        %2721 = vmatprep.subr.mxu0 0.0
        %2722 = vmatpush1.msra.mxu0 0.0
        %2723 = vmatprep.subr.mxu0 0.0
        %2724 = vmatpush1.msra.mxu0 0.0
        %2725 = vmatprep.mubr.f32.mxu0 0.0
        %2726 = vmatmul.mubr.f32.gmra.mrb[0].mxu0 %v1877
        %v2727 = vpop.f32.mrb[0].mxu0
        %v2728 = vadd.f32 0.0, %v2727
        %v2729 = vpop.f32.mrb[0].mxu0
        %v2730 = vadd.f32 0.0, %v2729
        %2731 = vdwg.mxu0
        %v2732 = vadd.f32 %v972, %v2657
        %v2733 = vadd.f32 %v974, %v2659
        %v2734 = vadd.f32 %v1043, %v2728
        %v2735 = vadd.f32 %v1045, %v2730
        %v2736 = vmul.f32 %v2732, 0.5
        %v2737 = vmul.f32 %v2733, 0.5
        %v2738 = vmul.f32 %v2734, 0.5
        %v2739 = vtanh.pop %v2736
        %v2740 = vtanh.pop %v2737
        %v2741 = vtanh.pop %v2738
        %v2742 = vadd.f32 %v2739, 1.0
        %v2743 = vadd.f32 %v2740, 1.0
        %v2744 = vadd.f32 %v2741, 1.0
        %v2745 = vmul.f32 %v2742, 0.5
        %v2746 = vmul.f32 %v2743, 0.5
        %v2747 = vmul.f32 %v2744, 0.5
        %v2748 = vtanh.pop %v2735
        %v2749 = vmul.f32 %v2746, %v1875
        %v2750 = vmul.f32 %v2745, %v2748
        %v2751 = vadd.f32 %v2749, %v2750
        %v2752 = vtanh.pop %v2751
        %v2753 = vmul.f32 %v2747, %v2752
        %v2754 = vmul.f32 %v2753, 0.5
        %v2755 = vtanh.pop %v2754
        %v2756 = vadd.f32 %v2755, 1.0
        %v2757 = vmul.f32 %v2756, 0.5
        %2758 = vmatprep.subr.mxu0 %v737
        %2759 = vmatpush1.msra.mxu0 %v736
        %2760 = vmatprep.subr.mxu0 %v741
        %2761 = vmatpush1.msra.mxu0 %v740
        %2762 = vmatprep.subr.mxu0 %v745
        %2763 = vmatpush1.msra.mxu0 %v744
        %2764 = vmatprep.subr.mxu0 %v749
        %2765 = vmatpush1.msra.mxu0 %v748
        %2766 = vmatprep.subr.mxu0 %v753
        %2767 = vmatpush1.msra.mxu0 %v752
        %2768 = vmatprep.subr.mxu0 %v757
        %2769 = vmatpush1.msra.mxu0 %v756
        %2770 = vmatprep.subr.mxu0 %v761
        %2771 = vmatpush1.msra.mxu0 %v760
        %2772 = vmatprep.subr.mxu0 %v765
        %2773 = vmatpush1.msra.mxu0 %v764
        %2774 = vmatprep.subr.mxu0 %v769
        %2775 = vmatpush1.msra.mxu0 %v768
        %2776 = vmatprep.subr.mxu0 %v773
        %2777 = vmatpush1.msra.mxu0 %v772
        %2778 = vmatprep.subr.mxu0 %v777
        %2779 = vmatpush1.msra.mxu0 %v776
        %2780 = vmatprep.subr.mxu0 %v781
        %2781 = vmatpush1.msra.mxu0 %v780
        %2782 = vmatprep.subr.mxu0 %v785
        %2783 = vmatpush1.msra.mxu0 %v784
        %2784 = vmatprep.subr.mxu0 %v789
        %2785 = vmatpush1.msra.mxu0 %v788
        %2786 = vmatprep.subr.mxu0 %v793
        %2787 = vmatpush1.msra.mxu0 %v792
        %2788 = vmatprep.subr.mxu0 %v797
        %2789 = vmatpush1.msra.mxu0 %v796
        %2790 = vmatprep.subr.mxu0 0.0
        %2791 = vmatpush1.msra.mxu0 0.0
        %2792 = vmatprep.subr.mxu0 0.0
        %2793 = vmatpush1.msra.mxu0 0.0
        %2794 = vmatprep.subr.mxu0 0.0
        %2795 = vmatpush1.msra.mxu0 0.0
        %2796 = vmatprep.subr.mxu0 0.0
        %2797 = vmatpush1.msra.mxu0 0.0
        %2798 = vmatprep.subr.mxu0 0.0
        %2799 = vmatpush1.msra.mxu0 0.0
        %2800 = vmatprep.subr.mxu0 0.0
        %2801 = vmatpush1.msra.mxu0 0.0
        %2802 = vmatprep.subr.mxu0 0.0
        %2803 = vmatpush1.msra.mxu0 0.0
        %2804 = vmatprep.subr.mxu0 0.0
        %2805 = vmatpush1.msra.mxu0 0.0
        %2806 = vmatprep.subr.mxu0 0.0
        %2807 = vmatpush1.msra.mxu0 0.0
        %2808 = vmatprep.subr.mxu0 0.0
        %2809 = vmatpush1.msra.mxu0 0.0
        %2810 = vmatprep.subr.mxu0 0.0
        %2811 = vmatpush1.msra.mxu0 0.0
        %2812 = vmatprep.subr.mxu0 0.0
        %2813 = vmatpush1.msra.mxu0 0.0
        %2814 = vmatprep.subr.mxu0 0.0
        %2815 = vmatpush1.msra.mxu0 0.0
        %2816 = vmatprep.subr.mxu0 0.0
        %2817 = vmatpush1.msra.mxu0 0.0
        %2818 = vmatprep.subr.mxu0 0.0
        %2819 = vmatpush1.msra.mxu0 0.0
        %2820 = vmatprep.subr.mxu0 0.0
        %2821 = vmatpush1.msra.mxu0 0.0
        %2822 = vmatprep.mubr.f32.mxu0 0.0
        %2823 = vmatmul.mubr.f32.gmra.mrb[0].mxu0 %v2187
        %v2824 = vpop.f32.mrb[0].mxu0
        %v2825 = vadd.f32 0.0, %v2824
        %v2826 = vpop.f32.mrb[0].mxu0
        %v2827 = vadd.f32 0.0, %v2826
        %2828 = vdwg.mxu0
        %2829 = vmatprep.subr.mxu0 %v739
        %2830 = vmatpush1.msra.mxu0 %v738
        %2831 = vmatprep.subr.mxu0 %v743
        %2832 = vmatpush1.msra.mxu0 %v742
        %2833 = vmatprep.subr.mxu0 %v747
        %2834 = vmatpush1.msra.mxu0 %v746
        %2835 = vmatprep.subr.mxu0 %v751
        %2836 = vmatpush1.msra.mxu0 %v750
        %2837 = vmatprep.subr.mxu0 %v755
        %2838 = vmatpush1.msra.mxu0 %v754
        %2839 = vmatprep.subr.mxu0 %v759
        %2840 = vmatpush1.msra.mxu0 %v758
        %2841 = vmatprep.subr.mxu0 %v763
        %2842 = vmatpush1.msra.mxu0 %v762
        %2843 = vmatprep.subr.mxu0 %v767
        %2844 = vmatpush1.msra.mxu0 %v766
        %2845 = vmatprep.subr.mxu0 %v771
        %2846 = vmatpush1.msra.mxu0 %v770
        %2847 = vmatprep.subr.mxu0 %v775
        %2848 = vmatpush1.msra.mxu0 %v774
        %2849 = vmatprep.subr.mxu0 %v779
        %2850 = vmatpush1.msra.mxu0 %v778
        %2851 = vmatprep.subr.mxu0 %v783
        %2852 = vmatpush1.msra.mxu0 %v782
        %2853 = vmatprep.subr.mxu0 %v787
        %2854 = vmatpush1.msra.mxu0 %v786
        %2855 = vmatprep.subr.mxu0 %v791
        %2856 = vmatpush1.msra.mxu0 %v790
        %2857 = vmatprep.subr.mxu0 %v795
        %2858 = vmatpush1.msra.mxu0 %v794
        %2859 = vmatprep.subr.mxu0 %v799
        %2860 = vmatpush1.msra.mxu0 %v798
        %2861 = vmatprep.subr.mxu0 0.0
        %2862 = vmatpush1.msra.mxu0 0.0
        %2863 = vmatprep.subr.mxu0 0.0
        %2864 = vmatpush1.msra.mxu0 0.0
        %2865 = vmatprep.subr.mxu0 0.0
        %2866 = vmatpush1.msra.mxu0 0.0
        %2867 = vmatprep.subr.mxu0 0.0
        %2868 = vmatpush1.msra.mxu0 0.0
        %2869 = vmatprep.subr.mxu0 0.0
        %2870 = vmatpush1.msra.mxu0 0.0
        %2871 = vmatprep.subr.mxu0 0.0
        %2872 = vmatpush1.msra.mxu0 0.0
        %2873 = vmatprep.subr.mxu0 0.0
        %2874 = vmatpush1.msra.mxu0 0.0
        %2875 = vmatprep.subr.mxu0 0.0
        %2876 = vmatpush1.msra.mxu0 0.0
        %2877 = vmatprep.subr.mxu0 0.0
        %2878 = vmatpush1.msra.mxu0 0.0
        %2879 = vmatprep.subr.mxu0 0.0
        %2880 = vmatpush1.msra.mxu0 0.0
        %2881 = vmatprep.subr.mxu0 0.0
        %2882 = vmatpush1.msra.mxu0 0.0
        %2883 = vmatprep.subr.mxu0 0.0
        %2884 = vmatpush1.msra.mxu0 0.0
        %2885 = vmatprep.subr.mxu0 0.0
        %2886 = vmatpush1.msra.mxu0 0.0
        %2887 = vmatprep.subr.mxu0 0.0
        %2888 = vmatpush1.msra.mxu0 0.0
        %2889 = vmatprep.subr.mxu0 0.0
        %2890 = vmatpush1.msra.mxu0 0.0
        %2891 = vmatprep.subr.mxu0 0.0
        %2892 = vmatpush1.msra.mxu0 0.0
        %2893 = vmatprep.mubr.f32.mxu0 0.0
        %2894 = vmatmul.mubr.f32.gmra.mrb[0].mxu0 %v2187
        %v2895 = vpop.f32.mrb[0].mxu0
        %v2896 = vadd.f32 0.0, %v2895
        %v2897 = vpop.f32.mrb[0].mxu0
        %v2898 = vadd.f32 0.0, %v2897
        %2899 = vdwg.mxu0
        %2900 = vmatprep.subr.mxu0 %v545
        %2901 = vmatpush1.msra.mxu0 %v544
        %2902 = vmatprep.subr.mxu0 %v549
        %2903 = vmatpush1.msra.mxu0 %v548
        %2904 = vmatprep.subr.mxu0 %v553
        %2905 = vmatpush1.msra.mxu0 %v552
        %2906 = vmatprep.subr.mxu0 %v557
        %2907 = vmatpush1.msra.mxu0 %v556
        %2908 = vmatprep.subr.mxu0 %v561
        %2909 = vmatpush1.msra.mxu0 %v560
        %2910 = vmatprep.subr.mxu0 %v565
        %2911 = vmatpush1.msra.mxu0 %v564
        %2912 = vmatprep.subr.mxu0 %v569
        %2913 = vmatpush1.msra.mxu0 %v568
        %2914 = vmatprep.subr.mxu0 %v573
        %2915 = vmatpush1.msra.mxu0 %v572
        %2916 = vmatprep.subr.mxu0 %v577
        %2917 = vmatpush1.msra.mxu0 %v576
        %2918 = vmatprep.subr.mxu0 %v581
        %2919 = vmatpush1.msra.mxu0 %v580
        %2920 = vmatprep.subr.mxu0 %v585
        %2921 = vmatpush1.msra.mxu0 %v584
        %2922 = vmatprep.subr.mxu0 %v589
        %2923 = vmatpush1.msra.mxu0 %v588
        %2924 = vmatprep.subr.mxu0 %v593
        %2925 = vmatpush1.msra.mxu0 %v592
        %2926 = vmatprep.subr.mxu0 %v597
        %2927 = vmatpush1.msra.mxu0 %v596
        %2928 = vmatprep.subr.mxu0 %v601
        %2929 = vmatpush1.msra.mxu0 %v600
        %2930 = vmatprep.subr.mxu0 %v605
        %2931 = vmatpush1.msra.mxu0 %v604
        %2932 = vmatprep.subr.mxu0 0.0
        %2933 = vmatpush1.msra.mxu0 0.0
        %2934 = vmatprep.subr.mxu0 0.0
        %2935 = vmatpush1.msra.mxu0 0.0
        %2936 = vmatprep.subr.mxu0 0.0
        %2937 = vmatpush1.msra.mxu0 0.0
        %2938 = vmatprep.subr.mxu0 0.0
        %2939 = vmatpush1.msra.mxu0 0.0
        %2940 = vmatprep.subr.mxu0 0.0
        %2941 = vmatpush1.msra.mxu0 0.0
        %2942 = vmatprep.subr.mxu0 0.0
        %2943 = vmatpush1.msra.mxu0 0.0
        %2944 = vmatprep.subr.mxu0 0.0
        %2945 = vmatpush1.msra.mxu0 0.0
        %2946 = vmatprep.subr.mxu0 0.0
        %2947 = vmatpush1.msra.mxu0 0.0
        %2948 = vmatprep.subr.mxu0 0.0
        %2949 = vmatpush1.msra.mxu0 0.0
        %2950 = vmatprep.subr.mxu0 0.0
        %2951 = vmatpush1.msra.mxu0 0.0
        %2952 = vmatprep.subr.mxu0 0.0
        %2953 = vmatpush1.msra.mxu0 0.0
        %2954 = vmatprep.subr.mxu0 0.0
        %2955 = vmatpush1.msra.mxu0 0.0
        %2956 = vmatprep.subr.mxu0 0.0
        %2957 = vmatpush1.msra.mxu0 0.0
        %2958 = vmatprep.subr.mxu0 0.0
        %2959 = vmatpush1.msra.mxu0 0.0
        %2960 = vmatprep.subr.mxu0 0.0
        %2961 = vmatpush1.msra.mxu0 0.0
        %2962 = vmatprep.subr.mxu0 0.0
        %2963 = vmatpush1.msra.mxu0 0.0
        %2964 = vmatprep.mubr.f32.mxu0 0.0
        %2965 = vmatmul.mubr.f32.gmra.mrb[0].mxu0 %v1881
        %v2966 = vpop.f32.mrb[0].mxu0
        %v2967 = vadd.f32 %v2825, %v2966
        %v2968 = vpop.f32.mrb[0].mxu0
        %v2969 = vadd.f32 %v2827, %v2968
        %2970 = vdwg.mxu0
        %2971 = vmatprep.subr.mxu0 %v547
        %2972 = vmatpush1.msra.mxu0 %v546
        %2973 = vmatprep.subr.mxu0 %v551
        %2974 = vmatpush1.msra.mxu0 %v550
        %2975 = vmatprep.subr.mxu0 %v555
        %2976 = vmatpush1.msra.mxu0 %v554
        %2977 = vmatprep.subr.mxu0 %v559
        %2978 = vmatpush1.msra.mxu0 %v558
        %2979 = vmatprep.subr.mxu0 %v563
        %2980 = vmatpush1.msra.mxu0 %v562
        %2981 = vmatprep.subr.mxu0 %v567
        %2982 = vmatpush1.msra.mxu0 %v566
        %2983 = vmatprep.subr.mxu0 %v571
        %2984 = vmatpush1.msra.mxu0 %v570
        %2985 = vmatprep.subr.mxu0 %v575
        %2986 = vmatpush1.msra.mxu0 %v574
        %2987 = vmatprep.subr.mxu0 %v579
        %2988 = vmatpush1.msra.mxu0 %v578
        %2989 = vmatprep.subr.mxu0 %v583
        %2990 = vmatpush1.msra.mxu0 %v582
        %2991 = vmatprep.subr.mxu0 %v587
        %2992 = vmatpush1.msra.mxu0 %v586
        %2993 = vmatprep.subr.mxu0 %v591
        %2994 = vmatpush1.msra.mxu0 %v590
        %2995 = vmatprep.subr.mxu0 %v595
        %2996 = vmatpush1.msra.mxu0 %v594
        %2997 = vmatprep.subr.mxu0 %v599
        %2998 = vmatpush1.msra.mxu0 %v598
        %2999 = vmatprep.subr.mxu0 %v603
        %3000 = vmatpush1.msra.mxu0 %v602
        %3001 = vmatprep.subr.mxu0 %v607
        %3002 = vmatpush1.msra.mxu0 %v606
        %3003 = vmatprep.subr.mxu0 0.0
        %3004 = vmatpush1.msra.mxu0 0.0
        %3005 = vmatprep.subr.mxu0 0.0
        %3006 = vmatpush1.msra.mxu0 0.0
        %3007 = vmatprep.subr.mxu0 0.0
        %3008 = vmatpush1.msra.mxu0 0.0
        %3009 = vmatprep.subr.mxu0 0.0
        %3010 = vmatpush1.msra.mxu0 0.0
        %3011 = vmatprep.subr.mxu0 0.0
        %3012 = vmatpush1.msra.mxu0 0.0
        %3013 = vmatprep.subr.mxu0 0.0
        %3014 = vmatpush1.msra.mxu0 0.0
        %3015 = vmatprep.subr.mxu0 0.0
        %3016 = vmatpush1.msra.mxu0 0.0
        %3017 = vmatprep.subr.mxu0 0.0
        %3018 = vmatpush1.msra.mxu0 0.0
        %3019 = vmatprep.subr.mxu0 0.0
        %3020 = vmatpush1.msra.mxu0 0.0
        %3021 = vmatprep.subr.mxu0 0.0
        %3022 = vmatpush1.msra.mxu0 0.0
        %3023 = vmatprep.subr.mxu0 0.0
        %3024 = vmatpush1.msra.mxu0 0.0
        %3025 = vmatprep.subr.mxu0 0.0
        %3026 = vmatpush1.msra.mxu0 0.0
        %3027 = vmatprep.subr.mxu0 0.0
        %3028 = vmatpush1.msra.mxu0 0.0
        %3029 = vmatprep.subr.mxu0 0.0
        %3030 = vmatpush1.msra.mxu0 0.0
        %3031 = vmatprep.subr.mxu0 0.0
        %3032 = vmatpush1.msra.mxu0 0.0
        %3033 = vmatprep.subr.mxu0 0.0
        %3034 = vmatpush1.msra.mxu0 0.0
        %3035 = vmatprep.mubr.f32.mxu0 0.0
        %3036 = vmatmul.mubr.f32.gmra.mrb[0].mxu0 %v1881
        %v3037 = vpop.f32.mrb[0].mxu0
        %v3038 = vadd.f32 %v2896, %v3037
        %v3039 = vpop.f32.mrb[0].mxu0
        %v3040 = vadd.f32 %v2898, %v3039
        %3041 = vdwg.mxu0
        %v3042 = vadd.f32 %v2967, %v1671
        %v3043 = vadd.f32 %v2969, %v1675
        %v3044 = vadd.f32 %v3038, %v1679
        %v3045 = vadd.f32 %v3040, %v1683
        %v3046 = vmul.f32 %v3042, 0.5
        %v3047 = vmul.f32 %v3043, 0.5
        %v3048 = vmul.f32 %v3044, 0.5
        %v3049 = vtanh.pop %v3046
        %v3050 = vtanh.pop %v3047
        %v3051 = vtanh.pop %v3048
        %v3052 = vadd.f32 %v3049, 1.0
        %v3053 = vadd.f32 %v3050, 1.0
        %v3054 = vadd.f32 %v3051, 1.0
        %v3055 = vmul.f32 %v3052, 0.5
        %v3056 = vmul.f32 %v3053, 0.5
        %v3057 = vmul.f32 %v3054, 0.5
        %v3058 = vtanh.pop %v3045
        %v3059 = vmul.f32 %v3056, %v2185
        %v3060 = vmul.f32 %v3055, %v3058
        %v3061 = vadd.f32 %v3059, %v3060
        %v3062 = vtanh.pop %v3061
        %v3063 = vmul.f32 %v3057, %v3062
        %v3064 = vmul.f32 %v3063, 0.5
        %v3065 = vtanh.pop %v3064
        %v3066 = vadd.f32 %v3065, 1.0
        %v3067 = vmul.f32 %v3066, 0.5
        %3068 = vmatprep.subr.mxu0 %v801
        %3069 = vmatpush1.msra.mxu0 %v800
        %3070 = vmatprep.subr.mxu0 %v805
        %3071 = vmatpush1.msra.mxu0 %v804
        %3072 = vmatprep.subr.mxu0 %v809
        %3073 = vmatpush1.msra.mxu0 %v808
        %3074 = vmatprep.subr.mxu0 %v813
        %3075 = vmatpush1.msra.mxu0 %v812
        %3076 = vmatprep.subr.mxu0 %v817
        %3077 = vmatpush1.msra.mxu0 %v816
        %3078 = vmatprep.subr.mxu0 %v821
        %3079 = vmatpush1.msra.mxu0 %v820
        %3080 = vmatprep.subr.mxu0 %v825
        %3081 = vmatpush1.msra.mxu0 %v824
        %3082 = vmatprep.subr.mxu0 %v829
        %3083 = vmatpush1.msra.mxu0 %v828
        %3084 = vmatprep.subr.mxu0 %v833
        %3085 = vmatpush1.msra.mxu0 %v832
        %3086 = vmatprep.subr.mxu0 %v837
        %3087 = vmatpush1.msra.mxu0 %v836
        %3088 = vmatprep.subr.mxu0 %v841
        %3089 = vmatpush1.msra.mxu0 %v840
        %3090 = vmatprep.subr.mxu0 %v845
        %3091 = vmatpush1.msra.mxu0 %v844
        %3092 = vmatprep.subr.mxu0 %v849
        %3093 = vmatpush1.msra.mxu0 %v848
        %3094 = vmatprep.subr.mxu0 %v853
        %3095 = vmatpush1.msra.mxu0 %v852
        %3096 = vmatprep.subr.mxu0 %v857
        %3097 = vmatpush1.msra.mxu0 %v856
        %3098 = vmatprep.subr.mxu0 %v861
        %3099 = vmatpush1.msra.mxu0 %v860
        %3100 = vmatprep.subr.mxu0 0.0
        %3101 = vmatpush1.msra.mxu0 0.0
        %3102 = vmatprep.subr.mxu0 0.0
        %3103 = vmatpush1.msra.mxu0 0.0
        %3104 = vmatprep.subr.mxu0 0.0
        %3105 = vmatpush1.msra.mxu0 0.0
        %3106 = vmatprep.subr.mxu0 0.0
        %3107 = vmatpush1.msra.mxu0 0.0
        %3108 = vmatprep.subr.mxu0 0.0
        %3109 = vmatpush1.msra.mxu0 0.0
        %3110 = vmatprep.subr.mxu0 0.0
        %3111 = vmatpush1.msra.mxu0 0.0
        %3112 = vmatprep.subr.mxu0 0.0
        %3113 = vmatpush1.msra.mxu0 0.0
        %3114 = vmatprep.subr.mxu0 0.0
        %3115 = vmatpush1.msra.mxu0 0.0
        %3116 = vmatprep.subr.mxu0 0.0
        %3117 = vmatpush1.msra.mxu0 0.0
        %3118 = vmatprep.subr.mxu0 0.0
        %3119 = vmatpush1.msra.mxu0 0.0
        %3120 = vmatprep.subr.mxu0 0.0
        %3121 = vmatpush1.msra.mxu0 0.0
        %3122 = vmatprep.subr.mxu0 0.0
        %3123 = vmatpush1.msra.mxu0 0.0
        %3124 = vmatprep.subr.mxu0 0.0
        %3125 = vmatpush1.msra.mxu0 0.0
        %3126 = vmatprep.subr.mxu0 0.0
        %3127 = vmatpush1.msra.mxu0 0.0
        %3128 = vmatprep.subr.mxu0 0.0
        %3129 = vmatpush1.msra.mxu0 0.0
        %3130 = vmatprep.subr.mxu0 0.0
        %3131 = vmatpush1.msra.mxu0 0.0
        %3132 = vmatprep.mubr.f32.mxu0 0.0
        %3133 = vmatmul.mubr.f32.gmra.mrb[0].mxu0 %v2518
        %v3134 = vpop.f32.mrb[0].mxu0
        %v3135 = vadd.f32 0.0, %v3134
        %v3136 = vpop.f32.mrb[0].mxu0
        %v3137 = vadd.f32 0.0, %v3136
        %3138 = vdwg.mxu0
        %3139 = vmatprep.subr.mxu0 %v803
        %3140 = vmatpush1.msra.mxu0 %v802
        %3141 = vmatprep.subr.mxu0 %v807
        %3142 = vmatpush1.msra.mxu0 %v806
        %3143 = vmatprep.subr.mxu0 %v811
        %3144 = vmatpush1.msra.mxu0 %v810
        %3145 = vmatprep.subr.mxu0 %v815
        %3146 = vmatpush1.msra.mxu0 %v814
        %3147 = vmatprep.subr.mxu0 %v819
        %3148 = vmatpush1.msra.mxu0 %v818
        %3149 = vmatprep.subr.mxu0 %v823
        %3150 = vmatpush1.msra.mxu0 %v822
        %3151 = vmatprep.subr.mxu0 %v827
        %3152 = vmatpush1.msra.mxu0 %v826
        %3153 = vmatprep.subr.mxu0 %v831
        %3154 = vmatpush1.msra.mxu0 %v830
        %3155 = vmatprep.subr.mxu0 %v835
        %3156 = vmatpush1.msra.mxu0 %v834
        %3157 = vmatprep.subr.mxu0 %v839
        %3158 = vmatpush1.msra.mxu0 %v838
        %3159 = vmatprep.subr.mxu0 %v843
        %3160 = vmatpush1.msra.mxu0 %v842
        %3161 = vmatprep.subr.mxu0 %v847
        %3162 = vmatpush1.msra.mxu0 %v846
        %3163 = vmatprep.subr.mxu0 %v851
        %3164 = vmatpush1.msra.mxu0 %v850
        %3165 = vmatprep.subr.mxu0 %v855
        %3166 = vmatpush1.msra.mxu0 %v854
        %3167 = vmatprep.subr.mxu0 %v859
        %3168 = vmatpush1.msra.mxu0 %v858
        %3169 = vmatprep.subr.mxu0 %v863
        %3170 = vmatpush1.msra.mxu0 %v862
        %3171 = vmatprep.subr.mxu0 0.0
        %3172 = vmatpush1.msra.mxu0 0.0
        %3173 = vmatprep.subr.mxu0 0.0
        %3174 = vmatpush1.msra.mxu0 0.0
        %3175 = vmatprep.subr.mxu0 0.0
        %3176 = vmatpush1.msra.mxu0 0.0
        %3177 = vmatprep.subr.mxu0 0.0
        %3178 = vmatpush1.msra.mxu0 0.0
        %3179 = vmatprep.subr.mxu0 0.0
        %3180 = vmatpush1.msra.mxu0 0.0
        %3181 = vmatprep.subr.mxu0 0.0
        %3182 = vmatpush1.msra.mxu0 0.0
        %3183 = vmatprep.subr.mxu0 0.0
        %3184 = vmatpush1.msra.mxu0 0.0
        %3185 = vmatprep.subr.mxu0 0.0
        %3186 = vmatpush1.msra.mxu0 0.0
        %3187 = vmatprep.subr.mxu0 0.0
        %3188 = vmatpush1.msra.mxu0 0.0
        %3189 = vmatprep.subr.mxu0 0.0
        %3190 = vmatpush1.msra.mxu0 0.0
        %3191 = vmatprep.subr.mxu0 0.0
        %3192 = vmatpush1.msra.mxu0 0.0
        %3193 = vmatprep.subr.mxu0 0.0
        %3194 = vmatpush1.msra.mxu0 0.0
        %3195 = vmatprep.subr.mxu0 0.0
        %3196 = vmatpush1.msra.mxu0 0.0
        %3197 = vmatprep.subr.mxu0 0.0
        %3198 = vmatpush1.msra.mxu0 0.0
        %3199 = vmatprep.subr.mxu0 0.0
        %3200 = vmatpush1.msra.mxu0 0.0
        %3201 = vmatprep.subr.mxu0 0.0
        %3202 = vmatpush1.msra.mxu0 0.0
        %3203 = vmatprep.mubr.f32.mxu0 0.0
        %3204 = vmatmul.mubr.f32.gmra.mrb[0].mxu0 %v2518
        %v3205 = vpop.f32.mrb[0].mxu0
        %v3206 = vadd.f32 0.0, %v3205
        %v3207 = vpop.f32.mrb[0].mxu0
        %v3208 = vadd.f32 0.0, %v3207
        %3209 = vdwg.mxu0
        %3210 = vmatprep.subr.mxu0 %v609
        %3211 = vmatpush1.msra.mxu0 %v608
        %3212 = vmatprep.subr.mxu0 %v613
        %3213 = vmatpush1.msra.mxu0 %v612
        %3214 = vmatprep.subr.mxu0 %v617
        %3215 = vmatpush1.msra.mxu0 %v616
        %3216 = vmatprep.subr.mxu0 %v621
        %3217 = vmatpush1.msra.mxu0 %v620
        %3218 = vmatprep.subr.mxu0 %v625
        %3219 = vmatpush1.msra.mxu0 %v624
        %3220 = vmatprep.subr.mxu0 %v629
        %3221 = vmatpush1.msra.mxu0 %v628
        %3222 = vmatprep.subr.mxu0 %v633
        %3223 = vmatpush1.msra.mxu0 %v632
        %3224 = vmatprep.subr.mxu0 %v637
        %3225 = vmatpush1.msra.mxu0 %v636
        %3226 = vmatprep.subr.mxu0 %v641
        %3227 = vmatpush1.msra.mxu0 %v640
        %3228 = vmatprep.subr.mxu0 %v645
        %3229 = vmatpush1.msra.mxu0 %v644
        %3230 = vmatprep.subr.mxu0 %v649
        %3231 = vmatpush1.msra.mxu0 %v648
        %3232 = vmatprep.subr.mxu0 %v653
        %3233 = vmatpush1.msra.mxu0 %v652
        %3234 = vmatprep.subr.mxu0 %v657
        %3235 = vmatpush1.msra.mxu0 %v656
        %3236 = vmatprep.subr.mxu0 %v661
        %3237 = vmatpush1.msra.mxu0 %v660
        %3238 = vmatprep.subr.mxu0 %v665
        %3239 = vmatpush1.msra.mxu0 %v664
        %3240 = vmatprep.subr.mxu0 %v669
        %3241 = vmatpush1.msra.mxu0 %v668
        %3242 = vmatprep.subr.mxu0 0.0
        %3243 = vmatpush1.msra.mxu0 0.0
        %3244 = vmatprep.subr.mxu0 0.0
        %3245 = vmatpush1.msra.mxu0 0.0
        %3246 = vmatprep.subr.mxu0 0.0
        %3247 = vmatpush1.msra.mxu0 0.0
        %3248 = vmatprep.subr.mxu0 0.0
        %3249 = vmatpush1.msra.mxu0 0.0
        %3250 = vmatprep.subr.mxu0 0.0
        %3251 = vmatpush1.msra.mxu0 0.0
        %3252 = vmatprep.subr.mxu0 0.0
        %3253 = vmatpush1.msra.mxu0 0.0
        %3254 = vmatprep.subr.mxu0 0.0
        %3255 = vmatpush1.msra.mxu0 0.0
        %3256 = vmatprep.subr.mxu0 0.0
        %3257 = vmatpush1.msra.mxu0 0.0
        %3258 = vmatprep.subr.mxu0 0.0
        %3259 = vmatpush1.msra.mxu0 0.0
        %3260 = vmatprep.subr.mxu0 0.0
        %3261 = vmatpush1.msra.mxu0 0.0
        %3262 = vmatprep.subr.mxu0 0.0
        %3263 = vmatpush1.msra.mxu0 0.0
        %3264 = vmatprep.subr.mxu0 0.0
        %3265 = vmatpush1.msra.mxu0 0.0
        %3266 = vmatprep.subr.mxu0 0.0
        %3267 = vmatpush1.msra.mxu0 0.0
        %3268 = vmatprep.subr.mxu0 0.0
        %3269 = vmatpush1.msra.mxu0 0.0
        %3270 = vmatprep.subr.mxu0 0.0
        %3271 = vmatpush1.msra.mxu0 0.0
        %3272 = vmatprep.subr.mxu0 0.0
        %3273 = vmatpush1.msra.mxu0 0.0
        %3274 = vmatprep.mubr.f32.mxu0 0.0
        %3275 = vmatmul.mubr.f32.gmra.mrb[0].mxu0 %v2191
        %v3276 = vpop.f32.mrb[0].mxu0
        %v3277 = vadd.f32 %v3135, %v3276
        %v3278 = vpop.f32.mrb[0].mxu0
        %v3279 = vadd.f32 %v3137, %v3278
        %3280 = vdwg.mxu0
        %3281 = vmatprep.subr.mxu0 %v611
        %3282 = vmatpush1.msra.mxu0 %v610
        %3283 = vmatprep.subr.mxu0 %v615
        %3284 = vmatpush1.msra.mxu0 %v614
        %3285 = vmatprep.subr.mxu0 %v619
        %3286 = vmatpush1.msra.mxu0 %v618
        %3287 = vmatprep.subr.mxu0 %v623
        %3288 = vmatpush1.msra.mxu0 %v622
        %3289 = vmatprep.subr.mxu0 %v627
        %3290 = vmatpush1.msra.mxu0 %v626
        %3291 = vmatprep.subr.mxu0 %v631
        %3292 = vmatpush1.msra.mxu0 %v630
        %3293 = vmatprep.subr.mxu0 %v635
        %3294 = vmatpush1.msra.mxu0 %v634
        %3295 = vmatprep.subr.mxu0 %v639
        %3296 = vmatpush1.msra.mxu0 %v638
        %3297 = vmatprep.subr.mxu0 %v643
        %3298 = vmatpush1.msra.mxu0 %v642
        %3299 = vmatprep.subr.mxu0 %v647
        %3300 = vmatpush1.msra.mxu0 %v646
        %3301 = vmatprep.subr.mxu0 %v651
        %3302 = vmatpush1.msra.mxu0 %v650
        %3303 = vmatprep.subr.mxu0 %v655
        %3304 = vmatpush1.msra.mxu0 %v654
        %3305 = vmatprep.subr.mxu0 %v659
        %3306 = vmatpush1.msra.mxu0 %v658
        %3307 = vmatprep.subr.mxu0 %v663
        %3308 = vmatpush1.msra.mxu0 %v662
        %3309 = vmatprep.subr.mxu0 %v667
        %3310 = vmatpush1.msra.mxu0 %v666
        %3311 = vmatprep.subr.mxu0 %v671
        %3312 = vmatpush1.msra.mxu0 %v670
        %3313 = vmatprep.subr.mxu0 0.0
        %3314 = vmatpush1.msra.mxu0 0.0
        %3315 = vmatprep.subr.mxu0 0.0
        %3316 = vmatpush1.msra.mxu0 0.0
        %3317 = vmatprep.subr.mxu0 0.0
        %3318 = vmatpush1.msra.mxu0 0.0
        %3319 = vmatprep.subr.mxu0 0.0
        %3320 = vmatpush1.msra.mxu0 0.0
        %3321 = vmatprep.subr.mxu0 0.0
        %3322 = vmatpush1.msra.mxu0 0.0
        %3323 = vmatprep.subr.mxu0 0.0
        %3324 = vmatpush1.msra.mxu0 0.0
        %3325 = vmatprep.subr.mxu0 0.0
        %3326 = vmatpush1.msra.mxu0 0.0
        %3327 = vmatprep.subr.mxu0 0.0
        %3328 = vmatpush1.msra.mxu0 0.0
        %3329 = vmatprep.subr.mxu0 0.0
        %3330 = vmatpush1.msra.mxu0 0.0
        %3331 = vmatprep.subr.mxu0 0.0
        %3332 = vmatpush1.msra.mxu0 0.0
        %3333 = vmatprep.subr.mxu0 0.0
        %3334 = vmatpush1.msra.mxu0 0.0
        %3335 = vmatprep.subr.mxu0 0.0
        %3336 = vmatpush1.msra.mxu0 0.0
        %3337 = vmatprep.subr.mxu0 0.0
        %3338 = vmatpush1.msra.mxu0 0.0
        %3339 = vmatprep.subr.mxu0 0.0
        %3340 = vmatpush1.msra.mxu0 0.0
        %3341 = vmatprep.subr.mxu0 0.0
        %3342 = vmatpush1.msra.mxu0 0.0
        %3343 = vmatprep.subr.mxu0 0.0
        %3344 = vmatpush1.msra.mxu0 0.0
        %3345 = vmatprep.mubr.f32.mxu0 0.0
        %3346 = vmatmul.mubr.f32.gmra.mrb[0].mxu0 %v2191
        %v3347 = vpop.f32.mrb[0].mxu0
        %v3348 = vadd.f32 %v3206, %v3347
        %v3349 = vpop.f32.mrb[0].mxu0
        %v3350 = vadd.f32 %v3208, %v3349
        %3351 = vdwg.mxu0
        %v3352 = vadd.f32 %v3277, %v2480
        %v3353 = vadd.f32 %v3279, %v2484
        %v3354 = vadd.f32 %v3348, %v2488
        %v3355 = vadd.f32 %v3350, %v2492
        %v3356 = vmul.f32 %v3352, 0.5
        %v3357 = vmul.f32 %v3353, 0.5
        %v3358 = vmul.f32 %v3354, 0.5
        %v3359 = vtanh.pop %v3356
        %v3360 = vtanh.pop %v3357
        %v3361 = vtanh.pop %v3358
        %v3362 = vadd.f32 %v3359, 1.0
        %v3363 = vadd.f32 %v3360, 1.0
        %v3364 = vadd.f32 %v3361, 1.0
        %v3365 = vmul.f32 %v3362, 0.5
        %v3366 = vmul.f32 %v3363, 0.5
        %v3367 = vmul.f32 %v3364, 0.5
        %v3368 = vtanh.pop %v3355
        %v3369 = vmul.f32 %v3366, %v2516
        %v3370 = vmul.f32 %v3365, %v3368
        %v3371 = vadd.f32 %v3369, %v3370
        %v3372 = vtanh.pop %v3371
        %v3373 = vmul.f32 %v3367, %v3372
        %3374 = vmatprep.subr.mxu0 0.0
        %3375 = vmatpush1.msra.mxu0 %v867
        %3376 = vmatprep.subr.mxu0 0.0
        %3377 = vmatpush1.msra.mxu0 %v868
        %3378 = vmatprep.subr.mxu0 0.0
        %3379 = vmatpush1.msra.mxu0 %v869
        %3380 = vmatprep.subr.mxu0 0.0
        %3381 = vmatpush1.msra.mxu0 %v870
        %3382 = vmatprep.subr.mxu0 0.0
        %3383 = vmatpush1.msra.mxu0 %v871
        %3384 = vmatprep.subr.mxu0 0.0
        %3385 = vmatpush1.msra.mxu0 %v872
        %3386 = vmatprep.subr.mxu0 0.0
        %3387 = vmatpush1.msra.mxu0 %v873
        %3388 = vmatprep.subr.mxu0 0.0
        %3389 = vmatpush1.msra.mxu0 %v874
        %3390 = vmatprep.subr.mxu0 0.0
        %3391 = vmatpush1.msra.mxu0 %v875
        %3392 = vmatprep.subr.mxu0 0.0
        %3393 = vmatpush1.msra.mxu0 %v876
        %3394 = vmatprep.subr.mxu0 0.0
        %3395 = vmatpush1.msra.mxu0 %v877
        %3396 = vmatprep.subr.mxu0 0.0
        %3397 = vmatpush1.msra.mxu0 %v878
        %3398 = vmatprep.subr.mxu0 0.0
        %3399 = vmatpush1.msra.mxu0 %v879
        %3400 = vmatprep.subr.mxu0 0.0
        %3401 = vmatpush1.msra.mxu0 %v880
        %3402 = vmatprep.subr.mxu0 0.0
        %3403 = vmatpush1.msra.mxu0 %v881
        %3404 = vmatprep.subr.mxu0 0.0
        %3405 = vmatpush1.msra.mxu0 %v882
        %3406 = vmatprep.subr.mxu0 0.0
        %3407 = vmatpush1.msra.mxu0 0.0
        %3408 = vmatprep.subr.mxu0 0.0
        %3409 = vmatpush1.msra.mxu0 0.0
        %3410 = vmatprep.subr.mxu0 0.0
        %3411 = vmatpush1.msra.mxu0 0.0
        %3412 = vmatprep.subr.mxu0 0.0
        %3413 = vmatpush1.msra.mxu0 0.0
        %3414 = vmatprep.subr.mxu0 0.0
        %3415 = vmatpush1.msra.mxu0 0.0
        %3416 = vmatprep.subr.mxu0 0.0
        %3417 = vmatpush1.msra.mxu0 0.0
        %3418 = vmatprep.subr.mxu0 0.0
        %3419 = vmatpush1.msra.mxu0 0.0
        %3420 = vmatprep.subr.mxu0 0.0
        %3421 = vmatpush1.msra.mxu0 0.0
        %3422 = vmatprep.subr.mxu0 0.0
        %3423 = vmatpush1.msra.mxu0 0.0
        %3424 = vmatprep.subr.mxu0 0.0
        %3425 = vmatpush1.msra.mxu0 0.0
        %3426 = vmatprep.subr.mxu0 0.0
        %3427 = vmatpush1.msra.mxu0 0.0
        %3428 = vmatprep.subr.mxu0 0.0
        %3429 = vmatpush1.msra.mxu0 0.0
        %3430 = vmatprep.subr.mxu0 0.0
        %3431 = vmatpush1.msra.mxu0 0.0
        %3432 = vmatprep.subr.mxu0 0.0
        %3433 = vmatpush1.msra.mxu0 0.0
        %3434 = vmatprep.subr.mxu0 0.0
        %3435 = vmatpush1.msra.mxu0 0.0
        %3436 = vmatprep.subr.mxu0 0.0
        %3437 = vmatpush1.msra.mxu0 0.0
        %3438 = vmatprep.mubr.f32.mxu0 0.0
        %3439 = vmatmul.mubr.f32.gmra.mrb[0].mxu0 %v3373
        %v3440 = vpop.f32.mrb[0].mxu0
        %v3441 = vadd.f32 0.0, %v3440
        %v3442 = vpop.f32.mrb[0].mxu0
        %3443 = vdwg.mxu0
        %s3444 = scalar_lea.vmem %s475, 8 [#allocation13]
        %3445 = vst [vmem:[%s3444] sm:$0xff] %v3441
        %3446 = vmatprep.subr.mxu0 %v673
        %3447 = vmatpush1.msra.mxu0 %v672
        %3448 = vmatprep.subr.mxu0 %v677
        %3449 = vmatpush1.msra.mxu0 %v676
        %3450 = vmatprep.subr.mxu0 %v681
        %3451 = vmatpush1.msra.mxu0 %v680
        %3452 = vmatprep.subr.mxu0 %v685
        %3453 = vmatpush1.msra.mxu0 %v684
        %3454 = vmatprep.subr.mxu0 %v689
        %3455 = vmatpush1.msra.mxu0 %v688
        %3456 = vmatprep.subr.mxu0 %v693
        %3457 = vmatpush1.msra.mxu0 %v692
        %3458 = vmatprep.subr.mxu0 %v697
        %3459 = vmatpush1.msra.mxu0 %v696
        %3460 = vmatprep.subr.mxu0 %v701
        %3461 = vmatpush1.msra.mxu0 %v700
        %3462 = vmatprep.subr.mxu0 %v705
        %3463 = vmatpush1.msra.mxu0 %v704
        %3464 = vmatprep.subr.mxu0 %v709
        %3465 = vmatpush1.msra.mxu0 %v708
        %3466 = vmatprep.subr.mxu0 %v713
        %3467 = vmatpush1.msra.mxu0 %v712
        %3468 = vmatprep.subr.mxu0 %v717
        %3469 = vmatpush1.msra.mxu0 %v716
        %3470 = vmatprep.subr.mxu0 %v721
        %3471 = vmatpush1.msra.mxu0 %v720
        %3472 = vmatprep.subr.mxu0 %v725
        %3473 = vmatpush1.msra.mxu0 %v724
        %3474 = vmatprep.subr.mxu0 %v729
        %3475 = vmatpush1.msra.mxu0 %v728
        %3476 = vmatprep.subr.mxu0 %v733
        %3477 = vmatpush1.msra.mxu0 %v732
        %3478 = vmatprep.subr.mxu0 0.0
        %3479 = vmatpush1.msra.mxu0 0.0
        %3480 = vmatprep.subr.mxu0 0.0
        %3481 = vmatpush1.msra.mxu0 0.0
        %3482 = vmatprep.subr.mxu0 0.0
        %3483 = vmatpush1.msra.mxu0 0.0
        %3484 = vmatprep.subr.mxu0 0.0
        %3485 = vmatpush1.msra.mxu0 0.0
        %3486 = vmatprep.subr.mxu0 0.0
        %3487 = vmatpush1.msra.mxu0 0.0
        %3488 = vmatprep.subr.mxu0 0.0
        %3489 = vmatpush1.msra.mxu0 0.0
        %3490 = vmatprep.subr.mxu0 0.0
        %3491 = vmatpush1.msra.mxu0 0.0
        %3492 = vmatprep.subr.mxu0 0.0
        %3493 = vmatpush1.msra.mxu0 0.0
        %3494 = vmatprep.subr.mxu0 0.0
        %3495 = vmatpush1.msra.mxu0 0.0
        %3496 = vmatprep.subr.mxu0 0.0
        %3497 = vmatpush1.msra.mxu0 0.0
        %3498 = vmatprep.subr.mxu0 0.0
        %3499 = vmatpush1.msra.mxu0 0.0
        %3500 = vmatprep.subr.mxu0 0.0
        %3501 = vmatpush1.msra.mxu0 0.0
        %3502 = vmatprep.subr.mxu0 0.0
        %3503 = vmatpush1.msra.mxu0 0.0
        %3504 = vmatprep.subr.mxu0 0.0
        %3505 = vmatpush1.msra.mxu0 0.0
        %3506 = vmatprep.subr.mxu0 0.0
        %3507 = vmatpush1.msra.mxu0 0.0
        %3508 = vmatprep.subr.mxu0 0.0
        %3509 = vmatpush1.msra.mxu0 0.0
        %3510 = vmatprep.mubr.f32.mxu0 0.0
        %3511 = vmatmul.mubr.f32.gmra.mrb[0].mxu0 %v2753
        %v3512 = vpop.f32.mrb[0].mxu0
        %v3513 = vadd.f32 0.0, %v3512
        %v3514 = vpop.f32.mrb[0].mxu0
        %v3515 = vadd.f32 0.0, %v3514
        %3516 = vdwg.mxu0
        %3517 = vmatprep.subr.mxu0 %v675
        %3518 = vmatpush1.msra.mxu0 %v674
        %3519 = vmatprep.subr.mxu0 %v679
        %3520 = vmatpush1.msra.mxu0 %v678
        %3521 = vmatprep.subr.mxu0 %v683
        %3522 = vmatpush1.msra.mxu0 %v682
        %3523 = vmatprep.subr.mxu0 %v687
        %3524 = vmatpush1.msra.mxu0 %v686
        %3525 = vmatprep.subr.mxu0 %v691
        %3526 = vmatpush1.msra.mxu0 %v690
        %3527 = vmatprep.subr.mxu0 %v695
        %3528 = vmatpush1.msra.mxu0 %v694
        %3529 = vmatprep.subr.mxu0 %v699
        %3530 = vmatpush1.msra.mxu0 %v698
        %3531 = vmatprep.subr.mxu0 %v703
        %3532 = vmatpush1.msra.mxu0 %v702
        %3533 = vmatprep.subr.mxu0 %v707
        %3534 = vmatpush1.msra.mxu0 %v706
        %3535 = vmatprep.subr.mxu0 %v711
        %3536 = vmatpush1.msra.mxu0 %v710
        %3537 = vmatprep.subr.mxu0 %v715
        %3538 = vmatpush1.msra.mxu0 %v714
        %3539 = vmatprep.subr.mxu0 %v719
        %3540 = vmatpush1.msra.mxu0 %v718
        %3541 = vmatprep.subr.mxu0 %v723
        %3542 = vmatpush1.msra.mxu0 %v722
        %3543 = vmatprep.subr.mxu0 %v727
        %3544 = vmatpush1.msra.mxu0 %v726
        %3545 = vmatprep.subr.mxu0 %v731
        %3546 = vmatpush1.msra.mxu0 %v730
        %3547 = vmatprep.subr.mxu0 %v735
        %3548 = vmatpush1.msra.mxu0 %v734
        %3549 = vmatprep.subr.mxu0 0.0
        %3550 = vmatpush1.msra.mxu0 0.0
        %3551 = vmatprep.subr.mxu0 0.0
        %3552 = vmatpush1.msra.mxu0 0.0
        %3553 = vmatprep.subr.mxu0 0.0
        %3554 = vmatpush1.msra.mxu0 0.0
        %3555 = vmatprep.subr.mxu0 0.0
        %3556 = vmatpush1.msra.mxu0 0.0
        %3557 = vmatprep.subr.mxu0 0.0
        %3558 = vmatpush1.msra.mxu0 0.0
        %3559 = vmatprep.subr.mxu0 0.0
        %3560 = vmatpush1.msra.mxu0 0.0
        %3561 = vmatprep.subr.mxu0 0.0
        %3562 = vmatpush1.msra.mxu0 0.0
        %3563 = vmatprep.subr.mxu0 0.0
        %3564 = vmatpush1.msra.mxu0 0.0
        %3565 = vmatprep.subr.mxu0 0.0
        %3566 = vmatpush1.msra.mxu0 0.0
        %3567 = vmatprep.subr.mxu0 0.0
        %3568 = vmatpush1.msra.mxu0 0.0
        %3569 = vmatprep.subr.mxu0 0.0
        %3570 = vmatpush1.msra.mxu0 0.0
        %3571 = vmatprep.subr.mxu0 0.0
        %3572 = vmatpush1.msra.mxu0 0.0
        %3573 = vmatprep.subr.mxu0 0.0
        %3574 = vmatpush1.msra.mxu0 0.0
        %3575 = vmatprep.subr.mxu0 0.0
        %3576 = vmatpush1.msra.mxu0 0.0
        %3577 = vmatprep.subr.mxu0 0.0
        %3578 = vmatpush1.msra.mxu0 0.0
        %3579 = vmatprep.subr.mxu0 0.0
        %3580 = vmatpush1.msra.mxu0 0.0
        %3581 = vmatprep.mubr.f32.mxu0 0.0
        %3582 = vmatmul.mubr.f32.gmra.mrb[0].mxu0 %v2753
        %v3583 = vpop.f32.mrb[0].mxu0
        %v3584 = vadd.f32 0.0, %v3583
        %v3585 = vpop.f32.mrb[0].mxu0
        %v3586 = vadd.f32 0.0, %v3585
        %3587 = vdwg.mxu0
        %v3588 = vadd.f32 %v972, %v3513
        %v3589 = vadd.f32 %v974, %v3515
        %v3590 = vadd.f32 %v1043, %v3584
        %v3591 = vadd.f32 %v1045, %v3586
        %v3592 = vmul.f32 %v3588, 0.5
        %v3593 = vmul.f32 %v3589, 0.5
        %v3594 = vmul.f32 %v3590, 0.5
        %v3595 = vtanh.pop %v3592
        %v3596 = vtanh.pop %v3593
        %v3597 = vtanh.pop %v3594
        %v3598 = vadd.f32 %v3595, 1.0
        %v3599 = vadd.f32 %v3596, 1.0
        %v3600 = vadd.f32 %v3597, 1.0
        %v3601 = vmul.f32 %v3598, 0.5
        %v3602 = vmul.f32 %v3599, 0.5
        %v3603 = vmul.f32 %v3600, 0.5
        %v3604 = vtanh.pop %v3591
        %v3605 = vmul.f32 %v3602, %v2751
        %v3606 = vmul.f32 %v3601, %v3604
        %v3607 = vadd.f32 %v3605, %v3606
        %v3608 = vtanh.pop %v3607
        %v3609 = vmul.f32 %v3603, %v3608
        %v3610 = vmul.f32 %v3609, 0.5
        %v3611 = vtanh.pop %v3610
        %v3612 = vadd.f32 %v3611, 1.0
        %v3613 = vmul.f32 %v3612, 0.5
        %3614 = vmatprep.subr.mxu0 %v737
        %3615 = vmatpush1.msra.mxu0 %v736
        %3616 = vmatprep.subr.mxu0 %v741
        %3617 = vmatpush1.msra.mxu0 %v740
        %3618 = vmatprep.subr.mxu0 %v745
        %3619 = vmatpush1.msra.mxu0 %v744
        %3620 = vmatprep.subr.mxu0 %v749
        %3621 = vmatpush1.msra.mxu0 %v748
        %3622 = vmatprep.subr.mxu0 %v753
        %3623 = vmatpush1.msra.mxu0 %v752
        %3624 = vmatprep.subr.mxu0 %v757
        %3625 = vmatpush1.msra.mxu0 %v756
        %3626 = vmatprep.subr.mxu0 %v761
        %3627 = vmatpush1.msra.mxu0 %v760
        %3628 = vmatprep.subr.mxu0 %v765
        %3629 = vmatpush1.msra.mxu0 %v764
        %3630 = vmatprep.subr.mxu0 %v769
        %3631 = vmatpush1.msra.mxu0 %v768
        %3632 = vmatprep.subr.mxu0 %v773
        %3633 = vmatpush1.msra.mxu0 %v772
        %3634 = vmatprep.subr.mxu0 %v777
        %3635 = vmatpush1.msra.mxu0 %v776
        %3636 = vmatprep.subr.mxu0 %v781
        %3637 = vmatpush1.msra.mxu0 %v780
        %3638 = vmatprep.subr.mxu0 %v785
        %3639 = vmatpush1.msra.mxu0 %v784
        %3640 = vmatprep.subr.mxu0 %v789
        %3641 = vmatpush1.msra.mxu0 %v788
        %3642 = vmatprep.subr.mxu0 %v793
        %3643 = vmatpush1.msra.mxu0 %v792
        %3644 = vmatprep.subr.mxu0 %v797
        %3645 = vmatpush1.msra.mxu0 %v796
        %3646 = vmatprep.subr.mxu0 0.0
        %3647 = vmatpush1.msra.mxu0 0.0
        %3648 = vmatprep.subr.mxu0 0.0
        %3649 = vmatpush1.msra.mxu0 0.0
        %3650 = vmatprep.subr.mxu0 0.0
        %3651 = vmatpush1.msra.mxu0 0.0
        %3652 = vmatprep.subr.mxu0 0.0
        %3653 = vmatpush1.msra.mxu0 0.0
        %3654 = vmatprep.subr.mxu0 0.0
        %3655 = vmatpush1.msra.mxu0 0.0
        %3656 = vmatprep.subr.mxu0 0.0
        %3657 = vmatpush1.msra.mxu0 0.0
        %3658 = vmatprep.subr.mxu0 0.0
        %3659 = vmatpush1.msra.mxu0 0.0
        %3660 = vmatprep.subr.mxu0 0.0
        %3661 = vmatpush1.msra.mxu0 0.0
        %3662 = vmatprep.subr.mxu0 0.0
        %3663 = vmatpush1.msra.mxu0 0.0
        %3664 = vmatprep.subr.mxu0 0.0
        %3665 = vmatpush1.msra.mxu0 0.0
        %3666 = vmatprep.subr.mxu0 0.0
        %3667 = vmatpush1.msra.mxu0 0.0
        %3668 = vmatprep.subr.mxu0 0.0
        %3669 = vmatpush1.msra.mxu0 0.0
        %3670 = vmatprep.subr.mxu0 0.0
        %3671 = vmatpush1.msra.mxu0 0.0
        %3672 = vmatprep.subr.mxu0 0.0
        %3673 = vmatpush1.msra.mxu0 0.0
        %3674 = vmatprep.subr.mxu0 0.0
        %3675 = vmatpush1.msra.mxu0 0.0
        %3676 = vmatprep.subr.mxu0 0.0
        %3677 = vmatpush1.msra.mxu0 0.0
        %3678 = vmatprep.mubr.f32.mxu0 0.0
        %3679 = vmatmul.mubr.f32.gmra.mrb[0].mxu0 %v3063
        %v3680 = vpop.f32.mrb[0].mxu0
        %v3681 = vadd.f32 0.0, %v3680
        %v3682 = vpop.f32.mrb[0].mxu0
        %v3683 = vadd.f32 0.0, %v3682
        %3684 = vdwg.mxu0
        %3685 = vmatprep.subr.mxu0 %v739
        %3686 = vmatpush1.msra.mxu0 %v738
        %3687 = vmatprep.subr.mxu0 %v743
        %3688 = vmatpush1.msra.mxu0 %v742
        %3689 = vmatprep.subr.mxu0 %v747
        %3690 = vmatpush1.msra.mxu0 %v746
        %3691 = vmatprep.subr.mxu0 %v751
        %3692 = vmatpush1.msra.mxu0 %v750
        %3693 = vmatprep.subr.mxu0 %v755
        %3694 = vmatpush1.msra.mxu0 %v754
        %3695 = vmatprep.subr.mxu0 %v759
        %3696 = vmatpush1.msra.mxu0 %v758
        %3697 = vmatprep.subr.mxu0 %v763
        %3698 = vmatpush1.msra.mxu0 %v762
        %3699 = vmatprep.subr.mxu0 %v767
        %3700 = vmatpush1.msra.mxu0 %v766
        %3701 = vmatprep.subr.mxu0 %v771
        %3702 = vmatpush1.msra.mxu0 %v770
        %3703 = vmatprep.subr.mxu0 %v775
        %3704 = vmatpush1.msra.mxu0 %v774
        %3705 = vmatprep.subr.mxu0 %v779
        %3706 = vmatpush1.msra.mxu0 %v778
        %3707 = vmatprep.subr.mxu0 %v783
        %3708 = vmatpush1.msra.mxu0 %v782
        %3709 = vmatprep.subr.mxu0 %v787
        %3710 = vmatpush1.msra.mxu0 %v786
        %3711 = vmatprep.subr.mxu0 %v791
        %3712 = vmatpush1.msra.mxu0 %v790
        %3713 = vmatprep.subr.mxu0 %v795
        %3714 = vmatpush1.msra.mxu0 %v794
        %3715 = vmatprep.subr.mxu0 %v799
        %3716 = vmatpush1.msra.mxu0 %v798
        %3717 = vmatprep.subr.mxu0 0.0
        %3718 = vmatpush1.msra.mxu0 0.0
        %3719 = vmatprep.subr.mxu0 0.0
        %3720 = vmatpush1.msra.mxu0 0.0
        %3721 = vmatprep.subr.mxu0 0.0
        %3722 = vmatpush1.msra.mxu0 0.0
        %3723 = vmatprep.subr.mxu0 0.0
        %3724 = vmatpush1.msra.mxu0 0.0
        %3725 = vmatprep.subr.mxu0 0.0
        %3726 = vmatpush1.msra.mxu0 0.0
        %3727 = vmatprep.subr.mxu0 0.0
        %3728 = vmatpush1.msra.mxu0 0.0
        %3729 = vmatprep.subr.mxu0 0.0
        %3730 = vmatpush1.msra.mxu0 0.0
        %3731 = vmatprep.subr.mxu0 0.0
        %3732 = vmatpush1.msra.mxu0 0.0
        %3733 = vmatprep.subr.mxu0 0.0
        %3734 = vmatpush1.msra.mxu0 0.0
        %3735 = vmatprep.subr.mxu0 0.0
        %3736 = vmatpush1.msra.mxu0 0.0
        %3737 = vmatprep.subr.mxu0 0.0
        %3738 = vmatpush1.msra.mxu0 0.0
        %3739 = vmatprep.subr.mxu0 0.0
        %3740 = vmatpush1.msra.mxu0 0.0
        %3741 = vmatprep.subr.mxu0 0.0
        %3742 = vmatpush1.msra.mxu0 0.0
        %3743 = vmatprep.subr.mxu0 0.0
        %3744 = vmatpush1.msra.mxu0 0.0
        %3745 = vmatprep.subr.mxu0 0.0
        %3746 = vmatpush1.msra.mxu0 0.0
        %3747 = vmatprep.subr.mxu0 0.0
        %3748 = vmatpush1.msra.mxu0 0.0
        %3749 = vmatprep.mubr.f32.mxu0 0.0
        %3750 = vmatmul.mubr.f32.gmra.mrb[0].mxu0 %v3063
        %v3751 = vpop.f32.mrb[0].mxu0
        %v3752 = vadd.f32 0.0, %v3751
        %v3753 = vpop.f32.mrb[0].mxu0
        %v3754 = vadd.f32 0.0, %v3753
        %3755 = vdwg.mxu0
        %3756 = vmatprep.subr.mxu0 %v545
        %3757 = vmatpush1.msra.mxu0 %v544
        %3758 = vmatprep.subr.mxu0 %v549
        %3759 = vmatpush1.msra.mxu0 %v548
        %3760 = vmatprep.subr.mxu0 %v553
        %3761 = vmatpush1.msra.mxu0 %v552
        %3762 = vmatprep.subr.mxu0 %v557
        %3763 = vmatpush1.msra.mxu0 %v556
        %3764 = vmatprep.subr.mxu0 %v561
        %3765 = vmatpush1.msra.mxu0 %v560
        %3766 = vmatprep.subr.mxu0 %v565
        %3767 = vmatpush1.msra.mxu0 %v564
        %3768 = vmatprep.subr.mxu0 %v569
        %3769 = vmatpush1.msra.mxu0 %v568
        %3770 = vmatprep.subr.mxu0 %v573
        %3771 = vmatpush1.msra.mxu0 %v572
        %3772 = vmatprep.subr.mxu0 %v577
        %3773 = vmatpush1.msra.mxu0 %v576
        %3774 = vmatprep.subr.mxu0 %v581
        %3775 = vmatpush1.msra.mxu0 %v580
        %3776 = vmatprep.subr.mxu0 %v585
        %3777 = vmatpush1.msra.mxu0 %v584
        %3778 = vmatprep.subr.mxu0 %v589
        %3779 = vmatpush1.msra.mxu0 %v588
        %3780 = vmatprep.subr.mxu0 %v593
        %3781 = vmatpush1.msra.mxu0 %v592
        %3782 = vmatprep.subr.mxu0 %v597
        %3783 = vmatpush1.msra.mxu0 %v596
        %3784 = vmatprep.subr.mxu0 %v601
        %3785 = vmatpush1.msra.mxu0 %v600
        %3786 = vmatprep.subr.mxu0 %v605
        %3787 = vmatpush1.msra.mxu0 %v604
        %3788 = vmatprep.subr.mxu0 0.0
        %3789 = vmatpush1.msra.mxu0 0.0
        %3790 = vmatprep.subr.mxu0 0.0
        %3791 = vmatpush1.msra.mxu0 0.0
        %3792 = vmatprep.subr.mxu0 0.0
        %3793 = vmatpush1.msra.mxu0 0.0
        %3794 = vmatprep.subr.mxu0 0.0
        %3795 = vmatpush1.msra.mxu0 0.0
        %3796 = vmatprep.subr.mxu0 0.0
        %3797 = vmatpush1.msra.mxu0 0.0
        %3798 = vmatprep.subr.mxu0 0.0
        %3799 = vmatpush1.msra.mxu0 0.0
        %3800 = vmatprep.subr.mxu0 0.0
        %3801 = vmatpush1.msra.mxu0 0.0
        %3802 = vmatprep.subr.mxu0 0.0
        %3803 = vmatpush1.msra.mxu0 0.0
        %3804 = vmatprep.subr.mxu0 0.0
        %3805 = vmatpush1.msra.mxu0 0.0
        %3806 = vmatprep.subr.mxu0 0.0
        %3807 = vmatpush1.msra.mxu0 0.0
        %3808 = vmatprep.subr.mxu0 0.0
        %3809 = vmatpush1.msra.mxu0 0.0
        %3810 = vmatprep.subr.mxu0 0.0
        %3811 = vmatpush1.msra.mxu0 0.0
        %3812 = vmatprep.subr.mxu0 0.0
        %3813 = vmatpush1.msra.mxu0 0.0
        %3814 = vmatprep.subr.mxu0 0.0
        %3815 = vmatpush1.msra.mxu0 0.0
        %3816 = vmatprep.subr.mxu0 0.0
        %3817 = vmatpush1.msra.mxu0 0.0
        %3818 = vmatprep.subr.mxu0 0.0
        %3819 = vmatpush1.msra.mxu0 0.0
        %3820 = vmatprep.mubr.f32.mxu0 0.0
        %3821 = vmatmul.mubr.f32.gmra.mrb[0].mxu0 %v2757
        %v3822 = vpop.f32.mrb[0].mxu0
        %v3823 = vadd.f32 %v3681, %v3822
        %v3824 = vpop.f32.mrb[0].mxu0
        %v3825 = vadd.f32 %v3683, %v3824
        %3826 = vdwg.mxu0
        %3827 = vmatprep.subr.mxu0 %v547
        %3828 = vmatpush1.msra.mxu0 %v546
        %3829 = vmatprep.subr.mxu0 %v551
        %3830 = vmatpush1.msra.mxu0 %v550
        %3831 = vmatprep.subr.mxu0 %v555
        %3832 = vmatpush1.msra.mxu0 %v554
        %3833 = vmatprep.subr.mxu0 %v559
        %3834 = vmatpush1.msra.mxu0 %v558
        %3835 = vmatprep.subr.mxu0 %v563
        %3836 = vmatpush1.msra.mxu0 %v562
        %3837 = vmatprep.subr.mxu0 %v567
        %3838 = vmatpush1.msra.mxu0 %v566
        %3839 = vmatprep.subr.mxu0 %v571
        %3840 = vmatpush1.msra.mxu0 %v570
        %3841 = vmatprep.subr.mxu0 %v575
        %3842 = vmatpush1.msra.mxu0 %v574
        %3843 = vmatprep.subr.mxu0 %v579
        %3844 = vmatpush1.msra.mxu0 %v578
        %3845 = vmatprep.subr.mxu0 %v583
        %3846 = vmatpush1.msra.mxu0 %v582
        %3847 = vmatprep.subr.mxu0 %v587
        %3848 = vmatpush1.msra.mxu0 %v586
        %3849 = vmatprep.subr.mxu0 %v591
        %3850 = vmatpush1.msra.mxu0 %v590
        %3851 = vmatprep.subr.mxu0 %v595
        %3852 = vmatpush1.msra.mxu0 %v594
        %3853 = vmatprep.subr.mxu0 %v599
        %3854 = vmatpush1.msra.mxu0 %v598
        %3855 = vmatprep.subr.mxu0 %v603
        %3856 = vmatpush1.msra.mxu0 %v602
        %3857 = vmatprep.subr.mxu0 %v607
        %3858 = vmatpush1.msra.mxu0 %v606
        %3859 = vmatprep.subr.mxu0 0.0
        %3860 = vmatpush1.msra.mxu0 0.0
        %3861 = vmatprep.subr.mxu0 0.0
        %3862 = vmatpush1.msra.mxu0 0.0
        %3863 = vmatprep.subr.mxu0 0.0
        %3864 = vmatpush1.msra.mxu0 0.0
        %3865 = vmatprep.subr.mxu0 0.0
        %3866 = vmatpush1.msra.mxu0 0.0
        %3867 = vmatprep.subr.mxu0 0.0
        %3868 = vmatpush1.msra.mxu0 0.0
        %3869 = vmatprep.subr.mxu0 0.0
        %3870 = vmatpush1.msra.mxu0 0.0
        %3871 = vmatprep.subr.mxu0 0.0
        %3872 = vmatpush1.msra.mxu0 0.0
        %3873 = vmatprep.subr.mxu0 0.0
        %3874 = vmatpush1.msra.mxu0 0.0
        %3875 = vmatprep.subr.mxu0 0.0
        %3876 = vmatpush1.msra.mxu0 0.0
        %3877 = vmatprep.subr.mxu0 0.0
        %3878 = vmatpush1.msra.mxu0 0.0
        %3879 = vmatprep.subr.mxu0 0.0
        %3880 = vmatpush1.msra.mxu0 0.0
        %3881 = vmatprep.subr.mxu0 0.0
        %3882 = vmatpush1.msra.mxu0 0.0
        %3883 = vmatprep.subr.mxu0 0.0
        %3884 = vmatpush1.msra.mxu0 0.0
        %3885 = vmatprep.subr.mxu0 0.0
        %3886 = vmatpush1.msra.mxu0 0.0
        %3887 = vmatprep.subr.mxu0 0.0
        %3888 = vmatpush1.msra.mxu0 0.0
        %3889 = vmatprep.subr.mxu0 0.0
        %3890 = vmatpush1.msra.mxu0 0.0
        %3891 = vmatprep.mubr.f32.mxu0 0.0
        %3892 = vmatmul.mubr.f32.gmra.mrb[0].mxu0 %v2757
        %v3893 = vpop.f32.mrb[0].mxu0
        %v3894 = vadd.f32 %v3752, %v3893
        %v3895 = vpop.f32.mrb[0].mxu0
        %v3896 = vadd.f32 %v3754, %v3895
        %3897 = vdwg.mxu0
        %v3898 = vadd.f32 %v3823, %v1671
        %v3899 = vadd.f32 %v3825, %v1675
        %v3900 = vadd.f32 %v3894, %v1679
        %v3901 = vadd.f32 %v3896, %v1683
        %v3902 = vmul.f32 %v3898, 0.5
        %v3903 = vmul.f32 %v3899, 0.5
        %v3904 = vmul.f32 %v3900, 0.5
        %v3905 = vtanh.pop %v3902
        %v3906 = vtanh.pop %v3903
        %v3907 = vtanh.pop %v3904
        %v3908 = vadd.f32 %v3905, 1.0
        %v3909 = vadd.f32 %v3906, 1.0
        %v3910 = vadd.f32 %v3907, 1.0
        %v3911 = vmul.f32 %v3908, 0.5
        %v3912 = vmul.f32 %v3909, 0.5
        %v3913 = vmul.f32 %v3910, 0.5
        %v3914 = vtanh.pop %v3901
        %v3915 = vmul.f32 %v3912, %v3061
        %v3916 = vmul.f32 %v3911, %v3914
        %v3917 = vadd.f32 %v3915, %v3916
        %v3918 = vtanh.pop %v3917
        %v3919 = vmul.f32 %v3913, %v3918
        %v3920 = vmul.f32 %v3919, 0.5
        %v3921 = vtanh.pop %v3920
        %v3922 = vadd.f32 %v3921, 1.0
        %v3923 = vmul.f32 %v3922, 0.5
        %3924 = vmatprep.subr.mxu0 %v801
        %3925 = vmatpush1.msra.mxu0 %v800
        %3926 = vmatprep.subr.mxu0 %v805
        %3927 = vmatpush1.msra.mxu0 %v804
        %3928 = vmatprep.subr.mxu0 %v809
        %3929 = vmatpush1.msra.mxu0 %v808
        %3930 = vmatprep.subr.mxu0 %v813
        %3931 = vmatpush1.msra.mxu0 %v812
        %3932 = vmatprep.subr.mxu0 %v817
        %3933 = vmatpush1.msra.mxu0 %v816
        %3934 = vmatprep.subr.mxu0 %v821
        %3935 = vmatpush1.msra.mxu0 %v820
        %3936 = vmatprep.subr.mxu0 %v825
        %3937 = vmatpush1.msra.mxu0 %v824
        %3938 = vmatprep.subr.mxu0 %v829
        %3939 = vmatpush1.msra.mxu0 %v828
        %3940 = vmatprep.subr.mxu0 %v833
        %3941 = vmatpush1.msra.mxu0 %v832
        %3942 = vmatprep.subr.mxu0 %v837
        %3943 = vmatpush1.msra.mxu0 %v836
        %3944 = vmatprep.subr.mxu0 %v841
        %3945 = vmatpush1.msra.mxu0 %v840
        %3946 = vmatprep.subr.mxu0 %v845
        %3947 = vmatpush1.msra.mxu0 %v844
        %3948 = vmatprep.subr.mxu0 %v849
        %3949 = vmatpush1.msra.mxu0 %v848
        %3950 = vmatprep.subr.mxu0 %v853
        %3951 = vmatpush1.msra.mxu0 %v852
        %3952 = vmatprep.subr.mxu0 %v857
        %3953 = vmatpush1.msra.mxu0 %v856
        %3954 = vmatprep.subr.mxu0 %v861
        %3955 = vmatpush1.msra.mxu0 %v860
        %3956 = vmatprep.subr.mxu0 0.0
        %3957 = vmatpush1.msra.mxu0 0.0
        %3958 = vmatprep.subr.mxu0 0.0
        %3959 = vmatpush1.msra.mxu0 0.0
        %3960 = vmatprep.subr.mxu0 0.0
        %3961 = vmatpush1.msra.mxu0 0.0
        %3962 = vmatprep.subr.mxu0 0.0
        %3963 = vmatpush1.msra.mxu0 0.0
        %3964 = vmatprep.subr.mxu0 0.0
        %3965 = vmatpush1.msra.mxu0 0.0
        %3966 = vmatprep.subr.mxu0 0.0
        %3967 = vmatpush1.msra.mxu0 0.0
        %3968 = vmatprep.subr.mxu0 0.0
        %3969 = vmatpush1.msra.mxu0 0.0
        %3970 = vmatprep.subr.mxu0 0.0
        %3971 = vmatpush1.msra.mxu0 0.0
        %3972 = vmatprep.subr.mxu0 0.0
        %3973 = vmatpush1.msra.mxu0 0.0
        %3974 = vmatprep.subr.mxu0 0.0
        %3975 = vmatpush1.msra.mxu0 0.0
        %3976 = vmatprep.subr.mxu0 0.0
        %3977 = vmatpush1.msra.mxu0 0.0
        %3978 = vmatprep.subr.mxu0 0.0
        %3979 = vmatpush1.msra.mxu0 0.0
        %3980 = vmatprep.subr.mxu0 0.0
        %3981 = vmatpush1.msra.mxu0 0.0
        %3982 = vmatprep.subr.mxu0 0.0
        %3983 = vmatpush1.msra.mxu0 0.0
        %3984 = vmatprep.subr.mxu0 0.0
        %3985 = vmatpush1.msra.mxu0 0.0
        %3986 = vmatprep.subr.mxu0 0.0
        %3987 = vmatpush1.msra.mxu0 0.0
        %3988 = vmatprep.mubr.f32.mxu0 0.0
        %3989 = vmatmul.mubr.f32.gmra.mrb[0].mxu0 %v3373
        %v3990 = vpop.f32.mrb[0].mxu0
        %v3991 = vadd.f32 0.0, %v3990
        %v3992 = vpop.f32.mrb[0].mxu0
        %v3993 = vadd.f32 0.0, %v3992
        %3994 = vdwg.mxu0
        %3995 = vmatprep.subr.mxu0 %v803
        %3996 = vmatpush1.msra.mxu0 %v802
        %3997 = vmatprep.subr.mxu0 %v807
        %3998 = vmatpush1.msra.mxu0 %v806
        %3999 = vmatprep.subr.mxu0 %v811
        %4000 = vmatpush1.msra.mxu0 %v810
        %4001 = vmatprep.subr.mxu0 %v815
        %4002 = vmatpush1.msra.mxu0 %v814
        %4003 = vmatprep.subr.mxu0 %v819
        %4004 = vmatpush1.msra.mxu0 %v818
        %4005 = vmatprep.subr.mxu0 %v823
        %4006 = vmatpush1.msra.mxu0 %v822
        %4007 = vmatprep.subr.mxu0 %v827
        %4008 = vmatpush1.msra.mxu0 %v826
        %4009 = vmatprep.subr.mxu0 %v831
        %4010 = vmatpush1.msra.mxu0 %v830
        %4011 = vmatprep.subr.mxu0 %v835
        %4012 = vmatpush1.msra.mxu0 %v834
        %4013 = vmatprep.subr.mxu0 %v839
        %4014 = vmatpush1.msra.mxu0 %v838
        %4015 = vmatprep.subr.mxu0 %v843
        %4016 = vmatpush1.msra.mxu0 %v842
        %4017 = vmatprep.subr.mxu0 %v847
        %4018 = vmatpush1.msra.mxu0 %v846
        %4019 = vmatprep.subr.mxu0 %v851
        %4020 = vmatpush1.msra.mxu0 %v850
        %4021 = vmatprep.subr.mxu0 %v855
        %4022 = vmatpush1.msra.mxu0 %v854
        %4023 = vmatprep.subr.mxu0 %v859
        %4024 = vmatpush1.msra.mxu0 %v858
        %4025 = vmatprep.subr.mxu0 %v863
        %4026 = vmatpush1.msra.mxu0 %v862
        %4027 = vmatprep.subr.mxu0 0.0
        %4028 = vmatpush1.msra.mxu0 0.0
        %4029 = vmatprep.subr.mxu0 0.0
        %4030 = vmatpush1.msra.mxu0 0.0
        %4031 = vmatprep.subr.mxu0 0.0
        %4032 = vmatpush1.msra.mxu0 0.0
        %4033 = vmatprep.subr.mxu0 0.0
        %4034 = vmatpush1.msra.mxu0 0.0
        %4035 = vmatprep.subr.mxu0 0.0
        %4036 = vmatpush1.msra.mxu0 0.0
        %4037 = vmatprep.subr.mxu0 0.0
        %4038 = vmatpush1.msra.mxu0 0.0
        %4039 = vmatprep.subr.mxu0 0.0
        %4040 = vmatpush1.msra.mxu0 0.0
        %4041 = vmatprep.subr.mxu0 0.0
        %4042 = vmatpush1.msra.mxu0 0.0
        %4043 = vmatprep.subr.mxu0 0.0
        %4044 = vmatpush1.msra.mxu0 0.0
        %4045 = vmatprep.subr.mxu0 0.0
        %4046 = vmatpush1.msra.mxu0 0.0
        %4047 = vmatprep.subr.mxu0 0.0
        %4048 = vmatpush1.msra.mxu0 0.0
        %4049 = vmatprep.subr.mxu0 0.0
        %4050 = vmatpush1.msra.mxu0 0.0
        %4051 = vmatprep.subr.mxu0 0.0
        %4052 = vmatpush1.msra.mxu0 0.0
        %4053 = vmatprep.subr.mxu0 0.0
        %4054 = vmatpush1.msra.mxu0 0.0
        %4055 = vmatprep.subr.mxu0 0.0
        %4056 = vmatpush1.msra.mxu0 0.0
        %4057 = vmatprep.subr.mxu0 0.0
        %4058 = vmatpush1.msra.mxu0 0.0
        %4059 = vmatprep.mubr.f32.mxu0 0.0
        %4060 = vmatmul.mubr.f32.gmra.mrb[0].mxu0 %v3373
        %v4061 = vpop.f32.mrb[0].mxu0
        %v4062 = vadd.f32 0.0, %v4061
        %v4063 = vpop.f32.mrb[0].mxu0
        %v4064 = vadd.f32 0.0, %v4063
        %4065 = vdwg.mxu0
        %4066 = vmatprep.subr.mxu0 %v609
        %4067 = vmatpush1.msra.mxu0 %v608
        %4068 = vmatprep.subr.mxu0 %v613
        %4069 = vmatpush1.msra.mxu0 %v612
        %4070 = vmatprep.subr.mxu0 %v617
        %4071 = vmatpush1.msra.mxu0 %v616
        %4072 = vmatprep.subr.mxu0 %v621
        %4073 = vmatpush1.msra.mxu0 %v620
        %4074 = vmatprep.subr.mxu0 %v625
        %4075 = vmatpush1.msra.mxu0 %v624
        %4076 = vmatprep.subr.mxu0 %v629
        %4077 = vmatpush1.msra.mxu0 %v628
        %4078 = vmatprep.subr.mxu0 %v633
        %4079 = vmatpush1.msra.mxu0 %v632
        %4080 = vmatprep.subr.mxu0 %v637
        %4081 = vmatpush1.msra.mxu0 %v636
        %4082 = vmatprep.subr.mxu0 %v641
        %4083 = vmatpush1.msra.mxu0 %v640
        %4084 = vmatprep.subr.mxu0 %v645
        %4085 = vmatpush1.msra.mxu0 %v644
        %4086 = vmatprep.subr.mxu0 %v649
        %4087 = vmatpush1.msra.mxu0 %v648
        %4088 = vmatprep.subr.mxu0 %v653
        %4089 = vmatpush1.msra.mxu0 %v652
        %4090 = vmatprep.subr.mxu0 %v657
        %4091 = vmatpush1.msra.mxu0 %v656
        %4092 = vmatprep.subr.mxu0 %v661
        %4093 = vmatpush1.msra.mxu0 %v660
        %4094 = vmatprep.subr.mxu0 %v665
        %4095 = vmatpush1.msra.mxu0 %v664
        %4096 = vmatprep.subr.mxu0 %v669
        %4097 = vmatpush1.msra.mxu0 %v668
        %4098 = vmatprep.subr.mxu0 0.0
        %4099 = vmatpush1.msra.mxu0 0.0
        %4100 = vmatprep.subr.mxu0 0.0
        %4101 = vmatpush1.msra.mxu0 0.0
        %4102 = vmatprep.subr.mxu0 0.0
        %4103 = vmatpush1.msra.mxu0 0.0
        %4104 = vmatprep.subr.mxu0 0.0
        %4105 = vmatpush1.msra.mxu0 0.0
        %4106 = vmatprep.subr.mxu0 0.0
        %4107 = vmatpush1.msra.mxu0 0.0
        %4108 = vmatprep.subr.mxu0 0.0
        %4109 = vmatpush1.msra.mxu0 0.0
        %4110 = vmatprep.subr.mxu0 0.0
        %4111 = vmatpush1.msra.mxu0 0.0
        %4112 = vmatprep.subr.mxu0 0.0
        %4113 = vmatpush1.msra.mxu0 0.0
        %4114 = vmatprep.subr.mxu0 0.0
        %4115 = vmatpush1.msra.mxu0 0.0
        %4116 = vmatprep.subr.mxu0 0.0
        %4117 = vmatpush1.msra.mxu0 0.0
        %4118 = vmatprep.subr.mxu0 0.0
        %4119 = vmatpush1.msra.mxu0 0.0
        %4120 = vmatprep.subr.mxu0 0.0
        %4121 = vmatpush1.msra.mxu0 0.0
        %4122 = vmatprep.subr.mxu0 0.0
        %4123 = vmatpush1.msra.mxu0 0.0
        %4124 = vmatprep.subr.mxu0 0.0
        %4125 = vmatpush1.msra.mxu0 0.0
        %4126 = vmatprep.subr.mxu0 0.0
        %4127 = vmatpush1.msra.mxu0 0.0
        %4128 = vmatprep.subr.mxu0 0.0
        %4129 = vmatpush1.msra.mxu0 0.0
        %4130 = vmatprep.mubr.f32.mxu0 0.0
        %4131 = vmatmul.mubr.f32.gmra.mrb[0].mxu0 %v3067
        %v4132 = vpop.f32.mrb[0].mxu0
        %v4133 = vadd.f32 %v3991, %v4132
        %v4134 = vpop.f32.mrb[0].mxu0
        %v4135 = vadd.f32 %v3993, %v4134
        %4136 = vdwg.mxu0
        %4137 = vmatprep.subr.mxu0 %v611
        %4138 = vmatpush1.msra.mxu0 %v610
        %4139 = vmatprep.subr.mxu0 %v615
        %4140 = vmatpush1.msra.mxu0 %v614
        %4141 = vmatprep.subr.mxu0 %v619
        %4142 = vmatpush1.msra.mxu0 %v618
        %4143 = vmatprep.subr.mxu0 %v623
        %4144 = vmatpush1.msra.mxu0 %v622
        %4145 = vmatprep.subr.mxu0 %v627
        %4146 = vmatpush1.msra.mxu0 %v626
        %4147 = vmatprep.subr.mxu0 %v631
        %4148 = vmatpush1.msra.mxu0 %v630
        %4149 = vmatprep.subr.mxu0 %v635
        %4150 = vmatpush1.msra.mxu0 %v634
        %4151 = vmatprep.subr.mxu0 %v639
        %4152 = vmatpush1.msra.mxu0 %v638
        %4153 = vmatprep.subr.mxu0 %v643
        %4154 = vmatpush1.msra.mxu0 %v642
        %4155 = vmatprep.subr.mxu0 %v647
        %4156 = vmatpush1.msra.mxu0 %v646
        %4157 = vmatprep.subr.mxu0 %v651
        %4158 = vmatpush1.msra.mxu0 %v650
        %4159 = vmatprep.subr.mxu0 %v655
        %4160 = vmatpush1.msra.mxu0 %v654
        %4161 = vmatprep.subr.mxu0 %v659
        %4162 = vmatpush1.msra.mxu0 %v658
        %4163 = vmatprep.subr.mxu0 %v663
        %4164 = vmatpush1.msra.mxu0 %v662
        %4165 = vmatprep.subr.mxu0 %v667
        %4166 = vmatpush1.msra.mxu0 %v666
        %4167 = vmatprep.subr.mxu0 %v671
        %4168 = vmatpush1.msra.mxu0 %v670
        %4169 = vmatprep.subr.mxu0 0.0
        %4170 = vmatpush1.msra.mxu0 0.0
        %4171 = vmatprep.subr.mxu0 0.0
        %4172 = vmatpush1.msra.mxu0 0.0
        %4173 = vmatprep.subr.mxu0 0.0
        %4174 = vmatpush1.msra.mxu0 0.0
        %4175 = vmatprep.subr.mxu0 0.0
        %4176 = vmatpush1.msra.mxu0 0.0
        %4177 = vmatprep.subr.mxu0 0.0
        %4178 = vmatpush1.msra.mxu0 0.0
        %4179 = vmatprep.subr.mxu0 0.0
        %4180 = vmatpush1.msra.mxu0 0.0
        %4181 = vmatprep.subr.mxu0 0.0
        %4182 = vmatpush1.msra.mxu0 0.0
        %4183 = vmatprep.subr.mxu0 0.0
        %4184 = vmatpush1.msra.mxu0 0.0
        %4185 = vmatprep.subr.mxu0 0.0
        %4186 = vmatpush1.msra.mxu0 0.0
        %4187 = vmatprep.subr.mxu0 0.0
        %4188 = vmatpush1.msra.mxu0 0.0
        %4189 = vmatprep.subr.mxu0 0.0
        %4190 = vmatpush1.msra.mxu0 0.0
        %4191 = vmatprep.subr.mxu0 0.0
        %4192 = vmatpush1.msra.mxu0 0.0
        %4193 = vmatprep.subr.mxu0 0.0
        %4194 = vmatpush1.msra.mxu0 0.0
        %4195 = vmatprep.subr.mxu0 0.0
        %4196 = vmatpush1.msra.mxu0 0.0
        %4197 = vmatprep.subr.mxu0 0.0
        %4198 = vmatpush1.msra.mxu0 0.0
        %4199 = vmatprep.subr.mxu0 0.0
        %4200 = vmatpush1.msra.mxu0 0.0
        %4201 = vmatprep.mubr.f32.mxu0 0.0
        %4202 = vmatmul.mubr.f32.gmra.mrb[0].mxu0 %v3067
        %v4203 = vpop.f32.mrb[0].mxu0
        %v4204 = vadd.f32 %v4062, %v4203
        %v4205 = vpop.f32.mrb[0].mxu0
        %v4206 = vadd.f32 %v4064, %v4205
        %4207 = vdwg.mxu0
        %v4208 = vadd.f32 %v4133, %v2480
        %v4209 = vadd.f32 %v4135, %v2484
        %v4210 = vadd.f32 %v4204, %v2488
        %v4211 = vadd.f32 %v4206, %v2492
        %v4212 = vmul.f32 %v4208, 0.5
        %v4213 = vmul.f32 %v4209, 0.5
        %v4214 = vmul.f32 %v4210, 0.5
        %v4215 = vtanh.pop %v4212
        %v4216 = vtanh.pop %v4213
        %v4217 = vtanh.pop %v4214
        %v4218 = vadd.f32 %v4215, 1.0
        %v4219 = vadd.f32 %v4216, 1.0
        %v4220 = vadd.f32 %v4217, 1.0
        %v4221 = vmul.f32 %v4218, 0.5
        %v4222 = vmul.f32 %v4219, 0.5
        %v4223 = vmul.f32 %v4220, 0.5
        %v4224 = vtanh.pop %v4211
        %v4225 = vmul.f32 %v4222, %v3371
        %v4226 = vmul.f32 %v4221, %v4224
        %v4227 = vadd.f32 %v4225, %v4226
        %v4228 = vtanh.pop %v4227
        %v4229 = vmul.f32 %v4223, %v4228
        %4230 = vmatprep.subr.mxu0 0.0
        %4231 = vmatpush1.msra.mxu0 %v867
        %4232 = vmatprep.subr.mxu0 0.0
        %4233 = vmatpush1.msra.mxu0 %v868
        %4234 = vmatprep.subr.mxu0 0.0
        %4235 = vmatpush1.msra.mxu0 %v869
        %4236 = vmatprep.subr.mxu0 0.0
        %4237 = vmatpush1.msra.mxu0 %v870
        %4238 = vmatprep.subr.mxu0 0.0
        %4239 = vmatpush1.msra.mxu0 %v871
        %4240 = vmatprep.subr.mxu0 0.0
        %4241 = vmatpush1.msra.mxu0 %v872
        %4242 = vmatprep.subr.mxu0 0.0
        %4243 = vmatpush1.msra.mxu0 %v873
        %4244 = vmatprep.subr.mxu0 0.0
        %4245 = vmatpush1.msra.mxu0 %v874
        %4246 = vmatprep.subr.mxu0 0.0
        %4247 = vmatpush1.msra.mxu0 %v875
        %4248 = vmatprep.subr.mxu0 0.0
        %4249 = vmatpush1.msra.mxu0 %v876
        %4250 = vmatprep.subr.mxu0 0.0
        %4251 = vmatpush1.msra.mxu0 %v877
        %4252 = vmatprep.subr.mxu0 0.0
        %4253 = vmatpush1.msra.mxu0 %v878
        %4254 = vmatprep.subr.mxu0 0.0
        %4255 = vmatpush1.msra.mxu0 %v879
        %4256 = vmatprep.subr.mxu0 0.0
        %4257 = vmatpush1.msra.mxu0 %v880
        %4258 = vmatprep.subr.mxu0 0.0
        %4259 = vmatpush1.msra.mxu0 %v881
        %4260 = vmatprep.subr.mxu0 0.0
        %4261 = vmatpush1.msra.mxu0 %v882
        %4262 = vmatprep.subr.mxu0 0.0
        %4263 = vmatpush1.msra.mxu0 0.0
        %4264 = vmatprep.subr.mxu0 0.0
        %4265 = vmatpush1.msra.mxu0 0.0
        %4266 = vmatprep.subr.mxu0 0.0
        %4267 = vmatpush1.msra.mxu0 0.0
        %4268 = vmatprep.subr.mxu0 0.0
        %4269 = vmatpush1.msra.mxu0 0.0
        %4270 = vmatprep.subr.mxu0 0.0
        %4271 = vmatpush1.msra.mxu0 0.0
        %4272 = vmatprep.subr.mxu0 0.0
        %4273 = vmatpush1.msra.mxu0 0.0
        %4274 = vmatprep.subr.mxu0 0.0
        %4275 = vmatpush1.msra.mxu0 0.0
        %4276 = vmatprep.subr.mxu0 0.0
        %4277 = vmatpush1.msra.mxu0 0.0
        %4278 = vmatprep.subr.mxu0 0.0
        %4279 = vmatpush1.msra.mxu0 0.0
        %4280 = vmatprep.subr.mxu0 0.0
        %4281 = vmatpush1.msra.mxu0 0.0
        %4282 = vmatprep.subr.mxu0 0.0
        %4283 = vmatpush1.msra.mxu0 0.0
        %4284 = vmatprep.subr.mxu0 0.0
        %4285 = vmatpush1.msra.mxu0 0.0
        %4286 = vmatprep.subr.mxu0 0.0
        %4287 = vmatpush1.msra.mxu0 0.0
        %4288 = vmatprep.subr.mxu0 0.0
        %4289 = vmatpush1.msra.mxu0 0.0
        %4290 = vmatprep.subr.mxu0 0.0
        %4291 = vmatpush1.msra.mxu0 0.0
        %4292 = vmatprep.subr.mxu0 0.0
        %4293 = vmatpush1.msra.mxu0 0.0
        %4294 = vmatprep.mubr.f32.mxu0 0.0
        %4295 = vmatmul.mubr.f32.gmra.mrb[0].mxu0 %v4229
        %v4296 = vpop.f32.mrb[0].mxu0
        %v4297 = vadd.f32 0.0, %v4296
        %v4298 = vpop.f32.mrb[0].mxu0
        %4299 = vdwg.mxu0
        %s4300 = scalar_lea.vmem %s475, 16 [#allocation13]
        %4301 = vst [vmem:[%s4300] sm:$0xff] %v4297
        %4302 = vmatprep.subr.mxu0 %v673
        %4303 = vmatpush1.msra.mxu0 %v672
        %4304 = vmatprep.subr.mxu0 %v677
        %4305 = vmatpush1.msra.mxu0 %v676
        %4306 = vmatprep.subr.mxu0 %v681
        %4307 = vmatpush1.msra.mxu0 %v680
        %4308 = vmatprep.subr.mxu0 %v685
        %4309 = vmatpush1.msra.mxu0 %v684
        %4310 = vmatprep.subr.mxu0 %v689
        %4311 = vmatpush1.msra.mxu0 %v688
        %4312 = vmatprep.subr.mxu0 %v693
        %4313 = vmatpush1.msra.mxu0 %v692
        %4314 = vmatprep.subr.mxu0 %v697
        %4315 = vmatpush1.msra.mxu0 %v696
        %4316 = vmatprep.subr.mxu0 %v701
        %4317 = vmatpush1.msra.mxu0 %v700
        %4318 = vmatprep.subr.mxu0 %v705
        %4319 = vmatpush1.msra.mxu0 %v704
        %4320 = vmatprep.subr.mxu0 %v709
        %4321 = vmatpush1.msra.mxu0 %v708
        %4322 = vmatprep.subr.mxu0 %v713
        %4323 = vmatpush1.msra.mxu0 %v712
        %4324 = vmatprep.subr.mxu0 %v717
        %4325 = vmatpush1.msra.mxu0 %v716
        %4326 = vmatprep.subr.mxu0 %v721
        %4327 = vmatpush1.msra.mxu0 %v720
        %4328 = vmatprep.subr.mxu0 %v725
        %4329 = vmatpush1.msra.mxu0 %v724
        %4330 = vmatprep.subr.mxu0 %v729
        %4331 = vmatpush1.msra.mxu0 %v728
        %4332 = vmatprep.subr.mxu0 %v733
        %4333 = vmatpush1.msra.mxu0 %v732
        %4334 = vmatprep.subr.mxu0 0.0
        %4335 = vmatpush1.msra.mxu0 0.0
        %4336 = vmatprep.subr.mxu0 0.0
        %4337 = vmatpush1.msra.mxu0 0.0
        %4338 = vmatprep.subr.mxu0 0.0
        %4339 = vmatpush1.msra.mxu0 0.0
        %4340 = vmatprep.subr.mxu0 0.0
        %4341 = vmatpush1.msra.mxu0 0.0
        %4342 = vmatprep.subr.mxu0 0.0
        %4343 = vmatpush1.msra.mxu0 0.0
        %4344 = vmatprep.subr.mxu0 0.0
        %4345 = vmatpush1.msra.mxu0 0.0
        %4346 = vmatprep.subr.mxu0 0.0
        %4347 = vmatpush1.msra.mxu0 0.0
        %4348 = vmatprep.subr.mxu0 0.0
        %4349 = vmatpush1.msra.mxu0 0.0
        %4350 = vmatprep.subr.mxu0 0.0
        %4351 = vmatpush1.msra.mxu0 0.0
        %4352 = vmatprep.subr.mxu0 0.0
        %4353 = vmatpush1.msra.mxu0 0.0
        %4354 = vmatprep.subr.mxu0 0.0
        %4355 = vmatpush1.msra.mxu0 0.0
        %4356 = vmatprep.subr.mxu0 0.0
        %4357 = vmatpush1.msra.mxu0 0.0
        %4358 = vmatprep.subr.mxu0 0.0
        %4359 = vmatpush1.msra.mxu0 0.0
        %4360 = vmatprep.subr.mxu0 0.0
        %4361 = vmatpush1.msra.mxu0 0.0
        %4362 = vmatprep.subr.mxu0 0.0
        %4363 = vmatpush1.msra.mxu0 0.0
        %4364 = vmatprep.subr.mxu0 0.0
        %4365 = vmatpush1.msra.mxu0 0.0
        %4366 = vmatprep.mubr.f32.mxu0 0.0
        %4367 = vmatmul.mubr.f32.gmra.mrb[0].mxu0 %v3609
        %v4368 = vpop.f32.mrb[0].mxu0
        %v4369 = vadd.f32 0.0, %v4368
        %v4370 = vpop.f32.mrb[0].mxu0
        %v4371 = vadd.f32 0.0, %v4370
        %4372 = vdwg.mxu0
        %4373 = vmatprep.subr.mxu0 %v675
        %4374 = vmatpush1.msra.mxu0 %v674
        %4375 = vmatprep.subr.mxu0 %v679
        %4376 = vmatpush1.msra.mxu0 %v678
        %4377 = vmatprep.subr.mxu0 %v683
        %4378 = vmatpush1.msra.mxu0 %v682
        %4379 = vmatprep.subr.mxu0 %v687
        %4380 = vmatpush1.msra.mxu0 %v686
        %4381 = vmatprep.subr.mxu0 %v691
        %4382 = vmatpush1.msra.mxu0 %v690
        %4383 = vmatprep.subr.mxu0 %v695
        %4384 = vmatpush1.msra.mxu0 %v694
        %4385 = vmatprep.subr.mxu0 %v699
        %4386 = vmatpush1.msra.mxu0 %v698
        %4387 = vmatprep.subr.mxu0 %v703
        %4388 = vmatpush1.msra.mxu0 %v702
        %4389 = vmatprep.subr.mxu0 %v707
        %4390 = vmatpush1.msra.mxu0 %v706
        %4391 = vmatprep.subr.mxu0 %v711
        %4392 = vmatpush1.msra.mxu0 %v710
        %4393 = vmatprep.subr.mxu0 %v715
        %4394 = vmatpush1.msra.mxu0 %v714
        %4395 = vmatprep.subr.mxu0 %v719
        %4396 = vmatpush1.msra.mxu0 %v718
        %4397 = vmatprep.subr.mxu0 %v723
        %4398 = vmatpush1.msra.mxu0 %v722
        %4399 = vmatprep.subr.mxu0 %v727
        %4400 = vmatpush1.msra.mxu0 %v726
        %4401 = vmatprep.subr.mxu0 %v731
        %4402 = vmatpush1.msra.mxu0 %v730
        %4403 = vmatprep.subr.mxu0 %v735
        %4404 = vmatpush1.msra.mxu0 %v734
        %4405 = vmatprep.subr.mxu0 0.0
        %4406 = vmatpush1.msra.mxu0 0.0
        %4407 = vmatprep.subr.mxu0 0.0
        %4408 = vmatpush1.msra.mxu0 0.0
        %4409 = vmatprep.subr.mxu0 0.0
        %4410 = vmatpush1.msra.mxu0 0.0
        %4411 = vmatprep.subr.mxu0 0.0
        %4412 = vmatpush1.msra.mxu0 0.0
        %4413 = vmatprep.subr.mxu0 0.0
        %4414 = vmatpush1.msra.mxu0 0.0
        %4415 = vmatprep.subr.mxu0 0.0
        %4416 = vmatpush1.msra.mxu0 0.0
        %4417 = vmatprep.subr.mxu0 0.0
        %4418 = vmatpush1.msra.mxu0 0.0
        %4419 = vmatprep.subr.mxu0 0.0
        %4420 = vmatpush1.msra.mxu0 0.0
        %4421 = vmatprep.subr.mxu0 0.0
        %4422 = vmatpush1.msra.mxu0 0.0
        %4423 = vmatprep.subr.mxu0 0.0
        %4424 = vmatpush1.msra.mxu0 0.0
        %4425 = vmatprep.subr.mxu0 0.0
        %4426 = vmatpush1.msra.mxu0 0.0
        %4427 = vmatprep.subr.mxu0 0.0
        %4428 = vmatpush1.msra.mxu0 0.0
        %4429 = vmatprep.subr.mxu0 0.0
        %4430 = vmatpush1.msra.mxu0 0.0
        %4431 = vmatprep.subr.mxu0 0.0
        %4432 = vmatpush1.msra.mxu0 0.0
        %4433 = vmatprep.subr.mxu0 0.0
        %4434 = vmatpush1.msra.mxu0 0.0
        %4435 = vmatprep.subr.mxu0 0.0
        %4436 = vmatpush1.msra.mxu0 0.0
        %4437 = vmatprep.mubr.f32.mxu0 0.0
        %4438 = vmatmul.mubr.f32.gmra.mrb[0].mxu0 %v3609
        %v4439 = vpop.f32.mrb[0].mxu0
        %v4440 = vadd.f32 0.0, %v4439
        %v4441 = vpop.f32.mrb[0].mxu0
        %v4442 = vadd.f32 0.0, %v4441
        %4443 = vdwg.mxu0
        %v4444 = vadd.f32 %v972, %v4369
        %v4445 = vadd.f32 %v974, %v4371
        %v4446 = vadd.f32 %v1043, %v4440
        %v4447 = vadd.f32 %v1045, %v4442
        %v4448 = vmul.f32 %v4444, 0.5
        %v4449 = vmul.f32 %v4445, 0.5
        %v4450 = vmul.f32 %v4446, 0.5
        %v4451 = vtanh.pop %v4448
        %v4452 = vtanh.pop %v4449
        %v4453 = vtanh.pop %v4450
        %v4454 = vadd.f32 %v4451, 1.0
        %v4455 = vadd.f32 %v4452, 1.0
        %v4456 = vadd.f32 %v4453, 1.0
        %v4457 = vmul.f32 %v4454, 0.5
        %v4458 = vmul.f32 %v4455, 0.5
        %v4459 = vmul.f32 %v4456, 0.5
        %v4460 = vtanh.pop %v4447
        %v4461 = vmul.f32 %v4458, %v3607
        %v4462 = vmul.f32 %v4457, %v4460
        %v4463 = vadd.f32 %v4461, %v4462
        %v4464 = vtanh.pop %v4463
        %v4465 = vmul.f32 %v4459, %v4464
        %v4466 = vmul.f32 %v4465, 0.5
        %v4467 = vtanh.pop %v4466
        %v4468 = vadd.f32 %v4467, 1.0
        %v4469 = vmul.f32 %v4468, 0.5
        %4470 = vmatprep.subr.mxu0 %v737
        %4471 = vmatpush1.msra.mxu0 %v736
        %4472 = vmatprep.subr.mxu0 %v741
        %4473 = vmatpush1.msra.mxu0 %v740
        %4474 = vmatprep.subr.mxu0 %v745
        %4475 = vmatpush1.msra.mxu0 %v744
        %4476 = vmatprep.subr.mxu0 %v749
        %4477 = vmatpush1.msra.mxu0 %v748
        %4478 = vmatprep.subr.mxu0 %v753
        %4479 = vmatpush1.msra.mxu0 %v752
        %4480 = vmatprep.subr.mxu0 %v757
        %4481 = vmatpush1.msra.mxu0 %v756
        %4482 = vmatprep.subr.mxu0 %v761
        %4483 = vmatpush1.msra.mxu0 %v760
        %4484 = vmatprep.subr.mxu0 %v765
        %4485 = vmatpush1.msra.mxu0 %v764
        %4486 = vmatprep.subr.mxu0 %v769
        %4487 = vmatpush1.msra.mxu0 %v768
        %4488 = vmatprep.subr.mxu0 %v773
        %4489 = vmatpush1.msra.mxu0 %v772
        %4490 = vmatprep.subr.mxu0 %v777
        %4491 = vmatpush1.msra.mxu0 %v776
        %4492 = vmatprep.subr.mxu0 %v781
        %4493 = vmatpush1.msra.mxu0 %v780
        %4494 = vmatprep.subr.mxu0 %v785
        %4495 = vmatpush1.msra.mxu0 %v784
        %4496 = vmatprep.subr.mxu0 %v789
        %4497 = vmatpush1.msra.mxu0 %v788
        %4498 = vmatprep.subr.mxu0 %v793
        %4499 = vmatpush1.msra.mxu0 %v792
        %4500 = vmatprep.subr.mxu0 %v797
        %4501 = vmatpush1.msra.mxu0 %v796
        %4502 = vmatprep.subr.mxu0 0.0
        %4503 = vmatpush1.msra.mxu0 0.0
        %4504 = vmatprep.subr.mxu0 0.0
        %4505 = vmatpush1.msra.mxu0 0.0
        %4506 = vmatprep.subr.mxu0 0.0
        %4507 = vmatpush1.msra.mxu0 0.0
        %4508 = vmatprep.subr.mxu0 0.0
        %4509 = vmatpush1.msra.mxu0 0.0
        %4510 = vmatprep.subr.mxu0 0.0
        %4511 = vmatpush1.msra.mxu0 0.0
        %4512 = vmatprep.subr.mxu0 0.0
        %4513 = vmatpush1.msra.mxu0 0.0
        %4514 = vmatprep.subr.mxu0 0.0
        %4515 = vmatpush1.msra.mxu0 0.0
        %4516 = vmatprep.subr.mxu0 0.0
        %4517 = vmatpush1.msra.mxu0 0.0
        %4518 = vmatprep.subr.mxu0 0.0
        %4519 = vmatpush1.msra.mxu0 0.0
        %4520 = vmatprep.subr.mxu0 0.0
        %4521 = vmatpush1.msra.mxu0 0.0
        %4522 = vmatprep.subr.mxu0 0.0
        %4523 = vmatpush1.msra.mxu0 0.0
        %4524 = vmatprep.subr.mxu0 0.0
        %4525 = vmatpush1.msra.mxu0 0.0
        %4526 = vmatprep.subr.mxu0 0.0
        %4527 = vmatpush1.msra.mxu0 0.0
        %4528 = vmatprep.subr.mxu0 0.0
        %4529 = vmatpush1.msra.mxu0 0.0
        %4530 = vmatprep.subr.mxu0 0.0
        %4531 = vmatpush1.msra.mxu0 0.0
        %4532 = vmatprep.subr.mxu0 0.0
        %4533 = vmatpush1.msra.mxu0 0.0
        %4534 = vmatprep.mubr.f32.mxu0 0.0
        %4535 = vmatmul.mubr.f32.gmra.mrb[0].mxu0 %v3919
        %v4536 = vpop.f32.mrb[0].mxu0
        %v4537 = vadd.f32 0.0, %v4536
        %v4538 = vpop.f32.mrb[0].mxu0
        %v4539 = vadd.f32 0.0, %v4538
        %4540 = vdwg.mxu0
        %4541 = vmatprep.subr.mxu0 %v739
        %4542 = vmatpush1.msra.mxu0 %v738
        %4543 = vmatprep.subr.mxu0 %v743
        %4544 = vmatpush1.msra.mxu0 %v742
        %4545 = vmatprep.subr.mxu0 %v747
        %4546 = vmatpush1.msra.mxu0 %v746
        %4547 = vmatprep.subr.mxu0 %v751
        %4548 = vmatpush1.msra.mxu0 %v750
        %4549 = vmatprep.subr.mxu0 %v755
        %4550 = vmatpush1.msra.mxu0 %v754
        %4551 = vmatprep.subr.mxu0 %v759
        %4552 = vmatpush1.msra.mxu0 %v758
        %4553 = vmatprep.subr.mxu0 %v763
        %4554 = vmatpush1.msra.mxu0 %v762
        %4555 = vmatprep.subr.mxu0 %v767
        %4556 = vmatpush1.msra.mxu0 %v766
        %4557 = vmatprep.subr.mxu0 %v771
        %4558 = vmatpush1.msra.mxu0 %v770
        %4559 = vmatprep.subr.mxu0 %v775
        %4560 = vmatpush1.msra.mxu0 %v774
        %4561 = vmatprep.subr.mxu0 %v779
        %4562 = vmatpush1.msra.mxu0 %v778
        %4563 = vmatprep.subr.mxu0 %v783
        %4564 = vmatpush1.msra.mxu0 %v782
        %4565 = vmatprep.subr.mxu0 %v787
        %4566 = vmatpush1.msra.mxu0 %v786
        %4567 = vmatprep.subr.mxu0 %v791
        %4568 = vmatpush1.msra.mxu0 %v790
        %4569 = vmatprep.subr.mxu0 %v795
        %4570 = vmatpush1.msra.mxu0 %v794
        %4571 = vmatprep.subr.mxu0 %v799
        %4572 = vmatpush1.msra.mxu0 %v798
        %4573 = vmatprep.subr.mxu0 0.0
        %4574 = vmatpush1.msra.mxu0 0.0
        %4575 = vmatprep.subr.mxu0 0.0
        %4576 = vmatpush1.msra.mxu0 0.0
        %4577 = vmatprep.subr.mxu0 0.0
        %4578 = vmatpush1.msra.mxu0 0.0
        %4579 = vmatprep.subr.mxu0 0.0
        %4580 = vmatpush1.msra.mxu0 0.0
        %4581 = vmatprep.subr.mxu0 0.0
        %4582 = vmatpush1.msra.mxu0 0.0
        %4583 = vmatprep.subr.mxu0 0.0
        %4584 = vmatpush1.msra.mxu0 0.0
        %4585 = vmatprep.subr.mxu0 0.0
        %4586 = vmatpush1.msra.mxu0 0.0
        %4587 = vmatprep.subr.mxu0 0.0
        %4588 = vmatpush1.msra.mxu0 0.0
        %4589 = vmatprep.subr.mxu0 0.0
        %4590 = vmatpush1.msra.mxu0 0.0
        %4591 = vmatprep.subr.mxu0 0.0
        %4592 = vmatpush1.msra.mxu0 0.0
        %4593 = vmatprep.subr.mxu0 0.0
        %4594 = vmatpush1.msra.mxu0 0.0
        %4595 = vmatprep.subr.mxu0 0.0
        %4596 = vmatpush1.msra.mxu0 0.0
        %4597 = vmatprep.subr.mxu0 0.0
        %4598 = vmatpush1.msra.mxu0 0.0
        %4599 = vmatprep.subr.mxu0 0.0
        %4600 = vmatpush1.msra.mxu0 0.0
        %4601 = vmatprep.subr.mxu0 0.0
        %4602 = vmatpush1.msra.mxu0 0.0
        %4603 = vmatprep.subr.mxu0 0.0
        %4604 = vmatpush1.msra.mxu0 0.0
        %4605 = vmatprep.mubr.f32.mxu0 0.0
        %4606 = vmatmul.mubr.f32.gmra.mrb[0].mxu0 %v3919
        %v4607 = vpop.f32.mrb[0].mxu0
        %v4608 = vadd.f32 0.0, %v4607
        %v4609 = vpop.f32.mrb[0].mxu0
        %v4610 = vadd.f32 0.0, %v4609
        %4611 = vdwg.mxu0
        %4612 = vmatprep.subr.mxu0 %v545
        %4613 = vmatpush1.msra.mxu0 %v544
        %4614 = vmatprep.subr.mxu0 %v549
        %4615 = vmatpush1.msra.mxu0 %v548
        %4616 = vmatprep.subr.mxu0 %v553
        %4617 = vmatpush1.msra.mxu0 %v552
        %4618 = vmatprep.subr.mxu0 %v557
        %4619 = vmatpush1.msra.mxu0 %v556
        %4620 = vmatprep.subr.mxu0 %v561
        %4621 = vmatpush1.msra.mxu0 %v560
        %4622 = vmatprep.subr.mxu0 %v565
        %4623 = vmatpush1.msra.mxu0 %v564
        %4624 = vmatprep.subr.mxu0 %v569
        %4625 = vmatpush1.msra.mxu0 %v568
        %4626 = vmatprep.subr.mxu0 %v573
        %4627 = vmatpush1.msra.mxu0 %v572
        %4628 = vmatprep.subr.mxu0 %v577
        %4629 = vmatpush1.msra.mxu0 %v576
        %4630 = vmatprep.subr.mxu0 %v581
        %4631 = vmatpush1.msra.mxu0 %v580
        %4632 = vmatprep.subr.mxu0 %v585
        %4633 = vmatpush1.msra.mxu0 %v584
        %4634 = vmatprep.subr.mxu0 %v589
        %4635 = vmatpush1.msra.mxu0 %v588
        %4636 = vmatprep.subr.mxu0 %v593
        %4637 = vmatpush1.msra.mxu0 %v592
        %4638 = vmatprep.subr.mxu0 %v597
        %4639 = vmatpush1.msra.mxu0 %v596
        %4640 = vmatprep.subr.mxu0 %v601
        %4641 = vmatpush1.msra.mxu0 %v600
        %4642 = vmatprep.subr.mxu0 %v605
        %4643 = vmatpush1.msra.mxu0 %v604
        %4644 = vmatprep.subr.mxu0 0.0
        %4645 = vmatpush1.msra.mxu0 0.0
        %4646 = vmatprep.subr.mxu0 0.0
        %4647 = vmatpush1.msra.mxu0 0.0
        %4648 = vmatprep.subr.mxu0 0.0
        %4649 = vmatpush1.msra.mxu0 0.0
        %4650 = vmatprep.subr.mxu0 0.0
        %4651 = vmatpush1.msra.mxu0 0.0
        %4652 = vmatprep.subr.mxu0 0.0
        %4653 = vmatpush1.msra.mxu0 0.0
        %4654 = vmatprep.subr.mxu0 0.0
        %4655 = vmatpush1.msra.mxu0 0.0
        %4656 = vmatprep.subr.mxu0 0.0
        %4657 = vmatpush1.msra.mxu0 0.0
        %4658 = vmatprep.subr.mxu0 0.0
        %4659 = vmatpush1.msra.mxu0 0.0
        %4660 = vmatprep.subr.mxu0 0.0
        %4661 = vmatpush1.msra.mxu0 0.0
        %4662 = vmatprep.subr.mxu0 0.0
        %4663 = vmatpush1.msra.mxu0 0.0
        %4664 = vmatprep.subr.mxu0 0.0
        %4665 = vmatpush1.msra.mxu0 0.0
        %4666 = vmatprep.subr.mxu0 0.0
        %4667 = vmatpush1.msra.mxu0 0.0
        %4668 = vmatprep.subr.mxu0 0.0
        %4669 = vmatpush1.msra.mxu0 0.0
        %4670 = vmatprep.subr.mxu0 0.0
        %4671 = vmatpush1.msra.mxu0 0.0
        %4672 = vmatprep.subr.mxu0 0.0
        %4673 = vmatpush1.msra.mxu0 0.0
        %4674 = vmatprep.subr.mxu0 0.0
        %4675 = vmatpush1.msra.mxu0 0.0
        %4676 = vmatprep.mubr.f32.mxu0 0.0
        %4677 = vmatmul.mubr.f32.gmra.mrb[0].mxu0 %v3613
        %v4678 = vpop.f32.mrb[0].mxu0
        %v4679 = vadd.f32 %v4537, %v4678
        %v4680 = vpop.f32.mrb[0].mxu0
        %v4681 = vadd.f32 %v4539, %v4680
        %4682 = vdwg.mxu0
        %4683 = vmatprep.subr.mxu0 %v547
        %4684 = vmatpush1.msra.mxu0 %v546
        %4685 = vmatprep.subr.mxu0 %v551
        %4686 = vmatpush1.msra.mxu0 %v550
        %4687 = vmatprep.subr.mxu0 %v555
        %4688 = vmatpush1.msra.mxu0 %v554
        %4689 = vmatprep.subr.mxu0 %v559
        %4690 = vmatpush1.msra.mxu0 %v558
        %4691 = vmatprep.subr.mxu0 %v563
        %4692 = vmatpush1.msra.mxu0 %v562
        %4693 = vmatprep.subr.mxu0 %v567
        %4694 = vmatpush1.msra.mxu0 %v566
        %4695 = vmatprep.subr.mxu0 %v571
        %4696 = vmatpush1.msra.mxu0 %v570
        %4697 = vmatprep.subr.mxu0 %v575
        %4698 = vmatpush1.msra.mxu0 %v574
        %4699 = vmatprep.subr.mxu0 %v579
        %4700 = vmatpush1.msra.mxu0 %v578
        %4701 = vmatprep.subr.mxu0 %v583
        %4702 = vmatpush1.msra.mxu0 %v582
        %4703 = vmatprep.subr.mxu0 %v587
        %4704 = vmatpush1.msra.mxu0 %v586
        %4705 = vmatprep.subr.mxu0 %v591
        %4706 = vmatpush1.msra.mxu0 %v590
        %4707 = vmatprep.subr.mxu0 %v595
        %4708 = vmatpush1.msra.mxu0 %v594
        %4709 = vmatprep.subr.mxu0 %v599
        %4710 = vmatpush1.msra.mxu0 %v598
        %4711 = vmatprep.subr.mxu0 %v603
        %4712 = vmatpush1.msra.mxu0 %v602
        %4713 = vmatprep.subr.mxu0 %v607
        %4714 = vmatpush1.msra.mxu0 %v606
        %4715 = vmatprep.subr.mxu0 0.0
        %4716 = vmatpush1.msra.mxu0 0.0
        %4717 = vmatprep.subr.mxu0 0.0
        %4718 = vmatpush1.msra.mxu0 0.0
        %4719 = vmatprep.subr.mxu0 0.0
        %4720 = vmatpush1.msra.mxu0 0.0
        %4721 = vmatprep.subr.mxu0 0.0
        %4722 = vmatpush1.msra.mxu0 0.0
        %4723 = vmatprep.subr.mxu0 0.0
        %4724 = vmatpush1.msra.mxu0 0.0
        %4725 = vmatprep.subr.mxu0 0.0
        %4726 = vmatpush1.msra.mxu0 0.0
        %4727 = vmatprep.subr.mxu0 0.0
        %4728 = vmatpush1.msra.mxu0 0.0
        %4729 = vmatprep.subr.mxu0 0.0
        %4730 = vmatpush1.msra.mxu0 0.0
        %4731 = vmatprep.subr.mxu0 0.0
        %4732 = vmatpush1.msra.mxu0 0.0
        %4733 = vmatprep.subr.mxu0 0.0
        %4734 = vmatpush1.msra.mxu0 0.0
        %4735 = vmatprep.subr.mxu0 0.0
        %4736 = vmatpush1.msra.mxu0 0.0
        %4737 = vmatprep.subr.mxu0 0.0
        %4738 = vmatpush1.msra.mxu0 0.0
        %4739 = vmatprep.subr.mxu0 0.0
        %4740 = vmatpush1.msra.mxu0 0.0
        %4741 = vmatprep.subr.mxu0 0.0
        %4742 = vmatpush1.msra.mxu0 0.0
        %4743 = vmatprep.subr.mxu0 0.0
        %4744 = vmatpush1.msra.mxu0 0.0
        %4745 = vmatprep.subr.mxu0 0.0
        %4746 = vmatpush1.msra.mxu0 0.0
        %4747 = vmatprep.mubr.f32.mxu0 0.0
        %4748 = vmatmul.mubr.f32.gmra.mrb[0].mxu0 %v3613
        %v4749 = vpop.f32.mrb[0].mxu0
        %v4750 = vadd.f32 %v4608, %v4749
        %v4751 = vpop.f32.mrb[0].mxu0
        %v4752 = vadd.f32 %v4610, %v4751
        %4753 = vdwg.mxu0
        %v4754 = vadd.f32 %v4679, %v1671
        %v4755 = vadd.f32 %v4681, %v1675
        %v4756 = vadd.f32 %v4750, %v1679
        %v4757 = vadd.f32 %v4752, %v1683
        %v4758 = vmul.f32 %v4754, 0.5
        %v4759 = vmul.f32 %v4755, 0.5
        %v4760 = vmul.f32 %v4756, 0.5
        %v4761 = vtanh.pop %v4758
        %v4762 = vtanh.pop %v4759
        %v4763 = vtanh.pop %v4760
        %v4764 = vadd.f32 %v4761, 1.0
        %v4765 = vadd.f32 %v4762, 1.0
        %v4766 = vadd.f32 %v4763, 1.0
        %v4767 = vmul.f32 %v4764, 0.5
        %v4768 = vmul.f32 %v4765, 0.5
        %v4769 = vmul.f32 %v4766, 0.5
        %v4770 = vtanh.pop %v4757
        %v4771 = vmul.f32 %v4768, %v3917
        %v4772 = vmul.f32 %v4767, %v4770
        %v4773 = vadd.f32 %v4771, %v4772
        %v4774 = vtanh.pop %v4773
        %v4775 = vmul.f32 %v4769, %v4774
        %v4776 = vmul.f32 %v4775, 0.5
        %v4777 = vtanh.pop %v4776
        %v4778 = vadd.f32 %v4777, 1.0
        %v4779 = vmul.f32 %v4778, 0.5
        %4780 = vmatprep.subr.mxu0 %v801
        %4781 = vmatpush1.msra.mxu0 %v800
        %4782 = vmatprep.subr.mxu0 %v805
        %4783 = vmatpush1.msra.mxu0 %v804
        %4784 = vmatprep.subr.mxu0 %v809
        %4785 = vmatpush1.msra.mxu0 %v808
        %4786 = vmatprep.subr.mxu0 %v813
        %4787 = vmatpush1.msra.mxu0 %v812
        %4788 = vmatprep.subr.mxu0 %v817
        %4789 = vmatpush1.msra.mxu0 %v816
        %4790 = vmatprep.subr.mxu0 %v821
        %4791 = vmatpush1.msra.mxu0 %v820
        %4792 = vmatprep.subr.mxu0 %v825
        %4793 = vmatpush1.msra.mxu0 %v824
        %4794 = vmatprep.subr.mxu0 %v829
        %4795 = vmatpush1.msra.mxu0 %v828
        %4796 = vmatprep.subr.mxu0 %v833
        %4797 = vmatpush1.msra.mxu0 %v832
        %4798 = vmatprep.subr.mxu0 %v837
        %4799 = vmatpush1.msra.mxu0 %v836
        %4800 = vmatprep.subr.mxu0 %v841
        %4801 = vmatpush1.msra.mxu0 %v840
        %4802 = vmatprep.subr.mxu0 %v845
        %4803 = vmatpush1.msra.mxu0 %v844
        %4804 = vmatprep.subr.mxu0 %v849
        %4805 = vmatpush1.msra.mxu0 %v848
        %4806 = vmatprep.subr.mxu0 %v853
        %4807 = vmatpush1.msra.mxu0 %v852
        %4808 = vmatprep.subr.mxu0 %v857
        %4809 = vmatpush1.msra.mxu0 %v856
        %4810 = vmatprep.subr.mxu0 %v861
        %4811 = vmatpush1.msra.mxu0 %v860
        %4812 = vmatprep.subr.mxu0 0.0
        %4813 = vmatpush1.msra.mxu0 0.0
        %4814 = vmatprep.subr.mxu0 0.0
        %4815 = vmatpush1.msra.mxu0 0.0
        %4816 = vmatprep.subr.mxu0 0.0
        %4817 = vmatpush1.msra.mxu0 0.0
        %4818 = vmatprep.subr.mxu0 0.0
        %4819 = vmatpush1.msra.mxu0 0.0
        %4820 = vmatprep.subr.mxu0 0.0
        %4821 = vmatpush1.msra.mxu0 0.0
        %4822 = vmatprep.subr.mxu0 0.0
        %4823 = vmatpush1.msra.mxu0 0.0
        %4824 = vmatprep.subr.mxu0 0.0
        %4825 = vmatpush1.msra.mxu0 0.0
        %4826 = vmatprep.subr.mxu0 0.0
        %4827 = vmatpush1.msra.mxu0 0.0
        %4828 = vmatprep.subr.mxu0 0.0
        %4829 = vmatpush1.msra.mxu0 0.0
        %4830 = vmatprep.subr.mxu0 0.0
        %4831 = vmatpush1.msra.mxu0 0.0
        %4832 = vmatprep.subr.mxu0 0.0
        %4833 = vmatpush1.msra.mxu0 0.0
        %4834 = vmatprep.subr.mxu0 0.0
        %4835 = vmatpush1.msra.mxu0 0.0
        %4836 = vmatprep.subr.mxu0 0.0
        %4837 = vmatpush1.msra.mxu0 0.0
        %4838 = vmatprep.subr.mxu0 0.0
        %4839 = vmatpush1.msra.mxu0 0.0
        %4840 = vmatprep.subr.mxu0 0.0
        %4841 = vmatpush1.msra.mxu0 0.0
        %4842 = vmatprep.subr.mxu0 0.0
        %4843 = vmatpush1.msra.mxu0 0.0
        %4844 = vmatprep.mubr.f32.mxu0 0.0
        %4845 = vmatmul.mubr.f32.gmra.mrb[0].mxu0 %v4229
        %v4846 = vpop.f32.mrb[0].mxu0
        %v4847 = vadd.f32 0.0, %v4846
        %v4848 = vpop.f32.mrb[0].mxu0
        %v4849 = vadd.f32 0.0, %v4848
        %4850 = vdwg.mxu0
        %4851 = vmatprep.subr.mxu0 %v803
        %4852 = vmatpush1.msra.mxu0 %v802
        %4853 = vmatprep.subr.mxu0 %v807
        %4854 = vmatpush1.msra.mxu0 %v806
        %4855 = vmatprep.subr.mxu0 %v811
        %4856 = vmatpush1.msra.mxu0 %v810
        %4857 = vmatprep.subr.mxu0 %v815
        %4858 = vmatpush1.msra.mxu0 %v814
        %4859 = vmatprep.subr.mxu0 %v819
        %4860 = vmatpush1.msra.mxu0 %v818
        %4861 = vmatprep.subr.mxu0 %v823
        %4862 = vmatpush1.msra.mxu0 %v822
        %4863 = vmatprep.subr.mxu0 %v827
        %4864 = vmatpush1.msra.mxu0 %v826
        %4865 = vmatprep.subr.mxu0 %v831
        %4866 = vmatpush1.msra.mxu0 %v830
        %4867 = vmatprep.subr.mxu0 %v835
        %4868 = vmatpush1.msra.mxu0 %v834
        %4869 = vmatprep.subr.mxu0 %v839
        %4870 = vmatpush1.msra.mxu0 %v838
        %4871 = vmatprep.subr.mxu0 %v843
        %4872 = vmatpush1.msra.mxu0 %v842
        %4873 = vmatprep.subr.mxu0 %v847
        %4874 = vmatpush1.msra.mxu0 %v846
        %4875 = vmatprep.subr.mxu0 %v851
        %4876 = vmatpush1.msra.mxu0 %v850
        %4877 = vmatprep.subr.mxu0 %v855
        %4878 = vmatpush1.msra.mxu0 %v854
        %4879 = vmatprep.subr.mxu0 %v859
        %4880 = vmatpush1.msra.mxu0 %v858
        %4881 = vmatprep.subr.mxu0 %v863
        %4882 = vmatpush1.msra.mxu0 %v862
        %4883 = vmatprep.subr.mxu0 0.0
        %4884 = vmatpush1.msra.mxu0 0.0
        %4885 = vmatprep.subr.mxu0 0.0
        %4886 = vmatpush1.msra.mxu0 0.0
        %4887 = vmatprep.subr.mxu0 0.0
        %4888 = vmatpush1.msra.mxu0 0.0
        %4889 = vmatprep.subr.mxu0 0.0
        %4890 = vmatpush1.msra.mxu0 0.0
        %4891 = vmatprep.subr.mxu0 0.0
        %4892 = vmatpush1.msra.mxu0 0.0
        %4893 = vmatprep.subr.mxu0 0.0
        %4894 = vmatpush1.msra.mxu0 0.0
        %4895 = vmatprep.subr.mxu0 0.0
        %4896 = vmatpush1.msra.mxu0 0.0
        %4897 = vmatprep.subr.mxu0 0.0
        %4898 = vmatpush1.msra.mxu0 0.0
        %4899 = vmatprep.subr.mxu0 0.0
        %4900 = vmatpush1.msra.mxu0 0.0
        %4901 = vmatprep.subr.mxu0 0.0
        %4902 = vmatpush1.msra.mxu0 0.0
        %4903 = vmatprep.subr.mxu0 0.0
        %4904 = vmatpush1.msra.mxu0 0.0
        %4905 = vmatprep.subr.mxu0 0.0
        %4906 = vmatpush1.msra.mxu0 0.0
        %4907 = vmatprep.subr.mxu0 0.0
        %4908 = vmatpush1.msra.mxu0 0.0
        %4909 = vmatprep.subr.mxu0 0.0
        %4910 = vmatpush1.msra.mxu0 0.0
        %4911 = vmatprep.subr.mxu0 0.0
        %4912 = vmatpush1.msra.mxu0 0.0
        %4913 = vmatprep.subr.mxu0 0.0
        %4914 = vmatpush1.msra.mxu0 0.0
        %4915 = vmatprep.mubr.f32.mxu0 0.0
        %4916 = vmatmul.mubr.f32.gmra.mrb[0].mxu0 %v4229
        %v4917 = vpop.f32.mrb[0].mxu0
        %v4918 = vadd.f32 0.0, %v4917
        %v4919 = vpop.f32.mrb[0].mxu0
        %v4920 = vadd.f32 0.0, %v4919
        %4921 = vdwg.mxu0
        %4922 = vmatprep.subr.mxu0 %v609
        %4923 = vmatpush1.msra.mxu0 %v608
        %4924 = vmatprep.subr.mxu0 %v613
        %4925 = vmatpush1.msra.mxu0 %v612
        %4926 = vmatprep.subr.mxu0 %v617
        %4927 = vmatpush1.msra.mxu0 %v616
        %4928 = vmatprep.subr.mxu0 %v621
        %4929 = vmatpush1.msra.mxu0 %v620
        %4930 = vmatprep.subr.mxu0 %v625
        %4931 = vmatpush1.msra.mxu0 %v624
        %4932 = vmatprep.subr.mxu0 %v629
        %4933 = vmatpush1.msra.mxu0 %v628
        %4934 = vmatprep.subr.mxu0 %v633
        %4935 = vmatpush1.msra.mxu0 %v632
        %4936 = vmatprep.subr.mxu0 %v637
        %4937 = vmatpush1.msra.mxu0 %v636
        %4938 = vmatprep.subr.mxu0 %v641
        %4939 = vmatpush1.msra.mxu0 %v640
        %4940 = vmatprep.subr.mxu0 %v645
        %4941 = vmatpush1.msra.mxu0 %v644
        %4942 = vmatprep.subr.mxu0 %v649
        %4943 = vmatpush1.msra.mxu0 %v648
        %4944 = vmatprep.subr.mxu0 %v653
        %4945 = vmatpush1.msra.mxu0 %v652
        %4946 = vmatprep.subr.mxu0 %v657
        %4947 = vmatpush1.msra.mxu0 %v656
        %4948 = vmatprep.subr.mxu0 %v661
        %4949 = vmatpush1.msra.mxu0 %v660
        %4950 = vmatprep.subr.mxu0 %v665
        %4951 = vmatpush1.msra.mxu0 %v664
        %4952 = vmatprep.subr.mxu0 %v669
        %4953 = vmatpush1.msra.mxu0 %v668
        %4954 = vmatprep.subr.mxu0 0.0
        %4955 = vmatpush1.msra.mxu0 0.0
        %4956 = vmatprep.subr.mxu0 0.0
        %4957 = vmatpush1.msra.mxu0 0.0
        %4958 = vmatprep.subr.mxu0 0.0
        %4959 = vmatpush1.msra.mxu0 0.0
        %4960 = vmatprep.subr.mxu0 0.0
        %4961 = vmatpush1.msra.mxu0 0.0
        %4962 = vmatprep.subr.mxu0 0.0
        %4963 = vmatpush1.msra.mxu0 0.0
        %4964 = vmatprep.subr.mxu0 0.0
        %4965 = vmatpush1.msra.mxu0 0.0
        %4966 = vmatprep.subr.mxu0 0.0
        %4967 = vmatpush1.msra.mxu0 0.0
        %4968 = vmatprep.subr.mxu0 0.0
        %4969 = vmatpush1.msra.mxu0 0.0
        %4970 = vmatprep.subr.mxu0 0.0
        %4971 = vmatpush1.msra.mxu0 0.0
        %4972 = vmatprep.subr.mxu0 0.0
        %4973 = vmatpush1.msra.mxu0 0.0
        %4974 = vmatprep.subr.mxu0 0.0
        %4975 = vmatpush1.msra.mxu0 0.0
        %4976 = vmatprep.subr.mxu0 0.0
        %4977 = vmatpush1.msra.mxu0 0.0
        %4978 = vmatprep.subr.mxu0 0.0
        %4979 = vmatpush1.msra.mxu0 0.0
        %4980 = vmatprep.subr.mxu0 0.0
        %4981 = vmatpush1.msra.mxu0 0.0
        %4982 = vmatprep.subr.mxu0 0.0
        %4983 = vmatpush1.msra.mxu0 0.0
        %4984 = vmatprep.subr.mxu0 0.0
        %4985 = vmatpush1.msra.mxu0 0.0
        %4986 = vmatprep.mubr.f32.mxu0 0.0
        %4987 = vmatmul.mubr.f32.gmra.mrb[0].mxu0 %v3923
        %v4988 = vpop.f32.mrb[0].mxu0
        %v4989 = vadd.f32 %v4847, %v4988
        %v4990 = vpop.f32.mrb[0].mxu0
        %v4991 = vadd.f32 %v4849, %v4990
        %4992 = vdwg.mxu0
        %4993 = vmatprep.subr.mxu0 %v611
        %4994 = vmatpush1.msra.mxu0 %v610
        %4995 = vmatprep.subr.mxu0 %v615
        %4996 = vmatpush1.msra.mxu0 %v614
        %4997 = vmatprep.subr.mxu0 %v619
        %4998 = vmatpush1.msra.mxu0 %v618
        %4999 = vmatprep.subr.mxu0 %v623
        %5000 = vmatpush1.msra.mxu0 %v622
        %5001 = vmatprep.subr.mxu0 %v627
        %5002 = vmatpush1.msra.mxu0 %v626
        %5003 = vmatprep.subr.mxu0 %v631
        %5004 = vmatpush1.msra.mxu0 %v630
        %5005 = vmatprep.subr.mxu0 %v635
        %5006 = vmatpush1.msra.mxu0 %v634
        %5007 = vmatprep.subr.mxu0 %v639
        %5008 = vmatpush1.msra.mxu0 %v638
        %5009 = vmatprep.subr.mxu0 %v643
        %5010 = vmatpush1.msra.mxu0 %v642
        %5011 = vmatprep.subr.mxu0 %v647
        %5012 = vmatpush1.msra.mxu0 %v646
        %5013 = vmatprep.subr.mxu0 %v651
        %5014 = vmatpush1.msra.mxu0 %v650
        %5015 = vmatprep.subr.mxu0 %v655
        %5016 = vmatpush1.msra.mxu0 %v654
        %5017 = vmatprep.subr.mxu0 %v659
        %5018 = vmatpush1.msra.mxu0 %v658
        %5019 = vmatprep.subr.mxu0 %v663
        %5020 = vmatpush1.msra.mxu0 %v662
        %5021 = vmatprep.subr.mxu0 %v667
        %5022 = vmatpush1.msra.mxu0 %v666
        %5023 = vmatprep.subr.mxu0 %v671
        %5024 = vmatpush1.msra.mxu0 %v670
        %5025 = vmatprep.subr.mxu0 0.0
        %5026 = vmatpush1.msra.mxu0 0.0
        %5027 = vmatprep.subr.mxu0 0.0
        %5028 = vmatpush1.msra.mxu0 0.0
        %5029 = vmatprep.subr.mxu0 0.0
        %5030 = vmatpush1.msra.mxu0 0.0
        %5031 = vmatprep.subr.mxu0 0.0
        %5032 = vmatpush1.msra.mxu0 0.0
        %5033 = vmatprep.subr.mxu0 0.0
        %5034 = vmatpush1.msra.mxu0 0.0
        %5035 = vmatprep.subr.mxu0 0.0
        %5036 = vmatpush1.msra.mxu0 0.0
        %5037 = vmatprep.subr.mxu0 0.0
        %5038 = vmatpush1.msra.mxu0 0.0
        %5039 = vmatprep.subr.mxu0 0.0
        %5040 = vmatpush1.msra.mxu0 0.0
        %5041 = vmatprep.subr.mxu0 0.0
        %5042 = vmatpush1.msra.mxu0 0.0
        %5043 = vmatprep.subr.mxu0 0.0
        %5044 = vmatpush1.msra.mxu0 0.0
        %5045 = vmatprep.subr.mxu0 0.0
        %5046 = vmatpush1.msra.mxu0 0.0
        %5047 = vmatprep.subr.mxu0 0.0
        %5048 = vmatpush1.msra.mxu0 0.0
        %5049 = vmatprep.subr.mxu0 0.0
        %5050 = vmatpush1.msra.mxu0 0.0
        %5051 = vmatprep.subr.mxu0 0.0
        %5052 = vmatpush1.msra.mxu0 0.0
        %5053 = vmatprep.subr.mxu0 0.0
        %5054 = vmatpush1.msra.mxu0 0.0
        %5055 = vmatprep.subr.mxu0 0.0
        %5056 = vmatpush1.msra.mxu0 0.0
        %5057 = vmatprep.mubr.f32.mxu0 0.0
        %5058 = vmatmul.mubr.f32.gmra.mrb[0].mxu0 %v3923
        %v5059 = vpop.f32.mrb[0].mxu0
        %v5060 = vadd.f32 %v4918, %v5059
        %v5061 = vpop.f32.mrb[0].mxu0
        %v5062 = vadd.f32 %v4920, %v5061
        %5063 = vdwg.mxu0
        %v5064 = vadd.f32 %v4989, %v2480
        %v5065 = vadd.f32 %v4991, %v2484
        %v5066 = vadd.f32 %v5060, %v2488
        %v5067 = vadd.f32 %v5062, %v2492
        %v5068 = vmul.f32 %v5064, 0.5
        %v5069 = vmul.f32 %v5065, 0.5
        %v5070 = vmul.f32 %v5066, 0.5
        %v5071 = vtanh.pop %v5068
        %v5072 = vtanh.pop %v5069
        %v5073 = vtanh.pop %v5070
        %v5074 = vadd.f32 %v5071, 1.0
        %v5075 = vadd.f32 %v5072, 1.0
        %v5076 = vadd.f32 %v5073, 1.0
        %v5077 = vmul.f32 %v5074, 0.5
        %v5078 = vmul.f32 %v5075, 0.5
        %v5079 = vmul.f32 %v5076, 0.5
        %v5080 = vtanh.pop %v5067
        %v5081 = vmul.f32 %v5078, %v4227
        %v5082 = vmul.f32 %v5077, %v5080
        %v5083 = vadd.f32 %v5081, %v5082
        %v5084 = vtanh.pop %v5083
        %v5085 = vmul.f32 %v5079, %v5084
        %5086 = vmatprep.subr.mxu0 0.0
        %5087 = vmatpush1.msra.mxu0 %v867
        %5088 = vmatprep.subr.mxu0 0.0
        %5089 = vmatpush1.msra.mxu0 %v868
        %5090 = vmatprep.subr.mxu0 0.0
        %5091 = vmatpush1.msra.mxu0 %v869
        %5092 = vmatprep.subr.mxu0 0.0
        %5093 = vmatpush1.msra.mxu0 %v870
        %5094 = vmatprep.subr.mxu0 0.0
        %5095 = vmatpush1.msra.mxu0 %v871
        %5096 = vmatprep.subr.mxu0 0.0
        %5097 = vmatpush1.msra.mxu0 %v872
        %5098 = vmatprep.subr.mxu0 0.0
        %5099 = vmatpush1.msra.mxu0 %v873
        %5100 = vmatprep.subr.mxu0 0.0
        %5101 = vmatpush1.msra.mxu0 %v874
        %5102 = vmatprep.subr.mxu0 0.0
        %5103 = vmatpush1.msra.mxu0 %v875
        %5104 = vmatprep.subr.mxu0 0.0
        %5105 = vmatpush1.msra.mxu0 %v876
        %5106 = vmatprep.subr.mxu0 0.0
        %5107 = vmatpush1.msra.mxu0 %v877
        %5108 = vmatprep.subr.mxu0 0.0
        %5109 = vmatpush1.msra.mxu0 %v878
        %5110 = vmatprep.subr.mxu0 0.0
        %5111 = vmatpush1.msra.mxu0 %v879
        %5112 = vmatprep.subr.mxu0 0.0
        %5113 = vmatpush1.msra.mxu0 %v880
        %5114 = vmatprep.subr.mxu0 0.0
        %5115 = vmatpush1.msra.mxu0 %v881
        %5116 = vmatprep.subr.mxu0 0.0
        %5117 = vmatpush1.msra.mxu0 %v882
        %5118 = vmatprep.subr.mxu0 0.0
        %5119 = vmatpush1.msra.mxu0 0.0
        %5120 = vmatprep.subr.mxu0 0.0
        %5121 = vmatpush1.msra.mxu0 0.0
        %5122 = vmatprep.subr.mxu0 0.0
        %5123 = vmatpush1.msra.mxu0 0.0
        %5124 = vmatprep.subr.mxu0 0.0
        %5125 = vmatpush1.msra.mxu0 0.0
        %5126 = vmatprep.subr.mxu0 0.0
        %5127 = vmatpush1.msra.mxu0 0.0
        %5128 = vmatprep.subr.mxu0 0.0
        %5129 = vmatpush1.msra.mxu0 0.0
        %5130 = vmatprep.subr.mxu0 0.0
        %5131 = vmatpush1.msra.mxu0 0.0
        %5132 = vmatprep.subr.mxu0 0.0
        %5133 = vmatpush1.msra.mxu0 0.0
        %5134 = vmatprep.subr.mxu0 0.0
        %5135 = vmatpush1.msra.mxu0 0.0
        %5136 = vmatprep.subr.mxu0 0.0
        %5137 = vmatpush1.msra.mxu0 0.0
        %5138 = vmatprep.subr.mxu0 0.0
        %5139 = vmatpush1.msra.mxu0 0.0
        %5140 = vmatprep.subr.mxu0 0.0
        %5141 = vmatpush1.msra.mxu0 0.0
        %5142 = vmatprep.subr.mxu0 0.0
        %5143 = vmatpush1.msra.mxu0 0.0
        %5144 = vmatprep.subr.mxu0 0.0
        %5145 = vmatpush1.msra.mxu0 0.0
        %5146 = vmatprep.subr.mxu0 0.0
        %5147 = vmatpush1.msra.mxu0 0.0
        %5148 = vmatprep.subr.mxu0 0.0
        %5149 = vmatpush1.msra.mxu0 0.0
        %5150 = vmatprep.mubr.f32.mxu0 0.0
        %5151 = vmatmul.mubr.f32.gmra.mrb[0].mxu0 %v5085
        %v5152 = vpop.f32.mrb[0].mxu0
        %v5153 = vadd.f32 0.0, %v5152
        %v5154 = vpop.f32.mrb[0].mxu0
        %5155 = vdwg.mxu0
        %s5156 = scalar_lea.vmem %s475, 24 [#allocation13]
        %5157 = vst [vmem:[%s5156] sm:$0xff] %v5153
        %5158 = vmatprep.subr.mxu0 %v673
        %5159 = vmatpush1.msra.mxu0 %v672
        %5160 = vmatprep.subr.mxu0 %v677
        %5161 = vmatpush1.msra.mxu0 %v676
        %5162 = vmatprep.subr.mxu0 %v681
        %5163 = vmatpush1.msra.mxu0 %v680
        %5164 = vmatprep.subr.mxu0 %v685
        %5165 = vmatpush1.msra.mxu0 %v684
        %5166 = vmatprep.subr.mxu0 %v689
        %5167 = vmatpush1.msra.mxu0 %v688
        %5168 = vmatprep.subr.mxu0 %v693
        %5169 = vmatpush1.msra.mxu0 %v692
        %5170 = vmatprep.subr.mxu0 %v697
        %5171 = vmatpush1.msra.mxu0 %v696
        %5172 = vmatprep.subr.mxu0 %v701
        %5173 = vmatpush1.msra.mxu0 %v700
        %5174 = vmatprep.subr.mxu0 %v705
        %5175 = vmatpush1.msra.mxu0 %v704
        %5176 = vmatprep.subr.mxu0 %v709
        %5177 = vmatpush1.msra.mxu0 %v708
        %5178 = vmatprep.subr.mxu0 %v713
        %5179 = vmatpush1.msra.mxu0 %v712
        %5180 = vmatprep.subr.mxu0 %v717
        %5181 = vmatpush1.msra.mxu0 %v716
        %5182 = vmatprep.subr.mxu0 %v721
        %5183 = vmatpush1.msra.mxu0 %v720
        %5184 = vmatprep.subr.mxu0 %v725
        %5185 = vmatpush1.msra.mxu0 %v724
        %5186 = vmatprep.subr.mxu0 %v729
        %5187 = vmatpush1.msra.mxu0 %v728
        %5188 = vmatprep.subr.mxu0 %v733
        %5189 = vmatpush1.msra.mxu0 %v732
        %5190 = vmatprep.subr.mxu0 0.0
        %5191 = vmatpush1.msra.mxu0 0.0
        %5192 = vmatprep.subr.mxu0 0.0
        %5193 = vmatpush1.msra.mxu0 0.0
        %5194 = vmatprep.subr.mxu0 0.0
        %5195 = vmatpush1.msra.mxu0 0.0
        %5196 = vmatprep.subr.mxu0 0.0
        %5197 = vmatpush1.msra.mxu0 0.0
        %5198 = vmatprep.subr.mxu0 0.0
        %5199 = vmatpush1.msra.mxu0 0.0
        %5200 = vmatprep.subr.mxu0 0.0
        %5201 = vmatpush1.msra.mxu0 0.0
        %5202 = vmatprep.subr.mxu0 0.0
        %5203 = vmatpush1.msra.mxu0 0.0
        %5204 = vmatprep.subr.mxu0 0.0
        %5205 = vmatpush1.msra.mxu0 0.0
        %5206 = vmatprep.subr.mxu0 0.0
        %5207 = vmatpush1.msra.mxu0 0.0
        %5208 = vmatprep.subr.mxu0 0.0
        %5209 = vmatpush1.msra.mxu0 0.0
        %5210 = vmatprep.subr.mxu0 0.0
        %5211 = vmatpush1.msra.mxu0 0.0
        %5212 = vmatprep.subr.mxu0 0.0
        %5213 = vmatpush1.msra.mxu0 0.0
        %5214 = vmatprep.subr.mxu0 0.0
        %5215 = vmatpush1.msra.mxu0 0.0
        %5216 = vmatprep.subr.mxu0 0.0
        %5217 = vmatpush1.msra.mxu0 0.0
        %5218 = vmatprep.subr.mxu0 0.0
        %5219 = vmatpush1.msra.mxu0 0.0
        %5220 = vmatprep.subr.mxu0 0.0
        %5221 = vmatpush1.msra.mxu0 0.0
        %5222 = vmatprep.mubr.f32.mxu0 0.0
        %5223 = vmatmul.mubr.f32.gmra.mrb[0].mxu0 %v4465
        %v5224 = vpop.f32.mrb[0].mxu0
        %v5225 = vadd.f32 0.0, %v5224
        %v5226 = vpop.f32.mrb[0].mxu0
        %v5227 = vadd.f32 0.0, %v5226
        %5228 = vdwg.mxu0
        %5229 = vmatprep.subr.mxu0 %v675
        %5230 = vmatpush1.msra.mxu0 %v674
        %5231 = vmatprep.subr.mxu0 %v679
        %5232 = vmatpush1.msra.mxu0 %v678
        %5233 = vmatprep.subr.mxu0 %v683
        %5234 = vmatpush1.msra.mxu0 %v682
        %5235 = vmatprep.subr.mxu0 %v687
        %5236 = vmatpush1.msra.mxu0 %v686
        %5237 = vmatprep.subr.mxu0 %v691
        %5238 = vmatpush1.msra.mxu0 %v690
        %5239 = vmatprep.subr.mxu0 %v695
        %5240 = vmatpush1.msra.mxu0 %v694
        %5241 = vmatprep.subr.mxu0 %v699
        %5242 = vmatpush1.msra.mxu0 %v698
        %5243 = vmatprep.subr.mxu0 %v703
        %5244 = vmatpush1.msra.mxu0 %v702
        %5245 = vmatprep.subr.mxu0 %v707
        %5246 = vmatpush1.msra.mxu0 %v706
        %5247 = vmatprep.subr.mxu0 %v711
        %5248 = vmatpush1.msra.mxu0 %v710
        %5249 = vmatprep.subr.mxu0 %v715
        %5250 = vmatpush1.msra.mxu0 %v714
        %5251 = vmatprep.subr.mxu0 %v719
        %5252 = vmatpush1.msra.mxu0 %v718
        %5253 = vmatprep.subr.mxu0 %v723
        %5254 = vmatpush1.msra.mxu0 %v722
        %5255 = vmatprep.subr.mxu0 %v727
        %5256 = vmatpush1.msra.mxu0 %v726
        %5257 = vmatprep.subr.mxu0 %v731
        %5258 = vmatpush1.msra.mxu0 %v730
        %5259 = vmatprep.subr.mxu0 %v735
        %5260 = vmatpush1.msra.mxu0 %v734
        %5261 = vmatprep.subr.mxu0 0.0
        %5262 = vmatpush1.msra.mxu0 0.0
        %5263 = vmatprep.subr.mxu0 0.0
        %5264 = vmatpush1.msra.mxu0 0.0
        %5265 = vmatprep.subr.mxu0 0.0
        %5266 = vmatpush1.msra.mxu0 0.0
        %5267 = vmatprep.subr.mxu0 0.0
        %5268 = vmatpush1.msra.mxu0 0.0
        %5269 = vmatprep.subr.mxu0 0.0
        %5270 = vmatpush1.msra.mxu0 0.0
        %5271 = vmatprep.subr.mxu0 0.0
        %5272 = vmatpush1.msra.mxu0 0.0
        %5273 = vmatprep.subr.mxu0 0.0
        %5274 = vmatpush1.msra.mxu0 0.0
        %5275 = vmatprep.subr.mxu0 0.0
        %5276 = vmatpush1.msra.mxu0 0.0
        %5277 = vmatprep.subr.mxu0 0.0
        %5278 = vmatpush1.msra.mxu0 0.0
        %5279 = vmatprep.subr.mxu0 0.0
        %5280 = vmatpush1.msra.mxu0 0.0
        %5281 = vmatprep.subr.mxu0 0.0
        %5282 = vmatpush1.msra.mxu0 0.0
        %5283 = vmatprep.subr.mxu0 0.0
        %5284 = vmatpush1.msra.mxu0 0.0
        %5285 = vmatprep.subr.mxu0 0.0
        %5286 = vmatpush1.msra.mxu0 0.0
        %5287 = vmatprep.subr.mxu0 0.0
        %5288 = vmatpush1.msra.mxu0 0.0
        %5289 = vmatprep.subr.mxu0 0.0
        %5290 = vmatpush1.msra.mxu0 0.0
        %5291 = vmatprep.subr.mxu0 0.0
        %5292 = vmatpush1.msra.mxu0 0.0
        %5293 = vmatprep.mubr.f32.mxu0 0.0
        %5294 = vmatmul.mubr.f32.gmra.mrb[0].mxu0 %v4465
        %v5295 = vpop.f32.mrb[0].mxu0
        %v5296 = vadd.f32 0.0, %v5295
        %v5297 = vpop.f32.mrb[0].mxu0
        %v5298 = vadd.f32 0.0, %v5297
        %5299 = vdwg.mxu0
        %v5300 = vadd.f32 %v972, %v5225
        %v5301 = vadd.f32 %v974, %v5227
        %v5302 = vadd.f32 %v1043, %v5296
        %v5303 = vadd.f32 %v1045, %v5298
        %v5304 = vmul.f32 %v5300, 0.5
        %v5305 = vmul.f32 %v5301, 0.5
        %v5306 = vmul.f32 %v5302, 0.5
        %v5307 = vtanh.pop %v5304
        %v5308 = vtanh.pop %v5305
        %v5309 = vtanh.pop %v5306
        %v5310 = vadd.f32 %v5307, 1.0
        %v5311 = vadd.f32 %v5308, 1.0
        %v5312 = vadd.f32 %v5309, 1.0
        %v5313 = vmul.f32 %v5310, 0.5
        %v5314 = vmul.f32 %v5311, 0.5
        %v5315 = vmul.f32 %v5312, 0.5
        %v5316 = vtanh.pop %v5303
        %v5317 = vmul.f32 %v5314, %v4463
        %v5318 = vmul.f32 %v5313, %v5316
        %v5319 = vadd.f32 %v5317, %v5318
        %v5320 = vtanh.pop %v5319
        %v5321 = vmul.f32 %v5315, %v5320
        %v5322 = vmul.f32 %v5321, 0.5
        %v5323 = vtanh.pop %v5322
        %v5324 = vadd.f32 %v5323, 1.0
        %v5325 = vmul.f32 %v5324, 0.5
        %5326 = vmatprep.subr.mxu0 %v737
        %5327 = vmatpush1.msra.mxu0 %v736
        %5328 = vmatprep.subr.mxu0 %v741
        %5329 = vmatpush1.msra.mxu0 %v740
        %5330 = vmatprep.subr.mxu0 %v745
        %5331 = vmatpush1.msra.mxu0 %v744
        %5332 = vmatprep.subr.mxu0 %v749
        %5333 = vmatpush1.msra.mxu0 %v748
        %5334 = vmatprep.subr.mxu0 %v753
        %5335 = vmatpush1.msra.mxu0 %v752
        %5336 = vmatprep.subr.mxu0 %v757
        %5337 = vmatpush1.msra.mxu0 %v756
        %5338 = vmatprep.subr.mxu0 %v761
        %5339 = vmatpush1.msra.mxu0 %v760
        %5340 = vmatprep.subr.mxu0 %v765
        %5341 = vmatpush1.msra.mxu0 %v764
        %5342 = vmatprep.subr.mxu0 %v769
        %5343 = vmatpush1.msra.mxu0 %v768
        %5344 = vmatprep.subr.mxu0 %v773
        %5345 = vmatpush1.msra.mxu0 %v772
        %5346 = vmatprep.subr.mxu0 %v777
        %5347 = vmatpush1.msra.mxu0 %v776
        %5348 = vmatprep.subr.mxu0 %v781
        %5349 = vmatpush1.msra.mxu0 %v780
        %5350 = vmatprep.subr.mxu0 %v785
        %5351 = vmatpush1.msra.mxu0 %v784
        %5352 = vmatprep.subr.mxu0 %v789
        %5353 = vmatpush1.msra.mxu0 %v788
        %5354 = vmatprep.subr.mxu0 %v793
        %5355 = vmatpush1.msra.mxu0 %v792
        %5356 = vmatprep.subr.mxu0 %v797
        %5357 = vmatpush1.msra.mxu0 %v796
        %5358 = vmatprep.subr.mxu0 0.0
        %5359 = vmatpush1.msra.mxu0 0.0
        %5360 = vmatprep.subr.mxu0 0.0
        %5361 = vmatpush1.msra.mxu0 0.0
        %5362 = vmatprep.subr.mxu0 0.0
        %5363 = vmatpush1.msra.mxu0 0.0
        %5364 = vmatprep.subr.mxu0 0.0
        %5365 = vmatpush1.msra.mxu0 0.0
        %5366 = vmatprep.subr.mxu0 0.0
        %5367 = vmatpush1.msra.mxu0 0.0
        %5368 = vmatprep.subr.mxu0 0.0
        %5369 = vmatpush1.msra.mxu0 0.0
        %5370 = vmatprep.subr.mxu0 0.0
        %5371 = vmatpush1.msra.mxu0 0.0
        %5372 = vmatprep.subr.mxu0 0.0
        %5373 = vmatpush1.msra.mxu0 0.0
        %5374 = vmatprep.subr.mxu0 0.0
        %5375 = vmatpush1.msra.mxu0 0.0
        %5376 = vmatprep.subr.mxu0 0.0
        %5377 = vmatpush1.msra.mxu0 0.0
        %5378 = vmatprep.subr.mxu0 0.0
        %5379 = vmatpush1.msra.mxu0 0.0
        %5380 = vmatprep.subr.mxu0 0.0
        %5381 = vmatpush1.msra.mxu0 0.0
        %5382 = vmatprep.subr.mxu0 0.0
        %5383 = vmatpush1.msra.mxu0 0.0
        %5384 = vmatprep.subr.mxu0 0.0
        %5385 = vmatpush1.msra.mxu0 0.0
        %5386 = vmatprep.subr.mxu0 0.0
        %5387 = vmatpush1.msra.mxu0 0.0
        %5388 = vmatprep.subr.mxu0 0.0
        %5389 = vmatpush1.msra.mxu0 0.0
        %5390 = vmatprep.mubr.f32.mxu0 0.0
        %5391 = vmatmul.mubr.f32.gmra.mrb[0].mxu0 %v4775
        %v5392 = vpop.f32.mrb[0].mxu0
        %v5393 = vadd.f32 0.0, %v5392
        %v5394 = vpop.f32.mrb[0].mxu0
        %v5395 = vadd.f32 0.0, %v5394
        %5396 = vdwg.mxu0
        %5397 = vmatprep.subr.mxu0 %v739
        %5398 = vmatpush1.msra.mxu0 %v738
        %5399 = vmatprep.subr.mxu0 %v743
        %5400 = vmatpush1.msra.mxu0 %v742
        %5401 = vmatprep.subr.mxu0 %v747
        %5402 = vmatpush1.msra.mxu0 %v746
        %5403 = vmatprep.subr.mxu0 %v751
        %5404 = vmatpush1.msra.mxu0 %v750
        %5405 = vmatprep.subr.mxu0 %v755
        %5406 = vmatpush1.msra.mxu0 %v754
        %5407 = vmatprep.subr.mxu0 %v759
        %5408 = vmatpush1.msra.mxu0 %v758
        %5409 = vmatprep.subr.mxu0 %v763
        %5410 = vmatpush1.msra.mxu0 %v762
        %5411 = vmatprep.subr.mxu0 %v767
        %5412 = vmatpush1.msra.mxu0 %v766
        %5413 = vmatprep.subr.mxu0 %v771
        %5414 = vmatpush1.msra.mxu0 %v770
        %5415 = vmatprep.subr.mxu0 %v775
        %5416 = vmatpush1.msra.mxu0 %v774
        %5417 = vmatprep.subr.mxu0 %v779
        %5418 = vmatpush1.msra.mxu0 %v778
        %5419 = vmatprep.subr.mxu0 %v783
        %5420 = vmatpush1.msra.mxu0 %v782
        %5421 = vmatprep.subr.mxu0 %v787
        %5422 = vmatpush1.msra.mxu0 %v786
        %5423 = vmatprep.subr.mxu0 %v791
        %5424 = vmatpush1.msra.mxu0 %v790
        %5425 = vmatprep.subr.mxu0 %v795
        %5426 = vmatpush1.msra.mxu0 %v794
        %5427 = vmatprep.subr.mxu0 %v799
        %5428 = vmatpush1.msra.mxu0 %v798
        %5429 = vmatprep.subr.mxu0 0.0
        %5430 = vmatpush1.msra.mxu0 0.0
        %5431 = vmatprep.subr.mxu0 0.0
        %5432 = vmatpush1.msra.mxu0 0.0
        %5433 = vmatprep.subr.mxu0 0.0
        %5434 = vmatpush1.msra.mxu0 0.0
        %5435 = vmatprep.subr.mxu0 0.0
        %5436 = vmatpush1.msra.mxu0 0.0
        %5437 = vmatprep.subr.mxu0 0.0
        %5438 = vmatpush1.msra.mxu0 0.0
        %5439 = vmatprep.subr.mxu0 0.0
        %5440 = vmatpush1.msra.mxu0 0.0
        %5441 = vmatprep.subr.mxu0 0.0
        %5442 = vmatpush1.msra.mxu0 0.0
        %5443 = vmatprep.subr.mxu0 0.0
        %5444 = vmatpush1.msra.mxu0 0.0
        %5445 = vmatprep.subr.mxu0 0.0
        %5446 = vmatpush1.msra.mxu0 0.0
        %5447 = vmatprep.subr.mxu0 0.0
        %5448 = vmatpush1.msra.mxu0 0.0
        %5449 = vmatprep.subr.mxu0 0.0
        %5450 = vmatpush1.msra.mxu0 0.0
        %5451 = vmatprep.subr.mxu0 0.0
        %5452 = vmatpush1.msra.mxu0 0.0
        %5453 = vmatprep.subr.mxu0 0.0
        %5454 = vmatpush1.msra.mxu0 0.0
        %5455 = vmatprep.subr.mxu0 0.0
        %5456 = vmatpush1.msra.mxu0 0.0
        %5457 = vmatprep.subr.mxu0 0.0
        %5458 = vmatpush1.msra.mxu0 0.0
        %5459 = vmatprep.subr.mxu0 0.0
        %5460 = vmatpush1.msra.mxu0 0.0
        %5461 = vmatprep.mubr.f32.mxu0 0.0
        %5462 = vmatmul.mubr.f32.gmra.mrb[0].mxu0 %v4775
        %v5463 = vpop.f32.mrb[0].mxu0
        %v5464 = vadd.f32 0.0, %v5463
        %v5465 = vpop.f32.mrb[0].mxu0
        %v5466 = vadd.f32 0.0, %v5465
        %5467 = vdwg.mxu0
        %5468 = vmatprep.subr.mxu0 %v545
        %5469 = vmatpush1.msra.mxu0 %v544
        %5470 = vmatprep.subr.mxu0 %v549
        %5471 = vmatpush1.msra.mxu0 %v548
        %5472 = vmatprep.subr.mxu0 %v553
        %5473 = vmatpush1.msra.mxu0 %v552
        %5474 = vmatprep.subr.mxu0 %v557
        %5475 = vmatpush1.msra.mxu0 %v556
        %5476 = vmatprep.subr.mxu0 %v561
        %5477 = vmatpush1.msra.mxu0 %v560
        %5478 = vmatprep.subr.mxu0 %v565
        %5479 = vmatpush1.msra.mxu0 %v564
        %5480 = vmatprep.subr.mxu0 %v569
        %5481 = vmatpush1.msra.mxu0 %v568
        %5482 = vmatprep.subr.mxu0 %v573
        %5483 = vmatpush1.msra.mxu0 %v572
        %5484 = vmatprep.subr.mxu0 %v577
        %5485 = vmatpush1.msra.mxu0 %v576
        %5486 = vmatprep.subr.mxu0 %v581
        %5487 = vmatpush1.msra.mxu0 %v580
        %5488 = vmatprep.subr.mxu0 %v585
        %5489 = vmatpush1.msra.mxu0 %v584
        %5490 = vmatprep.subr.mxu0 %v589
        %5491 = vmatpush1.msra.mxu0 %v588
        %5492 = vmatprep.subr.mxu0 %v593
        %5493 = vmatpush1.msra.mxu0 %v592
        %5494 = vmatprep.subr.mxu0 %v597
        %5495 = vmatpush1.msra.mxu0 %v596
        %5496 = vmatprep.subr.mxu0 %v601
        %5497 = vmatpush1.msra.mxu0 %v600
        %5498 = vmatprep.subr.mxu0 %v605
        %5499 = vmatpush1.msra.mxu0 %v604
        %5500 = vmatprep.subr.mxu0 0.0
        %5501 = vmatpush1.msra.mxu0 0.0
        %5502 = vmatprep.subr.mxu0 0.0
        %5503 = vmatpush1.msra.mxu0 0.0
        %5504 = vmatprep.subr.mxu0 0.0
        %5505 = vmatpush1.msra.mxu0 0.0
        %5506 = vmatprep.subr.mxu0 0.0
        %5507 = vmatpush1.msra.mxu0 0.0
        %5508 = vmatprep.subr.mxu0 0.0
        %5509 = vmatpush1.msra.mxu0 0.0
        %5510 = vmatprep.subr.mxu0 0.0
        %5511 = vmatpush1.msra.mxu0 0.0
        %5512 = vmatprep.subr.mxu0 0.0
        %5513 = vmatpush1.msra.mxu0 0.0
        %5514 = vmatprep.subr.mxu0 0.0
        %5515 = vmatpush1.msra.mxu0 0.0
        %5516 = vmatprep.subr.mxu0 0.0
        %5517 = vmatpush1.msra.mxu0 0.0
        %5518 = vmatprep.subr.mxu0 0.0
        %5519 = vmatpush1.msra.mxu0 0.0
        %5520 = vmatprep.subr.mxu0 0.0
        %5521 = vmatpush1.msra.mxu0 0.0
        %5522 = vmatprep.subr.mxu0 0.0
        %5523 = vmatpush1.msra.mxu0 0.0
        %5524 = vmatprep.subr.mxu0 0.0
        %5525 = vmatpush1.msra.mxu0 0.0
        %5526 = vmatprep.subr.mxu0 0.0
        %5527 = vmatpush1.msra.mxu0 0.0
        %5528 = vmatprep.subr.mxu0 0.0
        %5529 = vmatpush1.msra.mxu0 0.0
        %5530 = vmatprep.subr.mxu0 0.0
        %5531 = vmatpush1.msra.mxu0 0.0
        %5532 = vmatprep.mubr.f32.mxu0 0.0
        %5533 = vmatmul.mubr.f32.gmra.mrb[0].mxu0 %v4469
        %v5534 = vpop.f32.mrb[0].mxu0
        %v5535 = vadd.f32 %v5393, %v5534
        %v5536 = vpop.f32.mrb[0].mxu0
        %v5537 = vadd.f32 %v5395, %v5536
        %5538 = vdwg.mxu0
        %5539 = vmatprep.subr.mxu0 %v547
        %5540 = vmatpush1.msra.mxu0 %v546
        %5541 = vmatprep.subr.mxu0 %v551
        %5542 = vmatpush1.msra.mxu0 %v550
        %5543 = vmatprep.subr.mxu0 %v555
        %5544 = vmatpush1.msra.mxu0 %v554
        %5545 = vmatprep.subr.mxu0 %v559
        %5546 = vmatpush1.msra.mxu0 %v558
        %5547 = vmatprep.subr.mxu0 %v563
        %5548 = vmatpush1.msra.mxu0 %v562
        %5549 = vmatprep.subr.mxu0 %v567
        %5550 = vmatpush1.msra.mxu0 %v566
        %5551 = vmatprep.subr.mxu0 %v571
        %5552 = vmatpush1.msra.mxu0 %v570
        %5553 = vmatprep.subr.mxu0 %v575
        %5554 = vmatpush1.msra.mxu0 %v574
        %5555 = vmatprep.subr.mxu0 %v579
        %5556 = vmatpush1.msra.mxu0 %v578
        %5557 = vmatprep.subr.mxu0 %v583
        %5558 = vmatpush1.msra.mxu0 %v582
        %5559 = vmatprep.subr.mxu0 %v587
        %5560 = vmatpush1.msra.mxu0 %v586
        %5561 = vmatprep.subr.mxu0 %v591
        %5562 = vmatpush1.msra.mxu0 %v590
        %5563 = vmatprep.subr.mxu0 %v595
        %5564 = vmatpush1.msra.mxu0 %v594
        %5565 = vmatprep.subr.mxu0 %v599
        %5566 = vmatpush1.msra.mxu0 %v598
        %5567 = vmatprep.subr.mxu0 %v603
        %5568 = vmatpush1.msra.mxu0 %v602
        %5569 = vmatprep.subr.mxu0 %v607
        %5570 = vmatpush1.msra.mxu0 %v606
        %5571 = vmatprep.subr.mxu0 0.0
        %5572 = vmatpush1.msra.mxu0 0.0
        %5573 = vmatprep.subr.mxu0 0.0
        %5574 = vmatpush1.msra.mxu0 0.0
        %5575 = vmatprep.subr.mxu0 0.0
        %5576 = vmatpush1.msra.mxu0 0.0
        %5577 = vmatprep.subr.mxu0 0.0
        %5578 = vmatpush1.msra.mxu0 0.0
        %5579 = vmatprep.subr.mxu0 0.0
        %5580 = vmatpush1.msra.mxu0 0.0
        %5581 = vmatprep.subr.mxu0 0.0
        %5582 = vmatpush1.msra.mxu0 0.0
        %5583 = vmatprep.subr.mxu0 0.0
        %5584 = vmatpush1.msra.mxu0 0.0
        %5585 = vmatprep.subr.mxu0 0.0
        %5586 = vmatpush1.msra.mxu0 0.0
        %5587 = vmatprep.subr.mxu0 0.0
        %5588 = vmatpush1.msra.mxu0 0.0
        %5589 = vmatprep.subr.mxu0 0.0
        %5590 = vmatpush1.msra.mxu0 0.0
        %5591 = vmatprep.subr.mxu0 0.0
        %5592 = vmatpush1.msra.mxu0 0.0
        %5593 = vmatprep.subr.mxu0 0.0
        %5594 = vmatpush1.msra.mxu0 0.0
        %5595 = vmatprep.subr.mxu0 0.0
        %5596 = vmatpush1.msra.mxu0 0.0
        %5597 = vmatprep.subr.mxu0 0.0
        %5598 = vmatpush1.msra.mxu0 0.0
        %5599 = vmatprep.subr.mxu0 0.0
        %5600 = vmatpush1.msra.mxu0 0.0
        %5601 = vmatprep.subr.mxu0 0.0
        %5602 = vmatpush1.msra.mxu0 0.0
        %5603 = vmatprep.mubr.f32.mxu0 0.0
        %5604 = vmatmul.mubr.f32.gmra.mrb[0].mxu0 %v4469
        %v5605 = vpop.f32.mrb[0].mxu0
        %v5606 = vadd.f32 %v5464, %v5605
        %v5607 = vpop.f32.mrb[0].mxu0
        %v5608 = vadd.f32 %v5466, %v5607
        %5609 = vdwg.mxu0
        %v5610 = vadd.f32 %v5535, %v1671
        %v5611 = vadd.f32 %v5537, %v1675
        %v5612 = vadd.f32 %v5606, %v1679
        %v5613 = vadd.f32 %v5608, %v1683
        %v5614 = vmul.f32 %v5610, 0.5
        %v5615 = vmul.f32 %v5611, 0.5
        %v5616 = vmul.f32 %v5612, 0.5
        %v5617 = vtanh.pop %v5614
        %v5618 = vtanh.pop %v5615
        %v5619 = vtanh.pop %v5616
        %v5620 = vadd.f32 %v5617, 1.0
        %v5621 = vadd.f32 %v5618, 1.0
        %v5622 = vadd.f32 %v5619, 1.0
        %v5623 = vmul.f32 %v5620, 0.5
        %v5624 = vmul.f32 %v5621, 0.5
        %v5625 = vmul.f32 %v5622, 0.5
        %v5626 = vtanh.pop %v5613
        %v5627 = vmul.f32 %v5624, %v4773
        %v5628 = vmul.f32 %v5623, %v5626
        %v5629 = vadd.f32 %v5627, %v5628
        %v5630 = vtanh.pop %v5629
        %v5631 = vmul.f32 %v5625, %v5630
        %v5632 = vmul.f32 %v5631, 0.5
        %v5633 = vtanh.pop %v5632
        %v5634 = vadd.f32 %v5633, 1.0
        %v5635 = vmul.f32 %v5634, 0.5
        %5636 = vmatprep.subr.mxu0 %v801
        %5637 = vmatpush1.msra.mxu0 %v800
        %5638 = vmatprep.subr.mxu0 %v805
        %5639 = vmatpush1.msra.mxu0 %v804
        %5640 = vmatprep.subr.mxu0 %v809
        %5641 = vmatpush1.msra.mxu0 %v808
        %5642 = vmatprep.subr.mxu0 %v813
        %5643 = vmatpush1.msra.mxu0 %v812
        %5644 = vmatprep.subr.mxu0 %v817
        %5645 = vmatpush1.msra.mxu0 %v816
        %5646 = vmatprep.subr.mxu0 %v821
        %5647 = vmatpush1.msra.mxu0 %v820
        %5648 = vmatprep.subr.mxu0 %v825
        %5649 = vmatpush1.msra.mxu0 %v824
        %5650 = vmatprep.subr.mxu0 %v829
        %5651 = vmatpush1.msra.mxu0 %v828
        %5652 = vmatprep.subr.mxu0 %v833
        %5653 = vmatpush1.msra.mxu0 %v832
        %5654 = vmatprep.subr.mxu0 %v837
        %5655 = vmatpush1.msra.mxu0 %v836
        %5656 = vmatprep.subr.mxu0 %v841
        %5657 = vmatpush1.msra.mxu0 %v840
        %5658 = vmatprep.subr.mxu0 %v845
        %5659 = vmatpush1.msra.mxu0 %v844
        %5660 = vmatprep.subr.mxu0 %v849
        %5661 = vmatpush1.msra.mxu0 %v848
        %5662 = vmatprep.subr.mxu0 %v853
        %5663 = vmatpush1.msra.mxu0 %v852
        %5664 = vmatprep.subr.mxu0 %v857
        %5665 = vmatpush1.msra.mxu0 %v856
        %5666 = vmatprep.subr.mxu0 %v861
        %5667 = vmatpush1.msra.mxu0 %v860
        %5668 = vmatprep.subr.mxu0 0.0
        %5669 = vmatpush1.msra.mxu0 0.0
        %5670 = vmatprep.subr.mxu0 0.0
        %5671 = vmatpush1.msra.mxu0 0.0
        %5672 = vmatprep.subr.mxu0 0.0
        %5673 = vmatpush1.msra.mxu0 0.0
        %5674 = vmatprep.subr.mxu0 0.0
        %5675 = vmatpush1.msra.mxu0 0.0
        %5676 = vmatprep.subr.mxu0 0.0
        %5677 = vmatpush1.msra.mxu0 0.0
        %5678 = vmatprep.subr.mxu0 0.0
        %5679 = vmatpush1.msra.mxu0 0.0
        %5680 = vmatprep.subr.mxu0 0.0
        %5681 = vmatpush1.msra.mxu0 0.0
        %5682 = vmatprep.subr.mxu0 0.0
        %5683 = vmatpush1.msra.mxu0 0.0
        %5684 = vmatprep.subr.mxu0 0.0
        %5685 = vmatpush1.msra.mxu0 0.0
        %5686 = vmatprep.subr.mxu0 0.0
        %5687 = vmatpush1.msra.mxu0 0.0
        %5688 = vmatprep.subr.mxu0 0.0
        %5689 = vmatpush1.msra.mxu0 0.0
        %5690 = vmatprep.subr.mxu0 0.0
        %5691 = vmatpush1.msra.mxu0 0.0
        %5692 = vmatprep.subr.mxu0 0.0
        %5693 = vmatpush1.msra.mxu0 0.0
        %5694 = vmatprep.subr.mxu0 0.0
        %5695 = vmatpush1.msra.mxu0 0.0
        %5696 = vmatprep.subr.mxu0 0.0
        %5697 = vmatpush1.msra.mxu0 0.0
        %5698 = vmatprep.subr.mxu0 0.0
        %5699 = vmatpush1.msra.mxu0 0.0
        %5700 = vmatprep.mubr.f32.mxu0 0.0
        %5701 = vmatmul.mubr.f32.gmra.mrb[0].mxu0 %v5085
        %v5702 = vpop.f32.mrb[0].mxu0
        %v5703 = vadd.f32 0.0, %v5702
        %v5704 = vpop.f32.mrb[0].mxu0
        %v5705 = vadd.f32 0.0, %v5704
        %5706 = vdwg.mxu0
        %5707 = vmatprep.subr.mxu0 %v803
        %5708 = vmatpush1.msra.mxu0 %v802
        %5709 = vmatprep.subr.mxu0 %v807
        %5710 = vmatpush1.msra.mxu0 %v806
        %5711 = vmatprep.subr.mxu0 %v811
        %5712 = vmatpush1.msra.mxu0 %v810
        %5713 = vmatprep.subr.mxu0 %v815
        %5714 = vmatpush1.msra.mxu0 %v814
        %5715 = vmatprep.subr.mxu0 %v819
        %5716 = vmatpush1.msra.mxu0 %v818
        %5717 = vmatprep.subr.mxu0 %v823
        %5718 = vmatpush1.msra.mxu0 %v822
        %5719 = vmatprep.subr.mxu0 %v827
        %5720 = vmatpush1.msra.mxu0 %v826
        %5721 = vmatprep.subr.mxu0 %v831
        %5722 = vmatpush1.msra.mxu0 %v830
        %5723 = vmatprep.subr.mxu0 %v835
        %5724 = vmatpush1.msra.mxu0 %v834
        %5725 = vmatprep.subr.mxu0 %v839
        %5726 = vmatpush1.msra.mxu0 %v838
        %5727 = vmatprep.subr.mxu0 %v843
        %5728 = vmatpush1.msra.mxu0 %v842
        %5729 = vmatprep.subr.mxu0 %v847
        %5730 = vmatpush1.msra.mxu0 %v846
        %5731 = vmatprep.subr.mxu0 %v851
        %5732 = vmatpush1.msra.mxu0 %v850
        %5733 = vmatprep.subr.mxu0 %v855
        %5734 = vmatpush1.msra.mxu0 %v854
        %5735 = vmatprep.subr.mxu0 %v859
        %5736 = vmatpush1.msra.mxu0 %v858
        %5737 = vmatprep.subr.mxu0 %v863
        %5738 = vmatpush1.msra.mxu0 %v862
        %5739 = vmatprep.subr.mxu0 0.0
        %5740 = vmatpush1.msra.mxu0 0.0
        %5741 = vmatprep.subr.mxu0 0.0
        %5742 = vmatpush1.msra.mxu0 0.0
        %5743 = vmatprep.subr.mxu0 0.0
        %5744 = vmatpush1.msra.mxu0 0.0
        %5745 = vmatprep.subr.mxu0 0.0
        %5746 = vmatpush1.msra.mxu0 0.0
        %5747 = vmatprep.subr.mxu0 0.0
        %5748 = vmatpush1.msra.mxu0 0.0
        %5749 = vmatprep.subr.mxu0 0.0
        %5750 = vmatpush1.msra.mxu0 0.0
        %5751 = vmatprep.subr.mxu0 0.0
        %5752 = vmatpush1.msra.mxu0 0.0
        %5753 = vmatprep.subr.mxu0 0.0
        %5754 = vmatpush1.msra.mxu0 0.0
        %5755 = vmatprep.subr.mxu0 0.0
        %5756 = vmatpush1.msra.mxu0 0.0
        %5757 = vmatprep.subr.mxu0 0.0
        %5758 = vmatpush1.msra.mxu0 0.0
        %5759 = vmatprep.subr.mxu0 0.0
        %5760 = vmatpush1.msra.mxu0 0.0
        %5761 = vmatprep.subr.mxu0 0.0
        %5762 = vmatpush1.msra.mxu0 0.0
        %5763 = vmatprep.subr.mxu0 0.0
        %5764 = vmatpush1.msra.mxu0 0.0
        %5765 = vmatprep.subr.mxu0 0.0
        %5766 = vmatpush1.msra.mxu0 0.0
        %5767 = vmatprep.subr.mxu0 0.0
        %5768 = vmatpush1.msra.mxu0 0.0
        %5769 = vmatprep.subr.mxu0 0.0
        %5770 = vmatpush1.msra.mxu0 0.0
        %5771 = vmatprep.mubr.f32.mxu0 0.0
        %5772 = vmatmul.mubr.f32.gmra.mrb[0].mxu0 %v5085
        %v5773 = vpop.f32.mrb[0].mxu0
        %v5774 = vadd.f32 0.0, %v5773
        %v5775 = vpop.f32.mrb[0].mxu0
        %v5776 = vadd.f32 0.0, %v5775
        %5777 = vdwg.mxu0
        %5778 = vmatprep.subr.mxu0 %v609
        %5779 = vmatpush1.msra.mxu0 %v608
        %5780 = vmatprep.subr.mxu0 %v613
        %5781 = vmatpush1.msra.mxu0 %v612
        %5782 = vmatprep.subr.mxu0 %v617
        %5783 = vmatpush1.msra.mxu0 %v616
        %5784 = vmatprep.subr.mxu0 %v621
        %5785 = vmatpush1.msra.mxu0 %v620
        %5786 = vmatprep.subr.mxu0 %v625
        %5787 = vmatpush1.msra.mxu0 %v624
        %5788 = vmatprep.subr.mxu0 %v629
        %5789 = vmatpush1.msra.mxu0 %v628
        %5790 = vmatprep.subr.mxu0 %v633
        %5791 = vmatpush1.msra.mxu0 %v632
        %5792 = vmatprep.subr.mxu0 %v637
        %5793 = vmatpush1.msra.mxu0 %v636
        %5794 = vmatprep.subr.mxu0 %v641
        %5795 = vmatpush1.msra.mxu0 %v640
        %5796 = vmatprep.subr.mxu0 %v645
        %5797 = vmatpush1.msra.mxu0 %v644
        %5798 = vmatprep.subr.mxu0 %v649
        %5799 = vmatpush1.msra.mxu0 %v648
        %5800 = vmatprep.subr.mxu0 %v653
        %5801 = vmatpush1.msra.mxu0 %v652
        %5802 = vmatprep.subr.mxu0 %v657
        %5803 = vmatpush1.msra.mxu0 %v656
        %5804 = vmatprep.subr.mxu0 %v661
        %5805 = vmatpush1.msra.mxu0 %v660
        %5806 = vmatprep.subr.mxu0 %v665
        %5807 = vmatpush1.msra.mxu0 %v664
        %5808 = vmatprep.subr.mxu0 %v669
        %5809 = vmatpush1.msra.mxu0 %v668
        %5810 = vmatprep.subr.mxu0 0.0
        %5811 = vmatpush1.msra.mxu0 0.0
        %5812 = vmatprep.subr.mxu0 0.0
        %5813 = vmatpush1.msra.mxu0 0.0
        %5814 = vmatprep.subr.mxu0 0.0
        %5815 = vmatpush1.msra.mxu0 0.0
        %5816 = vmatprep.subr.mxu0 0.0
        %5817 = vmatpush1.msra.mxu0 0.0
        %5818 = vmatprep.subr.mxu0 0.0
        %5819 = vmatpush1.msra.mxu0 0.0
        %5820 = vmatprep.subr.mxu0 0.0
        %5821 = vmatpush1.msra.mxu0 0.0
        %5822 = vmatprep.subr.mxu0 0.0
        %5823 = vmatpush1.msra.mxu0 0.0
        %5824 = vmatprep.subr.mxu0 0.0
        %5825 = vmatpush1.msra.mxu0 0.0
        %5826 = vmatprep.subr.mxu0 0.0
        %5827 = vmatpush1.msra.mxu0 0.0
        %5828 = vmatprep.subr.mxu0 0.0
        %5829 = vmatpush1.msra.mxu0 0.0
        %5830 = vmatprep.subr.mxu0 0.0
        %5831 = vmatpush1.msra.mxu0 0.0
        %5832 = vmatprep.subr.mxu0 0.0
        %5833 = vmatpush1.msra.mxu0 0.0
        %5834 = vmatprep.subr.mxu0 0.0
        %5835 = vmatpush1.msra.mxu0 0.0
        %5836 = vmatprep.subr.mxu0 0.0
        %5837 = vmatpush1.msra.mxu0 0.0
        %5838 = vmatprep.subr.mxu0 0.0
        %5839 = vmatpush1.msra.mxu0 0.0
        %5840 = vmatprep.subr.mxu0 0.0
        %5841 = vmatpush1.msra.mxu0 0.0
        %5842 = vmatprep.mubr.f32.mxu0 0.0
        %5843 = vmatmul.mubr.f32.gmra.mrb[0].mxu0 %v4779
        %v5844 = vpop.f32.mrb[0].mxu0
        %v5845 = vadd.f32 %v5703, %v5844
        %v5846 = vpop.f32.mrb[0].mxu0
        %v5847 = vadd.f32 %v5705, %v5846
        %5848 = vdwg.mxu0
        %5849 = vmatprep.subr.mxu0 %v611
        %5850 = vmatpush1.msra.mxu0 %v610
        %5851 = vmatprep.subr.mxu0 %v615
        %5852 = vmatpush1.msra.mxu0 %v614
        %5853 = vmatprep.subr.mxu0 %v619
        %5854 = vmatpush1.msra.mxu0 %v618
        %5855 = vmatprep.subr.mxu0 %v623
        %5856 = vmatpush1.msra.mxu0 %v622
        %5857 = vmatprep.subr.mxu0 %v627
        %5858 = vmatpush1.msra.mxu0 %v626
        %5859 = vmatprep.subr.mxu0 %v631
        %5860 = vmatpush1.msra.mxu0 %v630
        %5861 = vmatprep.subr.mxu0 %v635
        %5862 = vmatpush1.msra.mxu0 %v634
        %5863 = vmatprep.subr.mxu0 %v639
        %5864 = vmatpush1.msra.mxu0 %v638
        %5865 = vmatprep.subr.mxu0 %v643
        %5866 = vmatpush1.msra.mxu0 %v642
        %5867 = vmatprep.subr.mxu0 %v647
        %5868 = vmatpush1.msra.mxu0 %v646
        %5869 = vmatprep.subr.mxu0 %v651
        %5870 = vmatpush1.msra.mxu0 %v650
        %5871 = vmatprep.subr.mxu0 %v655
        %5872 = vmatpush1.msra.mxu0 %v654
        %5873 = vmatprep.subr.mxu0 %v659
        %5874 = vmatpush1.msra.mxu0 %v658
        %5875 = vmatprep.subr.mxu0 %v663
        %5876 = vmatpush1.msra.mxu0 %v662
        %5877 = vmatprep.subr.mxu0 %v667
        %5878 = vmatpush1.msra.mxu0 %v666
        %5879 = vmatprep.subr.mxu0 %v671
        %5880 = vmatpush1.msra.mxu0 %v670
        %5881 = vmatprep.subr.mxu0 0.0
        %5882 = vmatpush1.msra.mxu0 0.0
        %5883 = vmatprep.subr.mxu0 0.0
        %5884 = vmatpush1.msra.mxu0 0.0
        %5885 = vmatprep.subr.mxu0 0.0
        %5886 = vmatpush1.msra.mxu0 0.0
        %5887 = vmatprep.subr.mxu0 0.0
        %5888 = vmatpush1.msra.mxu0 0.0
        %5889 = vmatprep.subr.mxu0 0.0
        %5890 = vmatpush1.msra.mxu0 0.0
        %5891 = vmatprep.subr.mxu0 0.0
        %5892 = vmatpush1.msra.mxu0 0.0
        %5893 = vmatprep.subr.mxu0 0.0
        %5894 = vmatpush1.msra.mxu0 0.0
        %5895 = vmatprep.subr.mxu0 0.0
        %5896 = vmatpush1.msra.mxu0 0.0
        %5897 = vmatprep.subr.mxu0 0.0
        %5898 = vmatpush1.msra.mxu0 0.0
        %5899 = vmatprep.subr.mxu0 0.0
        %5900 = vmatpush1.msra.mxu0 0.0
        %5901 = vmatprep.subr.mxu0 0.0
        %5902 = vmatpush1.msra.mxu0 0.0
        %5903 = vmatprep.subr.mxu0 0.0
        %5904 = vmatpush1.msra.mxu0 0.0
        %5905 = vmatprep.subr.mxu0 0.0
        %5906 = vmatpush1.msra.mxu0 0.0
        %5907 = vmatprep.subr.mxu0 0.0
        %5908 = vmatpush1.msra.mxu0 0.0
        %5909 = vmatprep.subr.mxu0 0.0
        %5910 = vmatpush1.msra.mxu0 0.0
        %5911 = vmatprep.subr.mxu0 0.0
        %5912 = vmatpush1.msra.mxu0 0.0
        %5913 = vmatprep.mubr.f32.mxu0 0.0
        %5914 = vmatmul.mubr.f32.gmra.mrb[0].mxu0 %v4779
        %v5915 = vpop.f32.mrb[0].mxu0
        %v5916 = vadd.f32 %v5774, %v5915
        %v5917 = vpop.f32.mrb[0].mxu0
        %v5918 = vadd.f32 %v5776, %v5917
        %5919 = vdwg.mxu0
        %v5920 = vadd.f32 %v5845, %v2480
        %v5921 = vadd.f32 %v5847, %v2484
        %v5922 = vadd.f32 %v5916, %v2488
        %v5923 = vadd.f32 %v5918, %v2492
        %v5924 = vmul.f32 %v5920, 0.5
        %v5925 = vmul.f32 %v5921, 0.5
        %v5926 = vmul.f32 %v5922, 0.5
        %v5927 = vtanh.pop %v5924
        %v5928 = vtanh.pop %v5925
        %v5929 = vtanh.pop %v5926
        %v5930 = vadd.f32 %v5927, 1.0
        %v5931 = vadd.f32 %v5928, 1.0
        %v5932 = vadd.f32 %v5929, 1.0
        %v5933 = vmul.f32 %v5930, 0.5
        %v5934 = vmul.f32 %v5931, 0.5
        %v5935 = vmul.f32 %v5932, 0.5
        %v5936 = vtanh.pop %v5923
        %v5937 = vmul.f32 %v5934, %v5083
        %v5938 = vmul.f32 %v5933, %v5936
        %v5939 = vadd.f32 %v5937, %v5938
        %v5940 = vtanh.pop %v5939
        %v5941 = vmul.f32 %v5935, %v5940
        %5942 = vmatprep.subr.mxu0 0.0
        %5943 = vmatpush1.msra.mxu0 %v867
        %5944 = vmatprep.subr.mxu0 0.0
        %5945 = vmatpush1.msra.mxu0 %v868
        %5946 = vmatprep.subr.mxu0 0.0
        %5947 = vmatpush1.msra.mxu0 %v869
        %5948 = vmatprep.subr.mxu0 0.0
        %5949 = vmatpush1.msra.mxu0 %v870
        %5950 = vmatprep.subr.mxu0 0.0
        %5951 = vmatpush1.msra.mxu0 %v871
        %5952 = vmatprep.subr.mxu0 0.0
        %5953 = vmatpush1.msra.mxu0 %v872
        %5954 = vmatprep.subr.mxu0 0.0
        %5955 = vmatpush1.msra.mxu0 %v873
        %5956 = vmatprep.subr.mxu0 0.0
        %5957 = vmatpush1.msra.mxu0 %v874
        %5958 = vmatprep.subr.mxu0 0.0
        %5959 = vmatpush1.msra.mxu0 %v875
        %5960 = vmatprep.subr.mxu0 0.0
        %5961 = vmatpush1.msra.mxu0 %v876
        %5962 = vmatprep.subr.mxu0 0.0
        %5963 = vmatpush1.msra.mxu0 %v877
        %5964 = vmatprep.subr.mxu0 0.0
        %5965 = vmatpush1.msra.mxu0 %v878
        %5966 = vmatprep.subr.mxu0 0.0
        %5967 = vmatpush1.msra.mxu0 %v879
        %5968 = vmatprep.subr.mxu0 0.0
        %5969 = vmatpush1.msra.mxu0 %v880
        %5970 = vmatprep.subr.mxu0 0.0
        %5971 = vmatpush1.msra.mxu0 %v881
        %5972 = vmatprep.subr.mxu0 0.0
        %5973 = vmatpush1.msra.mxu0 %v882
        %5974 = vmatprep.subr.mxu0 0.0
        %5975 = vmatpush1.msra.mxu0 0.0
        %5976 = vmatprep.subr.mxu0 0.0
        %5977 = vmatpush1.msra.mxu0 0.0
        %5978 = vmatprep.subr.mxu0 0.0
        %5979 = vmatpush1.msra.mxu0 0.0
        %5980 = vmatprep.subr.mxu0 0.0
        %5981 = vmatpush1.msra.mxu0 0.0
        %5982 = vmatprep.subr.mxu0 0.0
        %5983 = vmatpush1.msra.mxu0 0.0
        %5984 = vmatprep.subr.mxu0 0.0
        %5985 = vmatpush1.msra.mxu0 0.0
        %5986 = vmatprep.subr.mxu0 0.0
        %5987 = vmatpush1.msra.mxu0 0.0
        %5988 = vmatprep.subr.mxu0 0.0
        %5989 = vmatpush1.msra.mxu0 0.0
        %5990 = vmatprep.subr.mxu0 0.0
        %5991 = vmatpush1.msra.mxu0 0.0
        %5992 = vmatprep.subr.mxu0 0.0
        %5993 = vmatpush1.msra.mxu0 0.0
        %5994 = vmatprep.subr.mxu0 0.0
        %5995 = vmatpush1.msra.mxu0 0.0
        %5996 = vmatprep.subr.mxu0 0.0
        %5997 = vmatpush1.msra.mxu0 0.0
        %5998 = vmatprep.subr.mxu0 0.0
        %5999 = vmatpush1.msra.mxu0 0.0
        %6000 = vmatprep.subr.mxu0 0.0
        %6001 = vmatpush1.msra.mxu0 0.0
        %6002 = vmatprep.subr.mxu0 0.0
        %6003 = vmatpush1.msra.mxu0 0.0
        %6004 = vmatprep.subr.mxu0 0.0
        %6005 = vmatpush1.msra.mxu0 0.0
        %6006 = vmatprep.mubr.f32.mxu0 0.0
        %6007 = vmatmul.mubr.f32.gmra.mrb[0].mxu0 %v5941
        %v6008 = vpop.f32.mrb[0].mxu0
        %v6009 = vadd.f32 0.0, %v6008
        %v6010 = vpop.f32.mrb[0].mxu0
        %6011 = vdwg.mxu0
        %s6012 = scalar_lea.vmem %s475, 32 [#allocation13]
        %6013 = vst [vmem:[%s6012] sm:$0xff] %v6009
        %6014 = vmatprep.subr.mxu0 %v673
        %6015 = vmatpush1.msra.mxu0 %v672
        %6016 = vmatprep.subr.mxu0 %v677
        %6017 = vmatpush1.msra.mxu0 %v676
        %6018 = vmatprep.subr.mxu0 %v681
        %6019 = vmatpush1.msra.mxu0 %v680
        %6020 = vmatprep.subr.mxu0 %v685
        %6021 = vmatpush1.msra.mxu0 %v684
        %6022 = vmatprep.subr.mxu0 %v689
        %6023 = vmatpush1.msra.mxu0 %v688
        %6024 = vmatprep.subr.mxu0 %v693
        %6025 = vmatpush1.msra.mxu0 %v692
        %6026 = vmatprep.subr.mxu0 %v697
        %6027 = vmatpush1.msra.mxu0 %v696
        %6028 = vmatprep.subr.mxu0 %v701
        %6029 = vmatpush1.msra.mxu0 %v700
        %6030 = vmatprep.subr.mxu0 %v705
        %6031 = vmatpush1.msra.mxu0 %v704
        %6032 = vmatprep.subr.mxu0 %v709
        %6033 = vmatpush1.msra.mxu0 %v708
        %6034 = vmatprep.subr.mxu0 %v713
        %6035 = vmatpush1.msra.mxu0 %v712
        %6036 = vmatprep.subr.mxu0 %v717
        %6037 = vmatpush1.msra.mxu0 %v716
        %6038 = vmatprep.subr.mxu0 %v721
        %6039 = vmatpush1.msra.mxu0 %v720
        %6040 = vmatprep.subr.mxu0 %v725
        %6041 = vmatpush1.msra.mxu0 %v724
        %6042 = vmatprep.subr.mxu0 %v729
        %6043 = vmatpush1.msra.mxu0 %v728
        %6044 = vmatprep.subr.mxu0 %v733
        %6045 = vmatpush1.msra.mxu0 %v732
        %6046 = vmatprep.subr.mxu0 0.0
        %6047 = vmatpush1.msra.mxu0 0.0
        %6048 = vmatprep.subr.mxu0 0.0
        %6049 = vmatpush1.msra.mxu0 0.0
        %6050 = vmatprep.subr.mxu0 0.0
        %6051 = vmatpush1.msra.mxu0 0.0
        %6052 = vmatprep.subr.mxu0 0.0
        %6053 = vmatpush1.msra.mxu0 0.0
        %6054 = vmatprep.subr.mxu0 0.0
        %6055 = vmatpush1.msra.mxu0 0.0
        %6056 = vmatprep.subr.mxu0 0.0
        %6057 = vmatpush1.msra.mxu0 0.0
        %6058 = vmatprep.subr.mxu0 0.0
        %6059 = vmatpush1.msra.mxu0 0.0
        %6060 = vmatprep.subr.mxu0 0.0
        %6061 = vmatpush1.msra.mxu0 0.0
        %6062 = vmatprep.subr.mxu0 0.0
        %6063 = vmatpush1.msra.mxu0 0.0
        %6064 = vmatprep.subr.mxu0 0.0
        %6065 = vmatpush1.msra.mxu0 0.0
        %6066 = vmatprep.subr.mxu0 0.0
        %6067 = vmatpush1.msra.mxu0 0.0
        %6068 = vmatprep.subr.mxu0 0.0
        %6069 = vmatpush1.msra.mxu0 0.0
        %6070 = vmatprep.subr.mxu0 0.0
        %6071 = vmatpush1.msra.mxu0 0.0
        %6072 = vmatprep.subr.mxu0 0.0
        %6073 = vmatpush1.msra.mxu0 0.0
        %6074 = vmatprep.subr.mxu0 0.0
        %6075 = vmatpush1.msra.mxu0 0.0
        %6076 = vmatprep.subr.mxu0 0.0
        %6077 = vmatpush1.msra.mxu0 0.0
        %6078 = vmatprep.mubr.f32.mxu0 0.0
        %6079 = vmatmul.mubr.f32.gmra.mrb[0].mxu0 %v5321
        %v6080 = vpop.f32.mrb[0].mxu0
        %v6081 = vadd.f32 0.0, %v6080
        %v6082 = vpop.f32.mrb[0].mxu0
        %v6083 = vadd.f32 0.0, %v6082
        %6084 = vdwg.mxu0
        %6085 = vmatprep.subr.mxu0 %v675
        %6086 = vmatpush1.msra.mxu0 %v674
        %6087 = vmatprep.subr.mxu0 %v679
        %6088 = vmatpush1.msra.mxu0 %v678
        %6089 = vmatprep.subr.mxu0 %v683
        %6090 = vmatpush1.msra.mxu0 %v682
        %6091 = vmatprep.subr.mxu0 %v687
        %6092 = vmatpush1.msra.mxu0 %v686
        %6093 = vmatprep.subr.mxu0 %v691
        %6094 = vmatpush1.msra.mxu0 %v690
        %6095 = vmatprep.subr.mxu0 %v695
        %6096 = vmatpush1.msra.mxu0 %v694
        %6097 = vmatprep.subr.mxu0 %v699
        %6098 = vmatpush1.msra.mxu0 %v698
        %6099 = vmatprep.subr.mxu0 %v703
        %6100 = vmatpush1.msra.mxu0 %v702
        %6101 = vmatprep.subr.mxu0 %v707
        %6102 = vmatpush1.msra.mxu0 %v706
        %6103 = vmatprep.subr.mxu0 %v711
        %6104 = vmatpush1.msra.mxu0 %v710
        %6105 = vmatprep.subr.mxu0 %v715
        %6106 = vmatpush1.msra.mxu0 %v714
        %6107 = vmatprep.subr.mxu0 %v719
        %6108 = vmatpush1.msra.mxu0 %v718
        %6109 = vmatprep.subr.mxu0 %v723
        %6110 = vmatpush1.msra.mxu0 %v722
        %6111 = vmatprep.subr.mxu0 %v727
        %6112 = vmatpush1.msra.mxu0 %v726
        %6113 = vmatprep.subr.mxu0 %v731
        %6114 = vmatpush1.msra.mxu0 %v730
        %6115 = vmatprep.subr.mxu0 %v735
        %6116 = vmatpush1.msra.mxu0 %v734
        %6117 = vmatprep.subr.mxu0 0.0
        %6118 = vmatpush1.msra.mxu0 0.0
        %6119 = vmatprep.subr.mxu0 0.0
        %6120 = vmatpush1.msra.mxu0 0.0
        %6121 = vmatprep.subr.mxu0 0.0
        %6122 = vmatpush1.msra.mxu0 0.0
        %6123 = vmatprep.subr.mxu0 0.0
        %6124 = vmatpush1.msra.mxu0 0.0
        %6125 = vmatprep.subr.mxu0 0.0
        %6126 = vmatpush1.msra.mxu0 0.0
        %6127 = vmatprep.subr.mxu0 0.0
        %6128 = vmatpush1.msra.mxu0 0.0
        %6129 = vmatprep.subr.mxu0 0.0
        %6130 = vmatpush1.msra.mxu0 0.0
        %6131 = vmatprep.subr.mxu0 0.0
        %6132 = vmatpush1.msra.mxu0 0.0
        %6133 = vmatprep.subr.mxu0 0.0
        %6134 = vmatpush1.msra.mxu0 0.0
        %6135 = vmatprep.subr.mxu0 0.0
        %6136 = vmatpush1.msra.mxu0 0.0
        %6137 = vmatprep.subr.mxu0 0.0
        %6138 = vmatpush1.msra.mxu0 0.0
        %6139 = vmatprep.subr.mxu0 0.0
        %6140 = vmatpush1.msra.mxu0 0.0
        %6141 = vmatprep.subr.mxu0 0.0
        %6142 = vmatpush1.msra.mxu0 0.0
        %6143 = vmatprep.subr.mxu0 0.0
        %6144 = vmatpush1.msra.mxu0 0.0
        %6145 = vmatprep.subr.mxu0 0.0
        %6146 = vmatpush1.msra.mxu0 0.0
        %6147 = vmatprep.subr.mxu0 0.0
        %6148 = vmatpush1.msra.mxu0 0.0
        %6149 = vmatprep.mubr.f32.mxu0 0.0
        %6150 = vmatmul.mubr.f32.gmra.mrb[0].mxu0 %v5321
        %v6151 = vpop.f32.mrb[0].mxu0
        %v6152 = vadd.f32 0.0, %v6151
        %v6153 = vpop.f32.mrb[0].mxu0
        %v6154 = vadd.f32 0.0, %v6153
        %6155 = vdwg.mxu0
        %v6156 = vadd.f32 %v972, %v6081
        %v6157 = vadd.f32 %v974, %v6083
        %v6158 = vadd.f32 %v1043, %v6152
        %v6159 = vadd.f32 %v1045, %v6154
        %v6160 = vmul.f32 %v6156, 0.5
        %v6161 = vmul.f32 %v6157, 0.5
        %v6162 = vmul.f32 %v6158, 0.5
        %v6163 = vtanh.pop %v6160
        %v6164 = vtanh.pop %v6161
        %v6165 = vtanh.pop %v6162
        %v6166 = vadd.f32 %v6163, 1.0
        %v6167 = vadd.f32 %v6164, 1.0
        %v6168 = vadd.f32 %v6165, 1.0
        %v6169 = vmul.f32 %v6166, 0.5
        %v6170 = vmul.f32 %v6167, 0.5
        %v6171 = vmul.f32 %v6168, 0.5
        %v6172 = vtanh.pop %v6159
        %v6173 = vmul.f32 %v6170, %v5319
        %v6174 = vmul.f32 %v6169, %v6172
        %v6175 = vadd.f32 %v6173, %v6174
        %v6176 = vtanh.pop %v6175
        %v6177 = vmul.f32 %v6171, %v6176
        %v6178 = vmul.f32 %v6177, 0.5
        %v6179 = vtanh.pop %v6178
        %v6180 = vadd.f32 %v6179, 1.0
        %v6181 = vmul.f32 %v6180, 0.5
        %6182 = vmatprep.subr.mxu0 %v737
        %6183 = vmatpush1.msra.mxu0 %v736
        %6184 = vmatprep.subr.mxu0 %v741
        %6185 = vmatpush1.msra.mxu0 %v740
        %6186 = vmatprep.subr.mxu0 %v745
        %6187 = vmatpush1.msra.mxu0 %v744
        %6188 = vmatprep.subr.mxu0 %v749
        %6189 = vmatpush1.msra.mxu0 %v748
        %6190 = vmatprep.subr.mxu0 %v753
        %6191 = vmatpush1.msra.mxu0 %v752
        %6192 = vmatprep.subr.mxu0 %v757
        %6193 = vmatpush1.msra.mxu0 %v756
        %6194 = vmatprep.subr.mxu0 %v761
        %6195 = vmatpush1.msra.mxu0 %v760
        %6196 = vmatprep.subr.mxu0 %v765
        %6197 = vmatpush1.msra.mxu0 %v764
        %6198 = vmatprep.subr.mxu0 %v769
        %6199 = vmatpush1.msra.mxu0 %v768
        %6200 = vmatprep.subr.mxu0 %v773
        %6201 = vmatpush1.msra.mxu0 %v772
        %6202 = vmatprep.subr.mxu0 %v777
        %6203 = vmatpush1.msra.mxu0 %v776
        %6204 = vmatprep.subr.mxu0 %v781
        %6205 = vmatpush1.msra.mxu0 %v780
        %6206 = vmatprep.subr.mxu0 %v785
        %6207 = vmatpush1.msra.mxu0 %v784
        %6208 = vmatprep.subr.mxu0 %v789
        %6209 = vmatpush1.msra.mxu0 %v788
        %6210 = vmatprep.subr.mxu0 %v793
        %6211 = vmatpush1.msra.mxu0 %v792
        %6212 = vmatprep.subr.mxu0 %v797
        %6213 = vmatpush1.msra.mxu0 %v796
        %6214 = vmatprep.subr.mxu0 0.0
        %6215 = vmatpush1.msra.mxu0 0.0
        %6216 = vmatprep.subr.mxu0 0.0
        %6217 = vmatpush1.msra.mxu0 0.0
        %6218 = vmatprep.subr.mxu0 0.0
        %6219 = vmatpush1.msra.mxu0 0.0
        %6220 = vmatprep.subr.mxu0 0.0
        %6221 = vmatpush1.msra.mxu0 0.0
        %6222 = vmatprep.subr.mxu0 0.0
        %6223 = vmatpush1.msra.mxu0 0.0
        %6224 = vmatprep.subr.mxu0 0.0
        %6225 = vmatpush1.msra.mxu0 0.0
        %6226 = vmatprep.subr.mxu0 0.0
        %6227 = vmatpush1.msra.mxu0 0.0
        %6228 = vmatprep.subr.mxu0 0.0
        %6229 = vmatpush1.msra.mxu0 0.0
        %6230 = vmatprep.subr.mxu0 0.0
        %6231 = vmatpush1.msra.mxu0 0.0
        %6232 = vmatprep.subr.mxu0 0.0
        %6233 = vmatpush1.msra.mxu0 0.0
        %6234 = vmatprep.subr.mxu0 0.0
        %6235 = vmatpush1.msra.mxu0 0.0
        %6236 = vmatprep.subr.mxu0 0.0
        %6237 = vmatpush1.msra.mxu0 0.0
        %6238 = vmatprep.subr.mxu0 0.0
        %6239 = vmatpush1.msra.mxu0 0.0
        %6240 = vmatprep.subr.mxu0 0.0
        %6241 = vmatpush1.msra.mxu0 0.0
        %6242 = vmatprep.subr.mxu0 0.0
        %6243 = vmatpush1.msra.mxu0 0.0
        %6244 = vmatprep.subr.mxu0 0.0
        %6245 = vmatpush1.msra.mxu0 0.0
        %6246 = vmatprep.mubr.f32.mxu0 0.0
        %6247 = vmatmul.mubr.f32.gmra.mrb[0].mxu0 %v5631
        %v6248 = vpop.f32.mrb[0].mxu0
        %v6249 = vadd.f32 0.0, %v6248
        %v6250 = vpop.f32.mrb[0].mxu0
        %v6251 = vadd.f32 0.0, %v6250
        %6252 = vdwg.mxu0
        %6253 = vmatprep.subr.mxu0 %v739
        %6254 = vmatpush1.msra.mxu0 %v738
        %6255 = vmatprep.subr.mxu0 %v743
        %6256 = vmatpush1.msra.mxu0 %v742
        %6257 = vmatprep.subr.mxu0 %v747
        %6258 = vmatpush1.msra.mxu0 %v746
        %6259 = vmatprep.subr.mxu0 %v751
        %6260 = vmatpush1.msra.mxu0 %v750
        %6261 = vmatprep.subr.mxu0 %v755
        %6262 = vmatpush1.msra.mxu0 %v754
        %6263 = vmatprep.subr.mxu0 %v759
        %6264 = vmatpush1.msra.mxu0 %v758
        %6265 = vmatprep.subr.mxu0 %v763
        %6266 = vmatpush1.msra.mxu0 %v762
        %6267 = vmatprep.subr.mxu0 %v767
        %6268 = vmatpush1.msra.mxu0 %v766
        %6269 = vmatprep.subr.mxu0 %v771
        %6270 = vmatpush1.msra.mxu0 %v770
        %6271 = vmatprep.subr.mxu0 %v775
        %6272 = vmatpush1.msra.mxu0 %v774
        %6273 = vmatprep.subr.mxu0 %v779
        %6274 = vmatpush1.msra.mxu0 %v778
        %6275 = vmatprep.subr.mxu0 %v783
        %6276 = vmatpush1.msra.mxu0 %v782
        %6277 = vmatprep.subr.mxu0 %v787
        %6278 = vmatpush1.msra.mxu0 %v786
        %6279 = vmatprep.subr.mxu0 %v791
        %6280 = vmatpush1.msra.mxu0 %v790
        %6281 = vmatprep.subr.mxu0 %v795
        %6282 = vmatpush1.msra.mxu0 %v794
        %6283 = vmatprep.subr.mxu0 %v799
        %6284 = vmatpush1.msra.mxu0 %v798
        %6285 = vmatprep.subr.mxu0 0.0
        %6286 = vmatpush1.msra.mxu0 0.0
        %6287 = vmatprep.subr.mxu0 0.0
        %6288 = vmatpush1.msra.mxu0 0.0
        %6289 = vmatprep.subr.mxu0 0.0
        %6290 = vmatpush1.msra.mxu0 0.0
        %6291 = vmatprep.subr.mxu0 0.0
        %6292 = vmatpush1.msra.mxu0 0.0
        %6293 = vmatprep.subr.mxu0 0.0
        %6294 = vmatpush1.msra.mxu0 0.0
        %6295 = vmatprep.subr.mxu0 0.0
        %6296 = vmatpush1.msra.mxu0 0.0
        %6297 = vmatprep.subr.mxu0 0.0
        %6298 = vmatpush1.msra.mxu0 0.0
        %6299 = vmatprep.subr.mxu0 0.0
        %6300 = vmatpush1.msra.mxu0 0.0
        %6301 = vmatprep.subr.mxu0 0.0
        %6302 = vmatpush1.msra.mxu0 0.0
        %6303 = vmatprep.subr.mxu0 0.0
        %6304 = vmatpush1.msra.mxu0 0.0
        %6305 = vmatprep.subr.mxu0 0.0
        %6306 = vmatpush1.msra.mxu0 0.0
        %6307 = vmatprep.subr.mxu0 0.0
        %6308 = vmatpush1.msra.mxu0 0.0
        %6309 = vmatprep.subr.mxu0 0.0
        %6310 = vmatpush1.msra.mxu0 0.0
        %6311 = vmatprep.subr.mxu0 0.0
        %6312 = vmatpush1.msra.mxu0 0.0
        %6313 = vmatprep.subr.mxu0 0.0
        %6314 = vmatpush1.msra.mxu0 0.0
        %6315 = vmatprep.subr.mxu0 0.0
        %6316 = vmatpush1.msra.mxu0 0.0
        %6317 = vmatprep.mubr.f32.mxu0 0.0
        %6318 = vmatmul.mubr.f32.gmra.mrb[0].mxu0 %v5631
        %v6319 = vpop.f32.mrb[0].mxu0
        %v6320 = vadd.f32 0.0, %v6319
        %v6321 = vpop.f32.mrb[0].mxu0
        %v6322 = vadd.f32 0.0, %v6321
        %6323 = vdwg.mxu0
        %6324 = vmatprep.subr.mxu0 %v545
        %6325 = vmatpush1.msra.mxu0 %v544
        %6326 = vmatprep.subr.mxu0 %v549
        %6327 = vmatpush1.msra.mxu0 %v548
        %6328 = vmatprep.subr.mxu0 %v553
        %6329 = vmatpush1.msra.mxu0 %v552
        %6330 = vmatprep.subr.mxu0 %v557
        %6331 = vmatpush1.msra.mxu0 %v556
        %6332 = vmatprep.subr.mxu0 %v561
        %6333 = vmatpush1.msra.mxu0 %v560
        %6334 = vmatprep.subr.mxu0 %v565
        %6335 = vmatpush1.msra.mxu0 %v564
        %6336 = vmatprep.subr.mxu0 %v569
        %6337 = vmatpush1.msra.mxu0 %v568
        %6338 = vmatprep.subr.mxu0 %v573
        %6339 = vmatpush1.msra.mxu0 %v572
        %6340 = vmatprep.subr.mxu0 %v577
        %6341 = vmatpush1.msra.mxu0 %v576
        %6342 = vmatprep.subr.mxu0 %v581
        %6343 = vmatpush1.msra.mxu0 %v580
        %6344 = vmatprep.subr.mxu0 %v585
        %6345 = vmatpush1.msra.mxu0 %v584
        %6346 = vmatprep.subr.mxu0 %v589
        %6347 = vmatpush1.msra.mxu0 %v588
        %6348 = vmatprep.subr.mxu0 %v593
        %6349 = vmatpush1.msra.mxu0 %v592
        %6350 = vmatprep.subr.mxu0 %v597
        %6351 = vmatpush1.msra.mxu0 %v596
        %6352 = vmatprep.subr.mxu0 %v601
        %6353 = vmatpush1.msra.mxu0 %v600
        %6354 = vmatprep.subr.mxu0 %v605
        %6355 = vmatpush1.msra.mxu0 %v604
        %6356 = vmatprep.subr.mxu0 0.0
        %6357 = vmatpush1.msra.mxu0 0.0
        %6358 = vmatprep.subr.mxu0 0.0
        %6359 = vmatpush1.msra.mxu0 0.0
        %6360 = vmatprep.subr.mxu0 0.0
        %6361 = vmatpush1.msra.mxu0 0.0
        %6362 = vmatprep.subr.mxu0 0.0
        %6363 = vmatpush1.msra.mxu0 0.0
        %6364 = vmatprep.subr.mxu0 0.0
        %6365 = vmatpush1.msra.mxu0 0.0
        %6366 = vmatprep.subr.mxu0 0.0
        %6367 = vmatpush1.msra.mxu0 0.0
        %6368 = vmatprep.subr.mxu0 0.0
        %6369 = vmatpush1.msra.mxu0 0.0
        %6370 = vmatprep.subr.mxu0 0.0
        %6371 = vmatpush1.msra.mxu0 0.0
        %6372 = vmatprep.subr.mxu0 0.0
        %6373 = vmatpush1.msra.mxu0 0.0
        %6374 = vmatprep.subr.mxu0 0.0
        %6375 = vmatpush1.msra.mxu0 0.0
        %6376 = vmatprep.subr.mxu0 0.0
        %6377 = vmatpush1.msra.mxu0 0.0
        %6378 = vmatprep.subr.mxu0 0.0
        %6379 = vmatpush1.msra.mxu0 0.0
        %6380 = vmatprep.subr.mxu0 0.0
        %6381 = vmatpush1.msra.mxu0 0.0
        %6382 = vmatprep.subr.mxu0 0.0
        %6383 = vmatpush1.msra.mxu0 0.0
        %6384 = vmatprep.subr.mxu0 0.0
        %6385 = vmatpush1.msra.mxu0 0.0
        %6386 = vmatprep.subr.mxu0 0.0
        %6387 = vmatpush1.msra.mxu0 0.0
        %6388 = vmatprep.mubr.f32.mxu0 0.0
        %6389 = vmatmul.mubr.f32.gmra.mrb[0].mxu0 %v5325
        %v6390 = vpop.f32.mrb[0].mxu0
        %v6391 = vadd.f32 %v6249, %v6390
        %v6392 = vpop.f32.mrb[0].mxu0
        %v6393 = vadd.f32 %v6251, %v6392
        %6394 = vdwg.mxu0
        %6395 = vmatprep.subr.mxu0 %v547
        %6396 = vmatpush1.msra.mxu0 %v546
        %6397 = vmatprep.subr.mxu0 %v551
        %6398 = vmatpush1.msra.mxu0 %v550
        %6399 = vmatprep.subr.mxu0 %v555
        %6400 = vmatpush1.msra.mxu0 %v554
        %6401 = vmatprep.subr.mxu0 %v559
        %6402 = vmatpush1.msra.mxu0 %v558
        %6403 = vmatprep.subr.mxu0 %v563
        %6404 = vmatpush1.msra.mxu0 %v562
        %6405 = vmatprep.subr.mxu0 %v567
        %6406 = vmatpush1.msra.mxu0 %v566
        %6407 = vmatprep.subr.mxu0 %v571
        %6408 = vmatpush1.msra.mxu0 %v570
        %6409 = vmatprep.subr.mxu0 %v575
        %6410 = vmatpush1.msra.mxu0 %v574
        %6411 = vmatprep.subr.mxu0 %v579
        %6412 = vmatpush1.msra.mxu0 %v578
        %6413 = vmatprep.subr.mxu0 %v583
        %6414 = vmatpush1.msra.mxu0 %v582
        %6415 = vmatprep.subr.mxu0 %v587
        %6416 = vmatpush1.msra.mxu0 %v586
        %6417 = vmatprep.subr.mxu0 %v591
        %6418 = vmatpush1.msra.mxu0 %v590
        %6419 = vmatprep.subr.mxu0 %v595
        %6420 = vmatpush1.msra.mxu0 %v594
        %6421 = vmatprep.subr.mxu0 %v599
        %6422 = vmatpush1.msra.mxu0 %v598
        %6423 = vmatprep.subr.mxu0 %v603
        %6424 = vmatpush1.msra.mxu0 %v602
        %6425 = vmatprep.subr.mxu0 %v607
        %6426 = vmatpush1.msra.mxu0 %v606
        %6427 = vmatprep.subr.mxu0 0.0
        %6428 = vmatpush1.msra.mxu0 0.0
        %6429 = vmatprep.subr.mxu0 0.0
        %6430 = vmatpush1.msra.mxu0 0.0
        %6431 = vmatprep.subr.mxu0 0.0
        %6432 = vmatpush1.msra.mxu0 0.0
        %6433 = vmatprep.subr.mxu0 0.0
        %6434 = vmatpush1.msra.mxu0 0.0
        %6435 = vmatprep.subr.mxu0 0.0
        %6436 = vmatpush1.msra.mxu0 0.0
        %6437 = vmatprep.subr.mxu0 0.0
        %6438 = vmatpush1.msra.mxu0 0.0
        %6439 = vmatprep.subr.mxu0 0.0
        %6440 = vmatpush1.msra.mxu0 0.0
        %6441 = vmatprep.subr.mxu0 0.0
        %6442 = vmatpush1.msra.mxu0 0.0
        %6443 = vmatprep.subr.mxu0 0.0
        %6444 = vmatpush1.msra.mxu0 0.0
        %6445 = vmatprep.subr.mxu0 0.0
        %6446 = vmatpush1.msra.mxu0 0.0
        %6447 = vmatprep.subr.mxu0 0.0
        %6448 = vmatpush1.msra.mxu0 0.0
        %6449 = vmatprep.subr.mxu0 0.0
        %6450 = vmatpush1.msra.mxu0 0.0
        %6451 = vmatprep.subr.mxu0 0.0
        %6452 = vmatpush1.msra.mxu0 0.0
        %6453 = vmatprep.subr.mxu0 0.0
        %6454 = vmatpush1.msra.mxu0 0.0
        %6455 = vmatprep.subr.mxu0 0.0
        %6456 = vmatpush1.msra.mxu0 0.0
        %6457 = vmatprep.subr.mxu0 0.0
        %6458 = vmatpush1.msra.mxu0 0.0
        %6459 = vmatprep.mubr.f32.mxu0 0.0
        %6460 = vmatmul.mubr.f32.gmra.mrb[0].mxu0 %v5325
        %v6461 = vpop.f32.mrb[0].mxu0
        %v6462 = vadd.f32 %v6320, %v6461
        %v6463 = vpop.f32.mrb[0].mxu0
        %v6464 = vadd.f32 %v6322, %v6463
        %6465 = vdwg.mxu0
        %v6466 = vadd.f32 %v6391, %v1671
        %v6467 = vadd.f32 %v6393, %v1675
        %v6468 = vadd.f32 %v6462, %v1679
        %v6469 = vadd.f32 %v6464, %v1683
        %v6470 = vmul.f32 %v6466, 0.5
        %v6471 = vmul.f32 %v6467, 0.5
        %v6472 = vmul.f32 %v6468, 0.5
        %v6473 = vtanh.pop %v6470
        %v6474 = vtanh.pop %v6471
        %v6475 = vtanh.pop %v6472
        %v6476 = vadd.f32 %v6473, 1.0
        %v6477 = vadd.f32 %v6474, 1.0
        %v6478 = vadd.f32 %v6475, 1.0
        %v6479 = vmul.f32 %v6476, 0.5
        %v6480 = vmul.f32 %v6477, 0.5
        %v6481 = vmul.f32 %v6478, 0.5
        %v6482 = vtanh.pop %v6469
        %v6483 = vmul.f32 %v6480, %v5629
        %v6484 = vmul.f32 %v6479, %v6482
        %v6485 = vadd.f32 %v6483, %v6484
        %v6486 = vtanh.pop %v6485
        %v6487 = vmul.f32 %v6481, %v6486
        %v6488 = vmul.f32 %v6487, 0.5
        %v6489 = vtanh.pop %v6488
        %v6490 = vadd.f32 %v6489, 1.0
        %v6491 = vmul.f32 %v6490, 0.5
        %6492 = vmatprep.subr.mxu0 %v801
        %6493 = vmatpush1.msra.mxu0 %v800
        %6494 = vmatprep.subr.mxu0 %v805
        %6495 = vmatpush1.msra.mxu0 %v804
        %6496 = vmatprep.subr.mxu0 %v809
        %6497 = vmatpush1.msra.mxu0 %v808
        %6498 = vmatprep.subr.mxu0 %v813
        %6499 = vmatpush1.msra.mxu0 %v812
        %6500 = vmatprep.subr.mxu0 %v817
        %6501 = vmatpush1.msra.mxu0 %v816
        %6502 = vmatprep.subr.mxu0 %v821
        %6503 = vmatpush1.msra.mxu0 %v820
        %6504 = vmatprep.subr.mxu0 %v825
        %6505 = vmatpush1.msra.mxu0 %v824
        %6506 = vmatprep.subr.mxu0 %v829
        %6507 = vmatpush1.msra.mxu0 %v828
        %6508 = vmatprep.subr.mxu0 %v833
        %6509 = vmatpush1.msra.mxu0 %v832
        %6510 = vmatprep.subr.mxu0 %v837
        %6511 = vmatpush1.msra.mxu0 %v836
        %6512 = vmatprep.subr.mxu0 %v841
        %6513 = vmatpush1.msra.mxu0 %v840
        %6514 = vmatprep.subr.mxu0 %v845
        %6515 = vmatpush1.msra.mxu0 %v844
        %6516 = vmatprep.subr.mxu0 %v849
        %6517 = vmatpush1.msra.mxu0 %v848
        %6518 = vmatprep.subr.mxu0 %v853
        %6519 = vmatpush1.msra.mxu0 %v852
        %6520 = vmatprep.subr.mxu0 %v857
        %6521 = vmatpush1.msra.mxu0 %v856
        %6522 = vmatprep.subr.mxu0 %v861
        %6523 = vmatpush1.msra.mxu0 %v860
        %6524 = vmatprep.subr.mxu0 0.0
        %6525 = vmatpush1.msra.mxu0 0.0
        %6526 = vmatprep.subr.mxu0 0.0
        %6527 = vmatpush1.msra.mxu0 0.0
        %6528 = vmatprep.subr.mxu0 0.0
        %6529 = vmatpush1.msra.mxu0 0.0
        %6530 = vmatprep.subr.mxu0 0.0
        %6531 = vmatpush1.msra.mxu0 0.0
        %6532 = vmatprep.subr.mxu0 0.0
        %6533 = vmatpush1.msra.mxu0 0.0
        %6534 = vmatprep.subr.mxu0 0.0
        %6535 = vmatpush1.msra.mxu0 0.0
        %6536 = vmatprep.subr.mxu0 0.0
        %6537 = vmatpush1.msra.mxu0 0.0
        %6538 = vmatprep.subr.mxu0 0.0
        %6539 = vmatpush1.msra.mxu0 0.0
        %6540 = vmatprep.subr.mxu0 0.0
        %6541 = vmatpush1.msra.mxu0 0.0
        %6542 = vmatprep.subr.mxu0 0.0
        %6543 = vmatpush1.msra.mxu0 0.0
        %6544 = vmatprep.subr.mxu0 0.0
        %6545 = vmatpush1.msra.mxu0 0.0
        %6546 = vmatprep.subr.mxu0 0.0
        %6547 = vmatpush1.msra.mxu0 0.0
        %6548 = vmatprep.subr.mxu0 0.0
        %6549 = vmatpush1.msra.mxu0 0.0
        %6550 = vmatprep.subr.mxu0 0.0
        %6551 = vmatpush1.msra.mxu0 0.0
        %6552 = vmatprep.subr.mxu0 0.0
        %6553 = vmatpush1.msra.mxu0 0.0
        %6554 = vmatprep.subr.mxu0 0.0
        %6555 = vmatpush1.msra.mxu0 0.0
        %6556 = vmatprep.mubr.f32.mxu0 0.0
        %6557 = vmatmul.mubr.f32.gmra.mrb[0].mxu0 %v5941
        %v6558 = vpop.f32.mrb[0].mxu0
        %v6559 = vadd.f32 0.0, %v6558
        %v6560 = vpop.f32.mrb[0].mxu0
        %v6561 = vadd.f32 0.0, %v6560
        %6562 = vdwg.mxu0
        %6563 = vmatprep.subr.mxu0 %v803
        %6564 = vmatpush1.msra.mxu0 %v802
        %6565 = vmatprep.subr.mxu0 %v807
        %6566 = vmatpush1.msra.mxu0 %v806
        %6567 = vmatprep.subr.mxu0 %v811
        %6568 = vmatpush1.msra.mxu0 %v810
        %6569 = vmatprep.subr.mxu0 %v815
        %6570 = vmatpush1.msra.mxu0 %v814
        %6571 = vmatprep.subr.mxu0 %v819
        %6572 = vmatpush1.msra.mxu0 %v818
        %6573 = vmatprep.subr.mxu0 %v823
        %6574 = vmatpush1.msra.mxu0 %v822
        %6575 = vmatprep.subr.mxu0 %v827
        %6576 = vmatpush1.msra.mxu0 %v826
        %6577 = vmatprep.subr.mxu0 %v831
        %6578 = vmatpush1.msra.mxu0 %v830
        %6579 = vmatprep.subr.mxu0 %v835
        %6580 = vmatpush1.msra.mxu0 %v834
        %6581 = vmatprep.subr.mxu0 %v839
        %6582 = vmatpush1.msra.mxu0 %v838
        %6583 = vmatprep.subr.mxu0 %v843
        %6584 = vmatpush1.msra.mxu0 %v842
        %6585 = vmatprep.subr.mxu0 %v847
        %6586 = vmatpush1.msra.mxu0 %v846
        %6587 = vmatprep.subr.mxu0 %v851
        %6588 = vmatpush1.msra.mxu0 %v850
        %6589 = vmatprep.subr.mxu0 %v855
        %6590 = vmatpush1.msra.mxu0 %v854
        %6591 = vmatprep.subr.mxu0 %v859
        %6592 = vmatpush1.msra.mxu0 %v858
        %6593 = vmatprep.subr.mxu0 %v863
        %6594 = vmatpush1.msra.mxu0 %v862
        %6595 = vmatprep.subr.mxu0 0.0
        %6596 = vmatpush1.msra.mxu0 0.0
        %6597 = vmatprep.subr.mxu0 0.0
        %6598 = vmatpush1.msra.mxu0 0.0
        %6599 = vmatprep.subr.mxu0 0.0
        %6600 = vmatpush1.msra.mxu0 0.0
        %6601 = vmatprep.subr.mxu0 0.0
        %6602 = vmatpush1.msra.mxu0 0.0
        %6603 = vmatprep.subr.mxu0 0.0
        %6604 = vmatpush1.msra.mxu0 0.0
        %6605 = vmatprep.subr.mxu0 0.0
        %6606 = vmatpush1.msra.mxu0 0.0
        %6607 = vmatprep.subr.mxu0 0.0
        %6608 = vmatpush1.msra.mxu0 0.0
        %6609 = vmatprep.subr.mxu0 0.0
        %6610 = vmatpush1.msra.mxu0 0.0
        %6611 = vmatprep.subr.mxu0 0.0
        %6612 = vmatpush1.msra.mxu0 0.0
        %6613 = vmatprep.subr.mxu0 0.0
        %6614 = vmatpush1.msra.mxu0 0.0
        %6615 = vmatprep.subr.mxu0 0.0
        %6616 = vmatpush1.msra.mxu0 0.0
        %6617 = vmatprep.subr.mxu0 0.0
        %6618 = vmatpush1.msra.mxu0 0.0
        %6619 = vmatprep.subr.mxu0 0.0
        %6620 = vmatpush1.msra.mxu0 0.0
        %6621 = vmatprep.subr.mxu0 0.0
        %6622 = vmatpush1.msra.mxu0 0.0
        %6623 = vmatprep.subr.mxu0 0.0
        %6624 = vmatpush1.msra.mxu0 0.0
        %6625 = vmatprep.subr.mxu0 0.0
        %6626 = vmatpush1.msra.mxu0 0.0
        %6627 = vmatprep.mubr.f32.mxu0 0.0
        %6628 = vmatmul.mubr.f32.gmra.mrb[0].mxu0 %v5941
        %v6629 = vpop.f32.mrb[0].mxu0
        %v6630 = vadd.f32 0.0, %v6629
        %v6631 = vpop.f32.mrb[0].mxu0
        %v6632 = vadd.f32 0.0, %v6631
        %6633 = vdwg.mxu0
        %6634 = vmatprep.subr.mxu0 %v609
        %6635 = vmatpush1.msra.mxu0 %v608
        %6636 = vmatprep.subr.mxu0 %v613
        %6637 = vmatpush1.msra.mxu0 %v612
        %6638 = vmatprep.subr.mxu0 %v617
        %6639 = vmatpush1.msra.mxu0 %v616
        %6640 = vmatprep.subr.mxu0 %v621
        %6641 = vmatpush1.msra.mxu0 %v620
        %6642 = vmatprep.subr.mxu0 %v625
        %6643 = vmatpush1.msra.mxu0 %v624
        %6644 = vmatprep.subr.mxu0 %v629
        %6645 = vmatpush1.msra.mxu0 %v628
        %6646 = vmatprep.subr.mxu0 %v633
        %6647 = vmatpush1.msra.mxu0 %v632
        %6648 = vmatprep.subr.mxu0 %v637
        %6649 = vmatpush1.msra.mxu0 %v636
        %6650 = vmatprep.subr.mxu0 %v641
        %6651 = vmatpush1.msra.mxu0 %v640
        %6652 = vmatprep.subr.mxu0 %v645
        %6653 = vmatpush1.msra.mxu0 %v644
        %6654 = vmatprep.subr.mxu0 %v649
        %6655 = vmatpush1.msra.mxu0 %v648
        %6656 = vmatprep.subr.mxu0 %v653
        %6657 = vmatpush1.msra.mxu0 %v652
        %6658 = vmatprep.subr.mxu0 %v657
        %6659 = vmatpush1.msra.mxu0 %v656
        %6660 = vmatprep.subr.mxu0 %v661
        %6661 = vmatpush1.msra.mxu0 %v660
        %6662 = vmatprep.subr.mxu0 %v665
        %6663 = vmatpush1.msra.mxu0 %v664
        %6664 = vmatprep.subr.mxu0 %v669
        %6665 = vmatpush1.msra.mxu0 %v668
        %6666 = vmatprep.subr.mxu0 0.0
        %6667 = vmatpush1.msra.mxu0 0.0
        %6668 = vmatprep.subr.mxu0 0.0
        %6669 = vmatpush1.msra.mxu0 0.0
        %6670 = vmatprep.subr.mxu0 0.0
        %6671 = vmatpush1.msra.mxu0 0.0
        %6672 = vmatprep.subr.mxu0 0.0
        %6673 = vmatpush1.msra.mxu0 0.0
        %6674 = vmatprep.subr.mxu0 0.0
        %6675 = vmatpush1.msra.mxu0 0.0
        %6676 = vmatprep.subr.mxu0 0.0
        %6677 = vmatpush1.msra.mxu0 0.0
        %6678 = vmatprep.subr.mxu0 0.0
        %6679 = vmatpush1.msra.mxu0 0.0
        %6680 = vmatprep.subr.mxu0 0.0
        %6681 = vmatpush1.msra.mxu0 0.0
        %6682 = vmatprep.subr.mxu0 0.0
        %6683 = vmatpush1.msra.mxu0 0.0
        %6684 = vmatprep.subr.mxu0 0.0
        %6685 = vmatpush1.msra.mxu0 0.0
        %6686 = vmatprep.subr.mxu0 0.0
        %6687 = vmatpush1.msra.mxu0 0.0
        %6688 = vmatprep.subr.mxu0 0.0
        %6689 = vmatpush1.msra.mxu0 0.0
        %6690 = vmatprep.subr.mxu0 0.0
        %6691 = vmatpush1.msra.mxu0 0.0
        %6692 = vmatprep.subr.mxu0 0.0
        %6693 = vmatpush1.msra.mxu0 0.0
        %6694 = vmatprep.subr.mxu0 0.0
        %6695 = vmatpush1.msra.mxu0 0.0
        %6696 = vmatprep.subr.mxu0 0.0
        %6697 = vmatpush1.msra.mxu0 0.0
        %6698 = vmatprep.mubr.f32.mxu0 0.0
        %6699 = vmatmul.mubr.f32.gmra.mrb[0].mxu0 %v5635
        %v6700 = vpop.f32.mrb[0].mxu0
        %v6701 = vadd.f32 %v6559, %v6700
        %v6702 = vpop.f32.mrb[0].mxu0
        %v6703 = vadd.f32 %v6561, %v6702
        %6704 = vdwg.mxu0
        %6705 = vmatprep.subr.mxu0 %v611
        %6706 = vmatpush1.msra.mxu0 %v610
        %6707 = vmatprep.subr.mxu0 %v615
        %6708 = vmatpush1.msra.mxu0 %v614
        %6709 = vmatprep.subr.mxu0 %v619
        %6710 = vmatpush1.msra.mxu0 %v618
        %6711 = vmatprep.subr.mxu0 %v623
        %6712 = vmatpush1.msra.mxu0 %v622
        %6713 = vmatprep.subr.mxu0 %v627
        %6714 = vmatpush1.msra.mxu0 %v626
        %6715 = vmatprep.subr.mxu0 %v631
        %6716 = vmatpush1.msra.mxu0 %v630
        %6717 = vmatprep.subr.mxu0 %v635
        %6718 = vmatpush1.msra.mxu0 %v634
        %6719 = vmatprep.subr.mxu0 %v639
        %6720 = vmatpush1.msra.mxu0 %v638
        %6721 = vmatprep.subr.mxu0 %v643
        %6722 = vmatpush1.msra.mxu0 %v642
        %6723 = vmatprep.subr.mxu0 %v647
        %6724 = vmatpush1.msra.mxu0 %v646
        %6725 = vmatprep.subr.mxu0 %v651
        %6726 = vmatpush1.msra.mxu0 %v650
        %6727 = vmatprep.subr.mxu0 %v655
        %6728 = vmatpush1.msra.mxu0 %v654
        %6729 = vmatprep.subr.mxu0 %v659
        %6730 = vmatpush1.msra.mxu0 %v658
        %6731 = vmatprep.subr.mxu0 %v663
        %6732 = vmatpush1.msra.mxu0 %v662
        %6733 = vmatprep.subr.mxu0 %v667
        %6734 = vmatpush1.msra.mxu0 %v666
        %6735 = vmatprep.subr.mxu0 %v671
        %6736 = vmatpush1.msra.mxu0 %v670
        %6737 = vmatprep.subr.mxu0 0.0
        %6738 = vmatpush1.msra.mxu0 0.0
        %6739 = vmatprep.subr.mxu0 0.0
        %6740 = vmatpush1.msra.mxu0 0.0
        %6741 = vmatprep.subr.mxu0 0.0
        %6742 = vmatpush1.msra.mxu0 0.0
        %6743 = vmatprep.subr.mxu0 0.0
        %6744 = vmatpush1.msra.mxu0 0.0
        %6745 = vmatprep.subr.mxu0 0.0
        %6746 = vmatpush1.msra.mxu0 0.0
        %6747 = vmatprep.subr.mxu0 0.0
        %6748 = vmatpush1.msra.mxu0 0.0
        %6749 = vmatprep.subr.mxu0 0.0
        %6750 = vmatpush1.msra.mxu0 0.0
        %6751 = vmatprep.subr.mxu0 0.0
        %6752 = vmatpush1.msra.mxu0 0.0
        %6753 = vmatprep.subr.mxu0 0.0
        %6754 = vmatpush1.msra.mxu0 0.0
        %6755 = vmatprep.subr.mxu0 0.0
        %6756 = vmatpush1.msra.mxu0 0.0
        %6757 = vmatprep.subr.mxu0 0.0
        %6758 = vmatpush1.msra.mxu0 0.0
        %6759 = vmatprep.subr.mxu0 0.0
        %6760 = vmatpush1.msra.mxu0 0.0
        %6761 = vmatprep.subr.mxu0 0.0
        %6762 = vmatpush1.msra.mxu0 0.0
        %6763 = vmatprep.subr.mxu0 0.0
        %6764 = vmatpush1.msra.mxu0 0.0
        %6765 = vmatprep.subr.mxu0 0.0
        %6766 = vmatpush1.msra.mxu0 0.0
        %6767 = vmatprep.subr.mxu0 0.0
        %6768 = vmatpush1.msra.mxu0 0.0
        %6769 = vmatprep.mubr.f32.mxu0 0.0
        %6770 = vmatmul.mubr.f32.gmra.mrb[0].mxu0 %v5635
        %v6771 = vpop.f32.mrb[0].mxu0
        %v6772 = vadd.f32 %v6630, %v6771
        %v6773 = vpop.f32.mrb[0].mxu0
        %v6774 = vadd.f32 %v6632, %v6773
        %6775 = vdwg.mxu0
        %v6776 = vadd.f32 %v6701, %v2480
        %v6777 = vadd.f32 %v6703, %v2484
        %v6778 = vadd.f32 %v6772, %v2488
        %v6779 = vadd.f32 %v6774, %v2492
        %v6780 = vmul.f32 %v6776, 0.5
        %v6781 = vmul.f32 %v6777, 0.5
        %v6782 = vmul.f32 %v6778, 0.5
        %v6783 = vtanh.pop %v6780
        %v6784 = vtanh.pop %v6781
        %v6785 = vtanh.pop %v6782
        %v6786 = vadd.f32 %v6783, 1.0
        %v6787 = vadd.f32 %v6784, 1.0
        %v6788 = vadd.f32 %v6785, 1.0
        %v6789 = vmul.f32 %v6786, 0.5
        %v6790 = vmul.f32 %v6787, 0.5
        %v6791 = vmul.f32 %v6788, 0.5
        %v6792 = vtanh.pop %v6779
        %v6793 = vmul.f32 %v6790, %v5939
        %v6794 = vmul.f32 %v6789, %v6792
        %v6795 = vadd.f32 %v6793, %v6794
        %v6796 = vtanh.pop %v6795
        %v6797 = vmul.f32 %v6791, %v6796
        %6798 = vmatprep.subr.mxu0 0.0
        %6799 = vmatpush1.msra.mxu0 %v867
        %6800 = vmatprep.subr.mxu0 0.0
        %6801 = vmatpush1.msra.mxu0 %v868
        %6802 = vmatprep.subr.mxu0 0.0
        %6803 = vmatpush1.msra.mxu0 %v869
        %6804 = vmatprep.subr.mxu0 0.0
        %6805 = vmatpush1.msra.mxu0 %v870
        %6806 = vmatprep.subr.mxu0 0.0
        %6807 = vmatpush1.msra.mxu0 %v871
        %6808 = vmatprep.subr.mxu0 0.0
        %6809 = vmatpush1.msra.mxu0 %v872
        %6810 = vmatprep.subr.mxu0 0.0
        %6811 = vmatpush1.msra.mxu0 %v873
        %6812 = vmatprep.subr.mxu0 0.0
        %6813 = vmatpush1.msra.mxu0 %v874
        %6814 = vmatprep.subr.mxu0 0.0
        %6815 = vmatpush1.msra.mxu0 %v875
        %6816 = vmatprep.subr.mxu0 0.0
        %6817 = vmatpush1.msra.mxu0 %v876
        %6818 = vmatprep.subr.mxu0 0.0
        %6819 = vmatpush1.msra.mxu0 %v877
        %6820 = vmatprep.subr.mxu0 0.0
        %6821 = vmatpush1.msra.mxu0 %v878
        %6822 = vmatprep.subr.mxu0 0.0
        %6823 = vmatpush1.msra.mxu0 %v879
        %6824 = vmatprep.subr.mxu0 0.0
        %6825 = vmatpush1.msra.mxu0 %v880
        %6826 = vmatprep.subr.mxu0 0.0
        %6827 = vmatpush1.msra.mxu0 %v881
        %6828 = vmatprep.subr.mxu0 0.0
        %6829 = vmatpush1.msra.mxu0 %v882
        %6830 = vmatprep.subr.mxu0 0.0
        %6831 = vmatpush1.msra.mxu0 0.0
        %6832 = vmatprep.subr.mxu0 0.0
        %6833 = vmatpush1.msra.mxu0 0.0
        %6834 = vmatprep.subr.mxu0 0.0
        %6835 = vmatpush1.msra.mxu0 0.0
        %6836 = vmatprep.subr.mxu0 0.0
        %6837 = vmatpush1.msra.mxu0 0.0
        %6838 = vmatprep.subr.mxu0 0.0
        %6839 = vmatpush1.msra.mxu0 0.0
        %6840 = vmatprep.subr.mxu0 0.0
        %6841 = vmatpush1.msra.mxu0 0.0
        %6842 = vmatprep.subr.mxu0 0.0
        %6843 = vmatpush1.msra.mxu0 0.0
        %6844 = vmatprep.subr.mxu0 0.0
        %6845 = vmatpush1.msra.mxu0 0.0
        %6846 = vmatprep.subr.mxu0 0.0
        %6847 = vmatpush1.msra.mxu0 0.0
        %6848 = vmatprep.subr.mxu0 0.0
        %6849 = vmatpush1.msra.mxu0 0.0
        %6850 = vmatprep.subr.mxu0 0.0
        %6851 = vmatpush1.msra.mxu0 0.0
        %6852 = vmatprep.subr.mxu0 0.0
        %6853 = vmatpush1.msra.mxu0 0.0
        %6854 = vmatprep.subr.mxu0 0.0
        %6855 = vmatpush1.msra.mxu0 0.0
        %6856 = vmatprep.subr.mxu0 0.0
        %6857 = vmatpush1.msra.mxu0 0.0
        %6858 = vmatprep.subr.mxu0 0.0
        %6859 = vmatpush1.msra.mxu0 0.0
        %6860 = vmatprep.subr.mxu0 0.0
        %6861 = vmatpush1.msra.mxu0 0.0
        %6862 = vmatprep.mubr.f32.mxu0 0.0
        %6863 = vmatmul.mubr.f32.gmra.mrb[0].mxu0 %v6797
        %v6864 = vpop.f32.mrb[0].mxu0
        %v6865 = vadd.f32 0.0, %v6864
        %v6866 = vpop.f32.mrb[0].mxu0
        %6867 = vdwg.mxu0
        %s6868 = scalar_lea.vmem %s475, 40 [#allocation13]
        %6869 = vst [vmem:[%s6868] sm:$0xff] %v6865
        %6870 = vmatprep.subr.mxu0 %v737
        %6871 = vmatpush1.msra.mxu0 %v736
        %6872 = vmatprep.subr.mxu0 %v741
        %6873 = vmatpush1.msra.mxu0 %v740
        %6874 = vmatprep.subr.mxu0 %v745
        %6875 = vmatpush1.msra.mxu0 %v744
        %6876 = vmatprep.subr.mxu0 %v749
        %6877 = vmatpush1.msra.mxu0 %v748
        %6878 = vmatprep.subr.mxu0 %v753
        %6879 = vmatpush1.msra.mxu0 %v752
        %6880 = vmatprep.subr.mxu0 %v757
        %6881 = vmatpush1.msra.mxu0 %v756
        %6882 = vmatprep.subr.mxu0 %v761
        %6883 = vmatpush1.msra.mxu0 %v760
        %6884 = vmatprep.subr.mxu0 %v765
        %6885 = vmatpush1.msra.mxu0 %v764
        %6886 = vmatprep.subr.mxu0 %v769
        %6887 = vmatpush1.msra.mxu0 %v768
        %6888 = vmatprep.subr.mxu0 %v773
        %6889 = vmatpush1.msra.mxu0 %v772
        %6890 = vmatprep.subr.mxu0 %v777
        %6891 = vmatpush1.msra.mxu0 %v776
        %6892 = vmatprep.subr.mxu0 %v781
        %6893 = vmatpush1.msra.mxu0 %v780
        %6894 = vmatprep.subr.mxu0 %v785
        %6895 = vmatpush1.msra.mxu0 %v784
        %6896 = vmatprep.subr.mxu0 %v789
        %6897 = vmatpush1.msra.mxu0 %v788
        %6898 = vmatprep.subr.mxu0 %v793
        %6899 = vmatpush1.msra.mxu0 %v792
        %6900 = vmatprep.subr.mxu0 %v797
        %6901 = vmatpush1.msra.mxu0 %v796
        %6902 = vmatprep.subr.mxu0 0.0
        %6903 = vmatpush1.msra.mxu0 0.0
        %6904 = vmatprep.subr.mxu0 0.0
        %6905 = vmatpush1.msra.mxu0 0.0
        %6906 = vmatprep.subr.mxu0 0.0
        %6907 = vmatpush1.msra.mxu0 0.0
        %6908 = vmatprep.subr.mxu0 0.0
        %6909 = vmatpush1.msra.mxu0 0.0
        %6910 = vmatprep.subr.mxu0 0.0
        %6911 = vmatpush1.msra.mxu0 0.0
        %6912 = vmatprep.subr.mxu0 0.0
        %6913 = vmatpush1.msra.mxu0 0.0
        %6914 = vmatprep.subr.mxu0 0.0
        %6915 = vmatpush1.msra.mxu0 0.0
        %6916 = vmatprep.subr.mxu0 0.0
        %6917 = vmatpush1.msra.mxu0 0.0
        %6918 = vmatprep.subr.mxu0 0.0
        %6919 = vmatpush1.msra.mxu0 0.0
        %6920 = vmatprep.subr.mxu0 0.0
        %6921 = vmatpush1.msra.mxu0 0.0
        %6922 = vmatprep.subr.mxu0 0.0
        %6923 = vmatpush1.msra.mxu0 0.0
        %6924 = vmatprep.subr.mxu0 0.0
        %6925 = vmatpush1.msra.mxu0 0.0
        %6926 = vmatprep.subr.mxu0 0.0
        %6927 = vmatpush1.msra.mxu0 0.0
        %6928 = vmatprep.subr.mxu0 0.0
        %6929 = vmatpush1.msra.mxu0 0.0
        %6930 = vmatprep.subr.mxu0 0.0
        %6931 = vmatpush1.msra.mxu0 0.0
        %6932 = vmatprep.subr.mxu0 0.0
        %6933 = vmatpush1.msra.mxu0 0.0
        %6934 = vmatprep.mubr.f32.mxu0 0.0
        %6935 = vmatmul.mubr.f32.gmra.mrb[0].mxu0 %v6487
        %v6936 = vpop.f32.mrb[0].mxu0
        %v6937 = vadd.f32 0.0, %v6936
        %v6938 = vpop.f32.mrb[0].mxu0
        %v6939 = vadd.f32 0.0, %v6938
        %6940 = vdwg.mxu0
        %6941 = vmatprep.subr.mxu0 %v739
        %6942 = vmatpush1.msra.mxu0 %v738
        %6943 = vmatprep.subr.mxu0 %v743
        %6944 = vmatpush1.msra.mxu0 %v742
        %6945 = vmatprep.subr.mxu0 %v747
        %6946 = vmatpush1.msra.mxu0 %v746
        %6947 = vmatprep.subr.mxu0 %v751
        %6948 = vmatpush1.msra.mxu0 %v750
        %6949 = vmatprep.subr.mxu0 %v755
        %6950 = vmatpush1.msra.mxu0 %v754
        %6951 = vmatprep.subr.mxu0 %v759
        %6952 = vmatpush1.msra.mxu0 %v758
        %6953 = vmatprep.subr.mxu0 %v763
        %6954 = vmatpush1.msra.mxu0 %v762
        %6955 = vmatprep.subr.mxu0 %v767
        %6956 = vmatpush1.msra.mxu0 %v766
        %6957 = vmatprep.subr.mxu0 %v771
        %6958 = vmatpush1.msra.mxu0 %v770
        %6959 = vmatprep.subr.mxu0 %v775
        %6960 = vmatpush1.msra.mxu0 %v774
        %6961 = vmatprep.subr.mxu0 %v779
        %6962 = vmatpush1.msra.mxu0 %v778
        %6963 = vmatprep.subr.mxu0 %v783
        %6964 = vmatpush1.msra.mxu0 %v782
        %6965 = vmatprep.subr.mxu0 %v787
        %6966 = vmatpush1.msra.mxu0 %v786
        %6967 = vmatprep.subr.mxu0 %v791
        %6968 = vmatpush1.msra.mxu0 %v790
        %6969 = vmatprep.subr.mxu0 %v795
        %6970 = vmatpush1.msra.mxu0 %v794
        %6971 = vmatprep.subr.mxu0 %v799
        %6972 = vmatpush1.msra.mxu0 %v798
        %6973 = vmatprep.subr.mxu0 0.0
        %6974 = vmatpush1.msra.mxu0 0.0
        %6975 = vmatprep.subr.mxu0 0.0
        %6976 = vmatpush1.msra.mxu0 0.0
        %6977 = vmatprep.subr.mxu0 0.0
        %6978 = vmatpush1.msra.mxu0 0.0
        %6979 = vmatprep.subr.mxu0 0.0
        %6980 = vmatpush1.msra.mxu0 0.0
        %6981 = vmatprep.subr.mxu0 0.0
        %6982 = vmatpush1.msra.mxu0 0.0
        %6983 = vmatprep.subr.mxu0 0.0
        %6984 = vmatpush1.msra.mxu0 0.0
        %6985 = vmatprep.subr.mxu0 0.0
        %6986 = vmatpush1.msra.mxu0 0.0
        %6987 = vmatprep.subr.mxu0 0.0
        %6988 = vmatpush1.msra.mxu0 0.0
        %6989 = vmatprep.subr.mxu0 0.0
        %6990 = vmatpush1.msra.mxu0 0.0
        %6991 = vmatprep.subr.mxu0 0.0
        %6992 = vmatpush1.msra.mxu0 0.0
        %6993 = vmatprep.subr.mxu0 0.0
        %6994 = vmatpush1.msra.mxu0 0.0
        %6995 = vmatprep.subr.mxu0 0.0
        %6996 = vmatpush1.msra.mxu0 0.0
        %6997 = vmatprep.subr.mxu0 0.0
        %6998 = vmatpush1.msra.mxu0 0.0
        %6999 = vmatprep.subr.mxu0 0.0
        %7000 = vmatpush1.msra.mxu0 0.0
        %7001 = vmatprep.subr.mxu0 0.0
        %7002 = vmatpush1.msra.mxu0 0.0
        %7003 = vmatprep.subr.mxu0 0.0
        %7004 = vmatpush1.msra.mxu0 0.0
        %7005 = vmatprep.mubr.f32.mxu0 0.0
        %7006 = vmatmul.mubr.f32.gmra.mrb[0].mxu0 %v6487
        %v7007 = vpop.f32.mrb[0].mxu0
        %v7008 = vadd.f32 0.0, %v7007
        %v7009 = vpop.f32.mrb[0].mxu0
        %v7010 = vadd.f32 0.0, %v7009
        %7011 = vdwg.mxu0
        %7012 = vmatprep.subr.mxu0 %v545
        %7013 = vmatpush1.msra.mxu0 %v544
        %7014 = vmatprep.subr.mxu0 %v549
        %7015 = vmatpush1.msra.mxu0 %v548
        %7016 = vmatprep.subr.mxu0 %v553
        %7017 = vmatpush1.msra.mxu0 %v552
        %7018 = vmatprep.subr.mxu0 %v557
        %7019 = vmatpush1.msra.mxu0 %v556
        %7020 = vmatprep.subr.mxu0 %v561
        %7021 = vmatpush1.msra.mxu0 %v560
        %7022 = vmatprep.subr.mxu0 %v565
        %7023 = vmatpush1.msra.mxu0 %v564
        %7024 = vmatprep.subr.mxu0 %v569
        %7025 = vmatpush1.msra.mxu0 %v568
        %7026 = vmatprep.subr.mxu0 %v573
        %7027 = vmatpush1.msra.mxu0 %v572
        %7028 = vmatprep.subr.mxu0 %v577
        %7029 = vmatpush1.msra.mxu0 %v576
        %7030 = vmatprep.subr.mxu0 %v581
        %7031 = vmatpush1.msra.mxu0 %v580
        %7032 = vmatprep.subr.mxu0 %v585
        %7033 = vmatpush1.msra.mxu0 %v584
        %7034 = vmatprep.subr.mxu0 %v589
        %7035 = vmatpush1.msra.mxu0 %v588
        %7036 = vmatprep.subr.mxu0 %v593
        %7037 = vmatpush1.msra.mxu0 %v592
        %7038 = vmatprep.subr.mxu0 %v597
        %7039 = vmatpush1.msra.mxu0 %v596
        %7040 = vmatprep.subr.mxu0 %v601
        %7041 = vmatpush1.msra.mxu0 %v600
        %7042 = vmatprep.subr.mxu0 %v605
        %7043 = vmatpush1.msra.mxu0 %v604
        %7044 = vmatprep.subr.mxu0 0.0
        %7045 = vmatpush1.msra.mxu0 0.0
        %7046 = vmatprep.subr.mxu0 0.0
        %7047 = vmatpush1.msra.mxu0 0.0
        %7048 = vmatprep.subr.mxu0 0.0
        %7049 = vmatpush1.msra.mxu0 0.0
        %7050 = vmatprep.subr.mxu0 0.0
        %7051 = vmatpush1.msra.mxu0 0.0
        %7052 = vmatprep.subr.mxu0 0.0
        %7053 = vmatpush1.msra.mxu0 0.0
        %7054 = vmatprep.subr.mxu0 0.0
        %7055 = vmatpush1.msra.mxu0 0.0
        %7056 = vmatprep.subr.mxu0 0.0
        %7057 = vmatpush1.msra.mxu0 0.0
        %7058 = vmatprep.subr.mxu0 0.0
        %7059 = vmatpush1.msra.mxu0 0.0
        %7060 = vmatprep.subr.mxu0 0.0
        %7061 = vmatpush1.msra.mxu0 0.0
        %7062 = vmatprep.subr.mxu0 0.0
        %7063 = vmatpush1.msra.mxu0 0.0
        %7064 = vmatprep.subr.mxu0 0.0
        %7065 = vmatpush1.msra.mxu0 0.0
        %7066 = vmatprep.subr.mxu0 0.0
        %7067 = vmatpush1.msra.mxu0 0.0
        %7068 = vmatprep.subr.mxu0 0.0
        %7069 = vmatpush1.msra.mxu0 0.0
        %7070 = vmatprep.subr.mxu0 0.0
        %7071 = vmatpush1.msra.mxu0 0.0
        %7072 = vmatprep.subr.mxu0 0.0
        %7073 = vmatpush1.msra.mxu0 0.0
        %7074 = vmatprep.subr.mxu0 0.0
        %7075 = vmatpush1.msra.mxu0 0.0
        %7076 = vmatprep.mubr.f32.mxu0 0.0
        %7077 = vmatmul.mubr.f32.gmra.mrb[0].mxu0 %v6181
        %v7078 = vpop.f32.mrb[0].mxu0
        %v7079 = vadd.f32 %v6937, %v7078
        %v7080 = vpop.f32.mrb[0].mxu0
        %v7081 = vadd.f32 %v6939, %v7080
        %7082 = vdwg.mxu0
        %7083 = vmatprep.subr.mxu0 %v547
        %7084 = vmatpush1.msra.mxu0 %v546
        %7085 = vmatprep.subr.mxu0 %v551
        %7086 = vmatpush1.msra.mxu0 %v550
        %7087 = vmatprep.subr.mxu0 %v555
        %7088 = vmatpush1.msra.mxu0 %v554
        %7089 = vmatprep.subr.mxu0 %v559
        %7090 = vmatpush1.msra.mxu0 %v558
        %7091 = vmatprep.subr.mxu0 %v563
        %7092 = vmatpush1.msra.mxu0 %v562
        %7093 = vmatprep.subr.mxu0 %v567
        %7094 = vmatpush1.msra.mxu0 %v566
        %7095 = vmatprep.subr.mxu0 %v571
        %7096 = vmatpush1.msra.mxu0 %v570
        %7097 = vmatprep.subr.mxu0 %v575
        %7098 = vmatpush1.msra.mxu0 %v574
        %7099 = vmatprep.subr.mxu0 %v579
        %7100 = vmatpush1.msra.mxu0 %v578
        %7101 = vmatprep.subr.mxu0 %v583
        %7102 = vmatpush1.msra.mxu0 %v582
        %7103 = vmatprep.subr.mxu0 %v587
        %7104 = vmatpush1.msra.mxu0 %v586
        %7105 = vmatprep.subr.mxu0 %v591
        %7106 = vmatpush1.msra.mxu0 %v590
        %7107 = vmatprep.subr.mxu0 %v595
        %7108 = vmatpush1.msra.mxu0 %v594
        %7109 = vmatprep.subr.mxu0 %v599
        %7110 = vmatpush1.msra.mxu0 %v598
        %7111 = vmatprep.subr.mxu0 %v603
        %7112 = vmatpush1.msra.mxu0 %v602
        %7113 = vmatprep.subr.mxu0 %v607
        %7114 = vmatpush1.msra.mxu0 %v606
        %7115 = vmatprep.subr.mxu0 0.0
        %7116 = vmatpush1.msra.mxu0 0.0
        %7117 = vmatprep.subr.mxu0 0.0
        %7118 = vmatpush1.msra.mxu0 0.0
        %7119 = vmatprep.subr.mxu0 0.0
        %7120 = vmatpush1.msra.mxu0 0.0
        %7121 = vmatprep.subr.mxu0 0.0
        %7122 = vmatpush1.msra.mxu0 0.0
        %7123 = vmatprep.subr.mxu0 0.0
        %7124 = vmatpush1.msra.mxu0 0.0
        %7125 = vmatprep.subr.mxu0 0.0
        %7126 = vmatpush1.msra.mxu0 0.0
        %7127 = vmatprep.subr.mxu0 0.0
        %7128 = vmatpush1.msra.mxu0 0.0
        %7129 = vmatprep.subr.mxu0 0.0
        %7130 = vmatpush1.msra.mxu0 0.0
        %7131 = vmatprep.subr.mxu0 0.0
        %7132 = vmatpush1.msra.mxu0 0.0
        %7133 = vmatprep.subr.mxu0 0.0
        %7134 = vmatpush1.msra.mxu0 0.0
        %7135 = vmatprep.subr.mxu0 0.0
        %7136 = vmatpush1.msra.mxu0 0.0
        %7137 = vmatprep.subr.mxu0 0.0
        %7138 = vmatpush1.msra.mxu0 0.0
        %7139 = vmatprep.subr.mxu0 0.0
        %7140 = vmatpush1.msra.mxu0 0.0
        %7141 = vmatprep.subr.mxu0 0.0
        %7142 = vmatpush1.msra.mxu0 0.0
        %7143 = vmatprep.subr.mxu0 0.0
        %7144 = vmatpush1.msra.mxu0 0.0
        %7145 = vmatprep.subr.mxu0 0.0
        %7146 = vmatpush1.msra.mxu0 0.0
        %7147 = vmatprep.mubr.f32.mxu0 0.0
        %7148 = vmatmul.mubr.f32.gmra.mrb[0].mxu0 %v6181
        %v7149 = vpop.f32.mrb[0].mxu0
        %v7150 = vadd.f32 %v7008, %v7149
        %v7151 = vpop.f32.mrb[0].mxu0
        %v7152 = vadd.f32 %v7010, %v7151
        %7153 = vdwg.mxu0
        %v7154 = vadd.f32 %v7079, %v1671
        %v7155 = vadd.f32 %v7081, %v1675
        %v7156 = vadd.f32 %v7150, %v1679
        %v7157 = vadd.f32 %v7152, %v1683
        %v7158 = vmul.f32 %v7154, 0.5
        %v7159 = vmul.f32 %v7155, 0.5
        %v7160 = vmul.f32 %v7156, 0.5
        %v7161 = vtanh.pop %v7158
        %v7162 = vtanh.pop %v7159
        %v7163 = vtanh.pop %v7160
        %v7164 = vadd.f32 %v7161, 1.0
        %v7165 = vadd.f32 %v7162, 1.0
        %v7166 = vadd.f32 %v7163, 1.0
        %v7167 = vmul.f32 %v7164, 0.5
        %v7168 = vmul.f32 %v7165, 0.5
        %v7169 = vmul.f32 %v7166, 0.5
        %v7170 = vtanh.pop %v7157
        %v7171 = vmul.f32 %v7168, %v6485
        %v7172 = vmul.f32 %v7167, %v7170
        %v7173 = vadd.f32 %v7171, %v7172
        %v7174 = vtanh.pop %v7173
        %v7175 = vmul.f32 %v7169, %v7174
        %v7176 = vmul.f32 %v7175, 0.5
        %v7177 = vtanh.pop %v7176
        %v7178 = vadd.f32 %v7177, 1.0
        %v7179 = vmul.f32 %v7178, 0.5
        %7180 = vmatprep.subr.mxu0 %v801
        %7181 = vmatpush1.msra.mxu0 %v800
        %7182 = vmatprep.subr.mxu0 %v805
        %7183 = vmatpush1.msra.mxu0 %v804
        %7184 = vmatprep.subr.mxu0 %v809
        %7185 = vmatpush1.msra.mxu0 %v808
        %7186 = vmatprep.subr.mxu0 %v813
        %7187 = vmatpush1.msra.mxu0 %v812
        %7188 = vmatprep.subr.mxu0 %v817
        %7189 = vmatpush1.msra.mxu0 %v816
        %7190 = vmatprep.subr.mxu0 %v821
        %7191 = vmatpush1.msra.mxu0 %v820
        %7192 = vmatprep.subr.mxu0 %v825
        %7193 = vmatpush1.msra.mxu0 %v824
        %7194 = vmatprep.subr.mxu0 %v829
        %7195 = vmatpush1.msra.mxu0 %v828
        %7196 = vmatprep.subr.mxu0 %v833
        %7197 = vmatpush1.msra.mxu0 %v832
        %7198 = vmatprep.subr.mxu0 %v837
        %7199 = vmatpush1.msra.mxu0 %v836
        %7200 = vmatprep.subr.mxu0 %v841
        %7201 = vmatpush1.msra.mxu0 %v840
        %7202 = vmatprep.subr.mxu0 %v845
        %7203 = vmatpush1.msra.mxu0 %v844
        %7204 = vmatprep.subr.mxu0 %v849
        %7205 = vmatpush1.msra.mxu0 %v848
        %7206 = vmatprep.subr.mxu0 %v853
        %7207 = vmatpush1.msra.mxu0 %v852
        %7208 = vmatprep.subr.mxu0 %v857
        %7209 = vmatpush1.msra.mxu0 %v856
        %7210 = vmatprep.subr.mxu0 %v861
        %7211 = vmatpush1.msra.mxu0 %v860
        %7212 = vmatprep.subr.mxu0 0.0
        %7213 = vmatpush1.msra.mxu0 0.0
        %7214 = vmatprep.subr.mxu0 0.0
        %7215 = vmatpush1.msra.mxu0 0.0
        %7216 = vmatprep.subr.mxu0 0.0
        %7217 = vmatpush1.msra.mxu0 0.0
        %7218 = vmatprep.subr.mxu0 0.0
        %7219 = vmatpush1.msra.mxu0 0.0
        %7220 = vmatprep.subr.mxu0 0.0
        %7221 = vmatpush1.msra.mxu0 0.0
        %7222 = vmatprep.subr.mxu0 0.0
        %7223 = vmatpush1.msra.mxu0 0.0
        %7224 = vmatprep.subr.mxu0 0.0
        %7225 = vmatpush1.msra.mxu0 0.0
        %7226 = vmatprep.subr.mxu0 0.0
        %7227 = vmatpush1.msra.mxu0 0.0
        %7228 = vmatprep.subr.mxu0 0.0
        %7229 = vmatpush1.msra.mxu0 0.0
        %7230 = vmatprep.subr.mxu0 0.0
        %7231 = vmatpush1.msra.mxu0 0.0
        %7232 = vmatprep.subr.mxu0 0.0
        %7233 = vmatpush1.msra.mxu0 0.0
        %7234 = vmatprep.subr.mxu0 0.0
        %7235 = vmatpush1.msra.mxu0 0.0
        %7236 = vmatprep.subr.mxu0 0.0
        %7237 = vmatpush1.msra.mxu0 0.0
        %7238 = vmatprep.subr.mxu0 0.0
        %7239 = vmatpush1.msra.mxu0 0.0
        %7240 = vmatprep.subr.mxu0 0.0
        %7241 = vmatpush1.msra.mxu0 0.0
        %7242 = vmatprep.subr.mxu0 0.0
        %7243 = vmatpush1.msra.mxu0 0.0
        %7244 = vmatprep.mubr.f32.mxu0 0.0
        %7245 = vmatmul.mubr.f32.gmra.mrb[0].mxu0 %v6797
        %v7246 = vpop.f32.mrb[0].mxu0
        %v7247 = vadd.f32 0.0, %v7246
        %v7248 = vpop.f32.mrb[0].mxu0
        %v7249 = vadd.f32 0.0, %v7248
        %7250 = vdwg.mxu0
        %7251 = vmatprep.subr.mxu0 %v803
        %7252 = vmatpush1.msra.mxu0 %v802
        %7253 = vmatprep.subr.mxu0 %v807
        %7254 = vmatpush1.msra.mxu0 %v806
        %7255 = vmatprep.subr.mxu0 %v811
        %7256 = vmatpush1.msra.mxu0 %v810
        %7257 = vmatprep.subr.mxu0 %v815
        %7258 = vmatpush1.msra.mxu0 %v814
        %7259 = vmatprep.subr.mxu0 %v819
        %7260 = vmatpush1.msra.mxu0 %v818
        %7261 = vmatprep.subr.mxu0 %v823
        %7262 = vmatpush1.msra.mxu0 %v822
        %7263 = vmatprep.subr.mxu0 %v827
        %7264 = vmatpush1.msra.mxu0 %v826
        %7265 = vmatprep.subr.mxu0 %v831
        %7266 = vmatpush1.msra.mxu0 %v830
        %7267 = vmatprep.subr.mxu0 %v835
        %7268 = vmatpush1.msra.mxu0 %v834
        %7269 = vmatprep.subr.mxu0 %v839
        %7270 = vmatpush1.msra.mxu0 %v838
        %7271 = vmatprep.subr.mxu0 %v843
        %7272 = vmatpush1.msra.mxu0 %v842
        %7273 = vmatprep.subr.mxu0 %v847
        %7274 = vmatpush1.msra.mxu0 %v846
        %7275 = vmatprep.subr.mxu0 %v851
        %7276 = vmatpush1.msra.mxu0 %v850
        %7277 = vmatprep.subr.mxu0 %v855
        %7278 = vmatpush1.msra.mxu0 %v854
        %7279 = vmatprep.subr.mxu0 %v859
        %7280 = vmatpush1.msra.mxu0 %v858
        %7281 = vmatprep.subr.mxu0 %v863
        %7282 = vmatpush1.msra.mxu0 %v862
        %7283 = vmatprep.subr.mxu0 0.0
        %7284 = vmatpush1.msra.mxu0 0.0
        %7285 = vmatprep.subr.mxu0 0.0
        %7286 = vmatpush1.msra.mxu0 0.0
        %7287 = vmatprep.subr.mxu0 0.0
        %7288 = vmatpush1.msra.mxu0 0.0
        %7289 = vmatprep.subr.mxu0 0.0
        %7290 = vmatpush1.msra.mxu0 0.0
        %7291 = vmatprep.subr.mxu0 0.0
        %7292 = vmatpush1.msra.mxu0 0.0
        %7293 = vmatprep.subr.mxu0 0.0
        %7294 = vmatpush1.msra.mxu0 0.0
        %7295 = vmatprep.subr.mxu0 0.0
        %7296 = vmatpush1.msra.mxu0 0.0
        %7297 = vmatprep.subr.mxu0 0.0
        %7298 = vmatpush1.msra.mxu0 0.0
        %7299 = vmatprep.subr.mxu0 0.0
        %7300 = vmatpush1.msra.mxu0 0.0
        %7301 = vmatprep.subr.mxu0 0.0
        %7302 = vmatpush1.msra.mxu0 0.0
        %7303 = vmatprep.subr.mxu0 0.0
        %7304 = vmatpush1.msra.mxu0 0.0
        %7305 = vmatprep.subr.mxu0 0.0
        %7306 = vmatpush1.msra.mxu0 0.0
        %7307 = vmatprep.subr.mxu0 0.0
        %7308 = vmatpush1.msra.mxu0 0.0
        %7309 = vmatprep.subr.mxu0 0.0
        %7310 = vmatpush1.msra.mxu0 0.0
        %7311 = vmatprep.subr.mxu0 0.0
        %7312 = vmatpush1.msra.mxu0 0.0
        %7313 = vmatprep.subr.mxu0 0.0
        %7314 = vmatpush1.msra.mxu0 0.0
        %7315 = vmatprep.mubr.f32.mxu0 0.0
        %7316 = vmatmul.mubr.f32.gmra.mrb[0].mxu0 %v6797
        %v7317 = vpop.f32.mrb[0].mxu0
        %v7318 = vadd.f32 0.0, %v7317
        %v7319 = vpop.f32.mrb[0].mxu0
        %v7320 = vadd.f32 0.0, %v7319
        %7321 = vdwg.mxu0
        %7322 = vmatprep.subr.mxu0 %v609
        %7323 = vmatpush1.msra.mxu0 %v608
        %7324 = vmatprep.subr.mxu0 %v613
        %7325 = vmatpush1.msra.mxu0 %v612
        %7326 = vmatprep.subr.mxu0 %v617
        %7327 = vmatpush1.msra.mxu0 %v616
        %7328 = vmatprep.subr.mxu0 %v621
        %7329 = vmatpush1.msra.mxu0 %v620
        %7330 = vmatprep.subr.mxu0 %v625
        %7331 = vmatpush1.msra.mxu0 %v624
        %7332 = vmatprep.subr.mxu0 %v629
        %7333 = vmatpush1.msra.mxu0 %v628
        %7334 = vmatprep.subr.mxu0 %v633
        %7335 = vmatpush1.msra.mxu0 %v632
        %7336 = vmatprep.subr.mxu0 %v637
        %7337 = vmatpush1.msra.mxu0 %v636
        %7338 = vmatprep.subr.mxu0 %v641
        %7339 = vmatpush1.msra.mxu0 %v640
        %7340 = vmatprep.subr.mxu0 %v645
        %7341 = vmatpush1.msra.mxu0 %v644
        %7342 = vmatprep.subr.mxu0 %v649
        %7343 = vmatpush1.msra.mxu0 %v648
        %7344 = vmatprep.subr.mxu0 %v653
        %7345 = vmatpush1.msra.mxu0 %v652
        %7346 = vmatprep.subr.mxu0 %v657
        %7347 = vmatpush1.msra.mxu0 %v656
        %7348 = vmatprep.subr.mxu0 %v661
        %7349 = vmatpush1.msra.mxu0 %v660
        %7350 = vmatprep.subr.mxu0 %v665
        %7351 = vmatpush1.msra.mxu0 %v664
        %7352 = vmatprep.subr.mxu0 %v669
        %7353 = vmatpush1.msra.mxu0 %v668
        %7354 = vmatprep.subr.mxu0 0.0
        %7355 = vmatpush1.msra.mxu0 0.0
        %7356 = vmatprep.subr.mxu0 0.0
        %7357 = vmatpush1.msra.mxu0 0.0
        %7358 = vmatprep.subr.mxu0 0.0
        %7359 = vmatpush1.msra.mxu0 0.0
        %7360 = vmatprep.subr.mxu0 0.0
        %7361 = vmatpush1.msra.mxu0 0.0
        %7362 = vmatprep.subr.mxu0 0.0
        %7363 = vmatpush1.msra.mxu0 0.0
        %7364 = vmatprep.subr.mxu0 0.0
        %7365 = vmatpush1.msra.mxu0 0.0
        %7366 = vmatprep.subr.mxu0 0.0
        %7367 = vmatpush1.msra.mxu0 0.0
        %7368 = vmatprep.subr.mxu0 0.0
        %7369 = vmatpush1.msra.mxu0 0.0
        %7370 = vmatprep.subr.mxu0 0.0
        %7371 = vmatpush1.msra.mxu0 0.0
        %7372 = vmatprep.subr.mxu0 0.0
        %7373 = vmatpush1.msra.mxu0 0.0
        %7374 = vmatprep.subr.mxu0 0.0
        %7375 = vmatpush1.msra.mxu0 0.0
        %7376 = vmatprep.subr.mxu0 0.0
        %7377 = vmatpush1.msra.mxu0 0.0
        %7378 = vmatprep.subr.mxu0 0.0
        %7379 = vmatpush1.msra.mxu0 0.0
        %7380 = vmatprep.subr.mxu0 0.0
        %7381 = vmatpush1.msra.mxu0 0.0
        %7382 = vmatprep.subr.mxu0 0.0
        %7383 = vmatpush1.msra.mxu0 0.0
        %7384 = vmatprep.subr.mxu0 0.0
        %7385 = vmatpush1.msra.mxu0 0.0
        %7386 = vmatprep.mubr.f32.mxu0 0.0
        %7387 = vmatmul.mubr.f32.gmra.mrb[0].mxu0 %v6491
        %v7388 = vpop.f32.mrb[0].mxu0
        %v7389 = vadd.f32 %v7247, %v7388
        %v7390 = vpop.f32.mrb[0].mxu0
        %v7391 = vadd.f32 %v7249, %v7390
        %7392 = vdwg.mxu0
        %7393 = vmatprep.subr.mxu0 %v611
        %7394 = vmatpush1.msra.mxu0 %v610
        %7395 = vmatprep.subr.mxu0 %v615
        %7396 = vmatpush1.msra.mxu0 %v614
        %7397 = vmatprep.subr.mxu0 %v619
        %7398 = vmatpush1.msra.mxu0 %v618
        %7399 = vmatprep.subr.mxu0 %v623
        %7400 = vmatpush1.msra.mxu0 %v622
        %7401 = vmatprep.subr.mxu0 %v627
        %7402 = vmatpush1.msra.mxu0 %v626
        %7403 = vmatprep.subr.mxu0 %v631
        %7404 = vmatpush1.msra.mxu0 %v630
        %7405 = vmatprep.subr.mxu0 %v635
        %7406 = vmatpush1.msra.mxu0 %v634
        %7407 = vmatprep.subr.mxu0 %v639
        %7408 = vmatpush1.msra.mxu0 %v638
        %7409 = vmatprep.subr.mxu0 %v643
        %7410 = vmatpush1.msra.mxu0 %v642
        %7411 = vmatprep.subr.mxu0 %v647
        %7412 = vmatpush1.msra.mxu0 %v646
        %7413 = vmatprep.subr.mxu0 %v651
        %7414 = vmatpush1.msra.mxu0 %v650
        %7415 = vmatprep.subr.mxu0 %v655
        %7416 = vmatpush1.msra.mxu0 %v654
        %7417 = vmatprep.subr.mxu0 %v659
        %7418 = vmatpush1.msra.mxu0 %v658
        %7419 = vmatprep.subr.mxu0 %v663
        %7420 = vmatpush1.msra.mxu0 %v662
        %7421 = vmatprep.subr.mxu0 %v667
        %7422 = vmatpush1.msra.mxu0 %v666
        %7423 = vmatprep.subr.mxu0 %v671
        %7424 = vmatpush1.msra.mxu0 %v670
        %7425 = vmatprep.subr.mxu0 0.0
        %7426 = vmatpush1.msra.mxu0 0.0
        %7427 = vmatprep.subr.mxu0 0.0
        %7428 = vmatpush1.msra.mxu0 0.0
        %7429 = vmatprep.subr.mxu0 0.0
        %7430 = vmatpush1.msra.mxu0 0.0
        %7431 = vmatprep.subr.mxu0 0.0
        %7432 = vmatpush1.msra.mxu0 0.0
        %7433 = vmatprep.subr.mxu0 0.0
        %7434 = vmatpush1.msra.mxu0 0.0
        %7435 = vmatprep.subr.mxu0 0.0
        %7436 = vmatpush1.msra.mxu0 0.0
        %7437 = vmatprep.subr.mxu0 0.0
        %7438 = vmatpush1.msra.mxu0 0.0
        %7439 = vmatprep.subr.mxu0 0.0
        %7440 = vmatpush1.msra.mxu0 0.0
        %7441 = vmatprep.subr.mxu0 0.0
        %7442 = vmatpush1.msra.mxu0 0.0
        %7443 = vmatprep.subr.mxu0 0.0
        %7444 = vmatpush1.msra.mxu0 0.0
        %7445 = vmatprep.subr.mxu0 0.0
        %7446 = vmatpush1.msra.mxu0 0.0
        %7447 = vmatprep.subr.mxu0 0.0
        %7448 = vmatpush1.msra.mxu0 0.0
        %7449 = vmatprep.subr.mxu0 0.0
        %7450 = vmatpush1.msra.mxu0 0.0
        %7451 = vmatprep.subr.mxu0 0.0
        %7452 = vmatpush1.msra.mxu0 0.0
        %7453 = vmatprep.subr.mxu0 0.0
        %7454 = vmatpush1.msra.mxu0 0.0
        %7455 = vmatprep.subr.mxu0 0.0
        %7456 = vmatpush1.msra.mxu0 0.0
        %7457 = vmatprep.mubr.f32.mxu0 0.0
        %7458 = vmatmul.mubr.f32.gmra.mrb[0].mxu0 %v6491
        %v7459 = vpop.f32.mrb[0].mxu0
        %v7460 = vadd.f32 %v7318, %v7459
        %v7461 = vpop.f32.mrb[0].mxu0
        %v7462 = vadd.f32 %v7320, %v7461
        %7463 = vdwg.mxu0
        %v7464 = vadd.f32 %v7389, %v2480
        %v7465 = vadd.f32 %v7391, %v2484
        %v7466 = vadd.f32 %v7460, %v2488
        %v7467 = vadd.f32 %v7462, %v2492
        %v7468 = vmul.f32 %v7464, 0.5
        %v7469 = vmul.f32 %v7465, 0.5
        %v7470 = vmul.f32 %v7466, 0.5
        %v7471 = vtanh.pop %v7468
        %v7472 = vtanh.pop %v7469
        %v7473 = vtanh.pop %v7470
        %v7474 = vadd.f32 %v7471, 1.0
        %v7475 = vadd.f32 %v7472, 1.0
        %v7476 = vadd.f32 %v7473, 1.0
        %v7477 = vmul.f32 %v7474, 0.5
        %v7478 = vmul.f32 %v7475, 0.5
        %v7479 = vmul.f32 %v7476, 0.5
        %v7480 = vtanh.pop %v7467
        %v7481 = vmul.f32 %v7478, %v6795
        %v7482 = vmul.f32 %v7477, %v7480
        %v7483 = vadd.f32 %v7481, %v7482
        %v7484 = vtanh.pop %v7483
        %v7485 = vmul.f32 %v7479, %v7484
        %7486 = vmatprep.subr.mxu0 0.0
        %7487 = vmatpush1.msra.mxu0 %v867
        %7488 = vmatprep.subr.mxu0 0.0
        %7489 = vmatpush1.msra.mxu0 %v868
        %7490 = vmatprep.subr.mxu0 0.0
        %7491 = vmatpush1.msra.mxu0 %v869
        %7492 = vmatprep.subr.mxu0 0.0
        %7493 = vmatpush1.msra.mxu0 %v870
        %7494 = vmatprep.subr.mxu0 0.0
        %7495 = vmatpush1.msra.mxu0 %v871
        %7496 = vmatprep.subr.mxu0 0.0
        %7497 = vmatpush1.msra.mxu0 %v872
        %7498 = vmatprep.subr.mxu0 0.0
        %7499 = vmatpush1.msra.mxu0 %v873
        %7500 = vmatprep.subr.mxu0 0.0
        %7501 = vmatpush1.msra.mxu0 %v874
        %7502 = vmatprep.subr.mxu0 0.0
        %7503 = vmatpush1.msra.mxu0 %v875
        %7504 = vmatprep.subr.mxu0 0.0
        %7505 = vmatpush1.msra.mxu0 %v876
        %7506 = vmatprep.subr.mxu0 0.0
        %7507 = vmatpush1.msra.mxu0 %v877
        %7508 = vmatprep.subr.mxu0 0.0
        %7509 = vmatpush1.msra.mxu0 %v878
        %7510 = vmatprep.subr.mxu0 0.0
        %7511 = vmatpush1.msra.mxu0 %v879
        %7512 = vmatprep.subr.mxu0 0.0
        %7513 = vmatpush1.msra.mxu0 %v880
        %7514 = vmatprep.subr.mxu0 0.0
        %7515 = vmatpush1.msra.mxu0 %v881
        %7516 = vmatprep.subr.mxu0 0.0
        %7517 = vmatpush1.msra.mxu0 %v882
        %7518 = vmatprep.subr.mxu0 0.0
        %7519 = vmatpush1.msra.mxu0 0.0
        %7520 = vmatprep.subr.mxu0 0.0
        %7521 = vmatpush1.msra.mxu0 0.0
        %7522 = vmatprep.subr.mxu0 0.0
        %7523 = vmatpush1.msra.mxu0 0.0
        %7524 = vmatprep.subr.mxu0 0.0
        %7525 = vmatpush1.msra.mxu0 0.0
        %7526 = vmatprep.subr.mxu0 0.0
        %7527 = vmatpush1.msra.mxu0 0.0
        %7528 = vmatprep.subr.mxu0 0.0
        %7529 = vmatpush1.msra.mxu0 0.0
        %7530 = vmatprep.subr.mxu0 0.0
        %7531 = vmatpush1.msra.mxu0 0.0
        %7532 = vmatprep.subr.mxu0 0.0
        %7533 = vmatpush1.msra.mxu0 0.0
        %7534 = vmatprep.subr.mxu0 0.0
        %7535 = vmatpush1.msra.mxu0 0.0
        %7536 = vmatprep.subr.mxu0 0.0
        %7537 = vmatpush1.msra.mxu0 0.0
        %7538 = vmatprep.subr.mxu0 0.0
        %7539 = vmatpush1.msra.mxu0 0.0
        %7540 = vmatprep.subr.mxu0 0.0
        %7541 = vmatpush1.msra.mxu0 0.0
        %7542 = vmatprep.subr.mxu0 0.0
        %7543 = vmatpush1.msra.mxu0 0.0
        %7544 = vmatprep.subr.mxu0 0.0
        %7545 = vmatpush1.msra.mxu0 0.0
        %7546 = vmatprep.subr.mxu0 0.0
        %7547 = vmatpush1.msra.mxu0 0.0
        %7548 = vmatprep.subr.mxu0 0.0
        %7549 = vmatpush1.msra.mxu0 0.0
        %7550 = vmatprep.mubr.f32.mxu0 0.0
        %7551 = vmatmul.mubr.f32.gmra.mrb[0].mxu0 %v7485
        %v7552 = vpop.f32.mrb[0].mxu0
        %v7553 = vadd.f32 0.0, %v7552
        %v7554 = vpop.f32.mrb[0].mxu0
        %7555 = vdwg.mxu0
        %s7556 = scalar_lea.vmem %s475, 48 [#allocation13]
        %7557 = vst [vmem:[%s7556] sm:$0xff] %v7553
        %7558 = vmatprep.subr.mxu0 %v801
        %7559 = vmatpush1.msra.mxu0 %v800
        %7560 = vmatprep.subr.mxu0 %v805
        %7561 = vmatpush1.msra.mxu0 %v804
        %7562 = vmatprep.subr.mxu0 %v809
        %7563 = vmatpush1.msra.mxu0 %v808
        %7564 = vmatprep.subr.mxu0 %v813
        %7565 = vmatpush1.msra.mxu0 %v812
        %7566 = vmatprep.subr.mxu0 %v817
        %7567 = vmatpush1.msra.mxu0 %v816
        %7568 = vmatprep.subr.mxu0 %v821
        %7569 = vmatpush1.msra.mxu0 %v820
        %7570 = vmatprep.subr.mxu0 %v825
        %7571 = vmatpush1.msra.mxu0 %v824
        %7572 = vmatprep.subr.mxu0 %v829
        %7573 = vmatpush1.msra.mxu0 %v828
        %7574 = vmatprep.subr.mxu0 %v833
        %7575 = vmatpush1.msra.mxu0 %v832
        %7576 = vmatprep.subr.mxu0 %v837
        %7577 = vmatpush1.msra.mxu0 %v836
        %7578 = vmatprep.subr.mxu0 %v841
        %7579 = vmatpush1.msra.mxu0 %v840
        %7580 = vmatprep.subr.mxu0 %v845
        %7581 = vmatpush1.msra.mxu0 %v844
        %7582 = vmatprep.subr.mxu0 %v849
        %7583 = vmatpush1.msra.mxu0 %v848
        %7584 = vmatprep.subr.mxu0 %v853
        %7585 = vmatpush1.msra.mxu0 %v852
        %7586 = vmatprep.subr.mxu0 %v857
        %7587 = vmatpush1.msra.mxu0 %v856
        %7588 = vmatprep.subr.mxu0 %v861
        %7589 = vmatpush1.msra.mxu0 %v860
        %7590 = vmatprep.subr.mxu0 0.0
        %7591 = vmatpush1.msra.mxu0 0.0
        %7592 = vmatprep.subr.mxu0 0.0
        %7593 = vmatpush1.msra.mxu0 0.0
        %7594 = vmatprep.subr.mxu0 0.0
        %7595 = vmatpush1.msra.mxu0 0.0
        %7596 = vmatprep.subr.mxu0 0.0
        %7597 = vmatpush1.msra.mxu0 0.0
        %7598 = vmatprep.subr.mxu0 0.0
        %7599 = vmatpush1.msra.mxu0 0.0
        %7600 = vmatprep.subr.mxu0 0.0
        %7601 = vmatpush1.msra.mxu0 0.0
        %7602 = vmatprep.subr.mxu0 0.0
        %7603 = vmatpush1.msra.mxu0 0.0
        %7604 = vmatprep.subr.mxu0 0.0
        %7605 = vmatpush1.msra.mxu0 0.0
        %7606 = vmatprep.subr.mxu0 0.0
        %7607 = vmatpush1.msra.mxu0 0.0
        %7608 = vmatprep.subr.mxu0 0.0
        %7609 = vmatpush1.msra.mxu0 0.0
        %7610 = vmatprep.subr.mxu0 0.0
        %7611 = vmatpush1.msra.mxu0 0.0
        %7612 = vmatprep.subr.mxu0 0.0
        %7613 = vmatpush1.msra.mxu0 0.0
        %7614 = vmatprep.subr.mxu0 0.0
        %7615 = vmatpush1.msra.mxu0 0.0
        %7616 = vmatprep.subr.mxu0 0.0
        %7617 = vmatpush1.msra.mxu0 0.0
        %7618 = vmatprep.subr.mxu0 0.0
        %7619 = vmatpush1.msra.mxu0 0.0
        %7620 = vmatprep.subr.mxu0 0.0
        %7621 = vmatpush1.msra.mxu0 0.0
        %7622 = vmatprep.mubr.f32.mxu0 0.0
        %7623 = vmatmul.mubr.f32.gmra.mrb[0].mxu0 %v7485
        %v7624 = vpop.f32.mrb[0].mxu0
        %v7625 = vadd.f32 0.0, %v7624
        %v7626 = vpop.f32.mrb[0].mxu0
        %v7627 = vadd.f32 0.0, %v7626
        %7628 = vdwg.mxu0
        %7629 = vmatprep.subr.mxu0 %v803
        %7630 = vmatpush1.msra.mxu0 %v802
        %7631 = vmatprep.subr.mxu0 %v807
        %7632 = vmatpush1.msra.mxu0 %v806
        %7633 = vmatprep.subr.mxu0 %v811
        %7634 = vmatpush1.msra.mxu0 %v810
        %7635 = vmatprep.subr.mxu0 %v815
        %7636 = vmatpush1.msra.mxu0 %v814
        %7637 = vmatprep.subr.mxu0 %v819
        %7638 = vmatpush1.msra.mxu0 %v818
        %7639 = vmatprep.subr.mxu0 %v823
        %7640 = vmatpush1.msra.mxu0 %v822
        %7641 = vmatprep.subr.mxu0 %v827
        %7642 = vmatpush1.msra.mxu0 %v826
        %7643 = vmatprep.subr.mxu0 %v831
        %7644 = vmatpush1.msra.mxu0 %v830
        %7645 = vmatprep.subr.mxu0 %v835
        %7646 = vmatpush1.msra.mxu0 %v834
        %7647 = vmatprep.subr.mxu0 %v839
        %7648 = vmatpush1.msra.mxu0 %v838
        %7649 = vmatprep.subr.mxu0 %v843
        %7650 = vmatpush1.msra.mxu0 %v842
        %7651 = vmatprep.subr.mxu0 %v847
        %7652 = vmatpush1.msra.mxu0 %v846
        %7653 = vmatprep.subr.mxu0 %v851
        %7654 = vmatpush1.msra.mxu0 %v850
        %7655 = vmatprep.subr.mxu0 %v855
        %7656 = vmatpush1.msra.mxu0 %v854
        %7657 = vmatprep.subr.mxu0 %v859
        %7658 = vmatpush1.msra.mxu0 %v858
        %7659 = vmatprep.subr.mxu0 %v863
        %7660 = vmatpush1.msra.mxu0 %v862
        %7661 = vmatprep.subr.mxu0 0.0
        %7662 = vmatpush1.msra.mxu0 0.0
        %7663 = vmatprep.subr.mxu0 0.0
        %7664 = vmatpush1.msra.mxu0 0.0
        %7665 = vmatprep.subr.mxu0 0.0
        %7666 = vmatpush1.msra.mxu0 0.0
        %7667 = vmatprep.subr.mxu0 0.0
        %7668 = vmatpush1.msra.mxu0 0.0
        %7669 = vmatprep.subr.mxu0 0.0
        %7670 = vmatpush1.msra.mxu0 0.0
        %7671 = vmatprep.subr.mxu0 0.0
        %7672 = vmatpush1.msra.mxu0 0.0
        %7673 = vmatprep.subr.mxu0 0.0
        %7674 = vmatpush1.msra.mxu0 0.0
        %7675 = vmatprep.subr.mxu0 0.0
        %7676 = vmatpush1.msra.mxu0 0.0
        %7677 = vmatprep.subr.mxu0 0.0
        %7678 = vmatpush1.msra.mxu0 0.0
        %7679 = vmatprep.subr.mxu0 0.0
        %7680 = vmatpush1.msra.mxu0 0.0
        %7681 = vmatprep.subr.mxu0 0.0
        %7682 = vmatpush1.msra.mxu0 0.0
        %7683 = vmatprep.subr.mxu0 0.0
        %7684 = vmatpush1.msra.mxu0 0.0
        %7685 = vmatprep.subr.mxu0 0.0
        %7686 = vmatpush1.msra.mxu0 0.0
        %7687 = vmatprep.subr.mxu0 0.0
        %7688 = vmatpush1.msra.mxu0 0.0
        %7689 = vmatprep.subr.mxu0 0.0
        %7690 = vmatpush1.msra.mxu0 0.0
        %7691 = vmatprep.subr.mxu0 0.0
        %7692 = vmatpush1.msra.mxu0 0.0
        %7693 = vmatprep.mubr.f32.mxu0 0.0
        %7694 = vmatmul.mubr.f32.gmra.mrb[0].mxu0 %v7485
        %v7695 = vpop.f32.mrb[0].mxu0
        %v7696 = vadd.f32 0.0, %v7695
        %v7697 = vpop.f32.mrb[0].mxu0
        %v7698 = vadd.f32 0.0, %v7697
        %7699 = vdwg.mxu0
        %7700 = vmatprep.subr.mxu0 %v609
        %7701 = vmatpush1.msra.mxu0 %v608
        %7702 = vmatprep.subr.mxu0 %v613
        %7703 = vmatpush1.msra.mxu0 %v612
        %7704 = vmatprep.subr.mxu0 %v617
        %7705 = vmatpush1.msra.mxu0 %v616
        %7706 = vmatprep.subr.mxu0 %v621
        %7707 = vmatpush1.msra.mxu0 %v620
        %7708 = vmatprep.subr.mxu0 %v625
        %7709 = vmatpush1.msra.mxu0 %v624
        %7710 = vmatprep.subr.mxu0 %v629
        %7711 = vmatpush1.msra.mxu0 %v628
        %7712 = vmatprep.subr.mxu0 %v633
        %7713 = vmatpush1.msra.mxu0 %v632
        %7714 = vmatprep.subr.mxu0 %v637
        %7715 = vmatpush1.msra.mxu0 %v636
        %7716 = vmatprep.subr.mxu0 %v641
        %7717 = vmatpush1.msra.mxu0 %v640
        %7718 = vmatprep.subr.mxu0 %v645
        %7719 = vmatpush1.msra.mxu0 %v644
        %7720 = vmatprep.subr.mxu0 %v649
        %7721 = vmatpush1.msra.mxu0 %v648
        %7722 = vmatprep.subr.mxu0 %v653
        %7723 = vmatpush1.msra.mxu0 %v652
        %7724 = vmatprep.subr.mxu0 %v657
        %7725 = vmatpush1.msra.mxu0 %v656
        %7726 = vmatprep.subr.mxu0 %v661
        %7727 = vmatpush1.msra.mxu0 %v660
        %7728 = vmatprep.subr.mxu0 %v665
        %7729 = vmatpush1.msra.mxu0 %v664
        %7730 = vmatprep.subr.mxu0 %v669
        %7731 = vmatpush1.msra.mxu0 %v668
        %7732 = vmatprep.subr.mxu0 0.0
        %7733 = vmatpush1.msra.mxu0 0.0
        %7734 = vmatprep.subr.mxu0 0.0
        %7735 = vmatpush1.msra.mxu0 0.0
        %7736 = vmatprep.subr.mxu0 0.0
        %7737 = vmatpush1.msra.mxu0 0.0
        %7738 = vmatprep.subr.mxu0 0.0
        %7739 = vmatpush1.msra.mxu0 0.0
        %7740 = vmatprep.subr.mxu0 0.0
        %7741 = vmatpush1.msra.mxu0 0.0
        %7742 = vmatprep.subr.mxu0 0.0
        %7743 = vmatpush1.msra.mxu0 0.0
        %7744 = vmatprep.subr.mxu0 0.0
        %7745 = vmatpush1.msra.mxu0 0.0
        %7746 = vmatprep.subr.mxu0 0.0
        %7747 = vmatpush1.msra.mxu0 0.0
        %7748 = vmatprep.subr.mxu0 0.0
        %7749 = vmatpush1.msra.mxu0 0.0
        %7750 = vmatprep.subr.mxu0 0.0
        %7751 = vmatpush1.msra.mxu0 0.0
        %7752 = vmatprep.subr.mxu0 0.0
        %7753 = vmatpush1.msra.mxu0 0.0
        %7754 = vmatprep.subr.mxu0 0.0
        %7755 = vmatpush1.msra.mxu0 0.0
        %7756 = vmatprep.subr.mxu0 0.0
        %7757 = vmatpush1.msra.mxu0 0.0
        %7758 = vmatprep.subr.mxu0 0.0
        %7759 = vmatpush1.msra.mxu0 0.0
        %7760 = vmatprep.subr.mxu0 0.0
        %7761 = vmatpush1.msra.mxu0 0.0
        %7762 = vmatprep.subr.mxu0 0.0
        %7763 = vmatpush1.msra.mxu0 0.0
        %7764 = vmatprep.mubr.f32.mxu0 0.0
        %7765 = vmatmul.mubr.f32.gmra.mrb[0].mxu0 %v7179
        %v7766 = vpop.f32.mrb[0].mxu0
        %v7767 = vadd.f32 %v7625, %v7766
        %v7768 = vpop.f32.mrb[0].mxu0
        %v7769 = vadd.f32 %v7627, %v7768
        %7770 = vdwg.mxu0
        %7771 = vmatprep.subr.mxu0 %v611
        %7772 = vmatpush1.msra.mxu0 %v610
        %7773 = vmatprep.subr.mxu0 %v615
        %7774 = vmatpush1.msra.mxu0 %v614
        %7775 = vmatprep.subr.mxu0 %v619
        %7776 = vmatpush1.msra.mxu0 %v618
        %7777 = vmatprep.subr.mxu0 %v623
        %7778 = vmatpush1.msra.mxu0 %v622
        %7779 = vmatprep.subr.mxu0 %v627
        %7780 = vmatpush1.msra.mxu0 %v626
        %7781 = vmatprep.subr.mxu0 %v631
        %7782 = vmatpush1.msra.mxu0 %v630
        %7783 = vmatprep.subr.mxu0 %v635
        %7784 = vmatpush1.msra.mxu0 %v634
        %7785 = vmatprep.subr.mxu0 %v639
        %7786 = vmatpush1.msra.mxu0 %v638
        %7787 = vmatprep.subr.mxu0 %v643
        %7788 = vmatpush1.msra.mxu0 %v642
        %7789 = vmatprep.subr.mxu0 %v647
        %7790 = vmatpush1.msra.mxu0 %v646
        %7791 = vmatprep.subr.mxu0 %v651
        %7792 = vmatpush1.msra.mxu0 %v650
        %7793 = vmatprep.subr.mxu0 %v655
        %7794 = vmatpush1.msra.mxu0 %v654
        %7795 = vmatprep.subr.mxu0 %v659
        %7796 = vmatpush1.msra.mxu0 %v658
        %7797 = vmatprep.subr.mxu0 %v663
        %7798 = vmatpush1.msra.mxu0 %v662
        %7799 = vmatprep.subr.mxu0 %v667
        %7800 = vmatpush1.msra.mxu0 %v666
        %7801 = vmatprep.subr.mxu0 %v671
        %7802 = vmatpush1.msra.mxu0 %v670
        %7803 = vmatprep.subr.mxu0 0.0
        %7804 = vmatpush1.msra.mxu0 0.0
        %7805 = vmatprep.subr.mxu0 0.0
        %7806 = vmatpush1.msra.mxu0 0.0
        %7807 = vmatprep.subr.mxu0 0.0
        %7808 = vmatpush1.msra.mxu0 0.0
        %7809 = vmatprep.subr.mxu0 0.0
        %7810 = vmatpush1.msra.mxu0 0.0
        %7811 = vmatprep.subr.mxu0 0.0
        %7812 = vmatpush1.msra.mxu0 0.0
        %7813 = vmatprep.subr.mxu0 0.0
        %7814 = vmatpush1.msra.mxu0 0.0
        %7815 = vmatprep.subr.mxu0 0.0
        %7816 = vmatpush1.msra.mxu0 0.0
        %7817 = vmatprep.subr.mxu0 0.0
        %7818 = vmatpush1.msra.mxu0 0.0
        %7819 = vmatprep.subr.mxu0 0.0
        %7820 = vmatpush1.msra.mxu0 0.0
        %7821 = vmatprep.subr.mxu0 0.0
        %7822 = vmatpush1.msra.mxu0 0.0
        %7823 = vmatprep.subr.mxu0 0.0
        %7824 = vmatpush1.msra.mxu0 0.0
        %7825 = vmatprep.subr.mxu0 0.0
        %7826 = vmatpush1.msra.mxu0 0.0
        %7827 = vmatprep.subr.mxu0 0.0
        %7828 = vmatpush1.msra.mxu0 0.0
        %7829 = vmatprep.subr.mxu0 0.0
        %7830 = vmatpush1.msra.mxu0 0.0
        %7831 = vmatprep.subr.mxu0 0.0
        %7832 = vmatpush1.msra.mxu0 0.0
        %7833 = vmatprep.subr.mxu0 0.0
        %7834 = vmatpush1.msra.mxu0 0.0
        %7835 = vmatprep.mubr.f32.mxu0 0.0
        %7836 = vmatmul.mubr.f32.gmra.mrb[0].mxu0 %v7179
        %v7837 = vpop.f32.mrb[0].mxu0
        %v7838 = vadd.f32 %v7696, %v7837
        %v7839 = vpop.f32.mrb[0].mxu0
        %v7840 = vadd.f32 %v7698, %v7839
        %7841 = vdwg.mxu0
        %v7842 = vadd.f32 %v7767, %v2480
        %v7843 = vadd.f32 %v7769, %v2484
        %v7844 = vadd.f32 %v7838, %v2488
        %v7845 = vadd.f32 %v7840, %v2492
        %v7846 = vmul.f32 %v7842, 0.5
        %v7847 = vmul.f32 %v7843, 0.5
        %v7848 = vmul.f32 %v7844, 0.5
        %v7849 = vtanh.pop %v7846
        %v7850 = vtanh.pop %v7847
        %v7851 = vtanh.pop %v7848
        %v7852 = vadd.f32 %v7849, 1.0
        %v7853 = vadd.f32 %v7850, 1.0
        %v7854 = vadd.f32 %v7851, 1.0
        %v7855 = vmul.f32 %v7852, 0.5
        %v7856 = vmul.f32 %v7853, 0.5
        %v7857 = vmul.f32 %v7854, 0.5
        %v7858 = vtanh.pop %v7845
        %v7859 = vmul.f32 %v7856, %v7483
        %v7860 = vmul.f32 %v7855, %v7858
        %v7861 = vadd.f32 %v7859, %v7860
        %v7862 = vtanh.pop %v7861
        %v7863 = vmul.f32 %v7857, %v7862
        %7864 = vmatprep.subr.mxu0 0.0
        %7865 = vmatpush1.msra.mxu0 %v867
        %7866 = vmatprep.subr.mxu0 0.0
        %7867 = vmatpush1.msra.mxu0 %v868
        %7868 = vmatprep.subr.mxu0 0.0
        %7869 = vmatpush1.msra.mxu0 %v869
        %7870 = vmatprep.subr.mxu0 0.0
        %7871 = vmatpush1.msra.mxu0 %v870
        %7872 = vmatprep.subr.mxu0 0.0
        %7873 = vmatpush1.msra.mxu0 %v871
        %7874 = vmatprep.subr.mxu0 0.0
        %7875 = vmatpush1.msra.mxu0 %v872
        %7876 = vmatprep.subr.mxu0 0.0
        %7877 = vmatpush1.msra.mxu0 %v873
        %7878 = vmatprep.subr.mxu0 0.0
        %7879 = vmatpush1.msra.mxu0 %v874
        %7880 = vmatprep.subr.mxu0 0.0
        %7881 = vmatpush1.msra.mxu0 %v875
        %7882 = vmatprep.subr.mxu0 0.0
        %7883 = vmatpush1.msra.mxu0 %v876
        %7884 = vmatprep.subr.mxu0 0.0
        %7885 = vmatpush1.msra.mxu0 %v877
        %7886 = vmatprep.subr.mxu0 0.0
        %7887 = vmatpush1.msra.mxu0 %v878
        %7888 = vmatprep.subr.mxu0 0.0
        %7889 = vmatpush1.msra.mxu0 %v879
        %7890 = vmatprep.subr.mxu0 0.0
        %7891 = vmatpush1.msra.mxu0 %v880
        %7892 = vmatprep.subr.mxu0 0.0
        %7893 = vmatpush1.msra.mxu0 %v881
        %7894 = vmatprep.subr.mxu0 0.0
        %7895 = vmatpush1.msra.mxu0 %v882
        %7896 = vmatprep.subr.mxu0 0.0
        %7897 = vmatpush1.msra.mxu0 0.0
        %7898 = vmatprep.subr.mxu0 0.0
        %7899 = vmatpush1.msra.mxu0 0.0
        %7900 = vmatprep.subr.mxu0 0.0
        %7901 = vmatpush1.msra.mxu0 0.0
        %7902 = vmatprep.subr.mxu0 0.0
        %7903 = vmatpush1.msra.mxu0 0.0
        %7904 = vmatprep.subr.mxu0 0.0
        %7905 = vmatpush1.msra.mxu0 0.0
        %7906 = vmatprep.subr.mxu0 0.0
        %7907 = vmatpush1.msra.mxu0 0.0
        %7908 = vmatprep.subr.mxu0 0.0
        %7909 = vmatpush1.msra.mxu0 0.0
        %7910 = vmatprep.subr.mxu0 0.0
        %7911 = vmatpush1.msra.mxu0 0.0
        %7912 = vmatprep.subr.mxu0 0.0
        %7913 = vmatpush1.msra.mxu0 0.0
        %7914 = vmatprep.subr.mxu0 0.0
        %7915 = vmatpush1.msra.mxu0 0.0
        %7916 = vmatprep.subr.mxu0 0.0
        %7917 = vmatpush1.msra.mxu0 0.0
        %7918 = vmatprep.subr.mxu0 0.0
        %7919 = vmatpush1.msra.mxu0 0.0
        %7920 = vmatprep.subr.mxu0 0.0
        %7921 = vmatpush1.msra.mxu0 0.0
        %7922 = vmatprep.subr.mxu0 0.0
        %7923 = vmatpush1.msra.mxu0 0.0
        %7924 = vmatprep.subr.mxu0 0.0
        %7925 = vmatpush1.msra.mxu0 0.0
        %7926 = vmatprep.subr.mxu0 0.0
        %7927 = vmatpush1.msra.mxu0 0.0
        %7928 = vmatprep.mubr.f32.mxu0 0.0
        %7929 = vmatmul.mubr.f32.gmra.mrb[0].mxu0 %v7863
        %v7930 = vpop.f32.mrb[0].mxu0
        %v7931 = vadd.f32 0.0, %v7930
        %v7932 = vpop.f32.mrb[0].mxu0
        %7933 = vdwg.mxu0
        %s7934 = scalar_lea.vmem %s475, 56 [#allocation13]
        %7935 = vst [vmem:[%s7934] sm:$0xff] %v7931
        %s7936 = sand.u32 %s270, 1
        %s7937 = sand.u32 %s270, 1
        %s7938 = smul.addr %s7937, 64
        %s7939 = scalar_lea.vmem [#allocation13], %s7938
        // Predicated region
        $region93: #{decoder_forward.1} parent=63 // pred_check
          %p7940 = pneg %p280
        $region94: #{decoder_forward.1} parent=63 // pred_check_branch
          %7942 = sbr.rel (%p7940) target = $region96
        $region95: #{decoder_forward.1} parent=63 // pred_region
          %s7943 = smul.addr %s26, 8
          %s7944 = scalar_lea.vmem %s11, %s7943
          // Predicated region
          $region97: #{decoder_forward.1} parent=95 // pred_check
            _
          $region98: #{decoder_forward.1} parent=95 // pred_check_branch
            %7946 = sbr.rel (0) target = $region100
          $region99: #{decoder_forward.1} parent=95 // pred_region
            // Predicated region
            $region101: #{decoder_forward.1} parent=99 // pred_check
              _
            $region102: #{decoder_forward.1} parent=99 // pred_check_branch
              %7948 = sbr.rel (0) target = $region104
            $region103: #{decoder_forward.1} parent=99 // pred_region
              // Predicated region
              $region116: #{decoder_forward.1} parent=103 // pred_check
                _
              $region117: #{decoder_forward.1} parent=103 // pred_check_branch
                %7977 = sbr.rel (0) target = $region119
              $region118: #{decoder_forward.1} parent=103 // pred_region
                loop: start=0, step=1, limit=1
                $region120: #{decoder_forward.1} parent=118 // loop_pre_header
                  _
                $region121: #{decoder_forward.1} parent=118 // loop_header
                  %s7979 = sphi 0, %s7983
                  %p7980 = scmp.ge.s32.totalorder %s7979, 1
                  %s7984 = sphi %s7939, %s7939
                  %s7985 = sphi %s7944, %s7944
                $region122: #{decoder_forward.1} parent=118 // loop_header_branch
                  %7982 = sbr.rel (%p7980) target = $region126
                $region123: #{decoder_forward.1} parent=118 // loop_body
                  %v7986 = vld [vmem:[%s7984] sm:$0xff]
                  %7987 = vst [vmem:[%s7985] sm:$0xff] %v7986
                  %v7988 = vld [vmem:[%s7984 + $0x8] sm:$0xff]
                  %7989 = vst [vmem:[%s7985 + $0x10] sm:$0xff] %v7988
                  %v7990 = vld [vmem:[%s7984 + $0x10] sm:$0xff]
                  %7991 = vst [vmem:[%s7985 + $0x20] sm:$0xff] %v7990
                  %v7992 = vld [vmem:[%s7984 + $0x18] sm:$0xff]
                  %7993 = vst [vmem:[%s7985 + $0x30] sm:$0xff] %v7992
                  %v7994 = vld [vmem:[%s7984 + $0x20] sm:$0xff]
                  %7995 = vst [vmem:[%s7985 + $0x40] sm:$0xff] %v7994
                  %v7996 = vld [vmem:[%s7984 + $0x28] sm:$0xff]
                  %7997 = vst [vmem:[%s7985 + $0x50] sm:$0xff] %v7996
                  %v7998 = vld [vmem:[%s7984 + $0x30] sm:$0xff]
                  %7999 = vst [vmem:[%s7985 + $0x60] sm:$0xff] %v7998
                  %v8000 = vld [vmem:[%s7984 + $0x38] sm:$0xff]
                  %8001 = vst [vmem:[%s7985 + $0x70] sm:$0xff] %v8000
                $region124: #{decoder_forward.1} parent=118 // loop_footer
                  %s7983 = sadd.s32 1, %s7979
                $region125: #{decoder_forward.1} parent=118 // loop_footer_branch
                  %7978 = sbr.rel target = $region121
                $region126: #{decoder_forward.1} parent=118 // loop_exit
                  _
              $region119: #{decoder_forward.1} parent=103 // pred_fallthru
                _
              // Predicated region
              $region127: #{decoder_forward.1} parent=103 // pred_check
                _
              $region128: #{decoder_forward.1} parent=103 // pred_check_branch
                %8003 = sbr.rel target = $region130
              $region129: #{decoder_forward.1} parent=103 // pred_region
                _
              $region130: #{decoder_forward.1} parent=103 // pred_fallthru
                _
            $region104: #{decoder_forward.1} parent=99 // pred_fallthru
              _
            // Predicated region
            $region105: #{decoder_forward.1} parent=99 // pred_check
              _
            $region106: #{decoder_forward.1} parent=99 // pred_check_branch
              %7950 = sbr.rel target = $region108
            $region107: #{decoder_forward.1} parent=99 // pred_region
              loop: start=0, step=1, limit=1
              $region109: #{decoder_forward.1} parent=107 // loop_pre_header
                _
              $region110: #{decoder_forward.1} parent=107 // loop_header
                %s7953 = sphi 0, %s7957
                %p7954 = scmp.ge.s32.totalorder %s7953, 1
                %s7958 = sphi %s7939, %s7939
                %s7959 = sphi %s7944, %s7944
              $region111: #{decoder_forward.1} parent=107 // loop_header_branch
                %7956 = sbr.rel (%p7954) target = $region115
              $region112: #{decoder_forward.1} parent=107 // loop_body
                %v7960 = vld [vmem:[%s7958] sm:$0xff]
                %7961 = vst [vmem:[%s7959] sm:$0xff] %v7960
                %v7962 = vld [vmem:[%s7958 + $0x8] sm:$0xff]
                %7963 = vst [vmem:[%s7959 + $0x10] sm:$0xff] %v7962
                %v7964 = vld [vmem:[%s7958 + $0x10] sm:$0xff]
                %7965 = vst [vmem:[%s7959 + $0x20] sm:$0xff] %v7964
                %v7966 = vld [vmem:[%s7958 + $0x18] sm:$0xff]
                %7967 = vst [vmem:[%s7959 + $0x30] sm:$0xff] %v7966
                %v7968 = vld [vmem:[%s7958 + $0x20] sm:$0xff]
                %7969 = vst [vmem:[%s7959 + $0x40] sm:$0xff] %v7968
                %v7970 = vld [vmem:[%s7958 + $0x28] sm:$0xff]
                %7971 = vst [vmem:[%s7959 + $0x50] sm:$0xff] %v7970
                %v7972 = vld [vmem:[%s7958 + $0x30] sm:$0xff]
                %7973 = vst [vmem:[%s7959 + $0x60] sm:$0xff] %v7972
                %v7974 = vld [vmem:[%s7958 + $0x38] sm:$0xff]
                %7975 = vst [vmem:[%s7959 + $0x70] sm:$0xff] %v7974
              $region113: #{decoder_forward.1} parent=107 // loop_footer
                %s7957 = sadd.s32 1, %s7953
              $region114: #{decoder_forward.1} parent=107 // loop_footer_branch
                %7952 = sbr.rel target = $region110
              $region115: #{decoder_forward.1} parent=107 // loop_exit
                _
            $region108: #{decoder_forward.1} parent=99 // pred_fallthru
              _
          $region100: #{decoder_forward.1} parent=95 // pred_fallthru
            _
          %8004 = vnop
        $region96: #{decoder_forward.1} parent=63 // pred_fallthru
          _
      $region64: #{decoder_forward.1} parent=5 // pred_fallthru
        _
      %p8005 = scmp.le.s32.totalorder 2, %s21
      // Predicated region
      $region131: #{decoder_forward.1} parent=5 // pred_check
        %p8006 = pneg %p8005
      $region132: #{decoder_forward.1} parent=5 // pred_check_branch
        %8008 = sbr.rel (%p8006) target = $region134
      $region133: #{decoder_forward.1} parent=5 // pred_region
        %s8009 = ssub.s32 %s21, 2
        // Predicated region
        $region135: #{decoder_forward.1} parent=133 // pred_check
          %p8010 = pneg %p286
        $region136: #{decoder_forward.1} parent=133 // pred_check_branch
          %8012 = sbr.rel (%p8010) target = $region138
        $region137: #{decoder_forward.1} parent=133 // pred_region
          %s8013 = sand.u32 %s271, 1
          %s8014 = sand.u32 %s271, 1
          %s8015 = smul.addr %s8014, 64
          %s8016 = scalar_lea.vmem [#allocation13], %s8015
        $region138: #{decoder_forward.1} parent=133 // pred_fallthru
          _
      $region134: #{decoder_forward.1} parent=5 // pred_fallthru
        _
    $region6: #{decoder_forward.1} parent=1 // loop_footer
      %s25 = sadd.s32 1, %s21
    $region7: #{decoder_forward.1} parent=1 // loop_footer_branch
      %20 = sbr.rel target = $region3
    $region8: #{decoder_forward.1} parent=1 // loop_exit
      _
    %8017 = vsyncpa [#allocation3], 1
    %s8018 = scalar_lea.sflag [#allocation3], 1
    %8019 = vsyncpa %s8018, 1
    %8020 = vsyncpa [#allocation5], 1
    %8021 = vsyncpa [#allocation8], 1
    %8022 = vsyncpa [#allocation11], 1

</llo_original>
